<compile_context>
chip_gen: v5e
topology: v5e:2x2
jax: 0.10.0
libtpu: 0.0.40
codegen_flags: <defaults>
</compile_context>

<pallas_src>
import math
import functools

import jax
import jax.numpy as jnp
from jax.experimental import pallas as pl
from jax.experimental.pallas import tpu as pltpu


# ----------------------------- kernels ---------------------------------------

def _encoder_stack_kernel(x_ref, mask_ref,
                          wqkv_ref, bqkv_ref, wo_ref,
                          w1_ref, b1_ref, w2_ref, dvec_ref,
                          out_ref, qkv_scr, ctx_scr, *, nhead, nlayers):
    """All TransformerEncoderLayers (norm_first=False) fused for one row block.

    grid = (row_blocks,).  All nlayers' weights are VMEM-resident (constant index_map =>
    fetched once and reused across row blocks); the layer loop runs in-kernel so the
    (TN, D) residual stream never leaves VMEM/vregs between layers.
    """
    TN, D = x_ref.shape
    hd = D // nhead

    def layer_body(l, x):
        # packed per-layer (1, D) vectors: bo, ln1g, ln1b, ln2g, ln2b, b2 (+2 zero rows)
        dv = dvec_ref[l]                                     # (8, D) f32
        bo, ln1g, ln1b = dv[0:1, :], dv[1:2, :], dv[2:3, :]
        ln2g, ln2b, b2 = dv[3:4, :], dv[4:5, :], dv[5:6, :]

        # --- fused QKV projection (bf16 MXU, f32 accumulate) -------------------
        # store bias-added bf16 result to VMEM scratch immediately: the f32 (TN,3D)
        # intermediate dies early and q/k/v head slices are read back lane-aligned.
        xb = x.astype(jnp.bfloat16)
        qkv = jnp.dot(xb, wqkv_ref[l], preferred_element_type=jnp.float32) + bqkv_ref[l]
        qkv_scr[...] = qkv.astype(jnp.bfloat16)

        # --- multi-head attention on a lane-dense (TN, TN) block-diag score matrix
        for h in range(nhead):                               # nhead is small & static
            lo = h * hd
            qh = qkv_scr[:, lo:lo + hd]                      # 1/sqrt(hd) folded into wq/bq
            kh = qkv_scr[:, D + lo:D + lo + hd]
            vh = qkv_scr[:, 2 * D + lo:2 * D + lo + hd]
            # (TN, hd) x (TN, hd)^T -> (TN, TN) scores, + block-diag causal mask
            s = jax.lax.dot_general(qh, kh, (((1,), (1,)), ((), ())),
                                    preferred_element_type=jnp.float32) + mask_ref[...]
            m = jnp.max(s, axis=-1, keepdims=True)
            p = jnp.exp(s - m)
            p = p * pl.reciprocal(jnp.sum(p, axis=-1, keepdims=True), approx=True)
            ctx_scr[:, lo:lo + hd] = jnp.dot(
                p.astype(jnp.bfloat16), vh,
                preferred_element_type=jnp.float32).astype(jnp.bfloat16)

        # single K=D output projection (heads already lane-concatenated in ctx_scr)
        attn = jnp.dot(ctx_scr[...], wo_ref[l], preferred_element_type=jnp.float32) + bo

        # --- residual + LayerNorm 1 (f32, single-pass variance, rsqrt) ---------
        y = x + attn
        mu = jnp.mean(y, axis=-1, keepdims=True)
        var = jnp.mean(y * y, axis=-1, keepdims=True) - mu * mu
        y = (y - mu) * jax.lax.rsqrt(var + 1e-5) * ln1g + ln1b

        # --- feed-forward (ReLU), bf16 MXU / f32 accumulate ---------------------
        h1 = jnp.dot(y.astype(jnp.bfloat16), w1_ref[l],
                     preferred_element_type=jnp.float32) + b1_ref[l]
        h1 = jnp.maximum(h1, 0.0)
        ff = jnp.dot(h1.astype(jnp.bfloat16), w2_ref[l],
                     preferred_element_type=jnp.float32) + b2

        # --- residual + LayerNorm 2 ---------------------------------------------
        z = y + ff
        mu = jnp.mean(z, axis=-1, keepdims=True)
        var = jnp.mean(z * z, axis=-1, keepdims=True) - mu * mu
        return (z - mu) * jax.lax.rsqrt(var + 1e-5) * ln2g + ln2b

    x = jax.lax.fori_loop(0, nlayers, layer_body, x_ref[...])
    out_ref[...] = x.astype(out_ref.dtype)


def _decoder_kernel(x_ref, w_ref, b_ref, o_ref):
    o_ref[...] = (jnp.dot(x_ref[...], w_ref[...],
                          preferred_element_type=jnp.float32)
                  + b_ref[...]).astype(o_ref.dtype)


# ----------------------------- wrappers ---------------------------------------

def _choose_bblk(batch, seq, max_rows=256):
    """Batch elements per row block.

    Prefer the biggest block with (bblk*seq) a multiple of 8 (sublane rule) and
    <= max_rows, while keeping >= 2 row blocks so both v7x TensorCores get work.
    Falls back to the full batch (block == full array, always a legal BlockSpec).
    """
    candidates = [bb for bb in range(1, batch + 1) if batch % bb == 0]
    valid = [bb for bb in candidates if (bb * seq) % 8 == 0 and bb * seq <= max_rows]
    two_plus = [bb for bb in valid if batch // bb >= 2]
    if two_plus:
        return max(two_plus)
    if valid:
        return max(valid)
    return batch


def build_block_diag_mask(src_mask, bblk):
    """(TN, TN) additive mask: src_mask within each sequence, -1e30 across sequences."""
    S = src_mask.shape[0]
    TN = bblk * S
    r = jnp.arange(TN)
    bi, si = r // S, r % S
    same = bi[:, None] == bi[None, :]
    return jnp.where(same, src_mask[si[:, None], si[None, :]], -1e30).astype(jnp.float32)


def encoder_stack(x2d, mask_big, prep, *, nhead, seq, nlayers, bblk):
    N, D = x2d.shape
    L = nlayers
    Hf = prep["w1"].shape[2]
    TN = bblk * seq
    grid = (N // TN,)

    # Resident-weight design: all L layers' bf16 weights live in VMEM for the whole call
    # (~few MB here, well under the 32 MiB default scoped VMEM on v5e/v6e/v7x).
    # TODO(synk): for large d_model/d_hid where the stacked weights no longer fit
    # (especially v7x's 64 MiB physical VMEM), switch back to a streamed per-layer grid
    # axis (grid=(row_blocks, nlayers), index_map lambda rb, l: (l, 0, 0)).
    in_specs = [
        pl.BlockSpec((TN, D), lambda rb: (rb, 0)),            # x rows (per row block)
        pl.BlockSpec((TN, TN), lambda rb: (0, 0)),            # block-diag causal mask
        pl.BlockSpec((L, D, 3 * D), lambda rb: (0, 0, 0)),    # fused QKV weight (bf16)
        pl.BlockSpec((L, 1, 3 * D), lambda rb: (0, 0, 0)),    # fused QKV bias (f32)
        pl.BlockSpec((L, D, D), lambda rb: (0, 0, 0)),        # out-proj weight (bf16)
        pl.BlockSpec((L, D, Hf), lambda rb: (0, 0, 0)),       # FFN w1 (bf16)
        pl.BlockSpec((L, 1, Hf), lambda rb: (0, 0, 0)),       # FFN b1 (f32)
        pl.BlockSpec((L, Hf, D), lambda rb: (0, 0, 0)),       # FFN w2 (bf16)
        pl.BlockSpec((L, 8, D), lambda rb: (0, 0, 0)),        # packed bo/ln/b2 vectors
    ]
    return pl.pallas_call(
        functools.partial(_encoder_stack_kernel, nhead=nhead, nlayers=nlayers),
        out_shape=jax.ShapeDtypeStruct((N, D), jnp.bfloat16),
        grid=grid,
        in_specs=in_specs,
        out_specs=pl.BlockSpec((TN, D), lambda rb: (rb, 0)),
        scratch_shapes=[pltpu.VMEM((TN, 3 * D), jnp.bfloat16),   # bias-added QKV (bf16)
                        pltpu.VMEM((TN, D), jnp.bfloat16)],      # per-head contexts
        compiler_params=pltpu.CompilerParams(
            dimension_semantics=("parallel",)),
    )(x2d, mask_big, prep["wqkv"], prep["bqkv"], prep["wo"],
      prep["w1"], prep["b1"], prep["w2"], prep["dvecs"])


def decoder_linear(x_bf16, dec_w_bf16, dec_b_f32):
    N, D = x_bf16.shape
    Vp = dec_w_bf16.shape[1]                                  # already a multiple of 128
    # 128-row tiles (>= 2 parallel steps for v7x's 2 TCs when N >= 256); full-vocab tile
    # so x is loaded once per row tile and stores are wide and unmasked.
    TN = 128 if (N % 128 == 0 and N >= 256) else N
    grid = (N // TN,)
    return pl.pallas_call(
        _decoder_kernel,
        out_shape=jax.ShapeDtypeStruct((N, Vp), jnp.float32),
        grid=grid,
        in_specs=[pl.BlockSpec((TN, D), lambda i: (i, 0)),
                  pl.BlockSpec((D, Vp), lambda i: (0, 0)),
                  pl.BlockSpec((1, Vp), lambda i: (0, 0))],
        out_specs=pl.BlockSpec((TN, Vp), lambda i: (i, 0)),
        compiler_params=pltpu.CompilerParams(
            dimension_semantics=("parallel",)),
    )(x_bf16, dec_w_bf16, dec_b_f32)


# ----------------------------- params / model glue -----------------------------

def make_positional_encoding(S, D):
    position = jnp.arange(S, dtype=jnp.float32)[:, None]
    div_term = jnp.exp(jnp.arange(0, D, 2, dtype=jnp.float32) * (-math.log(10000.0) / D))
    pe = jnp.zeros((S, D), jnp.float32)
    pe = pe.at[:, 0::2].set(jnp.sin(position * div_term))
    pe = pe.at[:, 1::2].set(jnp.cos(position * div_term))
    return pe


def generate_square_subsequent_mask(S):
    # large negative finite value instead of -inf: identical softmax result for a
    # causal mask (diagonal is 0) but can never produce NaN from inf arithmetic.
    i = jnp.arange(S)
    return jnp.where(i[None, :] > i[:, None], -1e30, 0.0).astype(jnp.float32)


def init_params(key, ntoken, d_model, nhead, d_hid, nlayers):
    # NOTE: PyTorch uses xavier_uniform_ for the attention in_proj and Kaiming-uniform for
    # the FFN Linears; here we use uniform(+-1/sqrt(fan_in)). Forward math is identical;
    # load real weights for checkpoint parity.
    keys = jax.random.split(key, 2 + nlayers)
    params = {
        "emb": jax.random.uniform(keys[0], (ntoken, d_model), jnp.float32, -0.1, 0.1),
        "dec_w": jax.random.uniform(keys[1], (d_model, ntoken), jnp.float32, -0.1, 0.1),
        "dec_b": jnp.zeros((1, ntoken), jnp.float32),
        "layers": [],
    }
    a_d = 1.0 / math.sqrt(d_model)
    a_h = 1.0 / math.sqrt(d_hid)
    for l in range(nlayers):
        lk = jax.random.split(keys[2 + l], 6)
        params["layers"].append({
            "wq": jax.random.uniform(lk[0], (d_model, d_model), jnp.float32, -a_d, a_d),
            "wk": jax.random.uniform(lk[1], (d_model, d_model), jnp.float32, -a_d, a_d),
            "wv": jax.random.uniform(lk[2], (d_model, d_model), jnp.float32, -a_d, a_d),
            "bq": jnp.zeros((1, d_model), jnp.float32),
            "bk": jnp.zeros((1, d_model), jnp.float32),
            "bv": jnp.zeros((1, d_model), jnp.float32),
            "wo": jax.random.uniform(lk[3], (d_model, d_model), jnp.float32, -a_d, a_d),
            "bo": jnp.zeros((1, d_model), jnp.float32),
            "ln1g": jnp.ones((1, d_model), jnp.float32),
            "ln1b": jnp.zeros((1, d_model), jnp.float32),
            "ln2g": jnp.ones((1, d_model), jnp.float32),
            "ln2b": jnp.zeros((1, d_model), jnp.float32),
            "w1": jax.random.uniform(lk[4], (d_model, d_hid), jnp.float32, -a_d, a_d),
            "b1": jnp.zeros((1, d_hid), jnp.float32),
            "w2": jax.random.uniform(lk[5], (d_hid, d_model), jnp.float32, -a_h, a_h),
            "b2": jnp.zeros((1, d_model), jnp.float32),
        })
    return params


def prepare_params(params, ntoken, nhead):
    """Stack per-layer weights (leading layer axis), fold 1/sqrt(head_dim) into wq/bq,
    pack small vectors, cast matmul weights to bf16, pad vocab to a lane multiple."""
    layers = params["layers"]
    D = layers[0]["wo"].shape[0]
    scale = 1.0 / math.sqrt(D // nhead)

    def stack(f):
        return jnp.stack([f(lp) for lp in layers], axis=0)

    wqkv = stack(lambda lp: jnp.concatenate(
        [lp["wq"] * scale, lp["wk"], lp["wv"]], axis=1))
    bqkv = stack(lambda lp: jnp.concatenate(
        [lp["bq"] * scale, lp["bk"], lp["bv"]], axis=1))
    dvecs = stack(lambda lp: jnp.concatenate(
        [lp["bo"], lp["ln1g"], lp["ln1b"], lp["ln2g"], lp["ln2b"], lp["b2"],
         jnp.zeros((2, D), jnp.float32)], axis=0))                      # (L, 8, D)

    vpad = ((ntoken + 127) // 128) * 128 - ntoken                       # lane-dense vocab
    dec_w = jnp.pad(params["dec_w"], ((0, 0), (0, vpad))).astype(jnp.bfloat16)
    dec_b = jnp.pad(params["dec_b"], ((0, 0), (0, vpad)))

    return {
        "emb": params["emb"],
        "wqkv": wqkv.astype(jnp.bfloat16), "bqkv": bqkv,
        "wo": stack(lambda lp: lp["wo"]).astype(jnp.bfloat16),
        "w1": stack(lambda lp: lp["w1"]).astype(jnp.bfloat16),
        "b1": stack(lambda lp: lp["b1"]),
        "w2": stack(lambda lp: lp["w2"]).astype(jnp.bfloat16),
        "dvecs": dvecs,
        "dec_w": dec_w, "dec_b": dec_b,
    }


def transformer_model_forward(prep, src, src_mask, *, d_model, nhead, nlayers, ntoken):
    B, S = src.shape
    assert d_model % nhead == 0
    # embedding gather + sqrt(d_model) scale + positional encoding: plain JAX so XLA fuses
    # it with the gather (no extra elementwise kernel / HBM round trip).
    pe = make_positional_encoding(S, d_model)
    x = jnp.take(prep["emb"], src, axis=0) * math.sqrt(d_model) + pe[None]
    x2d = x.reshape(B * S, d_model)

    bblk = _choose_bblk(B, S)
    mask_big = build_block_diag_mask(src_mask, bblk)       # (bblk*S, bblk*S) additive mask
    x_enc = encoder_stack(x2d, mask_big, prep, nhead=nhead, seq=S,
                          nlayers=nlayers, bblk=bblk)
    logits = decoder_linear(x_enc, prep["dec_w"], prep["dec_b"])
    return logits[:, :ntoken].reshape(B, S, ntoken)


# TODO(synk): dropout (p=0.5) is an eval-mode identity here; training-mode RNG dropout not implemented.


# ----------------------------- pure-JAX reference (f32) ------------------------

def _layer_norm(x, g, b, eps=1e-5):
    mu = jnp.mean(x, axis=-1, keepdims=True)
    var = jnp.mean((x - mu) ** 2, axis=-1, keepdims=True)
    return (x - mu) / jnp.sqrt(var + eps) * g + b


def reference_forward(params, src, mask, *, d_model, nhead):
    B, S = src.shape
    D = d_model
    hd = D // nhead
    x = jnp.take(params["emb"], src, axis=0) * math.sqrt(D) + make_positional_encoding(S, D)[None]
    for lp in params["layers"]:
        q = x @ lp["wq"] + lp["bq"]
        k = x @ lp["wk"] + lp["bk"]
        v = x @ lp["wv"] + lp["bv"]
        heads = []
        for h in range(nhead):
            sl = slice(h * hd, (h + 1) * hd)
            s = jnp.einsum('bqd,bkd->bqk', q[..., sl], k[..., sl]) / math.sqrt(hd) + mask
            p = jax.nn.softmax(s, axis=-1)
            heads.append(jnp.einsum('bqk,bkd->bqd', p, v[..., sl]))
        attn = jnp.concatenate(heads, axis=-1) @ lp["wo"] + lp["bo"]
        x = _layer_norm(x + attn, lp["ln1g"], lp["ln1b"])
        ff = jnp.maximum(x @ lp["w1"] + lp["b1"], 0.0) @ lp["w2"] + lp["b2"]
        x = _layer_norm(x + ff, lp["ln2g"], lp["ln2b"])
    return x @ params["dec_w"] + params["dec_b"]


# ----------------------------- main --------------------------------------------

if __name__ == "__main__":
    # Small but TPU-friendly shapes (lane-multiple d_model/vocab, head_dim = 128).
    ntoken, d_model, nhead, d_hid, nlayers = 384, 256, 2, 512, 2
    B, S = 8, 32

    key = jax.random.PRNGKey(0)
    k_params, k_tok = jax.random.split(key)
    params = init_params(k_params, ntoken, d_model, nhead, d_hid, nlayers)
    prep = prepare_params(params, ntoken, nhead)
    src = jax.random.randint(k_tok, (B, S), 0, ntoken, dtype=jnp.int32)
    src_mask = generate_square_subsequent_mask(S)

    fwd = jax.jit(functools.partial(transformer_model_forward, d_model=d_model,
                                    nhead=nhead, nlayers=nlayers, ntoken=ntoken))
    out = jax.block_until_ready(fwd(prep, src, src_mask))
    assert out.shape == (B, S, ntoken)
    assert bool(jnp.all(jnp.isfinite(out)))

    ref = reference_forward(params, src, src_mask, d_model=d_model, nhead=nhead)
    max_err = float(jnp.max(jnp.abs(out - ref)))
    assert max_err < 0.25, f"mismatch vs f32 reference: max abs err {max_err}"

    print("KERNEL_OK")
</pallas_src>

<mosaic_0001>
module attributes {stable_mosaic.version = 11 : i64} {
  func.func @_encoder_stack_kernel(%arg0: i32, %arg1: memref<128x256xf32, #tpu.memory_space<vmem>>, %arg2: memref<128x128xf32, #tpu.memory_space<vmem>>, %arg3: memref<2x256x768xbf16, #tpu.memory_space<vmem>>, %arg4: memref<2x1x768xf32, #tpu.memory_space<vmem>>, %arg5: memref<2x256x256xbf16, #tpu.memory_space<vmem>>, %arg6: memref<2x256x512xbf16, #tpu.memory_space<vmem>>, %arg7: memref<2x1x512xf32, #tpu.memory_space<vmem>>, %arg8: memref<2x512x256xbf16, #tpu.memory_space<vmem>>, %arg9: memref<2x8x256xf32, #tpu.memory_space<vmem>>, %arg10: memref<128x256xbf16, #tpu.memory_space<vmem>>, %arg11: memref<128x768xbf16, #tpu.memory_space<vmem>>, %arg12: memref<128x256xbf16, #tpu.memory_space<vmem>>) attributes {dimension_semantics = [#tpu.dimension_semantics<parallel>], iteration_bounds = array<i64: 2>, scalar_prefetch = 0 : i64, scratch_operands = 2 : i64, tpu.core_type = #tpu.core_type<tc>, window_params = [{transform_indices = @transform_0, window_bounds = array<i64: 128, 256>}, {pipeline_mode = #tpu.pipeline_mode<synchronous>, transform_indices = @transform_1, window_bounds = array<i64: 128, 128>}, {pipeline_mode = #tpu.pipeline_mode<synchronous>, transform_indices = @transform_2, window_bounds = array<i64: 2, 256, 768>}, {pipeline_mode = #tpu.pipeline_mode<synchronous>, transform_indices = @transform_3, window_bounds = array<i64: 2, 1, 768>}, {pipeline_mode = #tpu.pipeline_mode<synchronous>, transform_indices = @transform_4, window_bounds = array<i64: 2, 256, 256>}, {pipeline_mode = #tpu.pipeline_mode<synchronous>, transform_indices = @transform_5, window_bounds = array<i64: 2, 256, 512>}, {pipeline_mode = #tpu.pipeline_mode<synchronous>, transform_indices = @transform_6, window_bounds = array<i64: 2, 1, 512>}, {pipeline_mode = #tpu.pipeline_mode<synchronous>, transform_indices = @transform_7, window_bounds = array<i64: 2, 512, 256>}, {pipeline_mode = #tpu.pipeline_mode<synchronous>, transform_indices = @transform_8, window_bounds = array<i64: 2, 8, 256>}, {transform_indices = @transform_9, window_bounds = array<i64: 128, 256>}]} {
    %c0 = arith.constant 0 : index
    %c0_0 = arith.constant 0 : index
    %0 = vector.load %arg1[%c0, %c0_0] : memref<128x256xf32, #tpu.memory_space<vmem>>, vector<128x256xf32>
    %c0_i32 = arith.constant 0 : i32
    %c2_i32 = arith.constant 2 : i32
    %1 = arith.addi %c0_i32, %c2_i32 : i32
    %c1_i32 = arith.constant 1 : i32
    %2 = scf.for %arg13 = %c0_i32 to %1 step %c1_i32 iter_args(%arg14 = %0) -> (vector<128x256xf32>)  : i32 {
      %5 = arith.index_cast %arg13 : i32 to index
      %c0_4 = arith.constant 0 : index
      %c0_5 = arith.constant 0 : index
      %6 = vector.load %arg9[%5, %c0_4, %c0_5] : memref<2x8x256xf32, #tpu.memory_space<vmem>>, vector<1x8x256xf32>
      %7 = vector.shape_cast %6 : vector<1x8x256xf32> to vector<8x256xf32>
      %8 = vector.extract_strided_slice %7 {offsets = [0, 0], sizes = [1, 256], strides = [1, 1]} : vector<8x256xf32> to vector<1x256xf32>
      %9 = vector.extract_strided_slice %7 {offsets = [1, 0], sizes = [1, 256], strides = [1, 1]} : vector<8x256xf32> to vector<1x256xf32>
      %10 = vector.extract_strided_slice %7 {offsets = [2, 0], sizes = [1, 256], strides = [1, 1]} : vector<8x256xf32> to vector<1x256xf32>
      %11 = vector.extract_strided_slice %7 {offsets = [3, 0], sizes = [1, 256], strides = [1, 1]} : vector<8x256xf32> to vector<1x256xf32>
      %12 = vector.extract_strided_slice %7 {offsets = [4, 0], sizes = [1, 256], strides = [1, 1]} : vector<8x256xf32> to vector<1x256xf32>
      %13 = vector.extract_strided_slice %7 {offsets = [5, 0], sizes = [1, 256], strides = [1, 1]} : vector<8x256xf32> to vector<1x256xf32>
      %14 = arith.truncf %arg14 : vector<128x256xf32> to vector<128x256xbf16>
      %15 = arith.index_cast %arg13 : i32 to index
      %c0_6 = arith.constant 0 : index
      %c0_7 = arith.constant 0 : index
      %16 = vector.load %arg3[%15, %c0_6, %c0_7] : memref<2x256x768xbf16, #tpu.memory_space<vmem>>, vector<1x256x768xbf16>
      %17 = vector.shape_cast %16 : vector<1x256x768xbf16> to vector<256x768xbf16>
      %cst = arith.constant dense<0.000000e+00> : vector<128x768xf32>
      %18 = tpu.matmul %14, %17, %cst {dimension_numbers = #tpu.dot_dimension_numbers<[1], [0], [0], [1], [0, 0, 1, 1], [], []>} : vector<128x256xbf16>, vector<256x768xbf16>, vector<128x768xf32> -> vector<128x768xf32>
      %19 = arith.index_cast %arg13 : i32 to index
      %c0_8 = arith.constant 0 : index
      %c0_9 = arith.constant 0 : index
      %20 = vector.load %arg4[%19, %c0_8, %c0_9] : memref<2x1x768xf32, #tpu.memory_space<vmem>>, vector<1x1x768xf32>
      %21 = vector.shape_cast %20 : vector<1x1x768xf32> to vector<1x768xf32>
      %22 = vector.broadcast %21 : vector<1x768xf32> to vector<128x768xf32>
      %23 = arith.addf %18, %22 : vector<128x768xf32>
      %24 = arith.truncf %23 : vector<128x768xf32> to vector<128x768xbf16>
      %c0_10 = arith.constant 0 : index
      %c0_11 = arith.constant 0 : index
      %25 = vector.load %arg11[%c0_10, %c0_11] : memref<128x768xbf16, #tpu.memory_space<vmem>>, vector<128x768xbf16>
      tpu.vector_store %arg11[%c0_10, %c0_11], %24 {strides = array<i32>} : memref<128x768xbf16, #tpu.memory_space<vmem>>, vector<128x768xbf16>,
      %c0_12 = arith.constant 0 : index
      %c0_13 = arith.constant 0 : index
      %26 = vector.load %arg11[%c0_12, %c0_13] : memref<128x768xbf16, #tpu.memory_space<vmem>>, vector<128x128xbf16>
      %c0_14 = arith.constant 0 : index
      %c256 = arith.constant 256 : index
      %27 = vector.load %arg11[%c0_14, %c256] : memref<128x768xbf16, #tpu.memory_space<vmem>>, vector<128x128xbf16>
      %c0_15 = arith.constant 0 : index
      %c512 = arith.constant 512 : index
      %28 = vector.load %arg11[%c0_15, %c512] : memref<128x768xbf16, #tpu.memory_space<vmem>>, vector<128x128xbf16>
      %cst_16 = arith.constant dense<0.000000e+00> : vector<128x128xf32>
      %29 = tpu.matmul %26, %27, %cst_16 {dimension_numbers = #tpu.dot_dimension_numbers<[1], [1], [0], [0], [0, 0, 1, 0], [], []>} : vector<128x128xbf16>, vector<128x128xbf16>, vector<128x128xf32> -> vector<128x128xf32>
      %c0_17 = arith.constant 0 : index
      %c0_18 = arith.constant 0 : index
      %30 = vector.load %arg2[%c0_17, %c0_18] : memref<128x128xf32, #tpu.memory_space<vmem>>, vector<128x128xf32>
      %31 = arith.addf %29, %30 : vector<128x128xf32>
      %cst_19 = arith.constant dense<0xFF800000> : vector<128xf32>
      %32 = vector.multi_reduction <maximumf>, %31, %cst_19 [1] : vector<128x128xf32> to vector<128xf32>
      %33 = vector.shape_cast %32 : vector<128xf32> to vector<128x1xf32>
      %34 = vector.broadcast %33 : vector<128x1xf32> to vector<128x128xf32>
      %35 = arith.subf %31, %34 : vector<128x128xf32>
      %36 = math.exp %35 : vector<128x128xf32>
      %cst_20 = arith.constant dense<0.000000e+00> : vector<128xf32>
      %37 = vector.multi_reduction <add>, %36, %cst_20 [1] : vector<128x128xf32> to vector<128xf32>
      %38 = vector.shape_cast %37 : vector<128xf32> to vector<128x1xf32>
      %39 = tpu.reciprocal %38 {approx = true} : vector<128x1xf32> -> vector<128x1xf32>
      %40 = vector.broadcast %39 : vector<128x1xf32> to vector<128x128xf32>
      %41 = arith.mulf %36, %40 : vector<128x128xf32>
      %42 = arith.truncf %41 : vector<128x128xf32> to vector<128x128xbf16>
      %cst_21 = arith.constant dense<0.000000e+00> : vector<128x128xf32>
      %43 = tpu.matmul %42, %28, %cst_21 {dimension_numbers = #tpu.dot_dimension_numbers<[1], [0], [0], [1], [0, 0, 1, 1], [], []>} : vector<128x128xbf16>, vector<128x128xbf16>, vector<128x128xf32> -> vector<128x128xf32>
      %44 = arith.truncf %43 : vector<128x128xf32> to vector<128x128xbf16>
      %c0_22 = arith.constant 0 : index
      %c0_23 = arith.constant 0 : index
      %45 = vector.load %arg12[%c0_22, %c0_23] : memref<128x256xbf16, #tpu.memory_space<vmem>>, vector<128x128xbf16>
      tpu.vector_store %arg12[%c0_22, %c0_23], %44 {strides = array<i32>} : memref<128x256xbf16, #tpu.memory_space<vmem>>, vector<128x128xbf16>,
      %c0_24 = arith.constant 0 : index
      %c128 = arith.constant 128 : index
      %46 = vector.load %arg11[%c0_24, %c128] : memref<128x768xbf16, #tpu.memory_space<vmem>>, vector<128x128xbf16>
      %c0_25 = arith.constant 0 : index
      %c384 = arith.constant 384 : index
      %47 = vector.load %arg11[%c0_25, %c384] : memref<128x768xbf16, #tpu.memory_space<vmem>>, vector<128x128xbf16>
      %c0_26 = arith.constant 0 : index
      %c640 = arith.constant 640 : index
      %48 = vector.load %arg11[%c0_26, %c640] : memref<128x768xbf16, #tpu.memory_space<vmem>>, vector<128x128xbf16>
      %cst_27 = arith.constant dense<0.000000e+00> : vector<128x128xf32>
      %49 = tpu.matmul %46, %47, %cst_27 {dimension_numbers = #tpu.dot_dimension_numbers<[1], [1], [0], [0], [0, 0, 1, 0], [], []>} : vector<128x128xbf16>, vector<128x128xbf16>, vector<128x128xf32> -> vector<128x128xf32>
      %c0_28 = arith.constant 0 : index
      %c0_29 = arith.constant 0 : index
      %50 = vector.load %arg2[%c0_28, %c0_29] : memref<128x128xf32, #tpu.memory_space<vmem>>, vector<128x128xf32>
      %51 = arith.addf %49, %50 : vector<128x128xf32>
      %cst_30 = arith.constant dense<0xFF800000> : vector<128xf32>
      %52 = vector.multi_reduction <maximumf>, %51, %cst_30 [1] : vector<128x128xf32> to vector<128xf32>
      %53 = vector.shape_cast %52 : vector<128xf32> to vector<128x1xf32>
      %54 = vector.broadcast %53 : vector<128x1xf32> to vector<128x128xf32>
      %55 = arith.subf %51, %54 : vector<128x128xf32>
      %56 = math.exp %55 : vector<128x128xf32>
      %cst_31 = arith.constant dense<0.000000e+00> : vector<128xf32>
      %57 = vector.multi_reduction <add>, %56, %cst_31 [1] : vector<128x128xf32> to vector<128xf32>
      %58 = vector.shape_cast %57 : vector<128xf32> to vector<128x1xf32>
      %59 = tpu.reciprocal %58 {approx = true} : vector<128x1xf32> -> vector<128x1xf32>
      %60 = vector.broadcast %59 : vector<128x1xf32> to vector<128x128xf32>
      %61 = arith.mulf %56, %60 : vector<128x128xf32>
      %62 = arith.truncf %61 : vector<128x128xf32> to vector<128x128xbf16>
      %cst_32 = arith.constant dense<0.000000e+00> : vector<128x128xf32>
      %63 = tpu.matmul %62, %48, %cst_32 {dimension_numbers = #tpu.dot_dimension_numbers<[1], [0], [0], [1], [0, 0, 1, 1], [], []>} : vector<128x128xbf16>, vector<128x128xbf16>, vector<128x128xf32> -> vector<128x128xf32>
      %64 = arith.truncf %63 : vector<128x128xf32> to vector<128x128xbf16>
      %c0_33 = arith.constant 0 : index
      %c128_34 = arith.constant 128 : index
      %65 = vector.load %arg12[%c0_33, %c128_34] : memref<128x256xbf16, #tpu.memory_space<vmem>>, vector<128x128xbf16>
      tpu.vector_store %arg12[%c0_33, %c128_34], %64 {strides = array<i32>} : memref<128x256xbf16, #tpu.memory_space<vmem>>, vector<128x128xbf16>,
      %c0_35 = arith.constant 0 : index
      %c0_36 = arith.constant 0 : index
      %66 = vector.load %arg12[%c0_35, %c0_36] : memref<128x256xbf16, #tpu.memory_space<vmem>>, vector<128x256xbf16>
      %67 = arith.index_cast %arg13 : i32 to index
      %c0_37 = arith.constant 0 : index
      %c0_38 = arith.constant 0 : index
      %68 = vector.load %arg5[%67, %c0_37, %c0_38] : memref<2x256x256xbf16, #tpu.memory_space<vmem>>, vector<1x256x256xbf16>
      %69 = vector.shape_cast %68 : vector<1x256x256xbf16> to vector<256x256xbf16>
      %cst_39 = arith.constant dense<0.000000e+00> : vector<128x256xf32>
      %70 = tpu.matmul %66, %69, %cst_39 {dimension_numbers = #tpu.dot_dimension_numbers<[1], [0], [0], [1], [0, 0, 1, 1], [], []>} : vector<128x256xbf16>, vector<256x256xbf16>, vector<128x256xf32> -> vector<128x256xf32>
      %71 = vector.broadcast %8 : vector<1x256xf32> to vector<128x256xf32>
      %72 = arith.addf %70, %71 : vector<128x256xf32>
      %73 = arith.addf %arg14, %72 : vector<128x256xf32>
      %cst_40 = arith.constant dense<0.000000e+00> : vector<128xf32>
      %74 = vector.multi_reduction <add>, %73, %cst_40 [1] : vector<128x256xf32> to vector<128xf32>
      %75 = vector.shape_cast %74 : vector<128xf32> to vector<128x1xf32>
      %cst_41 = arith.constant 2.560000e+02 : f32
      %76 = vector.broadcast %cst_41 : f32 to vector<128x1xf32>
      %77 = arith.divf %75, %76 : vector<128x1xf32>
      %78 = arith.mulf %73, %73 : vector<128x256xf32>
      %cst_42 = arith.constant dense<0.000000e+00> : vector<128xf32>
      %79 = vector.multi_reduction <add>, %78, %cst_42 [1] : vector<128x256xf32> to vector<128xf32>
      %80 = vector.shape_cast %79 : vector<128xf32> to vector<128x1xf32>
      %cst_43 = arith.constant 2.560000e+02 : f32
      %81 = vector.broadcast %cst_43 : f32 to vector<128x1xf32>
      %82 = arith.divf %80, %81 : vector<128x1xf32>
      %83 = arith.mulf %77, %77 : vector<128x1xf32>
      %84 = arith.subf %82, %83 : vector<128x1xf32>
      %85 = vector.broadcast %77 : vector<128x1xf32> to vector<128x256xf32>
      %86 = arith.subf %73, %85 : vector<128x256xf32>
      %cst_44 = arith.constant 9.99999974E-6 : f32
      %87 = vector.broadcast %cst_44 : f32 to vector<128x1xf32>
      %88 = arith.addf %84, %87 : vector<128x1xf32>
      %89 = math.rsqrt %88 : vector<128x1xf32>
      %90 = vector.broadcast %89 : vector<128x1xf32> to vector<128x256xf32>
      %91 = arith.mulf %86, %90 : vector<128x256xf32>
      %92 = vector.broadcast %9 : vector<1x256xf32> to vector<128x256xf32>
      %93 = arith.mulf %91, %92 : vector<128x256xf32>
      %94 = vector.broadcast %10 : vector<1x256xf32> to vector<128x256xf32>
      %95 = arith.addf %93, %94 : vector<128x256xf32>
      %96 = arith.truncf %95 : vector<128x256xf32> to vector<128x256xbf16>
      %97 = arith.index_cast %arg13 : i32 to index
      %c0_45 = arith.constant 0 : index
      %c0_46 = arith.constant 0 : index
      %98 = vector.load %arg6[%97, %c0_45, %c0_46] : memref<2x256x512xbf16, #tpu.memory_space<vmem>>, vector<1x256x512xbf16>
      %99 = vector.shape_cast %98 : vector<1x256x512xbf16> to vector<256x512xbf16>
      %cst_47 = arith.constant dense<0.000000e+00> : vector<128x512xf32>
      %100 = tpu.matmul %96, %99, %cst_47 {dimension_numbers = #tpu.dot_dimension_numbers<[1], [0], [0], [1], [0, 0, 1, 1], [], []>} : vector<128x256xbf16>, vector<256x512xbf16>, vector<128x512xf32> -> vector<128x512xf32>
      %101 = arith.index_cast %arg13 : i32 to index
      %c0_48 = arith.constant 0 : index
      %c0_49 = arith.constant 0 : index
      %102 = vector.load %arg7[%101, %c0_48, %c0_49] : memref<2x1x512xf32, #tpu.memory_space<vmem>>, vector<1x1x512xf32>
      %103 = vector.shape_cast %102 : vector<1x1x512xf32> to vector<1x512xf32>
      %104 = vector.broadcast %103 : vector<1x512xf32> to vector<128x512xf32>
      %105 = arith.addf %100, %104 : vector<128x512xf32>
      %cst_50 = arith.constant 0.000000e+00 : f32
      %106 = vector.broadcast %cst_50 : f32 to vector<128x512xf32>
      %107 = arith.maximumf %105, %106 : vector<128x512xf32>
      %108 = arith.truncf %107 : vector<128x512xf32> to vector<128x512xbf16>
      %109 = arith.index_cast %arg13 : i32 to index
      %c0_51 = arith.constant 0 : index
      %c0_52 = arith.constant 0 : index
      %110 = vector.load %arg8[%109, %c0_51, %c0_52] : memref<2x512x256xbf16, #tpu.memory_space<vmem>>, vector<1x512x256xbf16>
      %111 = vector.shape_cast %110 : vector<1x512x256xbf16> to vector<512x256xbf16>
      %cst_53 = arith.constant dense<0.000000e+00> : vector<128x256xf32>
      %112 = tpu.matmul %108, %111, %cst_53 {dimension_numbers = #tpu.dot_dimension_numbers<[1], [0], [0], [1], [0, 0, 1, 1], [], []>} : vector<128x512xbf16>, vector<512x256xbf16>, vector<128x256xf32> -> vector<128x256xf32>
      %113 = vector.broadcast %13 : vector<1x256xf32> to vector<128x256xf32>
      %114 = arith.addf %112, %113 : vector<128x256xf32>
      %115 = arith.addf %95, %114 : vector<128x256xf32>
      %cst_54 = arith.constant dense<0.000000e+00> : vector<128xf32>
      %116 = vector.multi_reduction <add>, %115, %cst_54 [1] : vector<128x256xf32> to vector<128xf32>
      %117 = vector.shape_cast %116 : vector<128xf32> to vector<128x1xf32>
      %cst_55 = arith.constant 2.560000e+02 : f32
      %118 = vector.broadcast %cst_55 : f32 to vector<128x1xf32>
      %119 = arith.divf %117, %118 : vector<128x1xf32>
      %120 = arith.mulf %115, %115 : vector<128x256xf32>
      %cst_56 = arith.constant dense<0.000000e+00> : vector<128xf32>
      %121 = vector.multi_reduction <add>, %120, %cst_56 [1] : vector<128x256xf32> to vector<128xf32>
      %122 = vector.shape_cast %121 : vector<128xf32> to vector<128x1xf32>
      %cst_57 = arith.constant 2.560000e+02 : f32
      %123 = vector.broadcast %cst_57 : f32 to vector<128x1xf32>
      %124 = arith.divf %122, %123 : vector<128x1xf32>
      %125 = arith.mulf %119, %119 : vector<128x1xf32>
      %126 = arith.subf %124, %125 : vector<128x1xf32>
      %127 = vector.broadcast %119 : vector<128x1xf32> to vector<128x256xf32>
      %128 = arith.subf %115, %127 : vector<128x256xf32>
      %cst_58 = arith.constant 9.99999974E-6 : f32
      %129 = vector.broadcast %cst_58 : f32 to vector<128x1xf32>
      %130 = arith.addf %126, %129 : vector<128x1xf32>
      %131 = math.rsqrt %130 : vector<128x1xf32>
      %132 = vector.broadcast %131 : vector<128x1xf32> to vector<128x256xf32>
      %133 = arith.mulf %128, %132 : vector<128x256xf32>
      %134 = vector.broadcast %11 : vector<1x256xf32> to vector<128x256xf32>
      %135 = arith.mulf %133, %134 : vector<128x256xf32>
      %136 = vector.broadcast %12 : vector<1x256xf32> to vector<128x256xf32>
      %137 = arith.addf %135, %136 : vector<128x256xf32>
      scf.yield %137 : vector<128x256xf32>
    }
    %c2_i32_1 = arith.constant 2 : i32
    %3 = arith.truncf %2 : vector<128x256xf32> to vector<128x256xbf16>
    %c0_2 = arith.constant 0 : index
    %c0_3 = arith.constant 0 : index
    %4 = vector.load %arg10[%c0_2, %c0_3] : memref<128x256xbf16, #tpu.memory_space<vmem>>, vector<128x256xbf16>
    tpu.vector_store %arg10[%c0_2, %c0_3], %3 {strides = array<i32>} : memref<128x256xbf16, #tpu.memory_space<vmem>>, vector<128x256xbf16>,
    return
  }
  func.func @transform_0(%arg0: i32) -> (i32, i32) {
    %c0_i32 = arith.constant 0 : i32
    %c0_i32_0 = arith.constant 0 : i32
    return %arg0, %c0_i32 : i32, i32
  }
  func.func @transform_1(%arg0: i32) -> (i32, i32) {
    %c0_i32 = arith.constant 0 : i32
    %c0_i32_0 = arith.constant 0 : i32
    %c0_i32_1 = arith.constant 0 : i32
    return %c0_i32, %c0_i32_0 : i32, i32
  }
  func.func @transform_2(%arg0: i32) -> (i32, i32, i32) {
    %c0_i32 = arith.constant 0 : i32
    %c0_i32_0 = arith.constant 0 : i32
    %c0_i32_1 = arith.constant 0 : i32
    %c0_i32_2 = arith.constant 0 : i32
    return %c0_i32, %c0_i32_0, %c0_i32_1 : i32, i32, i32
  }
  func.func @transform_3(%arg0: i32) -> (i32, i32, i32) {
    %c0_i32 = arith.constant 0 : i32
    %c0_i32_0 = arith.constant 0 : i32
    %c0_i32_1 = arith.constant 0 : i32
    %c0_i32_2 = arith.constant 0 : i32
    return %c0_i32, %c0_i32_0, %c0_i32_1 : i32, i32, i32
  }
  func.func @transform_4(%arg0: i32) -> (i32, i32, i32) {
    %c0_i32 = arith.constant 0 : i32
    %c0_i32_0 = arith.constant 0 : i32
    %c0_i32_1 = arith.constant 0 : i32
    %c0_i32_2 = arith.constant 0 : i32
    return %c0_i32, %c0_i32_0, %c0_i32_1 : i32, i32, i32
  }
  func.func @transform_5(%arg0: i32) -> (i32, i32, i32) {
    %c0_i32 = arith.constant 0 : i32
    %c0_i32_0 = arith.constant 0 : i32
    %c0_i32_1 = arith.constant 0 : i32
    %c0_i32_2 = arith.constant 0 : i32
    return %c0_i32, %c0_i32_0, %c0_i32_1 : i32, i32, i32
  }
  func.func @transform_6(%arg0: i32) -> (i32, i32, i32) {
    %c0_i32 = arith.constant 0 : i32
    %c0_i32_0 = arith.constant 0 : i32
    %c0_i32_1 = arith.constant 0 : i32
    %c0_i32_2 = arith.constant 0 : i32
    return %c0_i32, %c0_i32_0, %c0_i32_1 : i32, i32, i32
  }
  func.func @transform_7(%arg0: i32) -> (i32, i32, i32) {
    %c0_i32 = arith.constant 0 : i32
    %c0_i32_0 = arith.constant 0 : i32
    %c0_i32_1 = arith.constant 0 : i32
    %c0_i32_2 = arith.constant 0 : i32
    return %c0_i32, %c0_i32_0, %c0_i32_1 : i32, i32, i32
  }
  func.func @transform_8(%arg0: i32) -> (i32, i32, i32) {
    %c0_i32 = arith.constant 0 : i32
    %c0_i32_0 = arith.constant 0 : i32
    %c0_i32_1 = arith.constant 0 : i32
    %c0_i32_2 = arith.constant 0 : i32
    return %c0_i32, %c0_i32_0, %c0_i32_1 : i32, i32, i32
  }
  func.func @transform_9(%arg0: i32) -> (i32, i32) {
    %c0_i32 = arith.constant 0 : i32
    %c0_i32_0 = arith.constant 0 : i32
    return %arg0, %c0_i32 : i32, i32
  }
}

module attributes {stable_mosaic.version = 11 : i64} {
  func.func @_decoder_kernel(%arg0: i32, %arg1: memref<128x256xbf16, #tpu.memory_space<vmem>>, %arg2: memref<256x384xbf16, #tpu.memory_space<vmem>>, %arg3: memref<1x384xf32, #tpu.memory_space<vmem>>, %arg4: memref<128x384xf32, #tpu.memory_space<vmem>>) attributes {dimension_semantics = [#tpu.dimension_semantics<parallel>], iteration_bounds = array<i64: 2>, scalar_prefetch = 0 : i64, scratch_operands = 0 : i64, tpu.core_type = #tpu.core_type<tc>, window_params = [{transform_indices = @transform_0, window_bounds = array<i64: 128, 256>}, {pipeline_mode = #tpu.pipeline_mode<synchronous>, transform_indices = @transform_1, window_bounds = array<i64: 256, 384>}, {pipeline_mode = #tpu.pipeline_mode<synchronous>, transform_indices = @transform_2, window_bounds = array<i64: 1, 384>}, {transform_indices = @transform_3, window_bounds = array<i64: 128, 384>}]} {
    %c0 = arith.constant 0 : index
    %c0_0 = arith.constant 0 : index
    %0 = vector.load %arg1[%c0, %c0_0] : memref<128x256xbf16, #tpu.memory_space<vmem>>, vector<128x256xbf16>
    %c0_1 = arith.constant 0 : index
    %c0_2 = arith.constant 0 : index
    %1 = vector.load %arg2[%c0_1, %c0_2] : memref<256x384xbf16, #tpu.memory_space<vmem>>, vector<256x384xbf16>
    %cst = arith.constant dense<0.000000e+00> : vector<128x384xf32>
    %2 = tpu.matmul %0, %1, %cst {dimension_numbers = #tpu.dot_dimension_numbers<[1], [0], [0], [1], [0, 0, 1, 1], [], []>} : vector<128x256xbf16>, vector<256x384xbf16>, vector<128x384xf32> -> vector<128x384xf32>
    %c0_3 = arith.constant 0 : index
    %c0_4 = arith.constant 0 : index
    %3 = vector.load %arg3[%c0_3, %c0_4] : memref<1x384xf32, #tpu.memory_space<vmem>>, vector<1x384xf32>
    %4 = vector.broadcast %3 : vector<1x384xf32> to vector<128x384xf32>
    %5 = arith.addf %2, %4 : vector<128x384xf32>
    %c0_5 = arith.constant 0 : index
    %c0_6 = arith.constant 0 : index
    %6 = vector.load %arg4[%c0_5, %c0_6] : memref<128x384xf32, #tpu.memory_space<vmem>>, vector<128x384xf32>
    tpu.vector_store %arg4[%c0_5, %c0_6], %5 {strides = array<i32>} : memref<128x384xf32, #tpu.memory_space<vmem>>, vector<128x384xf32>,
    return
  }
  func.func @transform_0(%arg0: i32) -> (i32, i32) {
    %c0_i32 = arith.constant 0 : i32
    %c0_i32_0 = arith.constant 0 : i32
    return %arg0, %c0_i32 : i32, i32
  }
  func.func @transform_1(%arg0: i32) -> (i32, i32) {
    %c0_i32 = arith.constant 0 : i32
    %c0_i32_0 = arith.constant 0 : i32
    %c0_i32_1 = arith.constant 0 : i32
    return %c0_i32, %c0_i32_0 : i32, i32
  }
  func.func @transform_2(%arg0: i32) -> (i32, i32) {
    %c0_i32 = arith.constant 0 : i32
    %c0_i32_0 = arith.constant 0 : i32
    %c0_i32_1 = arith.constant 0 : i32
    return %c0_i32, %c0_i32_0 : i32, i32
  }
  func.func @transform_3(%arg0: i32) -> (i32, i32) {
    %c0_i32 = arith.constant 0 : i32
    %c0_i32_0 = arith.constant 0 : i32
    return %arg0, %c0_i32 : i32, i32
  }
}

</mosaic_0001>

<llo_original>
// kernel: transformer_model_forward.3
$region0: #{transformer_model_forward.3}
  #allocation0 [shape = 'u32[]', space=smem, size = 0x4, offset = 0x4, fixed_abs, tag = 'smem constant byte address 0x4 - core index']
  #allocation1 [shape = 'u32[72,128]{1,0:T(1,128)}', space=vmem, size = 0x9000, scoped, tag = 'internal scratch']
  %s0 = inlined_call_operand.vmem [shape: bf16[256,256], index: 0, kind: input, shape index: {}]
  %s1 = inlined_call_operand.vmem [shape: bf16[256,384], index: 1, kind: input, shape index: {}]
  %s2 = inlined_call_operand.vmem [shape: f32[1,384], index: 2, kind: input, shape index: {}]
  %s3 = inlined_call_operand.hbm [shape: f32[256,384], index: 3, kind: output, shape index: {}]
  %s4 = sld [smem:[#allocation0]]
  $region45: #{transformer_model_forward.3} parent=0
    _
  %s6 = ssub.s32 1, %s4
  %s7 = scalar_select 0, %s6, %s4
  $region1: #{transformer_model_forward.3} parent=0
    #allocation2 [shape = 'u8[393216]{0}', space=vmem, size = 0x60000, scoped, tag = 'output window, operand 0']
    #allocation3 [shape = 's32[2]{0}', space=sflag, size = 0x8, scoped, tag = 'scoped memory for transformer_model_forward.3']
    %8 = vsyncpa [#allocation3], 0
    %s9 = scalar_lea.sflag [#allocation3], 1
    %10 = vsyncpa %s9, 0
    loop: start=0, step=1, limit=4
    $region2: #{transformer_model_forward.3} parent=1 // loop_pre_header
      _
    $region3: #{transformer_model_forward.3} parent=1 // loop_header
      %s12 = sphi 0, %s16
      %p13 = scmp.ge.s32.totalorder %s12, 4
      %s22 = sphi 0, %s24
      %s25 = sphi 0, %s22
      %s26 = sphi 0, %s25
      %s42 = sphi 0, %s26
      %s46 = sphi 0, %s46
      %s48 = sphi 0, %s46
      %s49 = sphi 0, %s48
      %s63 = sphi 0, %s49
      %s67 = sphi 0, %s67
      %s69 = sphi 0, %s67
      %s70 = sphi 0, %s69
      %s84 = sphi 0, %s70
      %s90 = sphi 0, %s92
      %s93 = sphi 0, %s90
      %s94 = sphi 0, %s93
      %s110 = sphi 0, %s94
    $region4: #{transformer_model_forward.3} parent=1 // loop_header_branch
      %15 = sbr.rel (%p13) target = $region8
    $region5: #{transformer_model_forward.3} parent=1 // loop_body
      %s17 = ssub.s32 %s12, 1
      %s18 = ssub.s32 %s12, 2
      %s19 = sadd.s32 %s12, 1
      %s20 = ssub.s32 %s12, %s19
      %p21 = scmp.eq.s32.totalorder %s20, 0
      %s23 = sadd.s32 %s22, 1
      %s24 = scalar_select %p21, %s22, %s23
      %p27 = pneg %p21
      %p28 = scmp.eq.s32.totalorder %s12, 1
      %p29 = por %p27, %p28
      %p30 = scmp.ne.s32.totalorder %s22, %s25
      %p31 = scmp.eq.s32.totalorder %s12, 0
      %p32 = por %p30, %p31
      %p33 = scmp.ne.s32.totalorder %s22, %s25
      %p34 = scmp.eq.s32.totalorder %s17, 1
      %p35 = por %p33, %p34
      %p36 = scmp.ne.s32.totalorder %s25, %s26
      %p37 = scmp.eq.s32.totalorder %s17, 0
      %p38 = por %p36, %p37
      %p39 = scmp.ne.s32.totalorder %s25, %s26
      %p40 = scmp.eq.s32.totalorder %s18, 1
      %p41 = por %p39, %p40
      %p43 = scmp.ne.s32.totalorder %s26, %s42
      %p44 = scmp.eq.s32.totalorder %s18, 0
      %p45 = por %p43, %p44
      %s47 = sadd.s32 %s46, 1
      %p50 = scmp.eq.s32.totalorder %s12, 1
      %p51 = scmp.ne.s32.totalorder %s46, %s48
      %p52 = scmp.eq.s32.totalorder %s12, 0
      %p53 = por %p51, %p52
      %p54 = scmp.ne.s32.totalorder %s46, %s48
      %p55 = scmp.eq.s32.totalorder %s17, 1
      %p56 = por %p54, %p55
      %p57 = scmp.ne.s32.totalorder %s48, %s49
      %p58 = scmp.eq.s32.totalorder %s17, 0
      %p59 = por %p57, %p58
      %p60 = scmp.ne.s32.totalorder %s48, %s49
      %p61 = scmp.eq.s32.totalorder %s18, 1
      %p62 = por %p60, %p61
      %p64 = scmp.ne.s32.totalorder %s49, %s63
      %p65 = scmp.eq.s32.totalorder %s18, 0
      %p66 = por %p64, %p65
      %s68 = sadd.s32 %s67, 1
      %p71 = scmp.eq.s32.totalorder %s12, 1
      %p72 = scmp.ne.s32.totalorder %s67, %s69
      %p73 = scmp.eq.s32.totalorder %s12, 0
      %p74 = por %p72, %p73
      %p75 = scmp.ne.s32.totalorder %s67, %s69
      %p76 = scmp.eq.s32.totalorder %s17, 1
      %p77 = por %p75, %p76
      %p78 = scmp.ne.s32.totalorder %s69, %s70
      %p79 = scmp.eq.s32.totalorder %s17, 0
      %p80 = por %p78, %p79
      %p81 = scmp.ne.s32.totalorder %s69, %s70
      %p82 = scmp.eq.s32.totalorder %s18, 1
      %p83 = por %p81, %p82
      %p85 = scmp.ne.s32.totalorder %s70, %s84
      %p86 = scmp.eq.s32.totalorder %s18, 0
      %p87 = por %p85, %p86
      %s88 = ssub.s32 %s12, %s19
      %p89 = scmp.eq.s32.totalorder %s88, 0
      %s91 = sadd.s32 %s90, 1
      %s92 = scalar_select %p89, %s90, %s91
      %p95 = pneg %p89
      %p96 = scmp.eq.s32.totalorder %s12, 1
      %p97 = por %p95, %p96
      %p98 = scmp.ne.s32.totalorder %s90, %s93
      %p99 = scmp.eq.s32.totalorder %s12, 0
      %p100 = por %p98, %p99
      %p101 = scmp.ne.s32.totalorder %s90, %s93
      %p102 = scmp.eq.s32.totalorder %s17, 1
      %p103 = por %p101, %p102
      %p104 = scmp.ne.s32.totalorder %s93, %s94
      %p105 = scmp.eq.s32.totalorder %s17, 0
      %p106 = por %p104, %p105
      %p107 = scmp.ne.s32.totalorder %s93, %s94
      %p108 = scmp.eq.s32.totalorder %s18, 1
      %p109 = por %p107, %p108
      %p111 = scmp.ne.s32.totalorder %s94, %s110
      %p112 = scmp.eq.s32.totalorder %s18, 0
      %p113 = por %p111, %p112
      %p114 = scmp.le.s32.totalorder 1, %s12
      %p115 = scmp.lt.s32.totalorder %s12, 3
      %p116 = pnand %p114, %p115
      %p117 = pneg %p116
      // Predicated region
      $region9: #{transformer_model_forward.3} parent=5 // pred_check
        _
      $region10: #{transformer_model_forward.3} parent=5 // pred_check_branch
        %119 = sbr.rel (%p116) target = $region12
      $region11: #{transformer_model_forward.3} parent=5 // pred_region
        %s120 = ssub.s32 %s12, 1
        // Predicated region
        $region13: #{transformer_model_forward.3} parent=11 // pred_check
          %p121 = pneg %p59
        $region14: #{transformer_model_forward.3} parent=11 // pred_check_branch
          %123 = sbr.rel (%p121) target = $region16
        $region15: #{transformer_model_forward.3} parent=11 // pred_region
          _
        $region16: #{transformer_model_forward.3} parent=11 // pred_fallthru
          _
        // Predicated region
        $region17: #{transformer_model_forward.3} parent=11 // pred_check
          %p124 = pneg %p80
        $region18: #{transformer_model_forward.3} parent=11 // pred_check_branch
          %126 = sbr.rel (%p124) target = $region20
        $region19: #{transformer_model_forward.3} parent=11 // pred_region
          _
        $region20: #{transformer_model_forward.3} parent=11 // pred_fallthru
          _
      $region12: #{transformer_model_forward.3} parent=5 // pred_fallthru
        _
      %p127 = scmp.lt.s32.totalorder %s12, 2
      // Predicated region
      $region21: #{transformer_model_forward.3} parent=5 // pred_check
        %p128 = pneg %p127
      $region22: #{transformer_model_forward.3} parent=5 // pred_check_branch
        %130 = sbr.rel (%p128) target = $region24
      $region23: #{transformer_model_forward.3} parent=5 // pred_region
        // Predicated region
        $region25: #{transformer_model_forward.3} parent=23 // pred_check
          %p131 = pneg %p32
        $region26: #{transformer_model_forward.3} parent=23 // pred_check_branch
          %133 = sbr.rel (%p131) target = $region28
        $region27: #{transformer_model_forward.3} parent=23 // pred_region
          %s134 = smul.u32 16, %s12
          %p135 = scmp.lt.s32.totalorder %s134, 31
          %s136 = scalar_select %p135, %s134, 31
          %s137 = smul.addr %s136, 2
          %s138 = smul.addr %s137, 4
          %s139 = scalar_lea.vmem %s0, %s138
          %s140 = smul.u32 16, %s12
        $region28: #{transformer_model_forward.3} parent=23 // pred_fallthru
          _
      $region24: #{transformer_model_forward.3} parent=5 // pred_fallthru
        _
      %p141 = scmp.le.s32.totalorder 1, %s12
      %p142 = scmp.lt.s32.totalorder %s12, 3
      %p143 = pnand %p141, %p142
      %p144 = pneg %p143
      // Predicated region
      $region29: #{transformer_model_forward.3} parent=5 // pred_check
        _
      $region30: #{transformer_model_forward.3} parent=5 // pred_check_branch
        %146 = sbr.rel (%p143) target = $region32
      $region31: #{transformer_model_forward.3} parent=5 // pred_region
        %s147 = ssub.s32 %s12, 1
        %s148 = smul.u32 16, %s17
        %p149 = scmp.lt.s32.totalorder %s148, 31
        %s150 = scalar_select %p149, %s148, 31
        %s151 = smul.addr %s150, 2
        %s152 = smul.addr %s151, 4
        %s153 = scalar_lea.vmem %s0, %s152
        %p154 = pneg %p38
        %p155 = pneg %p35
        %p156 = pneg %p59
        %p157 = pneg %p56
        %p158 = pneg %p80
        %p159 = pneg %p77
        %p160 = pneg %p106
        %p161 = pneg %p103
        %s162 = sand.u32 %s93, 1
        %s163 = scalar_lea.sflag [#allocation3], %s162
        %s164 = sand.u32 %s93, 1
        %s165 = smul.addr %s164, 384
        %s166 = scalar_lea.vmem [#allocation2], %s165
        %s167 = smul.u32 16, %s17
        %p168 = scmp.lt.s32.totalorder %s167, 31
        %s169 = scalar_select %p168, %s167, 31
        %s170 = smul.addr %s169, 2
        %s171 = smul.addr %s170, 4
        %s172 = scalar_lea.vmem %s0, %s171
        %s173 = smul.u32 16, %s17
        %s174 = smul.u32 16, %s17
        %v175 = vld [vmem:[%s172] sm:$0xff]
        %v176 = vld [vmem:[%s172 + $0x8] sm:$0xff]
        %v177 = vld [vmem:[%s172 + $0x10] sm:$0xff]
        %v178 = vld [vmem:[%s172 + $0x18] sm:$0xff]
        %v179 = vld [vmem:[%s172 + $0x20] sm:$0xff]
        %v180 = vld [vmem:[%s172 + $0x28] sm:$0xff]
        %v181 = vld [vmem:[%s172 + $0x30] sm:$0xff]
        %v182 = vld [vmem:[%s172 + $0x38] sm:$0xff]
        %v183 = vld [vmem:[%s172 + $0x40] sm:$0xff]
        %v184 = vld [vmem:[%s172 + $0x48] sm:$0xff]
        %v185 = vld [vmem:[%s172 + $0x50] sm:$0xff]
        %v186 = vld [vmem:[%s172 + $0x58] sm:$0xff]
        %v187 = vld [vmem:[%s172 + $0x60] sm:$0xff]
        %v188 = vld [vmem:[%s172 + $0x68] sm:$0xff]
        %v189 = vld [vmem:[%s172 + $0x70] sm:$0xff]
        %v190 = vld [vmem:[%s172 + $0x78] sm:$0xff]
        %v191 = vld [vmem:[%s1] sm:$0xff]
        %v192 = vld [vmem:[%s1 + $0x8] sm:$0xf]
        %v193 = vld [vmem:[%s1 + $0xc] sm:$0xff]
        %v194 = vld [vmem:[%s1 + $0x14] sm:$0xf]
        %v195 = vld [vmem:[%s1 + $0x18] sm:$0xff]
        %v196 = vld [vmem:[%s1 + $0x20] sm:$0xf]
        %v197 = vld [vmem:[%s1 + $0x24] sm:$0xff]
        %v198 = vld [vmem:[%s1 + $0x2c] sm:$0xf]
        %v199 = vld [vmem:[%s1 + $0x30] sm:$0xff]
        %v200 = vld [vmem:[%s1 + $0x38] sm:$0xf]
        %v201 = vld [vmem:[%s1 + $0x3c] sm:$0xff]
        %v202 = vld [vmem:[%s1 + $0x44] sm:$0xf]
        %v203 = vld [vmem:[%s1 + $0x48] sm:$0xff]
        %v204 = vld [vmem:[%s1 + $0x50] sm:$0xf]
        %v205 = vld [vmem:[%s1 + $0x54] sm:$0xff]
        %v206 = vld [vmem:[%s1 + $0x5c] sm:$0xf]
        %v207 = vld [vmem:[%s1 + $0x60] sm:$0xff]
        %v208 = vld [vmem:[%s1 + $0x68] sm:$0xf]
        %v209 = vld [vmem:[%s1 + $0x6c] sm:$0xff]
        %v210 = vld [vmem:[%s1 + $0x74] sm:$0xf]
        %v211 = vld [vmem:[%s1 + $0x78] sm:$0xff]
        %v212 = vld [vmem:[%s1 + $0x80] sm:$0xf]
        %v213 = vld [vmem:[%s1 + $0x84] sm:$0xff]
        %v214 = vld [vmem:[%s1 + $0x8c] sm:$0xf]
        %v215 = vld [vmem:[%s1 + $0x90] sm:$0xff]
        %v216 = vld [vmem:[%s1 + $0x98] sm:$0xf]
        %v217 = vld [vmem:[%s1 + $0x9c] sm:$0xff]
        %v218 = vld [vmem:[%s1 + $0xa4] sm:$0xf]
        %v219 = vld [vmem:[%s1 + $0xa8] sm:$0xff]
        %v220 = vld [vmem:[%s1 + $0xb0] sm:$0xf]
        %v221 = vld [vmem:[%s1 + $0xb4] sm:$0xff]
        %v222 = vld [vmem:[%s1 + $0xbc] sm:$0xf]
        %v223 = vld [vmem:[%s1 + $0xc0] sm:$0xff]
        %v224 = vld [vmem:[%s1 + $0xc8] sm:$0xf]
        %v225 = vld [vmem:[%s1 + $0xcc] sm:$0xff]
        %v226 = vld [vmem:[%s1 + $0xd4] sm:$0xf]
        %v227 = vld [vmem:[%s1 + $0xd8] sm:$0xff]
        %v228 = vld [vmem:[%s1 + $0xe0] sm:$0xf]
        %v229 = vld [vmem:[%s1 + $0xe4] sm:$0xff]
        %v230 = vld [vmem:[%s1 + $0xec] sm:$0xf]
        %v231 = vld [vmem:[%s1 + $0xf0] sm:$0xff]
        %v232 = vld [vmem:[%s1 + $0xf8] sm:$0xf]
        %v233 = vld [vmem:[%s1 + $0xfc] sm:$0xff]
        %v234 = vld [vmem:[%s1 + $0x104] sm:$0xf]
        %v235 = vld [vmem:[%s1 + $0x108] sm:$0xff]
        %v236 = vld [vmem:[%s1 + $0x110] sm:$0xf]
        %v237 = vld [vmem:[%s1 + $0x114] sm:$0xff]
        %v238 = vld [vmem:[%s1 + $0x11c] sm:$0xf]
        %v239 = vld [vmem:[%s1 + $0x120] sm:$0xff]
        %v240 = vld [vmem:[%s1 + $0x128] sm:$0xf]
        %v241 = vld [vmem:[%s1 + $0x12c] sm:$0xff]
        %v242 = vld [vmem:[%s1 + $0x134] sm:$0xf]
        %v243 = vld [vmem:[%s1 + $0x138] sm:$0xff]
        %v244 = vld [vmem:[%s1 + $0x140] sm:$0xf]
        %v245 = vld [vmem:[%s1 + $0x144] sm:$0xff]
        %v246 = vld [vmem:[%s1 + $0x14c] sm:$0xf]
        %v247 = vld [vmem:[%s1 + $0x150] sm:$0xff]
        %v248 = vld [vmem:[%s1 + $0x158] sm:$0xf]
        %v249 = vld [vmem:[%s1 + $0x15c] sm:$0xff]
        %v250 = vld [vmem:[%s1 + $0x164] sm:$0xf]
        %v251 = vld [vmem:[%s1 + $0x168] sm:$0xff]
        %v252 = vld [vmem:[%s1 + $0x170] sm:$0xf]
        %v253 = vld [vmem:[%s1 + $0x174] sm:$0xff]
        %v254 = vld [vmem:[%s1 + $0x17c] sm:$0xf]
        %v255 = vld [vmem:[%s2] sm:$0x7]
        %v257 = vperm.slane %v255, 0
        %v258 = vperm.slane %v255, 1
        %v259 = vperm.slane %v255, 2
        %v279 = vunpack.c.l.b16 %v175
        %v280 = vunpack.c.h.b16 %v175
        %v281 = vunpack.c.l.b16 %v176
        %v282 = vunpack.c.h.b16 %v176
        %v283 = vunpack.c.l.b16 %v177
        %v284 = vunpack.c.h.b16 %v177
        %v285 = vunpack.c.l.b16 %v178
        %v286 = vunpack.c.h.b16 %v178
        %v287 = vunpack.c.l.b16 %v179
        %v288 = vunpack.c.h.b16 %v179
        %v289 = vunpack.c.l.b16 %v180
        %v290 = vunpack.c.h.b16 %v180
        %v291 = vunpack.c.l.b16 %v181
        %v292 = vunpack.c.h.b16 %v181
        %v293 = vunpack.c.l.b16 %v182
        %v294 = vunpack.c.h.b16 %v182
        %v295 = vunpack.c.l.b16 %v183
        %v296 = vunpack.c.h.b16 %v183
        %v297 = vunpack.c.l.b16 %v184
        %v298 = vunpack.c.h.b16 %v184
        %v299 = vunpack.c.l.b16 %v185
        %v300 = vunpack.c.h.b16 %v185
        %v301 = vunpack.c.l.b16 %v186
        %v302 = vunpack.c.h.b16 %v186
        %v303 = vunpack.c.l.b16 %v187
        %v304 = vunpack.c.h.b16 %v187
        %v305 = vunpack.c.l.b16 %v188
        %v306 = vunpack.c.h.b16 %v188
        %v307 = vunpack.c.l.b16 %v189
        %v308 = vunpack.c.h.b16 %v189
        %v309 = vunpack.c.l.b16 %v190
        %v310 = vunpack.c.h.b16 %v190
        %v311 = vpack.c.b16 %v281, %v279
        %v312 = vpack.c.b16 %v282, %v280
        %v313 = vpack.c.b16 %v285, %v283
        %v314 = vpack.c.b16 %v286, %v284
        %v315 = vpack.c.b16 %v289, %v287
        %v316 = vpack.c.b16 %v290, %v288
        %v317 = vpack.c.b16 %v293, %v291
        %v318 = vpack.c.b16 %v294, %v292
        %v319 = vpack.c.b16 %v297, %v295
        %v320 = vpack.c.b16 %v298, %v296
        %v321 = vpack.c.b16 %v301, %v299
        %v322 = vpack.c.b16 %v302, %v300
        %v323 = vpack.c.b16 %v305, %v303
        %v324 = vpack.c.b16 %v306, %v304
        %v325 = vpack.c.b16 %v309, %v307
        %v326 = vpack.c.b16 %v310, %v308
        %v407 = vunpack.c.l.b16 %v191
        %v408 = vunpack.c.h.b16 %v191
        %v409 = vunpack.c.l.b16 %v192
        %v410 = vunpack.c.l.b16 %v193
        %v411 = vunpack.c.h.b16 %v193
        %v412 = vunpack.c.l.b16 %v194
        %v413 = vunpack.c.l.b16 %v195
        %v414 = vunpack.c.h.b16 %v195
        %v415 = vunpack.c.l.b16 %v196
        %v416 = vunpack.c.l.b16 %v197
        %v417 = vunpack.c.h.b16 %v197
        %v418 = vunpack.c.l.b16 %v198
        %v419 = vunpack.c.l.b16 %v199
        %v420 = vunpack.c.h.b16 %v199
        %v421 = vunpack.c.l.b16 %v200
        %v422 = vunpack.c.l.b16 %v201
        %v423 = vunpack.c.h.b16 %v201
        %v424 = vunpack.c.l.b16 %v202
        %v425 = vunpack.c.l.b16 %v203
        %v426 = vunpack.c.h.b16 %v203
        %v427 = vunpack.c.l.b16 %v204
        %v428 = vunpack.c.l.b16 %v205
        %v429 = vunpack.c.h.b16 %v205
        %v430 = vunpack.c.l.b16 %v206
        %v431 = vunpack.c.l.b16 %v207
        %v432 = vunpack.c.h.b16 %v207
        %v433 = vunpack.c.l.b16 %v208
        %v434 = vunpack.c.l.b16 %v209
        %v435 = vunpack.c.h.b16 %v209
        %v436 = vunpack.c.l.b16 %v210
        %v437 = vunpack.c.l.b16 %v211
        %v438 = vunpack.c.h.b16 %v211
        %v439 = vunpack.c.l.b16 %v212
        %v440 = vunpack.c.l.b16 %v213
        %v441 = vunpack.c.h.b16 %v213
        %v442 = vunpack.c.l.b16 %v214
        %v443 = vunpack.c.l.b16 %v215
        %v444 = vunpack.c.h.b16 %v215
        %v445 = vunpack.c.l.b16 %v216
        %v446 = vunpack.c.l.b16 %v217
        %v447 = vunpack.c.h.b16 %v217
        %v448 = vunpack.c.l.b16 %v218
        %v449 = vunpack.c.l.b16 %v219
        %v450 = vunpack.c.h.b16 %v219
        %v451 = vunpack.c.l.b16 %v220
        %v452 = vunpack.c.l.b16 %v221
        %v453 = vunpack.c.h.b16 %v221
        %v454 = vunpack.c.l.b16 %v222
        %v455 = vunpack.c.l.b16 %v223
        %v456 = vunpack.c.h.b16 %v223
        %v457 = vunpack.c.l.b16 %v224
        %v458 = vunpack.c.l.b16 %v225
        %v459 = vunpack.c.h.b16 %v225
        %v460 = vunpack.c.l.b16 %v226
        %v461 = vunpack.c.l.b16 %v227
        %v462 = vunpack.c.h.b16 %v227
        %v463 = vunpack.c.l.b16 %v228
        %v464 = vunpack.c.l.b16 %v229
        %v465 = vunpack.c.h.b16 %v229
        %v466 = vunpack.c.l.b16 %v230
        %v467 = vunpack.c.l.b16 %v231
        %v468 = vunpack.c.h.b16 %v231
        %v469 = vunpack.c.l.b16 %v232
        %v470 = vunpack.c.l.b16 %v233
        %v471 = vunpack.c.h.b16 %v233
        %v472 = vunpack.c.l.b16 %v234
        %v473 = vunpack.c.l.b16 %v235
        %v474 = vunpack.c.h.b16 %v235
        %v475 = vunpack.c.l.b16 %v236
        %v476 = vunpack.c.l.b16 %v237
        %v477 = vunpack.c.h.b16 %v237
        %v478 = vunpack.c.l.b16 %v238
        %v479 = vunpack.c.l.b16 %v239
        %v480 = vunpack.c.h.b16 %v239
        %v481 = vunpack.c.l.b16 %v240
        %v482 = vunpack.c.l.b16 %v241
        %v483 = vunpack.c.h.b16 %v241
        %v484 = vunpack.c.l.b16 %v242
        %v485 = vunpack.c.l.b16 %v243
        %v486 = vunpack.c.h.b16 %v243
        %v487 = vunpack.c.l.b16 %v244
        %v488 = vunpack.c.l.b16 %v245
        %v489 = vunpack.c.h.b16 %v245
        %v490 = vunpack.c.l.b16 %v246
        %v491 = vunpack.c.l.b16 %v247
        %v492 = vunpack.c.h.b16 %v247
        %v493 = vunpack.c.l.b16 %v248
        %v494 = vunpack.c.l.b16 %v249
        %v495 = vunpack.c.h.b16 %v249
        %v496 = vunpack.c.l.b16 %v250
        %v497 = vunpack.c.l.b16 %v251
        %v498 = vunpack.c.h.b16 %v251
        %v499 = vunpack.c.l.b16 %v252
        %v500 = vunpack.c.l.b16 %v253
        %v501 = vunpack.c.h.b16 %v253
        %v502 = vunpack.c.l.b16 %v254
        %v503 = vpack.c.b16 %v410, %v407
        %v504 = vpack.c.b16 %v411, %v408
        %v505 = vpack.c.b16 %v412, %v409
        %v506 = vpack.c.b16 %v416, %v413
        %v507 = vpack.c.b16 %v417, %v414
        %v508 = vpack.c.b16 %v418, %v415
        %v509 = vpack.c.b16 %v422, %v419
        %v510 = vpack.c.b16 %v423, %v420
        %v511 = vpack.c.b16 %v424, %v421
        %v512 = vpack.c.b16 %v428, %v425
        %v513 = vpack.c.b16 %v429, %v426
        %v514 = vpack.c.b16 %v430, %v427
        %v515 = vpack.c.b16 %v434, %v431
        %v516 = vpack.c.b16 %v435, %v432
        %v517 = vpack.c.b16 %v436, %v433
        %v518 = vpack.c.b16 %v440, %v437
        %v519 = vpack.c.b16 %v441, %v438
        %v520 = vpack.c.b16 %v442, %v439
        %v521 = vpack.c.b16 %v446, %v443
        %v522 = vpack.c.b16 %v447, %v444
        %v523 = vpack.c.b16 %v448, %v445
        %v524 = vpack.c.b16 %v452, %v449
        %v525 = vpack.c.b16 %v453, %v450
        %v526 = vpack.c.b16 %v454, %v451
        %v527 = vpack.c.b16 %v458, %v455
        %v528 = vpack.c.b16 %v459, %v456
        %v529 = vpack.c.b16 %v460, %v457
        %v530 = vpack.c.b16 %v464, %v461
        %v531 = vpack.c.b16 %v465, %v462
        %v532 = vpack.c.b16 %v466, %v463
        %v533 = vpack.c.b16 %v470, %v467
        %v534 = vpack.c.b16 %v471, %v468
        %v535 = vpack.c.b16 %v472, %v469
        %v536 = vpack.c.b16 %v476, %v473
        %v537 = vpack.c.b16 %v477, %v474
        %v538 = vpack.c.b16 %v478, %v475
        %v539 = vpack.c.b16 %v482, %v479
        %v540 = vpack.c.b16 %v483, %v480
        %v541 = vpack.c.b16 %v484, %v481
        %v542 = vpack.c.b16 %v488, %v485
        %v543 = vpack.c.b16 %v489, %v486
        %v544 = vpack.c.b16 %v490, %v487
        %v545 = vpack.c.b16 %v494, %v491
        %v546 = vpack.c.b16 %v495, %v492
        %v547 = vpack.c.b16 %v496, %v493
        %v548 = vpack.c.b16 %v500, %v497
        %v549 = vpack.c.b16 %v501, %v498
        %v550 = vpack.c.b16 %v502, %v499
        %599 = vmatpush.bf16.msra.mxu0 %v524
        %600 = vmatpush.bf16.msra.mxu0 %v521
        %601 = vmatpush.bf16.msra.mxu0 %v518
        %602 = vmatpush.bf16.msra.mxu0 %v515
        %603 = vmatpush.bf16.msra.mxu0 %v512
        %604 = vmatpush.bf16.msra.mxu0 %v509
        %605 = vmatpush.bf16.msra.mxu0 %v506
        %606 = vmatpush.bf16.msra.mxu0 %v503
        %607 = vmatmul.bf16.gmra.mxu0 %v311
        %v608 = vpop.f32.mrf.mxu0
        %v609 = vadd.f32 %v257, %v608
        %v610 = vpop.f32.mrf.mxu0
        %v611 = vadd.f32 %v257, %v610
        %612 = vmatmul.bf16.gmra.mxu0 %v313
        %v613 = vpop.f32.mrf.mxu0
        %v614 = vadd.f32 %v257, %v613
        %v615 = vpop.f32.mrf.mxu0
        %v616 = vadd.f32 %v257, %v615
        %617 = vmatmul.bf16.gmra.mxu0 %v315
        %v618 = vpop.f32.mrf.mxu0
        %v619 = vadd.f32 %v257, %v618
        %v620 = vpop.f32.mrf.mxu0
        %v621 = vadd.f32 %v257, %v620
        %622 = vmatmul.bf16.gmra.mxu0 %v317
        %v623 = vpop.f32.mrf.mxu0
        %v624 = vadd.f32 %v257, %v623
        %v625 = vpop.f32.mrf.mxu0
        %v626 = vadd.f32 %v257, %v625
        %627 = vmatmul.bf16.gmra.mxu0 %v319
        %v628 = vpop.f32.mrf.mxu0
        %v629 = vadd.f32 %v257, %v628
        %v630 = vpop.f32.mrf.mxu0
        %v631 = vadd.f32 %v257, %v630
        %632 = vmatmul.bf16.gmra.mxu0 %v321
        %v633 = vpop.f32.mrf.mxu0
        %v634 = vadd.f32 %v257, %v633
        %v635 = vpop.f32.mrf.mxu0
        %v636 = vadd.f32 %v257, %v635
        %637 = vmatmul.bf16.gmra.mxu0 %v323
        %v638 = vpop.f32.mrf.mxu0
        %v639 = vadd.f32 %v257, %v638
        %v640 = vpop.f32.mrf.mxu0
        %v641 = vadd.f32 %v257, %v640
        %642 = vmatmul.bf16.gmra.mxu0 %v325
        %v643 = vpop.f32.mrf.mxu0
        %v644 = vadd.f32 %v257, %v643
        %v645 = vpop.f32.mrf.mxu0
        %v646 = vadd.f32 %v257, %v645
        %647 = vdwg.mxu0
        %648 = vmatpush.bf16.msra.mxu0 %v548
        %649 = vmatpush.bf16.msra.mxu0 %v545
        %650 = vmatpush.bf16.msra.mxu0 %v542
        %651 = vmatpush.bf16.msra.mxu0 %v539
        %652 = vmatpush.bf16.msra.mxu0 %v536
        %653 = vmatpush.bf16.msra.mxu0 %v533
        %654 = vmatpush.bf16.msra.mxu0 %v530
        %655 = vmatpush.bf16.msra.mxu0 %v527
        %656 = vmatmul.bf16.gmra.mxu0 %v312
        %v657 = vpop.f32.mrf.mxu0
        %v658 = vadd.f32 %v609, %v657
        %v659 = vpop.f32.mrf.mxu0
        %v660 = vadd.f32 %v611, %v659
        %661 = vmatmul.bf16.gmra.mxu0 %v314
        %v662 = vpop.f32.mrf.mxu0
        %v663 = vadd.f32 %v614, %v662
        %v664 = vpop.f32.mrf.mxu0
        %v665 = vadd.f32 %v616, %v664
        %666 = vmatmul.bf16.gmra.mxu0 %v316
        %v667 = vpop.f32.mrf.mxu0
        %v668 = vadd.f32 %v619, %v667
        %v669 = vpop.f32.mrf.mxu0
        %v670 = vadd.f32 %v621, %v669
        %671 = vmatmul.bf16.gmra.mxu0 %v318
        %v672 = vpop.f32.mrf.mxu0
        %v673 = vadd.f32 %v624, %v672
        %v674 = vpop.f32.mrf.mxu0
        %v675 = vadd.f32 %v626, %v674
        %676 = vmatmul.bf16.gmra.mxu0 %v320
        %v677 = vpop.f32.mrf.mxu0
        %v678 = vadd.f32 %v629, %v677
        %v679 = vpop.f32.mrf.mxu0
        %v680 = vadd.f32 %v631, %v679
        %681 = vmatmul.bf16.gmra.mxu0 %v322
        %v682 = vpop.f32.mrf.mxu0
        %v683 = vadd.f32 %v634, %v682
        %v684 = vpop.f32.mrf.mxu0
        %v685 = vadd.f32 %v636, %v684
        %686 = vmatmul.bf16.gmra.mxu0 %v324
        %v687 = vpop.f32.mrf.mxu0
        %v688 = vadd.f32 %v639, %v687
        %v689 = vpop.f32.mrf.mxu0
        %v690 = vadd.f32 %v641, %v689
        %691 = vmatmul.bf16.gmra.mxu0 %v326
        %v692 = vpop.f32.mrf.mxu0
        %v693 = vadd.f32 %v644, %v692
        %v694 = vpop.f32.mrf.mxu0
        %v695 = vadd.f32 %v646, %v694
        %696 = vdwg.mxu0
        %697 = vmatpush.bf16.msra.mxu0 %v525
        %698 = vmatpush.bf16.msra.mxu0 %v522
        %699 = vmatpush.bf16.msra.mxu0 %v519
        %700 = vmatpush.bf16.msra.mxu0 %v516
        %701 = vmatpush.bf16.msra.mxu0 %v513
        %702 = vmatpush.bf16.msra.mxu0 %v510
        %703 = vmatpush.bf16.msra.mxu0 %v507
        %704 = vmatpush.bf16.msra.mxu0 %v504
        %705 = vmatmul.bf16.gmra.mxu0 %v311
        %v706 = vpop.f32.mrf.mxu0
        %v707 = vadd.f32 %v258, %v706
        %v708 = vpop.f32.mrf.mxu0
        %v709 = vadd.f32 %v258, %v708
        %710 = vmatmul.bf16.gmra.mxu0 %v313
        %v711 = vpop.f32.mrf.mxu0
        %v712 = vadd.f32 %v258, %v711
        %v713 = vpop.f32.mrf.mxu0
        %v714 = vadd.f32 %v258, %v713
        %715 = vmatmul.bf16.gmra.mxu0 %v315
        %v716 = vpop.f32.mrf.mxu0
        %v717 = vadd.f32 %v258, %v716
        %v718 = vpop.f32.mrf.mxu0
        %v719 = vadd.f32 %v258, %v718
        %720 = vmatmul.bf16.gmra.mxu0 %v317
        %v721 = vpop.f32.mrf.mxu0
        %v722 = vadd.f32 %v258, %v721
        %v723 = vpop.f32.mrf.mxu0
        %v724 = vadd.f32 %v258, %v723
        %725 = vmatmul.bf16.gmra.mxu0 %v319
        %v726 = vpop.f32.mrf.mxu0
        %v727 = vadd.f32 %v258, %v726
        %v728 = vpop.f32.mrf.mxu0
        %v729 = vadd.f32 %v258, %v728
        %730 = vmatmul.bf16.gmra.mxu0 %v321
        %v731 = vpop.f32.mrf.mxu0
        %v732 = vadd.f32 %v258, %v731
        %v733 = vpop.f32.mrf.mxu0
        %v734 = vadd.f32 %v258, %v733
        %735 = vmatmul.bf16.gmra.mxu0 %v323
        %v736 = vpop.f32.mrf.mxu0
        %v737 = vadd.f32 %v258, %v736
        %v738 = vpop.f32.mrf.mxu0
        %v739 = vadd.f32 %v258, %v738
        %740 = vmatmul.bf16.gmra.mxu0 %v325
        %v741 = vpop.f32.mrf.mxu0
        %v742 = vadd.f32 %v258, %v741
        %v743 = vpop.f32.mrf.mxu0
        %v744 = vadd.f32 %v258, %v743
        %745 = vdwg.mxu0
        %746 = vmatpush.bf16.msra.mxu0 %v549
        %747 = vmatpush.bf16.msra.mxu0 %v546
        %748 = vmatpush.bf16.msra.mxu0 %v543
        %749 = vmatpush.bf16.msra.mxu0 %v540
        %750 = vmatpush.bf16.msra.mxu0 %v537
        %751 = vmatpush.bf16.msra.mxu0 %v534
        %752 = vmatpush.bf16.msra.mxu0 %v531
        %753 = vmatpush.bf16.msra.mxu0 %v528
        %754 = vmatmul.bf16.gmra.mxu0 %v312
        %v755 = vpop.f32.mrf.mxu0
        %v756 = vadd.f32 %v707, %v755
        %v757 = vpop.f32.mrf.mxu0
        %v758 = vadd.f32 %v709, %v757
        %759 = vmatmul.bf16.gmra.mxu0 %v314
        %v760 = vpop.f32.mrf.mxu0
        %v761 = vadd.f32 %v712, %v760
        %v762 = vpop.f32.mrf.mxu0
        %v763 = vadd.f32 %v714, %v762
        %764 = vmatmul.bf16.gmra.mxu0 %v316
        %v765 = vpop.f32.mrf.mxu0
        %v766 = vadd.f32 %v717, %v765
        %v767 = vpop.f32.mrf.mxu0
        %v768 = vadd.f32 %v719, %v767
        %769 = vmatmul.bf16.gmra.mxu0 %v318
        %v770 = vpop.f32.mrf.mxu0
        %v771 = vadd.f32 %v722, %v770
        %v772 = vpop.f32.mrf.mxu0
        %v773 = vadd.f32 %v724, %v772
        %774 = vmatmul.bf16.gmra.mxu0 %v320
        %v775 = vpop.f32.mrf.mxu0
        %v776 = vadd.f32 %v727, %v775
        %v777 = vpop.f32.mrf.mxu0
        %v778 = vadd.f32 %v729, %v777
        %779 = vmatmul.bf16.gmra.mxu0 %v322
        %v780 = vpop.f32.mrf.mxu0
        %v781 = vadd.f32 %v732, %v780
        %v782 = vpop.f32.mrf.mxu0
        %v783 = vadd.f32 %v734, %v782
        %784 = vmatmul.bf16.gmra.mxu0 %v324
        %v785 = vpop.f32.mrf.mxu0
        %v786 = vadd.f32 %v737, %v785
        %v787 = vpop.f32.mrf.mxu0
        %v788 = vadd.f32 %v739, %v787
        %789 = vmatmul.bf16.gmra.mxu0 %v326
        %v790 = vpop.f32.mrf.mxu0
        %v791 = vadd.f32 %v742, %v790
        %v792 = vpop.f32.mrf.mxu0
        %v793 = vadd.f32 %v744, %v792
        %794 = vdwg.mxu0
        %795 = vmatpush.bf16.msra.mxu0 %v526
        %796 = vmatpush.bf16.msra.mxu0 %v523
        %797 = vmatpush.bf16.msra.mxu0 %v520
        %798 = vmatpush.bf16.msra.mxu0 %v517
        %799 = vmatpush.bf16.msra.mxu0 %v514
        %800 = vmatpush.bf16.msra.mxu0 %v511
        %801 = vmatpush.bf16.msra.mxu0 %v508
        %802 = vmatpush.bf16.msra.mxu0 %v505
        %803 = vmatmul.bf16.gmra.mxu0 %v311
        %v804 = vpop.f32.mrf.mxu0
        %v805 = vadd.f32 %v259, %v804
        %v806 = vpop.f32.mrf.mxu0
        %v807 = vadd.f32 %v259, %v806
        %808 = vmatmul.bf16.gmra.mxu0 %v313
        %v809 = vpop.f32.mrf.mxu0
        %v810 = vadd.f32 %v259, %v809
        %v811 = vpop.f32.mrf.mxu0
        %v812 = vadd.f32 %v259, %v811
        %813 = vmatmul.bf16.gmra.mxu0 %v315
        %v814 = vpop.f32.mrf.mxu0
        %v815 = vadd.f32 %v259, %v814
        %v816 = vpop.f32.mrf.mxu0
        %v817 = vadd.f32 %v259, %v816
        %818 = vmatmul.bf16.gmra.mxu0 %v317
        %v819 = vpop.f32.mrf.mxu0
        %v820 = vadd.f32 %v259, %v819
        %v821 = vpop.f32.mrf.mxu0
        %v822 = vadd.f32 %v259, %v821
        %823 = vmatmul.bf16.gmra.mxu0 %v319
        %v824 = vpop.f32.mrf.mxu0
        %v825 = vadd.f32 %v259, %v824
        %v826 = vpop.f32.mrf.mxu0
        %v827 = vadd.f32 %v259, %v826
        %828 = vmatmul.bf16.gmra.mxu0 %v321
        %v829 = vpop.f32.mrf.mxu0
        %v830 = vadd.f32 %v259, %v829
        %v831 = vpop.f32.mrf.mxu0
        %v832 = vadd.f32 %v259, %v831
        %833 = vmatmul.bf16.gmra.mxu0 %v323
        %v834 = vpop.f32.mrf.mxu0
        %v835 = vadd.f32 %v259, %v834
        %v836 = vpop.f32.mrf.mxu0
        %v837 = vadd.f32 %v259, %v836
        %838 = vmatmul.bf16.gmra.mxu0 %v325
        %v839 = vpop.f32.mrf.mxu0
        %v840 = vadd.f32 %v259, %v839
        %v841 = vpop.f32.mrf.mxu0
        %v842 = vadd.f32 %v259, %v841
        %843 = vdwg.mxu0
        %844 = vmatpush.bf16.msra.mxu0 %v550
        %845 = vmatpush.bf16.msra.mxu0 %v547
        %846 = vmatpush.bf16.msra.mxu0 %v544
        %847 = vmatpush.bf16.msra.mxu0 %v541
        %848 = vmatpush.bf16.msra.mxu0 %v538
        %849 = vmatpush.bf16.msra.mxu0 %v535
        %850 = vmatpush.bf16.msra.mxu0 %v532
        %851 = vmatpush.bf16.msra.mxu0 %v529
        %852 = vmatmul.bf16.gmra.mxu0 %v312
        %v853 = vpop.f32.mrf.mxu0
        %v854 = vadd.f32 %v805, %v853
        %v855 = vpop.f32.mrf.mxu0
        %v856 = vadd.f32 %v807, %v855
        %857 = vmatmul.bf16.gmra.mxu0 %v314
        %v858 = vpop.f32.mrf.mxu0
        %v859 = vadd.f32 %v810, %v858
        %v860 = vpop.f32.mrf.mxu0
        %v861 = vadd.f32 %v812, %v860
        %862 = vmatmul.bf16.gmra.mxu0 %v316
        %v863 = vpop.f32.mrf.mxu0
        %v864 = vadd.f32 %v815, %v863
        %v865 = vpop.f32.mrf.mxu0
        %v866 = vadd.f32 %v817, %v865
        %867 = vmatmul.bf16.gmra.mxu0 %v318
        %v868 = vpop.f32.mrf.mxu0
        %v869 = vadd.f32 %v820, %v868
        %v870 = vpop.f32.mrf.mxu0
        %v871 = vadd.f32 %v822, %v870
        %872 = vmatmul.bf16.gmra.mxu0 %v320
        %v873 = vpop.f32.mrf.mxu0
        %v874 = vadd.f32 %v825, %v873
        %v875 = vpop.f32.mrf.mxu0
        %v876 = vadd.f32 %v827, %v875
        %877 = vmatmul.bf16.gmra.mxu0 %v322
        %v878 = vpop.f32.mrf.mxu0
        %v879 = vadd.f32 %v830, %v878
        %v880 = vpop.f32.mrf.mxu0
        %v881 = vadd.f32 %v832, %v880
        %882 = vmatmul.bf16.gmra.mxu0 %v324
        %v883 = vpop.f32.mrf.mxu0
        %v884 = vadd.f32 %v835, %v883
        %v885 = vpop.f32.mrf.mxu0
        %v886 = vadd.f32 %v837, %v885
        %887 = vmatmul.bf16.gmra.mxu0 %v326
        %v888 = vpop.f32.mrf.mxu0
        %v889 = vadd.f32 %v840, %v888
        %v890 = vpop.f32.mrf.mxu0
        %v891 = vadd.f32 %v842, %v890
        %892 = vdwg.mxu0
        %893 = vst [vmem:[%s166] sm:$0xff] %v658
        %894 = vst [vmem:[%s166 + $0x8] sm:$0xff] %v756
        %895 = vst [vmem:[%s166 + $0x10] sm:$0xff] %v854
        %896 = vst [vmem:[%s166 + $0x18] sm:$0xff] %v660
        %897 = vst [vmem:[%s166 + $0x20] sm:$0xff] %v758
        %898 = vst [vmem:[%s166 + $0x28] sm:$0xff] %v856
        %899 = vst [vmem:[%s166 + $0x30] sm:$0xff] %v663
        %900 = vst [vmem:[%s166 + $0x38] sm:$0xff] %v761
        %901 = vst [vmem:[%s166 + $0x40] sm:$0xff] %v859
        %902 = vst [vmem:[%s166 + $0x48] sm:$0xff] %v665
        %903 = vst [vmem:[%s166 + $0x50] sm:$0xff] %v763
        %904 = vst [vmem:[%s166 + $0x58] sm:$0xff] %v861
        %905 = vst [vmem:[%s166 + $0x60] sm:$0xff] %v668
        %906 = vst [vmem:[%s166 + $0x68] sm:$0xff] %v766
        %907 = vst [vmem:[%s166 + $0x70] sm:$0xff] %v864
        %908 = vst [vmem:[%s166 + $0x78] sm:$0xff] %v670
        %909 = vst [vmem:[%s166 + $0x80] sm:$0xff] %v768
        %910 = vst [vmem:[%s166 + $0x88] sm:$0xff] %v866
        %911 = vst [vmem:[%s166 + $0x90] sm:$0xff] %v673
        %912 = vst [vmem:[%s166 + $0x98] sm:$0xff] %v771
        %913 = vst [vmem:[%s166 + $0xa0] sm:$0xff] %v869
        %914 = vst [vmem:[%s166 + $0xa8] sm:$0xff] %v675
        %915 = vst [vmem:[%s166 + $0xb0] sm:$0xff] %v773
        %916 = vst [vmem:[%s166 + $0xb8] sm:$0xff] %v871
        %917 = vst [vmem:[%s166 + $0xc0] sm:$0xff] %v678
        %918 = vst [vmem:[%s166 + $0xc8] sm:$0xff] %v776
        %919 = vst [vmem:[%s166 + $0xd0] sm:$0xff] %v874
        %920 = vst [vmem:[%s166 + $0xd8] sm:$0xff] %v680
        %921 = vst [vmem:[%s166 + $0xe0] sm:$0xff] %v778
        %922 = vst [vmem:[%s166 + $0xe8] sm:$0xff] %v876
        %923 = vst [vmem:[%s166 + $0xf0] sm:$0xff] %v683
        %924 = vst [vmem:[%s166 + $0xf8] sm:$0xff] %v781
        %925 = vst [vmem:[%s166 + $0x100] sm:$0xff] %v879
        %926 = vst [vmem:[%s166 + $0x108] sm:$0xff] %v685
        %927 = vst [vmem:[%s166 + $0x110] sm:$0xff] %v783
        %928 = vst [vmem:[%s166 + $0x118] sm:$0xff] %v881
        %929 = vst [vmem:[%s166 + $0x120] sm:$0xff] %v688
        %930 = vst [vmem:[%s166 + $0x128] sm:$0xff] %v786
        %931 = vst [vmem:[%s166 + $0x130] sm:$0xff] %v884
        %932 = vst [vmem:[%s166 + $0x138] sm:$0xff] %v690
        %933 = vst [vmem:[%s166 + $0x140] sm:$0xff] %v788
        %934 = vst [vmem:[%s166 + $0x148] sm:$0xff] %v886
        %935 = vst [vmem:[%s166 + $0x150] sm:$0xff] %v693
        %936 = vst [vmem:[%s166 + $0x158] sm:$0xff] %v791
        %937 = vst [vmem:[%s166 + $0x160] sm:$0xff] %v889
        %938 = vst [vmem:[%s166 + $0x168] sm:$0xff] %v695
        %939 = vst [vmem:[%s166 + $0x170] sm:$0xff] %v793
        %940 = vst [vmem:[%s166 + $0x178] sm:$0xff] %v891
        %s941 = sand.u32 %s93, 1
        %s942 = scalar_lea.sflag [#allocation3], %s941
        %s943 = sand.u32 %s93, 1
        %s944 = smul.addr %s943, 384
        %s945 = scalar_lea.vmem [#allocation2], %s944
        // Predicated region
        $region33: #{transformer_model_forward.3} parent=31 // pred_check
          %p946 = pneg %p103
        $region34: #{transformer_model_forward.3} parent=31 // pred_check_branch
          %948 = sbr.rel (%p946) target = $region36
        $region35: #{transformer_model_forward.3} parent=31 // pred_region
          %s949 = smul.u32 16, %s17
          %951 = vsyncadd %s942, 0
          %s952 = smul.addr %s949, 3
          %s953 = smul.addr %s952, 8
          %s954 = scalar_lea.hbm %s3, %s953
          %s955 = sshll.u32 %s945, 4
          %s956 = int_to_ptr.vmem [resolvable:$true] %s955
          %s957 = sshll.u32 %s954, 4
          %s958 = int_to_ptr.hbm [resolvable:$true] %s957
          %963 = dma.vmem_to_hbm [thread:$0]  %s956, 6144, %s958, %s942, 384, 384, 24
        $region36: #{transformer_model_forward.3} parent=31 // pred_fallthru
          _
      $region32: #{transformer_model_forward.3} parent=5 // pred_fallthru
        _
      %p964 = scmp.le.s32.totalorder 2, %s12
      // Predicated region
      $region37: #{transformer_model_forward.3} parent=5 // pred_check
        %p965 = pneg %p964
      $region38: #{transformer_model_forward.3} parent=5 // pred_check_branch
        %967 = sbr.rel (%p965) target = $region40
      $region39: #{transformer_model_forward.3} parent=5 // pred_region
        %s968 = ssub.s32 %s12, 2
        // Predicated region
        $region41: #{transformer_model_forward.3} parent=39 // pred_check
          %p969 = pneg %p109
        $region42: #{transformer_model_forward.3} parent=39 // pred_check_branch
          %971 = sbr.rel (%p969) target = $region44
        $region43: #{transformer_model_forward.3} parent=39 // pred_region
          %s972 = sand.u32 %s94, 1
          %s973 = scalar_lea.sflag [#allocation3], %s972
          %s974 = sand.u32 %s94, 1
          %s975 = smul.addr %s974, 384
          %s976 = scalar_lea.vmem [#allocation2], %s975
          %978 = dma.done %s973, 6144
        $region44: #{transformer_model_forward.3} parent=39 // pred_fallthru
          _
      $region40: #{transformer_model_forward.3} parent=5 // pred_fallthru
        _
    $region6: #{transformer_model_forward.3} parent=1 // loop_footer
      %s16 = sadd.s32 1, %s12
    $region7: #{transformer_model_forward.3} parent=1 // loop_footer_branch
      %11 = sbr.rel target = $region3
    $region8: #{transformer_model_forward.3} parent=1 // loop_exit
      _
    %979 = vsyncpa [#allocation3], 1
    %s980 = scalar_lea.sflag [#allocation3], 1
    %981 = vsyncpa %s980, 1

// kernel: transformer_model_forward.2
$region0: #{transformer_model_forward.2}
  #allocation0 [shape = 'u32[]', space=smem, size = 0x4, offset = 0x4, fixed_abs, tag = 'smem constant byte address 0x4 - core index']
  #allocation1 [shape = 'u32[72,128]{1,0:T(1,128)}', space=vmem, size = 0x9000, scoped, tag = 'internal scratch']
  #allocation2 [shape = 'bf16[128,768]{1,0:T(8,128)(2,1)}', space=vmem, size = 0x30000, scoped, tag = 'scratch operand']
  #allocation3 [shape = 'bf16[128,256]{1,0:T(8,128)(2,1)}', space=vmem, size = 0x10000, scoped, tag = 'scratch operand']
  %s0 = inlined_call_operand.vmem [shape: f32[256,256], index: 0, kind: input, shape index: {}]
  %s1 = inlined_call_operand.vmem [shape: f32[128,128], index: 1, kind: input, shape index: {}]
  %s2 = inlined_call_operand.vmem [shape: bf16[2,256,768], index: 2, kind: input, shape index: {}]
  %s3 = inlined_call_operand.vmem [shape: f32[2,1,768], index: 3, kind: input, shape index: {}]
  %s4 = inlined_call_operand.vmem [shape: bf16[2,256,256], index: 4, kind: input, shape index: {}]
  %s5 = inlined_call_operand.vmem [shape: bf16[2,256,512], index: 5, kind: input, shape index: {}]
  %s6 = inlined_call_operand.vmem [shape: f32[2,1,512], index: 6, kind: input, shape index: {}]
  %s7 = inlined_call_operand.vmem [shape: bf16[2,512,256], index: 7, kind: input, shape index: {}]
  %s8 = inlined_call_operand.vmem [shape: f32[2,8,256], index: 8, kind: input, shape index: {}]
  %s9 = inlined_call_operand.vmem [shape: bf16[256,256], index: 9, kind: output, shape index: {}]
  %s10 = sld [smem:[#allocation0]]
  $region76: #{transformer_model_forward.2} parent=0
    _
  %s12 = ssub.s32 1, %s10
  %s13 = scalar_select 0, %s12, %s10
  loop: start=0, step=1, limit=4
  $region2: #{transformer_model_forward.2} parent=0 // loop_pre_header
    _
  $region3: #{transformer_model_forward.2} parent=0 // loop_header
    %s15 = sphi 0, %s19
    %p16 = scmp.ge.s32.totalorder %s15, 4
    %s25 = sphi 0, %s27
    %s28 = sphi 0, %s25
    %s29 = sphi 0, %s28
    %s45 = sphi 0, %s29
    %s49 = sphi 0, %s49
    %s51 = sphi 0, %s49
    %s52 = sphi 0, %s51
    %s66 = sphi 0, %s52
    %s70 = sphi 0, %s70
    %s72 = sphi 0, %s70
    %s73 = sphi 0, %s72
    %s87 = sphi 0, %s73
    %s91 = sphi 0, %s91
    %s93 = sphi 0, %s91
    %s94 = sphi 0, %s93
    %s108 = sphi 0, %s94
    %s112 = sphi 0, %s112
    %s114 = sphi 0, %s112
    %s115 = sphi 0, %s114
    %s129 = sphi 0, %s115
    %s133 = sphi 0, %s133
    %s135 = sphi 0, %s133
    %s136 = sphi 0, %s135
    %s150 = sphi 0, %s136
    %s154 = sphi 0, %s154
    %s156 = sphi 0, %s154
    %s157 = sphi 0, %s156
    %s171 = sphi 0, %s157
    %s175 = sphi 0, %s175
    %s177 = sphi 0, %s175
    %s178 = sphi 0, %s177
    %s192 = sphi 0, %s178
    %s196 = sphi 0, %s196
    %s198 = sphi 0, %s196
    %s199 = sphi 0, %s198
    %s213 = sphi 0, %s199
    %s219 = sphi 0, %s221
    %s222 = sphi 0, %s219
    %s223 = sphi 0, %s222
    %s239 = sphi 0, %s223
  $region4: #{transformer_model_forward.2} parent=0 // loop_header_branch
    %18 = sbr.rel (%p16) target = $region8
  $region5: #{transformer_model_forward.2} parent=0 // loop_body
    %s20 = ssub.s32 %s15, 1
    %s21 = ssub.s32 %s15, 2
    %s22 = sadd.s32 %s15, 1
    %s23 = ssub.s32 %s15, %s22
    %p24 = scmp.eq.s32.totalorder %s23, 0
    %s26 = sadd.s32 %s25, 1
    %s27 = scalar_select %p24, %s25, %s26
    %p30 = pneg %p24
    %p31 = scmp.eq.s32.totalorder %s15, 1
    %p32 = por %p30, %p31
    %p33 = scmp.ne.s32.totalorder %s25, %s28
    %p34 = scmp.eq.s32.totalorder %s15, 0
    %p35 = por %p33, %p34
    %p36 = scmp.ne.s32.totalorder %s25, %s28
    %p37 = scmp.eq.s32.totalorder %s20, 1
    %p38 = por %p36, %p37
    %p39 = scmp.ne.s32.totalorder %s28, %s29
    %p40 = scmp.eq.s32.totalorder %s20, 0
    %p41 = por %p39, %p40
    %p42 = scmp.ne.s32.totalorder %s28, %s29
    %p43 = scmp.eq.s32.totalorder %s21, 1
    %p44 = por %p42, %p43
    %p46 = scmp.ne.s32.totalorder %s29, %s45
    %p47 = scmp.eq.s32.totalorder %s21, 0
    %p48 = por %p46, %p47
    %s50 = sadd.s32 %s49, 1
    %p53 = scmp.eq.s32.totalorder %s15, 1
    %p54 = scmp.ne.s32.totalorder %s49, %s51
    %p55 = scmp.eq.s32.totalorder %s15, 0
    %p56 = por %p54, %p55
    %p57 = scmp.ne.s32.totalorder %s49, %s51
    %p58 = scmp.eq.s32.totalorder %s20, 1
    %p59 = por %p57, %p58
    %p60 = scmp.ne.s32.totalorder %s51, %s52
    %p61 = scmp.eq.s32.totalorder %s20, 0
    %p62 = por %p60, %p61
    %p63 = scmp.ne.s32.totalorder %s51, %s52
    %p64 = scmp.eq.s32.totalorder %s21, 1
    %p65 = por %p63, %p64
    %p67 = scmp.ne.s32.totalorder %s52, %s66
    %p68 = scmp.eq.s32.totalorder %s21, 0
    %p69 = por %p67, %p68
    %s71 = sadd.s32 %s70, 1
    %p74 = scmp.eq.s32.totalorder %s15, 1
    %p75 = scmp.ne.s32.totalorder %s70, %s72
    %p76 = scmp.eq.s32.totalorder %s15, 0
    %p77 = por %p75, %p76
    %p78 = scmp.ne.s32.totalorder %s70, %s72
    %p79 = scmp.eq.s32.totalorder %s20, 1
    %p80 = por %p78, %p79
    %p81 = scmp.ne.s32.totalorder %s72, %s73
    %p82 = scmp.eq.s32.totalorder %s20, 0
    %p83 = por %p81, %p82
    %p84 = scmp.ne.s32.totalorder %s72, %s73
    %p85 = scmp.eq.s32.totalorder %s21, 1
    %p86 = por %p84, %p85
    %p88 = scmp.ne.s32.totalorder %s73, %s87
    %p89 = scmp.eq.s32.totalorder %s21, 0
    %p90 = por %p88, %p89
    %s92 = sadd.s32 %s91, 1
    %p95 = scmp.eq.s32.totalorder %s15, 1
    %p96 = scmp.ne.s32.totalorder %s91, %s93
    %p97 = scmp.eq.s32.totalorder %s15, 0
    %p98 = por %p96, %p97
    %p99 = scmp.ne.s32.totalorder %s91, %s93
    %p100 = scmp.eq.s32.totalorder %s20, 1
    %p101 = por %p99, %p100
    %p102 = scmp.ne.s32.totalorder %s93, %s94
    %p103 = scmp.eq.s32.totalorder %s20, 0
    %p104 = por %p102, %p103
    %p105 = scmp.ne.s32.totalorder %s93, %s94
    %p106 = scmp.eq.s32.totalorder %s21, 1
    %p107 = por %p105, %p106
    %p109 = scmp.ne.s32.totalorder %s94, %s108
    %p110 = scmp.eq.s32.totalorder %s21, 0
    %p111 = por %p109, %p110
    %s113 = sadd.s32 %s112, 1
    %p116 = scmp.eq.s32.totalorder %s15, 1
    %p117 = scmp.ne.s32.totalorder %s112, %s114
    %p118 = scmp.eq.s32.totalorder %s15, 0
    %p119 = por %p117, %p118
    %p120 = scmp.ne.s32.totalorder %s112, %s114
    %p121 = scmp.eq.s32.totalorder %s20, 1
    %p122 = por %p120, %p121
    %p123 = scmp.ne.s32.totalorder %s114, %s115
    %p124 = scmp.eq.s32.totalorder %s20, 0
    %p125 = por %p123, %p124
    %p126 = scmp.ne.s32.totalorder %s114, %s115
    %p127 = scmp.eq.s32.totalorder %s21, 1
    %p128 = por %p126, %p127
    %p130 = scmp.ne.s32.totalorder %s115, %s129
    %p131 = scmp.eq.s32.totalorder %s21, 0
    %p132 = por %p130, %p131
    %s134 = sadd.s32 %s133, 1
    %p137 = scmp.eq.s32.totalorder %s15, 1
    %p138 = scmp.ne.s32.totalorder %s133, %s135
    %p139 = scmp.eq.s32.totalorder %s15, 0
    %p140 = por %p138, %p139
    %p141 = scmp.ne.s32.totalorder %s133, %s135
    %p142 = scmp.eq.s32.totalorder %s20, 1
    %p143 = por %p141, %p142
    %p144 = scmp.ne.s32.totalorder %s135, %s136
    %p145 = scmp.eq.s32.totalorder %s20, 0
    %p146 = por %p144, %p145
    %p147 = scmp.ne.s32.totalorder %s135, %s136
    %p148 = scmp.eq.s32.totalorder %s21, 1
    %p149 = por %p147, %p148
    %p151 = scmp.ne.s32.totalorder %s136, %s150
    %p152 = scmp.eq.s32.totalorder %s21, 0
    %p153 = por %p151, %p152
    %s155 = sadd.s32 %s154, 1
    %p158 = scmp.eq.s32.totalorder %s15, 1
    %p159 = scmp.ne.s32.totalorder %s154, %s156
    %p160 = scmp.eq.s32.totalorder %s15, 0
    %p161 = por %p159, %p160
    %p162 = scmp.ne.s32.totalorder %s154, %s156
    %p163 = scmp.eq.s32.totalorder %s20, 1
    %p164 = por %p162, %p163
    %p165 = scmp.ne.s32.totalorder %s156, %s157
    %p166 = scmp.eq.s32.totalorder %s20, 0
    %p167 = por %p165, %p166
    %p168 = scmp.ne.s32.totalorder %s156, %s157
    %p169 = scmp.eq.s32.totalorder %s21, 1
    %p170 = por %p168, %p169
    %p172 = scmp.ne.s32.totalorder %s157, %s171
    %p173 = scmp.eq.s32.totalorder %s21, 0
    %p174 = por %p172, %p173
    %s176 = sadd.s32 %s175, 1
    %p179 = scmp.eq.s32.totalorder %s15, 1
    %p180 = scmp.ne.s32.totalorder %s175, %s177
    %p181 = scmp.eq.s32.totalorder %s15, 0
    %p182 = por %p180, %p181
    %p183 = scmp.ne.s32.totalorder %s175, %s177
    %p184 = scmp.eq.s32.totalorder %s20, 1
    %p185 = por %p183, %p184
    %p186 = scmp.ne.s32.totalorder %s177, %s178
    %p187 = scmp.eq.s32.totalorder %s20, 0
    %p188 = por %p186, %p187
    %p189 = scmp.ne.s32.totalorder %s177, %s178
    %p190 = scmp.eq.s32.totalorder %s21, 1
    %p191 = por %p189, %p190
    %p193 = scmp.ne.s32.totalorder %s178, %s192
    %p194 = scmp.eq.s32.totalorder %s21, 0
    %p195 = por %p193, %p194
    %s197 = sadd.s32 %s196, 1
    %p200 = scmp.eq.s32.totalorder %s15, 1
    %p201 = scmp.ne.s32.totalorder %s196, %s198
    %p202 = scmp.eq.s32.totalorder %s15, 0
    %p203 = por %p201, %p202
    %p204 = scmp.ne.s32.totalorder %s196, %s198
    %p205 = scmp.eq.s32.totalorder %s20, 1
    %p206 = por %p204, %p205
    %p207 = scmp.ne.s32.totalorder %s198, %s199
    %p208 = scmp.eq.s32.totalorder %s20, 0
    %p209 = por %p207, %p208
    %p210 = scmp.ne.s32.totalorder %s198, %s199
    %p211 = scmp.eq.s32.totalorder %s21, 1
    %p212 = por %p210, %p211
    %p214 = scmp.ne.s32.totalorder %s199, %s213
    %p215 = scmp.eq.s32.totalorder %s21, 0
    %p216 = por %p214, %p215
    %s217 = ssub.s32 %s15, %s22
    %p218 = scmp.eq.s32.totalorder %s217, 0
    %s220 = sadd.s32 %s219, 1
    %s221 = scalar_select %p218, %s219, %s220
    %p224 = pneg %p218
    %p225 = scmp.eq.s32.totalorder %s15, 1
    %p226 = por %p224, %p225
    %p227 = scmp.ne.s32.totalorder %s219, %s222
    %p228 = scmp.eq.s32.totalorder %s15, 0
    %p229 = por %p227, %p228
    %p230 = scmp.ne.s32.totalorder %s219, %s222
    %p231 = scmp.eq.s32.totalorder %s20, 1
    %p232 = por %p230, %p231
    %p233 = scmp.ne.s32.totalorder %s222, %s223
    %p234 = scmp.eq.s32.totalorder %s20, 0
    %p235 = por %p233, %p234
    %p236 = scmp.ne.s32.totalorder %s222, %s223
    %p237 = scmp.eq.s32.totalorder %s21, 1
    %p238 = por %p236, %p237
    %p240 = scmp.ne.s32.totalorder %s223, %s239
    %p241 = scmp.eq.s32.totalorder %s21, 0
    %p242 = por %p240, %p241
    %p243 = scmp.le.s32.totalorder 1, %s15
    %p244 = scmp.lt.s32.totalorder %s15, 3
    %p245 = pnand %p243, %p244
    %p246 = pneg %p245
    // Predicated region
    $region9: #{transformer_model_forward.2} parent=5 // pred_check
      _
    $region10: #{transformer_model_forward.2} parent=5 // pred_check_branch
      %248 = sbr.rel (%p245) target = $region12
    $region11: #{transformer_model_forward.2} parent=5 // pred_region
      %s249 = ssub.s32 %s15, 1
      // Predicated region
      $region13: #{transformer_model_forward.2} parent=11 // pred_check
        %p250 = pneg %p62
      $region14: #{transformer_model_forward.2} parent=11 // pred_check_branch
        %252 = sbr.rel (%p250) target = $region16
      $region15: #{transformer_model_forward.2} parent=11 // pred_region
        _
      $region16: #{transformer_model_forward.2} parent=11 // pred_fallthru
        _
      // Predicated region
      $region17: #{transformer_model_forward.2} parent=11 // pred_check
        %p253 = pneg %p83
      $region18: #{transformer_model_forward.2} parent=11 // pred_check_branch
        %255 = sbr.rel (%p253) target = $region20
      $region19: #{transformer_model_forward.2} parent=11 // pred_region
        _
      $region20: #{transformer_model_forward.2} parent=11 // pred_fallthru
        _
      // Predicated region
      $region21: #{transformer_model_forward.2} parent=11 // pred_check
        %p256 = pneg %p104
      $region22: #{transformer_model_forward.2} parent=11 // pred_check_branch
        %258 = sbr.rel (%p256) target = $region24
      $region23: #{transformer_model_forward.2} parent=11 // pred_region
        _
      $region24: #{transformer_model_forward.2} parent=11 // pred_fallthru
        _
      // Predicated region
      $region25: #{transformer_model_forward.2} parent=11 // pred_check
        %p259 = pneg %p125
      $region26: #{transformer_model_forward.2} parent=11 // pred_check_branch
        %261 = sbr.rel (%p259) target = $region28
      $region27: #{transformer_model_forward.2} parent=11 // pred_region
        _
      $region28: #{transformer_model_forward.2} parent=11 // pred_fallthru
        _
      // Predicated region
      $region29: #{transformer_model_forward.2} parent=11 // pred_check
        %p262 = pneg %p146
      $region30: #{transformer_model_forward.2} parent=11 // pred_check_branch
        %264 = sbr.rel (%p262) target = $region32
      $region31: #{transformer_model_forward.2} parent=11 // pred_region
        _
      $region32: #{transformer_model_forward.2} parent=11 // pred_fallthru
        _
      // Predicated region
      $region33: #{transformer_model_forward.2} parent=11 // pred_check
        %p265 = pneg %p167
      $region34: #{transformer_model_forward.2} parent=11 // pred_check_branch
        %267 = sbr.rel (%p265) target = $region36
      $region35: #{transformer_model_forward.2} parent=11 // pred_region
        _
      $region36: #{transformer_model_forward.2} parent=11 // pred_fallthru
        _
      // Predicated region
      $region37: #{transformer_model_forward.2} parent=11 // pred_check
        %p268 = pneg %p188
      $region38: #{transformer_model_forward.2} parent=11 // pred_check_branch
        %270 = sbr.rel (%p268) target = $region40
      $region39: #{transformer_model_forward.2} parent=11 // pred_region
        _
      $region40: #{transformer_model_forward.2} parent=11 // pred_fallthru
        _
      // Predicated region
      $region41: #{transformer_model_forward.2} parent=11 // pred_check
        %p271 = pneg %p209
      $region42: #{transformer_model_forward.2} parent=11 // pred_check_branch
        %273 = sbr.rel (%p271) target = $region44
      $region43: #{transformer_model_forward.2} parent=11 // pred_region
        _
      $region44: #{transformer_model_forward.2} parent=11 // pred_fallthru
        _
    $region12: #{transformer_model_forward.2} parent=5 // pred_fallthru
      _
    %p274 = scmp.lt.s32.totalorder %s15, 2
    // Predicated region
    $region45: #{transformer_model_forward.2} parent=5 // pred_check
      %p275 = pneg %p274
    $region46: #{transformer_model_forward.2} parent=5 // pred_check_branch
      %277 = sbr.rel (%p275) target = $region48
    $region47: #{transformer_model_forward.2} parent=5 // pred_region
      // Predicated region
      $region49: #{transformer_model_forward.2} parent=47 // pred_check
        %p278 = pneg %p35
      $region50: #{transformer_model_forward.2} parent=47 // pred_check_branch
        %280 = sbr.rel (%p278) target = $region52
      $region51: #{transformer_model_forward.2} parent=47 // pred_region
        %s281 = smul.u32 16, %s15
        %p282 = scmp.lt.s32.totalorder %s281, 31
        %s283 = scalar_select %p282, %s281, 31
        %s284 = smul.addr %s283, 2
        %s285 = smul.addr %s284, 8
        %s286 = scalar_lea.vmem %s0, %s285
        %s287 = smul.u32 16, %s15
      $region52: #{transformer_model_forward.2} parent=47 // pred_fallthru
        _
    $region48: #{transformer_model_forward.2} parent=5 // pred_fallthru
      _
    %p288 = scmp.le.s32.totalorder 1, %s15
    %p289 = scmp.lt.s32.totalorder %s15, 3
    %p290 = pnand %p288, %p289
    %p291 = pneg %p290
    // Predicated region
    $region53: #{transformer_model_forward.2} parent=5 // pred_check
      _
    $region54: #{transformer_model_forward.2} parent=5 // pred_check_branch
      %293 = sbr.rel (%p290) target = $region56
    $region55: #{transformer_model_forward.2} parent=5 // pred_region
      %s294 = ssub.s32 %s15, 1
      %s295 = smul.u32 16, %s20
      %p296 = scmp.lt.s32.totalorder %s295, 31
      %s297 = scalar_select %p296, %s295, 31
      %s298 = smul.addr %s297, 2
      %s299 = smul.addr %s298, 8
      %s300 = scalar_lea.vmem %s0, %s299
      %p301 = pneg %p41
      %p302 = pneg %p38
      %p303 = pneg %p62
      %p304 = pneg %p59
      %p305 = pneg %p83
      %p306 = pneg %p80
      %p307 = pneg %p104
      %p308 = pneg %p101
      %p309 = pneg %p125
      %p310 = pneg %p122
      %p311 = pneg %p146
      %p312 = pneg %p143
      %p313 = pneg %p167
      %p314 = pneg %p164
      %p315 = pneg %p188
      %p316 = pneg %p185
      %p317 = pneg %p209
      %p318 = pneg %p206
      %p319 = pneg %p235
      %p320 = pneg %p232
      %s321 = smul.u32 16, %s20
      %p322 = scmp.lt.s32.totalorder %s321, 31
      %s323 = scalar_select %p322, %s321, 31
      %s324 = smul.addr %s323, 2
      %s325 = smul.addr %s324, 4
      %s326 = scalar_lea.vmem %s9, %s325
      %s327 = smul.u32 16, %s20
      %p328 = scmp.lt.s32.totalorder %s327, 31
      %s329 = scalar_select %p328, %s327, 31
      %s330 = smul.addr %s329, 2
      %s331 = smul.addr %s330, 8
      %s332 = scalar_lea.vmem %s0, %s331
      %s333 = smul.u32 16, %s20
      %s334 = smul.u32 16, %s20
      %p335 = scmp.lt.s32.totalorder %s334, 31
      %s336 = scalar_select %p335, %s334, 31
      %s337 = smul.addr %s336, 2
      %s338 = smul.addr %s337, 4
      %s339 = scalar_lea.vmem %s9, %s338
      %s340 = smul.u32 16, %s20
      %v341 = vld [vmem:[%s332] sm:$0xff]
      %v342 = vld [vmem:[%s332 + $0x8] sm:$0xff]
      %v343 = vld [vmem:[%s332 + $0x10] sm:$0xff]
      %v344 = vld [vmem:[%s332 + $0x18] sm:$0xff]
      %v345 = vld [vmem:[%s332 + $0x20] sm:$0xff]
      %v346 = vld [vmem:[%s332 + $0x28] sm:$0xff]
      %v347 = vld [vmem:[%s332 + $0x30] sm:$0xff]
      %v348 = vld [vmem:[%s332 + $0x38] sm:$0xff]
      %v349 = vld [vmem:[%s332 + $0x40] sm:$0xff]
      %v350 = vld [vmem:[%s332 + $0x48] sm:$0xff]
      %v351 = vld [vmem:[%s332 + $0x50] sm:$0xff]
      %v352 = vld [vmem:[%s332 + $0x58] sm:$0xff]
      %v353 = vld [vmem:[%s332 + $0x60] sm:$0xff]
      %v354 = vld [vmem:[%s332 + $0x68] sm:$0xff]
      %v355 = vld [vmem:[%s332 + $0x70] sm:$0xff]
      %v356 = vld [vmem:[%s332 + $0x78] sm:$0xff]
      %v357 = vld [vmem:[%s332 + $0x80] sm:$0xff]
      %v358 = vld [vmem:[%s332 + $0x88] sm:$0xff]
      %v359 = vld [vmem:[%s332 + $0x90] sm:$0xff]
      %v360 = vld [vmem:[%s332 + $0x98] sm:$0xff]
      %v361 = vld [vmem:[%s332 + $0xa0] sm:$0xff]
      %v362 = vld [vmem:[%s332 + $0xa8] sm:$0xff]
      %v363 = vld [vmem:[%s332 + $0xb0] sm:$0xff]
      %v364 = vld [vmem:[%s332 + $0xb8] sm:$0xff]
      %v365 = vld [vmem:[%s332 + $0xc0] sm:$0xff]
      %v366 = vld [vmem:[%s332 + $0xc8] sm:$0xff]
      %v367 = vld [vmem:[%s332 + $0xd0] sm:$0xff]
      %v368 = vld [vmem:[%s332 + $0xd8] sm:$0xff]
      %v369 = vld [vmem:[%s332 + $0xe0] sm:$0xff]
      %v370 = vld [vmem:[%s332 + $0xe8] sm:$0xff]
      %v371 = vld [vmem:[%s332 + $0xf0] sm:$0xff]
      %v372 = vld [vmem:[%s332 + $0xf8] sm:$0xff]
      loop: start=0, step=1, limit=2
      $region57: #{transformer_model_forward.2} parent=55 // loop_pre_header
        _
      $region58: #{transformer_model_forward.2} parent=55 // loop_header
        %s374 = sphi 0, %s378
        %p375 = scmp.ge.s32.totalorder %s374, 2
        %v379 = vphi %v341, %v5902
        %v380 = vphi %v342, %v5903
        %v381 = vphi %v343, %v5904
        %v382 = vphi %v344, %v5905
        %v383 = vphi %v345, %v5906
        %v384 = vphi %v346, %v5907
        %v385 = vphi %v347, %v5908
        %v386 = vphi %v348, %v5909
        %v387 = vphi %v349, %v5910
        %v388 = vphi %v350, %v5911
        %v389 = vphi %v351, %v5912
        %v390 = vphi %v352, %v5913
        %v391 = vphi %v353, %v5914
        %v392 = vphi %v354, %v5915
        %v393 = vphi %v355, %v5916
        %v394 = vphi %v356, %v5917
        %v395 = vphi %v357, %v5918
        %v396 = vphi %v358, %v5919
        %v397 = vphi %v359, %v5920
        %v398 = vphi %v360, %v5921
        %v399 = vphi %v361, %v5922
        %v400 = vphi %v362, %v5923
        %v401 = vphi %v363, %v5924
        %v402 = vphi %v364, %v5925
        %v403 = vphi %v365, %v5926
        %v404 = vphi %v366, %v5927
        %v405 = vphi %v367, %v5928
        %v406 = vphi %v368, %v5929
        %v407 = vphi %v369, %v5930
        %v408 = vphi %v370, %v5931
        %v409 = vphi %v371, %v5932
        %v410 = vphi %v372, %v5933
      $region59: #{transformer_model_forward.2} parent=55 // loop_header_branch
        %377 = sbr.rel (%p375) target = $region63
      $region60: #{transformer_model_forward.2} parent=55 // loop_body
        %s411 = smul.u32 %s374, 2
        %s412 = smul.addr %s411, 8
        %s413 = scalar_lea.vmem %s8, %s412
        %v414 = vld [vmem:[%s413] sm:$0xff]
        %v415 = vld [vmem:[%s413 + $0x8] sm:$0xff]
        %v416 = vpack.c.bf16 %v381, %v379
        %v417 = vpack.c.bf16 %v382, %v380
        %v418 = vpack.c.bf16 %v385, %v383
        %v419 = vpack.c.bf16 %v386, %v384
        %v420 = vpack.c.bf16 %v389, %v387
        %v421 = vpack.c.bf16 %v390, %v388
        %v422 = vpack.c.bf16 %v393, %v391
        %v423 = vpack.c.bf16 %v394, %v392
        %v424 = vpack.c.bf16 %v397, %v395
        %v425 = vpack.c.bf16 %v398, %v396
        %v426 = vpack.c.bf16 %v401, %v399
        %v427 = vpack.c.bf16 %v402, %v400
        %v428 = vpack.c.bf16 %v405, %v403
        %v429 = vpack.c.bf16 %v406, %v404
        %v430 = vpack.c.bf16 %v409, %v407
        %v431 = vpack.c.bf16 %v410, %v408
        %s432 = smul.u32 %s374, 192
        %s433 = smul.addr %s432, 4
        %s434 = scalar_lea.vmem %s2, %s433
        %v435 = vld [vmem:[%s434] sm:$0xff]
        %v436 = vld [vmem:[%s434 + $0x8] sm:$0xff]
        %v437 = vld [vmem:[%s434 + $0x10] sm:$0xff]
        %v438 = vld [vmem:[%s434 + $0x18] sm:$0xff]
        %v439 = vld [vmem:[%s434 + $0x20] sm:$0xff]
        %v440 = vld [vmem:[%s434 + $0x28] sm:$0xff]
        %v441 = vld [vmem:[%s434 + $0x30] sm:$0xff]
        %v442 = vld [vmem:[%s434 + $0x38] sm:$0xff]
        %v443 = vld [vmem:[%s434 + $0x40] sm:$0xff]
        %v444 = vld [vmem:[%s434 + $0x48] sm:$0xff]
        %v445 = vld [vmem:[%s434 + $0x50] sm:$0xff]
        %v446 = vld [vmem:[%s434 + $0x58] sm:$0xff]
        %v447 = vld [vmem:[%s434 + $0x60] sm:$0xff]
        %v448 = vld [vmem:[%s434 + $0x68] sm:$0xff]
        %v449 = vld [vmem:[%s434 + $0x70] sm:$0xff]
        %v450 = vld [vmem:[%s434 + $0x78] sm:$0xff]
        %v451 = vld [vmem:[%s434 + $0x80] sm:$0xff]
        %v452 = vld [vmem:[%s434 + $0x88] sm:$0xff]
        %v453 = vld [vmem:[%s434 + $0x90] sm:$0xff]
        %v454 = vld [vmem:[%s434 + $0x98] sm:$0xff]
        %v455 = vld [vmem:[%s434 + $0xa0] sm:$0xff]
        %v456 = vld [vmem:[%s434 + $0xa8] sm:$0xff]
        %v457 = vld [vmem:[%s434 + $0xb0] sm:$0xff]
        %v458 = vld [vmem:[%s434 + $0xb8] sm:$0xff]
        %v459 = vld [vmem:[%s434 + $0xc0] sm:$0xff]
        %v460 = vld [vmem:[%s434 + $0xc8] sm:$0xff]
        %v461 = vld [vmem:[%s434 + $0xd0] sm:$0xff]
        %v462 = vld [vmem:[%s434 + $0xd8] sm:$0xff]
        %v463 = vld [vmem:[%s434 + $0xe0] sm:$0xff]
        %v464 = vld [vmem:[%s434 + $0xe8] sm:$0xff]
        %v465 = vld [vmem:[%s434 + $0xf0] sm:$0xff]
        %v466 = vld [vmem:[%s434 + $0xf8] sm:$0xff]
        %v467 = vld [vmem:[%s434 + $0x100] sm:$0xff]
        %v468 = vld [vmem:[%s434 + $0x108] sm:$0xff]
        %v469 = vld [vmem:[%s434 + $0x110] sm:$0xff]
        %v470 = vld [vmem:[%s434 + $0x118] sm:$0xff]
        %v471 = vld [vmem:[%s434 + $0x120] sm:$0xff]
        %v472 = vld [vmem:[%s434 + $0x128] sm:$0xff]
        %v473 = vld [vmem:[%s434 + $0x130] sm:$0xff]
        %v474 = vld [vmem:[%s434 + $0x138] sm:$0xff]
        %v475 = vld [vmem:[%s434 + $0x140] sm:$0xff]
        %v476 = vld [vmem:[%s434 + $0x148] sm:$0xff]
        %v477 = vld [vmem:[%s434 + $0x150] sm:$0xff]
        %v478 = vld [vmem:[%s434 + $0x158] sm:$0xff]
        %v479 = vld [vmem:[%s434 + $0x160] sm:$0xff]
        %v480 = vld [vmem:[%s434 + $0x168] sm:$0xff]
        %v481 = vld [vmem:[%s434 + $0x170] sm:$0xff]
        %v482 = vld [vmem:[%s434 + $0x178] sm:$0xff]
        %v483 = vld [vmem:[%s434 + $0x180] sm:$0xff]
        %v484 = vld [vmem:[%s434 + $0x188] sm:$0xff]
        %v485 = vld [vmem:[%s434 + $0x190] sm:$0xff]
        %v486 = vld [vmem:[%s434 + $0x198] sm:$0xff]
        %v487 = vld [vmem:[%s434 + $0x1a0] sm:$0xff]
        %v488 = vld [vmem:[%s434 + $0x1a8] sm:$0xff]
        %v489 = vld [vmem:[%s434 + $0x1b0] sm:$0xff]
        %v490 = vld [vmem:[%s434 + $0x1b8] sm:$0xff]
        %v491 = vld [vmem:[%s434 + $0x1c0] sm:$0xff]
        %v492 = vld [vmem:[%s434 + $0x1c8] sm:$0xff]
        %v493 = vld [vmem:[%s434 + $0x1d0] sm:$0xff]
        %v494 = vld [vmem:[%s434 + $0x1d8] sm:$0xff]
        %v495 = vld [vmem:[%s434 + $0x1e0] sm:$0xff]
        %v496 = vld [vmem:[%s434 + $0x1e8] sm:$0xff]
        %v497 = vld [vmem:[%s434 + $0x1f0] sm:$0xff]
        %v498 = vld [vmem:[%s434 + $0x1f8] sm:$0xff]
        %v499 = vld [vmem:[%s434 + $0x200] sm:$0xff]
        %v500 = vld [vmem:[%s434 + $0x208] sm:$0xff]
        %v501 = vld [vmem:[%s434 + $0x210] sm:$0xff]
        %v502 = vld [vmem:[%s434 + $0x218] sm:$0xff]
        %v503 = vld [vmem:[%s434 + $0x220] sm:$0xff]
        %v504 = vld [vmem:[%s434 + $0x228] sm:$0xff]
        %v505 = vld [vmem:[%s434 + $0x230] sm:$0xff]
        %v506 = vld [vmem:[%s434 + $0x238] sm:$0xff]
        %v507 = vld [vmem:[%s434 + $0x240] sm:$0xff]
        %v508 = vld [vmem:[%s434 + $0x248] sm:$0xff]
        %v509 = vld [vmem:[%s434 + $0x250] sm:$0xff]
        %v510 = vld [vmem:[%s434 + $0x258] sm:$0xff]
        %v511 = vld [vmem:[%s434 + $0x260] sm:$0xff]
        %v512 = vld [vmem:[%s434 + $0x268] sm:$0xff]
        %v513 = vld [vmem:[%s434 + $0x270] sm:$0xff]
        %v514 = vld [vmem:[%s434 + $0x278] sm:$0xff]
        %v515 = vld [vmem:[%s434 + $0x280] sm:$0xff]
        %v516 = vld [vmem:[%s434 + $0x288] sm:$0xff]
        %v517 = vld [vmem:[%s434 + $0x290] sm:$0xff]
        %v518 = vld [vmem:[%s434 + $0x298] sm:$0xff]
        %v519 = vld [vmem:[%s434 + $0x2a0] sm:$0xff]
        %v520 = vld [vmem:[%s434 + $0x2a8] sm:$0xff]
        %v521 = vld [vmem:[%s434 + $0x2b0] sm:$0xff]
        %v522 = vld [vmem:[%s434 + $0x2b8] sm:$0xff]
        %v523 = vld [vmem:[%s434 + $0x2c0] sm:$0xff]
        %v524 = vld [vmem:[%s434 + $0x2c8] sm:$0xff]
        %v525 = vld [vmem:[%s434 + $0x2d0] sm:$0xff]
        %v526 = vld [vmem:[%s434 + $0x2d8] sm:$0xff]
        %v527 = vld [vmem:[%s434 + $0x2e0] sm:$0xff]
        %v528 = vld [vmem:[%s434 + $0x2e8] sm:$0xff]
        %v529 = vld [vmem:[%s434 + $0x2f0] sm:$0xff]
        %v530 = vld [vmem:[%s434 + $0x2f8] sm:$0xff]
        %s531 = smul.u32 %s374, 6
        %s532 = scalar_lea.vmem %s3, %s531
        %v533 = vld [vmem:[%s532] sm:$0x3f]
        %v535 = vperm.slane %v533, 0
        %v536 = vperm.slane %v533, 1
        %v537 = vperm.slane %v533, 2
        %v538 = vperm.slane %v533, 3
        %v539 = vperm.slane %v533, 4
        %v540 = vperm.slane %v533, 5
        %v643 = vunpack.c.l.b16 %v435
        %v644 = vunpack.c.h.b16 %v435
        %v645 = vunpack.c.l.b16 %v436
        %v646 = vunpack.c.h.b16 %v436
        %v647 = vunpack.c.l.b16 %v437
        %v648 = vunpack.c.h.b16 %v437
        %v649 = vunpack.c.l.b16 %v438
        %v650 = vunpack.c.h.b16 %v438
        %v651 = vunpack.c.l.b16 %v439
        %v652 = vunpack.c.h.b16 %v439
        %v653 = vunpack.c.l.b16 %v440
        %v654 = vunpack.c.h.b16 %v440
        %v655 = vunpack.c.l.b16 %v441
        %v656 = vunpack.c.h.b16 %v441
        %v657 = vunpack.c.l.b16 %v442
        %v658 = vunpack.c.h.b16 %v442
        %v659 = vunpack.c.l.b16 %v443
        %v660 = vunpack.c.h.b16 %v443
        %v661 = vunpack.c.l.b16 %v444
        %v662 = vunpack.c.h.b16 %v444
        %v663 = vunpack.c.l.b16 %v445
        %v664 = vunpack.c.h.b16 %v445
        %v665 = vunpack.c.l.b16 %v446
        %v666 = vunpack.c.h.b16 %v446
        %v667 = vunpack.c.l.b16 %v447
        %v668 = vunpack.c.h.b16 %v447
        %v669 = vunpack.c.l.b16 %v448
        %v670 = vunpack.c.h.b16 %v448
        %v671 = vunpack.c.l.b16 %v449
        %v672 = vunpack.c.h.b16 %v449
        %v673 = vunpack.c.l.b16 %v450
        %v674 = vunpack.c.h.b16 %v450
        %v675 = vunpack.c.l.b16 %v451
        %v676 = vunpack.c.h.b16 %v451
        %v677 = vunpack.c.l.b16 %v452
        %v678 = vunpack.c.h.b16 %v452
        %v679 = vunpack.c.l.b16 %v453
        %v680 = vunpack.c.h.b16 %v453
        %v681 = vunpack.c.l.b16 %v454
        %v682 = vunpack.c.h.b16 %v454
        %v683 = vunpack.c.l.b16 %v455
        %v684 = vunpack.c.h.b16 %v455
        %v685 = vunpack.c.l.b16 %v456
        %v686 = vunpack.c.h.b16 %v456
        %v687 = vunpack.c.l.b16 %v457
        %v688 = vunpack.c.h.b16 %v457
        %v689 = vunpack.c.l.b16 %v458
        %v690 = vunpack.c.h.b16 %v458
        %v691 = vunpack.c.l.b16 %v459
        %v692 = vunpack.c.h.b16 %v459
        %v693 = vunpack.c.l.b16 %v460
        %v694 = vunpack.c.h.b16 %v460
        %v695 = vunpack.c.l.b16 %v461
        %v696 = vunpack.c.h.b16 %v461
        %v697 = vunpack.c.l.b16 %v462
        %v698 = vunpack.c.h.b16 %v462
        %v699 = vunpack.c.l.b16 %v463
        %v700 = vunpack.c.h.b16 %v463
        %v701 = vunpack.c.l.b16 %v464
        %v702 = vunpack.c.h.b16 %v464
        %v703 = vunpack.c.l.b16 %v465
        %v704 = vunpack.c.h.b16 %v465
        %v705 = vunpack.c.l.b16 %v466
        %v706 = vunpack.c.h.b16 %v466
        %v707 = vunpack.c.l.b16 %v467
        %v708 = vunpack.c.h.b16 %v467
        %v709 = vunpack.c.l.b16 %v468
        %v710 = vunpack.c.h.b16 %v468
        %v711 = vunpack.c.l.b16 %v469
        %v712 = vunpack.c.h.b16 %v469
        %v713 = vunpack.c.l.b16 %v470
        %v714 = vunpack.c.h.b16 %v470
        %v715 = vunpack.c.l.b16 %v471
        %v716 = vunpack.c.h.b16 %v471
        %v717 = vunpack.c.l.b16 %v472
        %v718 = vunpack.c.h.b16 %v472
        %v719 = vunpack.c.l.b16 %v473
        %v720 = vunpack.c.h.b16 %v473
        %v721 = vunpack.c.l.b16 %v474
        %v722 = vunpack.c.h.b16 %v474
        %v723 = vunpack.c.l.b16 %v475
        %v724 = vunpack.c.h.b16 %v475
        %v725 = vunpack.c.l.b16 %v476
        %v726 = vunpack.c.h.b16 %v476
        %v727 = vunpack.c.l.b16 %v477
        %v728 = vunpack.c.h.b16 %v477
        %v729 = vunpack.c.l.b16 %v478
        %v730 = vunpack.c.h.b16 %v478
        %v731 = vunpack.c.l.b16 %v479
        %v732 = vunpack.c.h.b16 %v479
        %v733 = vunpack.c.l.b16 %v480
        %v734 = vunpack.c.h.b16 %v480
        %v735 = vunpack.c.l.b16 %v481
        %v736 = vunpack.c.h.b16 %v481
        %v737 = vunpack.c.l.b16 %v482
        %v738 = vunpack.c.h.b16 %v482
        %v739 = vunpack.c.l.b16 %v483
        %v740 = vunpack.c.h.b16 %v483
        %v741 = vunpack.c.l.b16 %v484
        %v742 = vunpack.c.h.b16 %v484
        %v743 = vunpack.c.l.b16 %v485
        %v744 = vunpack.c.h.b16 %v485
        %v745 = vunpack.c.l.b16 %v486
        %v746 = vunpack.c.h.b16 %v486
        %v747 = vunpack.c.l.b16 %v487
        %v748 = vunpack.c.h.b16 %v487
        %v749 = vunpack.c.l.b16 %v488
        %v750 = vunpack.c.h.b16 %v488
        %v751 = vunpack.c.l.b16 %v489
        %v752 = vunpack.c.h.b16 %v489
        %v753 = vunpack.c.l.b16 %v490
        %v754 = vunpack.c.h.b16 %v490
        %v755 = vunpack.c.l.b16 %v491
        %v756 = vunpack.c.h.b16 %v491
        %v757 = vunpack.c.l.b16 %v492
        %v758 = vunpack.c.h.b16 %v492
        %v759 = vunpack.c.l.b16 %v493
        %v760 = vunpack.c.h.b16 %v493
        %v761 = vunpack.c.l.b16 %v494
        %v762 = vunpack.c.h.b16 %v494
        %v763 = vunpack.c.l.b16 %v495
        %v764 = vunpack.c.h.b16 %v495
        %v765 = vunpack.c.l.b16 %v496
        %v766 = vunpack.c.h.b16 %v496
        %v767 = vunpack.c.l.b16 %v497
        %v768 = vunpack.c.h.b16 %v497
        %v769 = vunpack.c.l.b16 %v498
        %v770 = vunpack.c.h.b16 %v498
        %v771 = vunpack.c.l.b16 %v499
        %v772 = vunpack.c.h.b16 %v499
        %v773 = vunpack.c.l.b16 %v500
        %v774 = vunpack.c.h.b16 %v500
        %v775 = vunpack.c.l.b16 %v501
        %v776 = vunpack.c.h.b16 %v501
        %v777 = vunpack.c.l.b16 %v502
        %v778 = vunpack.c.h.b16 %v502
        %v779 = vunpack.c.l.b16 %v503
        %v780 = vunpack.c.h.b16 %v503
        %v781 = vunpack.c.l.b16 %v504
        %v782 = vunpack.c.h.b16 %v504
        %v783 = vunpack.c.l.b16 %v505
        %v784 = vunpack.c.h.b16 %v505
        %v785 = vunpack.c.l.b16 %v506
        %v786 = vunpack.c.h.b16 %v506
        %v787 = vunpack.c.l.b16 %v507
        %v788 = vunpack.c.h.b16 %v507
        %v789 = vunpack.c.l.b16 %v508
        %v790 = vunpack.c.h.b16 %v508
        %v791 = vunpack.c.l.b16 %v509
        %v792 = vunpack.c.h.b16 %v509
        %v793 = vunpack.c.l.b16 %v510
        %v794 = vunpack.c.h.b16 %v510
        %v795 = vunpack.c.l.b16 %v511
        %v796 = vunpack.c.h.b16 %v511
        %v797 = vunpack.c.l.b16 %v512
        %v798 = vunpack.c.h.b16 %v512
        %v799 = vunpack.c.l.b16 %v513
        %v800 = vunpack.c.h.b16 %v513
        %v801 = vunpack.c.l.b16 %v514
        %v802 = vunpack.c.h.b16 %v514
        %v803 = vunpack.c.l.b16 %v515
        %v804 = vunpack.c.h.b16 %v515
        %v805 = vunpack.c.l.b16 %v516
        %v806 = vunpack.c.h.b16 %v516
        %v807 = vunpack.c.l.b16 %v517
        %v808 = vunpack.c.h.b16 %v517
        %v809 = vunpack.c.l.b16 %v518
        %v810 = vunpack.c.h.b16 %v518
        %v811 = vunpack.c.l.b16 %v519
        %v812 = vunpack.c.h.b16 %v519
        %v813 = vunpack.c.l.b16 %v520
        %v814 = vunpack.c.h.b16 %v520
        %v815 = vunpack.c.l.b16 %v521
        %v816 = vunpack.c.h.b16 %v521
        %v817 = vunpack.c.l.b16 %v522
        %v818 = vunpack.c.h.b16 %v522
        %v819 = vunpack.c.l.b16 %v523
        %v820 = vunpack.c.h.b16 %v523
        %v821 = vunpack.c.l.b16 %v524
        %v822 = vunpack.c.h.b16 %v524
        %v823 = vunpack.c.l.b16 %v525
        %v824 = vunpack.c.h.b16 %v525
        %v825 = vunpack.c.l.b16 %v526
        %v826 = vunpack.c.h.b16 %v526
        %v827 = vunpack.c.l.b16 %v527
        %v828 = vunpack.c.h.b16 %v527
        %v829 = vunpack.c.l.b16 %v528
        %v830 = vunpack.c.h.b16 %v528
        %v831 = vunpack.c.l.b16 %v529
        %v832 = vunpack.c.h.b16 %v529
        %v833 = vunpack.c.l.b16 %v530
        %v834 = vunpack.c.h.b16 %v530
        %v835 = vpack.c.b16 %v649, %v643
        %v836 = vpack.c.b16 %v650, %v644
        %v837 = vpack.c.b16 %v651, %v645
        %v838 = vpack.c.b16 %v652, %v646
        %v839 = vpack.c.b16 %v653, %v647
        %v840 = vpack.c.b16 %v654, %v648
        %v841 = vpack.c.b16 %v661, %v655
        %v842 = vpack.c.b16 %v662, %v656
        %v843 = vpack.c.b16 %v663, %v657
        %v844 = vpack.c.b16 %v664, %v658
        %v845 = vpack.c.b16 %v665, %v659
        %v846 = vpack.c.b16 %v666, %v660
        %v847 = vpack.c.b16 %v673, %v667
        %v848 = vpack.c.b16 %v674, %v668
        %v849 = vpack.c.b16 %v675, %v669
        %v850 = vpack.c.b16 %v676, %v670
        %v851 = vpack.c.b16 %v677, %v671
        %v852 = vpack.c.b16 %v678, %v672
        %v853 = vpack.c.b16 %v685, %v679
        %v854 = vpack.c.b16 %v686, %v680
        %v855 = vpack.c.b16 %v687, %v681
        %v856 = vpack.c.b16 %v688, %v682
        %v857 = vpack.c.b16 %v689, %v683
        %v858 = vpack.c.b16 %v690, %v684
        %v859 = vpack.c.b16 %v697, %v691
        %v860 = vpack.c.b16 %v698, %v692
        %v861 = vpack.c.b16 %v699, %v693
        %v862 = vpack.c.b16 %v700, %v694
        %v863 = vpack.c.b16 %v701, %v695
        %v864 = vpack.c.b16 %v702, %v696
        %v865 = vpack.c.b16 %v709, %v703
        %v866 = vpack.c.b16 %v710, %v704
        %v867 = vpack.c.b16 %v711, %v705
        %v868 = vpack.c.b16 %v712, %v706
        %v869 = vpack.c.b16 %v713, %v707
        %v870 = vpack.c.b16 %v714, %v708
        %v871 = vpack.c.b16 %v721, %v715
        %v872 = vpack.c.b16 %v722, %v716
        %v873 = vpack.c.b16 %v723, %v717
        %v874 = vpack.c.b16 %v724, %v718
        %v875 = vpack.c.b16 %v725, %v719
        %v876 = vpack.c.b16 %v726, %v720
        %v877 = vpack.c.b16 %v733, %v727
        %v878 = vpack.c.b16 %v734, %v728
        %v879 = vpack.c.b16 %v735, %v729
        %v880 = vpack.c.b16 %v736, %v730
        %v881 = vpack.c.b16 %v737, %v731
        %v882 = vpack.c.b16 %v738, %v732
        %v883 = vpack.c.b16 %v745, %v739
        %v884 = vpack.c.b16 %v746, %v740
        %v885 = vpack.c.b16 %v747, %v741
        %v886 = vpack.c.b16 %v748, %v742
        %v887 = vpack.c.b16 %v749, %v743
        %v888 = vpack.c.b16 %v750, %v744
        %v889 = vpack.c.b16 %v757, %v751
        %v890 = vpack.c.b16 %v758, %v752
        %v891 = vpack.c.b16 %v759, %v753
        %v892 = vpack.c.b16 %v760, %v754
        %v893 = vpack.c.b16 %v761, %v755
        %v894 = vpack.c.b16 %v762, %v756
        %v895 = vpack.c.b16 %v769, %v763
        %v896 = vpack.c.b16 %v770, %v764
        %v897 = vpack.c.b16 %v771, %v765
        %v898 = vpack.c.b16 %v772, %v766
        %v899 = vpack.c.b16 %v773, %v767
        %v900 = vpack.c.b16 %v774, %v768
        %v901 = vpack.c.b16 %v781, %v775
        %v902 = vpack.c.b16 %v782, %v776
        %v903 = vpack.c.b16 %v783, %v777
        %v904 = vpack.c.b16 %v784, %v778
        %v905 = vpack.c.b16 %v785, %v779
        %v906 = vpack.c.b16 %v786, %v780
        %v907 = vpack.c.b16 %v793, %v787
        %v908 = vpack.c.b16 %v794, %v788
        %v909 = vpack.c.b16 %v795, %v789
        %v910 = vpack.c.b16 %v796, %v790
        %v911 = vpack.c.b16 %v797, %v791
        %v912 = vpack.c.b16 %v798, %v792
        %v913 = vpack.c.b16 %v805, %v799
        %v914 = vpack.c.b16 %v806, %v800
        %v915 = vpack.c.b16 %v807, %v801
        %v916 = vpack.c.b16 %v808, %v802
        %v917 = vpack.c.b16 %v809, %v803
        %v918 = vpack.c.b16 %v810, %v804
        %v919 = vpack.c.b16 %v817, %v811
        %v920 = vpack.c.b16 %v818, %v812
        %v921 = vpack.c.b16 %v819, %v813
        %v922 = vpack.c.b16 %v820, %v814
        %v923 = vpack.c.b16 %v821, %v815
        %v924 = vpack.c.b16 %v822, %v816
        %v925 = vpack.c.b16 %v829, %v823
        %v926 = vpack.c.b16 %v830, %v824
        %v927 = vpack.c.b16 %v831, %v825
        %v928 = vpack.c.b16 %v832, %v826
        %v929 = vpack.c.b16 %v833, %v827
        %v930 = vpack.c.b16 %v834, %v828
        %1027 = vmatpush.bf16.msra.mxu0 %v877
        %1028 = vmatpush.bf16.msra.mxu0 %v871
        %1029 = vmatpush.bf16.msra.mxu0 %v865
        %1030 = vmatpush.bf16.msra.mxu0 %v859
        %1031 = vmatpush.bf16.msra.mxu0 %v853
        %1032 = vmatpush.bf16.msra.mxu0 %v847
        %1033 = vmatpush.bf16.msra.mxu0 %v841
        %1034 = vmatpush.bf16.msra.mxu0 %v835
        %1035 = vmatmul.bf16.gmra.mxu0 %v416
        %v1036 = vpop.f32.mrf.mxu0
        %v1037 = vadd.f32 %v535, %v1036
        %v1038 = vpop.f32.mrf.mxu0
        %v1039 = vadd.f32 %v535, %v1038
        %1040 = vmatmul.bf16.gmra.mxu0 %v418
        %v1041 = vpop.f32.mrf.mxu0
        %v1042 = vadd.f32 %v535, %v1041
        %v1043 = vpop.f32.mrf.mxu0
        %v1044 = vadd.f32 %v535, %v1043
        %1045 = vmatmul.bf16.gmra.mxu0 %v420
        %v1046 = vpop.f32.mrf.mxu0
        %v1047 = vadd.f32 %v535, %v1046
        %v1048 = vpop.f32.mrf.mxu0
        %v1049 = vadd.f32 %v535, %v1048
        %1050 = vmatmul.bf16.gmra.mxu0 %v422
        %v1051 = vpop.f32.mrf.mxu0
        %v1052 = vadd.f32 %v535, %v1051
        %v1053 = vpop.f32.mrf.mxu0
        %v1054 = vadd.f32 %v535, %v1053
        %1055 = vmatmul.bf16.gmra.mxu0 %v424
        %v1056 = vpop.f32.mrf.mxu0
        %v1057 = vadd.f32 %v535, %v1056
        %v1058 = vpop.f32.mrf.mxu0
        %v1059 = vadd.f32 %v535, %v1058
        %1060 = vmatmul.bf16.gmra.mxu0 %v426
        %v1061 = vpop.f32.mrf.mxu0
        %v1062 = vadd.f32 %v535, %v1061
        %v1063 = vpop.f32.mrf.mxu0
        %v1064 = vadd.f32 %v535, %v1063
        %1065 = vmatmul.bf16.gmra.mxu0 %v428
        %v1066 = vpop.f32.mrf.mxu0
        %v1067 = vadd.f32 %v535, %v1066
        %v1068 = vpop.f32.mrf.mxu0
        %v1069 = vadd.f32 %v535, %v1068
        %1070 = vmatmul.bf16.gmra.mxu0 %v430
        %v1071 = vpop.f32.mrf.mxu0
        %v1072 = vadd.f32 %v535, %v1071
        %v1073 = vpop.f32.mrf.mxu0
        %v1074 = vadd.f32 %v535, %v1073
        %1075 = vdwg.mxu0
        %1076 = vmatpush.bf16.msra.mxu0 %v925
        %1077 = vmatpush.bf16.msra.mxu0 %v919
        %1078 = vmatpush.bf16.msra.mxu0 %v913
        %1079 = vmatpush.bf16.msra.mxu0 %v907
        %1080 = vmatpush.bf16.msra.mxu0 %v901
        %1081 = vmatpush.bf16.msra.mxu0 %v895
        %1082 = vmatpush.bf16.msra.mxu0 %v889
        %1083 = vmatpush.bf16.msra.mxu0 %v883
        %1084 = vmatmul.bf16.gmra.mxu0 %v417
        %v1085 = vpop.f32.mrf.mxu0
        %v1086 = vadd.f32 %v1037, %v1085
        %v1087 = vpop.f32.mrf.mxu0
        %v1088 = vadd.f32 %v1039, %v1087
        %1089 = vmatmul.bf16.gmra.mxu0 %v419
        %v1090 = vpop.f32.mrf.mxu0
        %v1091 = vadd.f32 %v1042, %v1090
        %v1092 = vpop.f32.mrf.mxu0
        %v1093 = vadd.f32 %v1044, %v1092
        %1094 = vmatmul.bf16.gmra.mxu0 %v421
        %v1095 = vpop.f32.mrf.mxu0
        %v1096 = vadd.f32 %v1047, %v1095
        %v1097 = vpop.f32.mrf.mxu0
        %v1098 = vadd.f32 %v1049, %v1097
        %1099 = vmatmul.bf16.gmra.mxu0 %v423
        %v1100 = vpop.f32.mrf.mxu0
        %v1101 = vadd.f32 %v1052, %v1100
        %v1102 = vpop.f32.mrf.mxu0
        %v1103 = vadd.f32 %v1054, %v1102
        %1104 = vmatmul.bf16.gmra.mxu0 %v425
        %v1105 = vpop.f32.mrf.mxu0
        %v1106 = vadd.f32 %v1057, %v1105
        %v1107 = vpop.f32.mrf.mxu0
        %v1108 = vadd.f32 %v1059, %v1107
        %1109 = vmatmul.bf16.gmra.mxu0 %v427
        %v1110 = vpop.f32.mrf.mxu0
        %v1111 = vadd.f32 %v1062, %v1110
        %v1112 = vpop.f32.mrf.mxu0
        %v1113 = vadd.f32 %v1064, %v1112
        %1114 = vmatmul.bf16.gmra.mxu0 %v429
        %v1115 = vpop.f32.mrf.mxu0
        %v1116 = vadd.f32 %v1067, %v1115
        %v1117 = vpop.f32.mrf.mxu0
        %v1118 = vadd.f32 %v1069, %v1117
        %1119 = vmatmul.bf16.gmra.mxu0 %v431
        %v1120 = vpop.f32.mrf.mxu0
        %v1121 = vadd.f32 %v1072, %v1120
        %v1122 = vpop.f32.mrf.mxu0
        %v1123 = vadd.f32 %v1074, %v1122
        %1124 = vdwg.mxu0
        %1125 = vmatpush.bf16.msra.mxu0 %v878
        %1126 = vmatpush.bf16.msra.mxu0 %v872
        %1127 = vmatpush.bf16.msra.mxu0 %v866
        %1128 = vmatpush.bf16.msra.mxu0 %v860
        %1129 = vmatpush.bf16.msra.mxu0 %v854
        %1130 = vmatpush.bf16.msra.mxu0 %v848
        %1131 = vmatpush.bf16.msra.mxu0 %v842
        %1132 = vmatpush.bf16.msra.mxu0 %v836
        %1133 = vmatmul.bf16.gmra.mxu0 %v416
        %v1134 = vpop.f32.mrf.mxu0
        %v1135 = vadd.f32 %v536, %v1134
        %v1136 = vpop.f32.mrf.mxu0
        %v1137 = vadd.f32 %v536, %v1136
        %1138 = vmatmul.bf16.gmra.mxu0 %v418
        %v1139 = vpop.f32.mrf.mxu0
        %v1140 = vadd.f32 %v536, %v1139
        %v1141 = vpop.f32.mrf.mxu0
        %v1142 = vadd.f32 %v536, %v1141
        %1143 = vmatmul.bf16.gmra.mxu0 %v420
        %v1144 = vpop.f32.mrf.mxu0
        %v1145 = vadd.f32 %v536, %v1144
        %v1146 = vpop.f32.mrf.mxu0
        %v1147 = vadd.f32 %v536, %v1146
        %1148 = vmatmul.bf16.gmra.mxu0 %v422
        %v1149 = vpop.f32.mrf.mxu0
        %v1150 = vadd.f32 %v536, %v1149
        %v1151 = vpop.f32.mrf.mxu0
        %v1152 = vadd.f32 %v536, %v1151
        %1153 = vmatmul.bf16.gmra.mxu0 %v424
        %v1154 = vpop.f32.mrf.mxu0
        %v1155 = vadd.f32 %v536, %v1154
        %v1156 = vpop.f32.mrf.mxu0
        %v1157 = vadd.f32 %v536, %v1156
        %1158 = vmatmul.bf16.gmra.mxu0 %v426
        %v1159 = vpop.f32.mrf.mxu0
        %v1160 = vadd.f32 %v536, %v1159
        %v1161 = vpop.f32.mrf.mxu0
        %v1162 = vadd.f32 %v536, %v1161
        %1163 = vmatmul.bf16.gmra.mxu0 %v428
        %v1164 = vpop.f32.mrf.mxu0
        %v1165 = vadd.f32 %v536, %v1164
        %v1166 = vpop.f32.mrf.mxu0
        %v1167 = vadd.f32 %v536, %v1166
        %1168 = vmatmul.bf16.gmra.mxu0 %v430
        %v1169 = vpop.f32.mrf.mxu0
        %v1170 = vadd.f32 %v536, %v1169
        %v1171 = vpop.f32.mrf.mxu0
        %v1172 = vadd.f32 %v536, %v1171
        %1173 = vdwg.mxu0
        %1174 = vmatpush.bf16.msra.mxu0 %v926
        %1175 = vmatpush.bf16.msra.mxu0 %v920
        %1176 = vmatpush.bf16.msra.mxu0 %v914
        %1177 = vmatpush.bf16.msra.mxu0 %v908
        %1178 = vmatpush.bf16.msra.mxu0 %v902
        %1179 = vmatpush.bf16.msra.mxu0 %v896
        %1180 = vmatpush.bf16.msra.mxu0 %v890
        %1181 = vmatpush.bf16.msra.mxu0 %v884
        %1182 = vmatmul.bf16.gmra.mxu0 %v417
        %v1183 = vpop.f32.mrf.mxu0
        %v1184 = vadd.f32 %v1135, %v1183
        %v1185 = vpop.f32.mrf.mxu0
        %v1186 = vadd.f32 %v1137, %v1185
        %1187 = vmatmul.bf16.gmra.mxu0 %v419
        %v1188 = vpop.f32.mrf.mxu0
        %v1189 = vadd.f32 %v1140, %v1188
        %v1190 = vpop.f32.mrf.mxu0
        %v1191 = vadd.f32 %v1142, %v1190
        %1192 = vmatmul.bf16.gmra.mxu0 %v421
        %v1193 = vpop.f32.mrf.mxu0
        %v1194 = vadd.f32 %v1145, %v1193
        %v1195 = vpop.f32.mrf.mxu0
        %v1196 = vadd.f32 %v1147, %v1195
        %1197 = vmatmul.bf16.gmra.mxu0 %v423
        %v1198 = vpop.f32.mrf.mxu0
        %v1199 = vadd.f32 %v1150, %v1198
        %v1200 = vpop.f32.mrf.mxu0
        %v1201 = vadd.f32 %v1152, %v1200
        %1202 = vmatmul.bf16.gmra.mxu0 %v425
        %v1203 = vpop.f32.mrf.mxu0
        %v1204 = vadd.f32 %v1155, %v1203
        %v1205 = vpop.f32.mrf.mxu0
        %v1206 = vadd.f32 %v1157, %v1205
        %1207 = vmatmul.bf16.gmra.mxu0 %v427
        %v1208 = vpop.f32.mrf.mxu0
        %v1209 = vadd.f32 %v1160, %v1208
        %v1210 = vpop.f32.mrf.mxu0
        %v1211 = vadd.f32 %v1162, %v1210
        %1212 = vmatmul.bf16.gmra.mxu0 %v429
        %v1213 = vpop.f32.mrf.mxu0
        %v1214 = vadd.f32 %v1165, %v1213
        %v1215 = vpop.f32.mrf.mxu0
        %v1216 = vadd.f32 %v1167, %v1215
        %1217 = vmatmul.bf16.gmra.mxu0 %v431
        %v1218 = vpop.f32.mrf.mxu0
        %v1219 = vadd.f32 %v1170, %v1218
        %v1220 = vpop.f32.mrf.mxu0
        %v1221 = vadd.f32 %v1172, %v1220
        %1222 = vdwg.mxu0
        %1223 = vmatpush.bf16.msra.mxu0 %v879
        %1224 = vmatpush.bf16.msra.mxu0 %v873
        %1225 = vmatpush.bf16.msra.mxu0 %v867
        %1226 = vmatpush.bf16.msra.mxu0 %v861
        %1227 = vmatpush.bf16.msra.mxu0 %v855
        %1228 = vmatpush.bf16.msra.mxu0 %v849
        %1229 = vmatpush.bf16.msra.mxu0 %v843
        %1230 = vmatpush.bf16.msra.mxu0 %v837
        %1231 = vmatmul.bf16.gmra.mxu0 %v416
        %v1232 = vpop.f32.mrf.mxu0
        %v1233 = vadd.f32 %v537, %v1232
        %v1234 = vpop.f32.mrf.mxu0
        %v1235 = vadd.f32 %v537, %v1234
        %1236 = vmatmul.bf16.gmra.mxu0 %v418
        %v1237 = vpop.f32.mrf.mxu0
        %v1238 = vadd.f32 %v537, %v1237
        %v1239 = vpop.f32.mrf.mxu0
        %v1240 = vadd.f32 %v537, %v1239
        %1241 = vmatmul.bf16.gmra.mxu0 %v420
        %v1242 = vpop.f32.mrf.mxu0
        %v1243 = vadd.f32 %v537, %v1242
        %v1244 = vpop.f32.mrf.mxu0
        %v1245 = vadd.f32 %v537, %v1244
        %1246 = vmatmul.bf16.gmra.mxu0 %v422
        %v1247 = vpop.f32.mrf.mxu0
        %v1248 = vadd.f32 %v537, %v1247
        %v1249 = vpop.f32.mrf.mxu0
        %v1250 = vadd.f32 %v537, %v1249
        %1251 = vmatmul.bf16.gmra.mxu0 %v424
        %v1252 = vpop.f32.mrf.mxu0
        %v1253 = vadd.f32 %v537, %v1252
        %v1254 = vpop.f32.mrf.mxu0
        %v1255 = vadd.f32 %v537, %v1254
        %1256 = vmatmul.bf16.gmra.mxu0 %v426
        %v1257 = vpop.f32.mrf.mxu0
        %v1258 = vadd.f32 %v537, %v1257
        %v1259 = vpop.f32.mrf.mxu0
        %v1260 = vadd.f32 %v537, %v1259
        %1261 = vmatmul.bf16.gmra.mxu0 %v428
        %v1262 = vpop.f32.mrf.mxu0
        %v1263 = vadd.f32 %v537, %v1262
        %v1264 = vpop.f32.mrf.mxu0
        %v1265 = vadd.f32 %v537, %v1264
        %1266 = vmatmul.bf16.gmra.mxu0 %v430
        %v1267 = vpop.f32.mrf.mxu0
        %v1268 = vadd.f32 %v537, %v1267
        %v1269 = vpop.f32.mrf.mxu0
        %v1270 = vadd.f32 %v537, %v1269
        %1271 = vdwg.mxu0
        %1272 = vmatpush.bf16.msra.mxu0 %v927
        %1273 = vmatpush.bf16.msra.mxu0 %v921
        %1274 = vmatpush.bf16.msra.mxu0 %v915
        %1275 = vmatpush.bf16.msra.mxu0 %v909
        %1276 = vmatpush.bf16.msra.mxu0 %v903
        %1277 = vmatpush.bf16.msra.mxu0 %v897
        %1278 = vmatpush.bf16.msra.mxu0 %v891
        %1279 = vmatpush.bf16.msra.mxu0 %v885
        %1280 = vmatmul.bf16.gmra.mxu0 %v417
        %v1281 = vpop.f32.mrf.mxu0
        %v1282 = vadd.f32 %v1233, %v1281
        %v1283 = vpop.f32.mrf.mxu0
        %v1284 = vadd.f32 %v1235, %v1283
        %1285 = vmatmul.bf16.gmra.mxu0 %v419
        %v1286 = vpop.f32.mrf.mxu0
        %v1287 = vadd.f32 %v1238, %v1286
        %v1288 = vpop.f32.mrf.mxu0
        %v1289 = vadd.f32 %v1240, %v1288
        %1290 = vmatmul.bf16.gmra.mxu0 %v421
        %v1291 = vpop.f32.mrf.mxu0
        %v1292 = vadd.f32 %v1243, %v1291
        %v1293 = vpop.f32.mrf.mxu0
        %v1294 = vadd.f32 %v1245, %v1293
        %1295 = vmatmul.bf16.gmra.mxu0 %v423
        %v1296 = vpop.f32.mrf.mxu0
        %v1297 = vadd.f32 %v1248, %v1296
        %v1298 = vpop.f32.mrf.mxu0
        %v1299 = vadd.f32 %v1250, %v1298
        %1300 = vmatmul.bf16.gmra.mxu0 %v425
        %v1301 = vpop.f32.mrf.mxu0
        %v1302 = vadd.f32 %v1253, %v1301
        %v1303 = vpop.f32.mrf.mxu0
        %v1304 = vadd.f32 %v1255, %v1303
        %1305 = vmatmul.bf16.gmra.mxu0 %v427
        %v1306 = vpop.f32.mrf.mxu0
        %v1307 = vadd.f32 %v1258, %v1306
        %v1308 = vpop.f32.mrf.mxu0
        %v1309 = vadd.f32 %v1260, %v1308
        %1310 = vmatmul.bf16.gmra.mxu0 %v429
        %v1311 = vpop.f32.mrf.mxu0
        %v1312 = vadd.f32 %v1263, %v1311
        %v1313 = vpop.f32.mrf.mxu0
        %v1314 = vadd.f32 %v1265, %v1313
        %1315 = vmatmul.bf16.gmra.mxu0 %v431
        %v1316 = vpop.f32.mrf.mxu0
        %v1317 = vadd.f32 %v1268, %v1316
        %v1318 = vpop.f32.mrf.mxu0
        %v1319 = vadd.f32 %v1270, %v1318
        %1320 = vdwg.mxu0
        %1321 = vmatpush.bf16.msra.mxu0 %v880
        %1322 = vmatpush.bf16.msra.mxu0 %v874
        %1323 = vmatpush.bf16.msra.mxu0 %v868
        %1324 = vmatpush.bf16.msra.mxu0 %v862
        %1325 = vmatpush.bf16.msra.mxu0 %v856
        %1326 = vmatpush.bf16.msra.mxu0 %v850
        %1327 = vmatpush.bf16.msra.mxu0 %v844
        %1328 = vmatpush.bf16.msra.mxu0 %v838
        %1329 = vmatmul.bf16.gmra.mxu0 %v416
        %v1330 = vpop.f32.mrf.mxu0
        %v1331 = vadd.f32 %v538, %v1330
        %v1332 = vpop.f32.mrf.mxu0
        %v1333 = vadd.f32 %v538, %v1332
        %1334 = vmatmul.bf16.gmra.mxu0 %v418
        %v1335 = vpop.f32.mrf.mxu0
        %v1336 = vadd.f32 %v538, %v1335
        %v1337 = vpop.f32.mrf.mxu0
        %v1338 = vadd.f32 %v538, %v1337
        %1339 = vmatmul.bf16.gmra.mxu0 %v420
        %v1340 = vpop.f32.mrf.mxu0
        %v1341 = vadd.f32 %v538, %v1340
        %v1342 = vpop.f32.mrf.mxu0
        %v1343 = vadd.f32 %v538, %v1342
        %1344 = vmatmul.bf16.gmra.mxu0 %v422
        %v1345 = vpop.f32.mrf.mxu0
        %v1346 = vadd.f32 %v538, %v1345
        %v1347 = vpop.f32.mrf.mxu0
        %v1348 = vadd.f32 %v538, %v1347
        %1349 = vmatmul.bf16.gmra.mxu0 %v424
        %v1350 = vpop.f32.mrf.mxu0
        %v1351 = vadd.f32 %v538, %v1350
        %v1352 = vpop.f32.mrf.mxu0
        %v1353 = vadd.f32 %v538, %v1352
        %1354 = vmatmul.bf16.gmra.mxu0 %v426
        %v1355 = vpop.f32.mrf.mxu0
        %v1356 = vadd.f32 %v538, %v1355
        %v1357 = vpop.f32.mrf.mxu0
        %v1358 = vadd.f32 %v538, %v1357
        %1359 = vmatmul.bf16.gmra.mxu0 %v428
        %v1360 = vpop.f32.mrf.mxu0
        %v1361 = vadd.f32 %v538, %v1360
        %v1362 = vpop.f32.mrf.mxu0
        %v1363 = vadd.f32 %v538, %v1362
        %1364 = vmatmul.bf16.gmra.mxu0 %v430
        %v1365 = vpop.f32.mrf.mxu0
        %v1366 = vadd.f32 %v538, %v1365
        %v1367 = vpop.f32.mrf.mxu0
        %v1368 = vadd.f32 %v538, %v1367
        %1369 = vdwg.mxu0
        %1370 = vmatpush.bf16.msra.mxu0 %v928
        %1371 = vmatpush.bf16.msra.mxu0 %v922
        %1372 = vmatpush.bf16.msra.mxu0 %v916
        %1373 = vmatpush.bf16.msra.mxu0 %v910
        %1374 = vmatpush.bf16.msra.mxu0 %v904
        %1375 = vmatpush.bf16.msra.mxu0 %v898
        %1376 = vmatpush.bf16.msra.mxu0 %v892
        %1377 = vmatpush.bf16.msra.mxu0 %v886
        %1378 = vmatmul.bf16.gmra.mxu0 %v417
        %v1379 = vpop.f32.mrf.mxu0
        %v1380 = vadd.f32 %v1331, %v1379
        %v1381 = vpop.f32.mrf.mxu0
        %v1382 = vadd.f32 %v1333, %v1381
        %1383 = vmatmul.bf16.gmra.mxu0 %v419
        %v1384 = vpop.f32.mrf.mxu0
        %v1385 = vadd.f32 %v1336, %v1384
        %v1386 = vpop.f32.mrf.mxu0
        %v1387 = vadd.f32 %v1338, %v1386
        %1388 = vmatmul.bf16.gmra.mxu0 %v421
        %v1389 = vpop.f32.mrf.mxu0
        %v1390 = vadd.f32 %v1341, %v1389
        %v1391 = vpop.f32.mrf.mxu0
        %v1392 = vadd.f32 %v1343, %v1391
        %1393 = vmatmul.bf16.gmra.mxu0 %v423
        %v1394 = vpop.f32.mrf.mxu0
        %v1395 = vadd.f32 %v1346, %v1394
        %v1396 = vpop.f32.mrf.mxu0
        %v1397 = vadd.f32 %v1348, %v1396
        %1398 = vmatmul.bf16.gmra.mxu0 %v425
        %v1399 = vpop.f32.mrf.mxu0
        %v1400 = vadd.f32 %v1351, %v1399
        %v1401 = vpop.f32.mrf.mxu0
        %v1402 = vadd.f32 %v1353, %v1401
        %1403 = vmatmul.bf16.gmra.mxu0 %v427
        %v1404 = vpop.f32.mrf.mxu0
        %v1405 = vadd.f32 %v1356, %v1404
        %v1406 = vpop.f32.mrf.mxu0
        %v1407 = vadd.f32 %v1358, %v1406
        %1408 = vmatmul.bf16.gmra.mxu0 %v429
        %v1409 = vpop.f32.mrf.mxu0
        %v1410 = vadd.f32 %v1361, %v1409
        %v1411 = vpop.f32.mrf.mxu0
        %v1412 = vadd.f32 %v1363, %v1411
        %1413 = vmatmul.bf16.gmra.mxu0 %v431
        %v1414 = vpop.f32.mrf.mxu0
        %v1415 = vadd.f32 %v1366, %v1414
        %v1416 = vpop.f32.mrf.mxu0
        %v1417 = vadd.f32 %v1368, %v1416
        %1418 = vdwg.mxu0
        %1419 = vmatpush.bf16.msra.mxu0 %v881
        %1420 = vmatpush.bf16.msra.mxu0 %v875
        %1421 = vmatpush.bf16.msra.mxu0 %v869
        %1422 = vmatpush.bf16.msra.mxu0 %v863
        %1423 = vmatpush.bf16.msra.mxu0 %v857
        %1424 = vmatpush.bf16.msra.mxu0 %v851
        %1425 = vmatpush.bf16.msra.mxu0 %v845
        %1426 = vmatpush.bf16.msra.mxu0 %v839
        %1427 = vmatmul.bf16.gmra.mxu0 %v416
        %v1428 = vpop.f32.mrf.mxu0
        %v1429 = vadd.f32 %v539, %v1428
        %v1430 = vpop.f32.mrf.mxu0
        %v1431 = vadd.f32 %v539, %v1430
        %1432 = vmatmul.bf16.gmra.mxu0 %v418
        %v1433 = vpop.f32.mrf.mxu0
        %v1434 = vadd.f32 %v539, %v1433
        %v1435 = vpop.f32.mrf.mxu0
        %v1436 = vadd.f32 %v539, %v1435
        %1437 = vmatmul.bf16.gmra.mxu0 %v420
        %v1438 = vpop.f32.mrf.mxu0
        %v1439 = vadd.f32 %v539, %v1438
        %v1440 = vpop.f32.mrf.mxu0
        %v1441 = vadd.f32 %v539, %v1440
        %1442 = vmatmul.bf16.gmra.mxu0 %v422
        %v1443 = vpop.f32.mrf.mxu0
        %v1444 = vadd.f32 %v539, %v1443
        %v1445 = vpop.f32.mrf.mxu0
        %v1446 = vadd.f32 %v539, %v1445
        %1447 = vmatmul.bf16.gmra.mxu0 %v424
        %v1448 = vpop.f32.mrf.mxu0
        %v1449 = vadd.f32 %v539, %v1448
        %v1450 = vpop.f32.mrf.mxu0
        %v1451 = vadd.f32 %v539, %v1450
        %1452 = vmatmul.bf16.gmra.mxu0 %v426
        %v1453 = vpop.f32.mrf.mxu0
        %v1454 = vadd.f32 %v539, %v1453
        %v1455 = vpop.f32.mrf.mxu0
        %v1456 = vadd.f32 %v539, %v1455
        %1457 = vmatmul.bf16.gmra.mxu0 %v428
        %v1458 = vpop.f32.mrf.mxu0
        %v1459 = vadd.f32 %v539, %v1458
        %v1460 = vpop.f32.mrf.mxu0
        %v1461 = vadd.f32 %v539, %v1460
        %1462 = vmatmul.bf16.gmra.mxu0 %v430
        %v1463 = vpop.f32.mrf.mxu0
        %v1464 = vadd.f32 %v539, %v1463
        %v1465 = vpop.f32.mrf.mxu0
        %v1466 = vadd.f32 %v539, %v1465
        %1467 = vdwg.mxu0
        %1468 = vmatpush.bf16.msra.mxu0 %v929
        %1469 = vmatpush.bf16.msra.mxu0 %v923
        %1470 = vmatpush.bf16.msra.mxu0 %v917
        %1471 = vmatpush.bf16.msra.mxu0 %v911
        %1472 = vmatpush.bf16.msra.mxu0 %v905
        %1473 = vmatpush.bf16.msra.mxu0 %v899
        %1474 = vmatpush.bf16.msra.mxu0 %v893
        %1475 = vmatpush.bf16.msra.mxu0 %v887
        %1476 = vmatmul.bf16.gmra.mxu0 %v417
        %v1477 = vpop.f32.mrf.mxu0
        %v1478 = vadd.f32 %v1429, %v1477
        %v1479 = vpop.f32.mrf.mxu0
        %v1480 = vadd.f32 %v1431, %v1479
        %1481 = vmatmul.bf16.gmra.mxu0 %v419
        %v1482 = vpop.f32.mrf.mxu0
        %v1483 = vadd.f32 %v1434, %v1482
        %v1484 = vpop.f32.mrf.mxu0
        %v1485 = vadd.f32 %v1436, %v1484
        %1486 = vmatmul.bf16.gmra.mxu0 %v421
        %v1487 = vpop.f32.mrf.mxu0
        %v1488 = vadd.f32 %v1439, %v1487
        %v1489 = vpop.f32.mrf.mxu0
        %v1490 = vadd.f32 %v1441, %v1489
        %1491 = vmatmul.bf16.gmra.mxu0 %v423
        %v1492 = vpop.f32.mrf.mxu0
        %v1493 = vadd.f32 %v1444, %v1492
        %v1494 = vpop.f32.mrf.mxu0
        %v1495 = vadd.f32 %v1446, %v1494
        %1496 = vmatmul.bf16.gmra.mxu0 %v425
        %v1497 = vpop.f32.mrf.mxu0
        %v1498 = vadd.f32 %v1449, %v1497
        %v1499 = vpop.f32.mrf.mxu0
        %v1500 = vadd.f32 %v1451, %v1499
        %1501 = vmatmul.bf16.gmra.mxu0 %v427
        %v1502 = vpop.f32.mrf.mxu0
        %v1503 = vadd.f32 %v1454, %v1502
        %v1504 = vpop.f32.mrf.mxu0
        %v1505 = vadd.f32 %v1456, %v1504
        %1506 = vmatmul.bf16.gmra.mxu0 %v429
        %v1507 = vpop.f32.mrf.mxu0
        %v1508 = vadd.f32 %v1459, %v1507
        %v1509 = vpop.f32.mrf.mxu0
        %v1510 = vadd.f32 %v1461, %v1509
        %1511 = vmatmul.bf16.gmra.mxu0 %v431
        %v1512 = vpop.f32.mrf.mxu0
        %v1513 = vadd.f32 %v1464, %v1512
        %v1514 = vpop.f32.mrf.mxu0
        %v1515 = vadd.f32 %v1466, %v1514
        %1516 = vdwg.mxu0
        %1517 = vmatpush.bf16.msra.mxu0 %v882
        %1518 = vmatpush.bf16.msra.mxu0 %v876
        %1519 = vmatpush.bf16.msra.mxu0 %v870
        %1520 = vmatpush.bf16.msra.mxu0 %v864
        %1521 = vmatpush.bf16.msra.mxu0 %v858
        %1522 = vmatpush.bf16.msra.mxu0 %v852
        %1523 = vmatpush.bf16.msra.mxu0 %v846
        %1524 = vmatpush.bf16.msra.mxu0 %v840
        %1525 = vmatmul.bf16.gmra.mxu0 %v416
        %v1526 = vpop.f32.mrf.mxu0
        %v1527 = vadd.f32 %v540, %v1526
        %v1528 = vpop.f32.mrf.mxu0
        %v1529 = vadd.f32 %v540, %v1528
        %1530 = vmatmul.bf16.gmra.mxu0 %v418
        %v1531 = vpop.f32.mrf.mxu0
        %v1532 = vadd.f32 %v540, %v1531
        %v1533 = vpop.f32.mrf.mxu0
        %v1534 = vadd.f32 %v540, %v1533
        %1535 = vmatmul.bf16.gmra.mxu0 %v420
        %v1536 = vpop.f32.mrf.mxu0
        %v1537 = vadd.f32 %v540, %v1536
        %v1538 = vpop.f32.mrf.mxu0
        %v1539 = vadd.f32 %v540, %v1538
        %1540 = vmatmul.bf16.gmra.mxu0 %v422
        %v1541 = vpop.f32.mrf.mxu0
        %v1542 = vadd.f32 %v540, %v1541
        %v1543 = vpop.f32.mrf.mxu0
        %v1544 = vadd.f32 %v540, %v1543
        %1545 = vmatmul.bf16.gmra.mxu0 %v424
        %v1546 = vpop.f32.mrf.mxu0
        %v1547 = vadd.f32 %v540, %v1546
        %v1548 = vpop.f32.mrf.mxu0
        %v1549 = vadd.f32 %v540, %v1548
        %1550 = vmatmul.bf16.gmra.mxu0 %v426
        %v1551 = vpop.f32.mrf.mxu0
        %v1552 = vadd.f32 %v540, %v1551
        %v1553 = vpop.f32.mrf.mxu0
        %v1554 = vadd.f32 %v540, %v1553
        %1555 = vmatmul.bf16.gmra.mxu0 %v428
        %v1556 = vpop.f32.mrf.mxu0
        %v1557 = vadd.f32 %v540, %v1556
        %v1558 = vpop.f32.mrf.mxu0
        %v1559 = vadd.f32 %v540, %v1558
        %1560 = vmatmul.bf16.gmra.mxu0 %v430
        %v1561 = vpop.f32.mrf.mxu0
        %v1562 = vadd.f32 %v540, %v1561
        %v1563 = vpop.f32.mrf.mxu0
        %v1564 = vadd.f32 %v540, %v1563
        %1565 = vdwg.mxu0
        %1566 = vmatpush.bf16.msra.mxu0 %v930
        %1567 = vmatpush.bf16.msra.mxu0 %v924
        %1568 = vmatpush.bf16.msra.mxu0 %v918
        %1569 = vmatpush.bf16.msra.mxu0 %v912
        %1570 = vmatpush.bf16.msra.mxu0 %v906
        %1571 = vmatpush.bf16.msra.mxu0 %v900
        %1572 = vmatpush.bf16.msra.mxu0 %v894
        %1573 = vmatpush.bf16.msra.mxu0 %v888
        %1574 = vmatmul.bf16.gmra.mxu0 %v417
        %v1575 = vpop.f32.mrf.mxu0
        %v1576 = vadd.f32 %v1527, %v1575
        %v1577 = vpop.f32.mrf.mxu0
        %v1578 = vadd.f32 %v1529, %v1577
        %1579 = vmatmul.bf16.gmra.mxu0 %v419
        %v1580 = vpop.f32.mrf.mxu0
        %v1581 = vadd.f32 %v1532, %v1580
        %v1582 = vpop.f32.mrf.mxu0
        %v1583 = vadd.f32 %v1534, %v1582
        %1584 = vmatmul.bf16.gmra.mxu0 %v421
        %v1585 = vpop.f32.mrf.mxu0
        %v1586 = vadd.f32 %v1537, %v1585
        %v1587 = vpop.f32.mrf.mxu0
        %v1588 = vadd.f32 %v1539, %v1587
        %1589 = vmatmul.bf16.gmra.mxu0 %v423
        %v1590 = vpop.f32.mrf.mxu0
        %v1591 = vadd.f32 %v1542, %v1590
        %v1592 = vpop.f32.mrf.mxu0
        %v1593 = vadd.f32 %v1544, %v1592
        %1594 = vmatmul.bf16.gmra.mxu0 %v425
        %v1595 = vpop.f32.mrf.mxu0
        %v1596 = vadd.f32 %v1547, %v1595
        %v1597 = vpop.f32.mrf.mxu0
        %v1598 = vadd.f32 %v1549, %v1597
        %1599 = vmatmul.bf16.gmra.mxu0 %v427
        %v1600 = vpop.f32.mrf.mxu0
        %v1601 = vadd.f32 %v1552, %v1600
        %v1602 = vpop.f32.mrf.mxu0
        %v1603 = vadd.f32 %v1554, %v1602
        %1604 = vmatmul.bf16.gmra.mxu0 %v429
        %v1605 = vpop.f32.mrf.mxu0
        %v1606 = vadd.f32 %v1557, %v1605
        %v1607 = vpop.f32.mrf.mxu0
        %v1608 = vadd.f32 %v1559, %v1607
        %1609 = vmatmul.bf16.gmra.mxu0 %v431
        %v1610 = vpop.f32.mrf.mxu0
        %v1611 = vadd.f32 %v1562, %v1610
        %v1612 = vpop.f32.mrf.mxu0
        %v1613 = vadd.f32 %v1564, %v1612
        %1614 = vdwg.mxu0
        %v1615 = vpack.c.bf16 %v1184, %v1086
        %v1616 = vpack.c.bf16 %v1380, %v1282
        %v1617 = vpack.c.bf16 %v1576, %v1478
        %v1618 = vpack.c.bf16 %v1186, %v1088
        %v1619 = vpack.c.bf16 %v1382, %v1284
        %v1620 = vpack.c.bf16 %v1578, %v1480
        %v1621 = vpack.c.bf16 %v1189, %v1091
        %v1622 = vpack.c.bf16 %v1385, %v1287
        %v1623 = vpack.c.bf16 %v1581, %v1483
        %v1624 = vpack.c.bf16 %v1191, %v1093
        %v1625 = vpack.c.bf16 %v1387, %v1289
        %v1626 = vpack.c.bf16 %v1583, %v1485
        %v1627 = vpack.c.bf16 %v1194, %v1096
        %v1628 = vpack.c.bf16 %v1390, %v1292
        %v1629 = vpack.c.bf16 %v1586, %v1488
        %v1630 = vpack.c.bf16 %v1196, %v1098
        %v1631 = vpack.c.bf16 %v1392, %v1294
        %v1632 = vpack.c.bf16 %v1588, %v1490
        %v1633 = vpack.c.bf16 %v1199, %v1101
        %v1634 = vpack.c.bf16 %v1395, %v1297
        %v1635 = vpack.c.bf16 %v1591, %v1493
        %v1636 = vpack.c.bf16 %v1201, %v1103
        %v1637 = vpack.c.bf16 %v1397, %v1299
        %v1638 = vpack.c.bf16 %v1593, %v1495
        %v1639 = vpack.c.bf16 %v1204, %v1106
        %v1640 = vpack.c.bf16 %v1400, %v1302
        %v1641 = vpack.c.bf16 %v1596, %v1498
        %v1642 = vpack.c.bf16 %v1206, %v1108
        %v1643 = vpack.c.bf16 %v1402, %v1304
        %v1644 = vpack.c.bf16 %v1598, %v1500
        %v1645 = vpack.c.bf16 %v1209, %v1111
        %v1646 = vpack.c.bf16 %v1405, %v1307
        %v1647 = vpack.c.bf16 %v1601, %v1503
        %v1648 = vpack.c.bf16 %v1211, %v1113
        %v1649 = vpack.c.bf16 %v1407, %v1309
        %v1650 = vpack.c.bf16 %v1603, %v1505
        %v1651 = vpack.c.bf16 %v1214, %v1116
        %v1652 = vpack.c.bf16 %v1410, %v1312
        %v1653 = vpack.c.bf16 %v1606, %v1508
        %v1654 = vpack.c.bf16 %v1216, %v1118
        %v1655 = vpack.c.bf16 %v1412, %v1314
        %v1656 = vpack.c.bf16 %v1608, %v1510
        %v1657 = vpack.c.bf16 %v1219, %v1121
        %v1658 = vpack.c.bf16 %v1415, %v1317
        %v1659 = vpack.c.bf16 %v1611, %v1513
        %v1660 = vpack.c.bf16 %v1221, %v1123
        %v1661 = vpack.c.bf16 %v1417, %v1319
        %v1662 = vpack.c.bf16 %v1613, %v1515
        %1663 = vst [vmem:[#allocation2] sm:$0xff] %v1615
        %1664 = vst [vmem:[#allocation2 + $0x8] sm:$0xff] %v1616
        %1665 = vst [vmem:[#allocation2 + $0x10] sm:$0xff] %v1617
        %1666 = vst [vmem:[#allocation2 + $0x18] sm:$0xff] %v1618
        %1667 = vst [vmem:[#allocation2 + $0x20] sm:$0xff] %v1619
        %1668 = vst [vmem:[#allocation2 + $0x28] sm:$0xff] %v1620
        %1669 = vst [vmem:[#allocation2 + $0x30] sm:$0xff] %v1621
        %1670 = vst [vmem:[#allocation2 + $0x38] sm:$0xff] %v1622
        %1671 = vst [vmem:[#allocation2 + $0x40] sm:$0xff] %v1623
        %1672 = vst [vmem:[#allocation2 + $0x48] sm:$0xff] %v1624
        %1673 = vst [vmem:[#allocation2 + $0x50] sm:$0xff] %v1625
        %1674 = vst [vmem:[#allocation2 + $0x58] sm:$0xff] %v1626
        %1675 = vst [vmem:[#allocation2 + $0x60] sm:$0xff] %v1627
        %1676 = vst [vmem:[#allocation2 + $0x68] sm:$0xff] %v1628
        %1677 = vst [vmem:[#allocation2 + $0x70] sm:$0xff] %v1629
        %1678 = vst [vmem:[#allocation2 + $0x78] sm:$0xff] %v1630
        %1679 = vst [vmem:[#allocation2 + $0x80] sm:$0xff] %v1631
        %1680 = vst [vmem:[#allocation2 + $0x88] sm:$0xff] %v1632
        %1681 = vst [vmem:[#allocation2 + $0x90] sm:$0xff] %v1633
        %1682 = vst [vmem:[#allocation2 + $0x98] sm:$0xff] %v1634
        %1683 = vst [vmem:[#allocation2 + $0xa0] sm:$0xff] %v1635
        %1684 = vst [vmem:[#allocation2 + $0xa8] sm:$0xff] %v1636
        %1685 = vst [vmem:[#allocation2 + $0xb0] sm:$0xff] %v1637
        %1686 = vst [vmem:[#allocation2 + $0xb8] sm:$0xff] %v1638
        %1687 = vst [vmem:[#allocation2 + $0xc0] sm:$0xff] %v1639
        %1688 = vst [vmem:[#allocation2 + $0xc8] sm:$0xff] %v1640
        %1689 = vst [vmem:[#allocation2 + $0xd0] sm:$0xff] %v1641
        %1690 = vst [vmem:[#allocation2 + $0xd8] sm:$0xff] %v1642
        %1691 = vst [vmem:[#allocation2 + $0xe0] sm:$0xff] %v1643
        %1692 = vst [vmem:[#allocation2 + $0xe8] sm:$0xff] %v1644
        %1693 = vst [vmem:[#allocation2 + $0xf0] sm:$0xff] %v1645
        %1694 = vst [vmem:[#allocation2 + $0xf8] sm:$0xff] %v1646
        %1695 = vst [vmem:[#allocation2 + $0x100] sm:$0xff] %v1647
        %1696 = vst [vmem:[#allocation2 + $0x108] sm:$0xff] %v1648
        %1697 = vst [vmem:[#allocation2 + $0x110] sm:$0xff] %v1649
        %1698 = vst [vmem:[#allocation2 + $0x118] sm:$0xff] %v1650
        %1699 = vst [vmem:[#allocation2 + $0x120] sm:$0xff] %v1651
        %1700 = vst [vmem:[#allocation2 + $0x128] sm:$0xff] %v1652
        %1701 = vst [vmem:[#allocation2 + $0x130] sm:$0xff] %v1653
        %1702 = vst [vmem:[#allocation2 + $0x138] sm:$0xff] %v1654
        %1703 = vst [vmem:[#allocation2 + $0x140] sm:$0xff] %v1655
        %1704 = vst [vmem:[#allocation2 + $0x148] sm:$0xff] %v1656
        %1705 = vst [vmem:[#allocation2 + $0x150] sm:$0xff] %v1657
        %1706 = vst [vmem:[#allocation2 + $0x158] sm:$0xff] %v1658
        %1707 = vst [vmem:[#allocation2 + $0x160] sm:$0xff] %v1659
        %1708 = vst [vmem:[#allocation2 + $0x168] sm:$0xff] %v1660
        %1709 = vst [vmem:[#allocation2 + $0x170] sm:$0xff] %v1661
        %1710 = vst [vmem:[#allocation2 + $0x178] sm:$0xff] %v1662
        %v1711 = vld [vmem:[#allocation2] sm:$0xf]
        %v1712 = vld [vmem:[#allocation2 + $0x18] sm:$0xf]
        %v1713 = vld [vmem:[#allocation2 + $0x30] sm:$0xf]
        %v1714 = vld [vmem:[#allocation2 + $0x48] sm:$0xf]
        %v1715 = vld [vmem:[#allocation2 + $0x60] sm:$0xf]
        %v1716 = vld [vmem:[#allocation2 + $0x78] sm:$0xf]
        %v1717 = vld [vmem:[#allocation2 + $0x90] sm:$0xf]
        %v1718 = vld [vmem:[#allocation2 + $0xa8] sm:$0xf]
        %v1719 = vld [vmem:[#allocation2 + $0xc0] sm:$0xf]
        %v1720 = vld [vmem:[#allocation2 + $0xd8] sm:$0xf]
        %v1721 = vld [vmem:[#allocation2 + $0xf0] sm:$0xf]
        %v1722 = vld [vmem:[#allocation2 + $0x108] sm:$0xf]
        %v1723 = vld [vmem:[#allocation2 + $0x120] sm:$0xf]
        %v1724 = vld [vmem:[#allocation2 + $0x138] sm:$0xf]
        %v1725 = vld [vmem:[#allocation2 + $0x150] sm:$0xf]
        %v1726 = vld [vmem:[#allocation2 + $0x168] sm:$0xf]
        %v1727 = vld [vmem:[#allocation2 + $0x8] sm:$0xf]
        %v1728 = vld [vmem:[#allocation2 + $0x20] sm:$0xf]
        %v1729 = vld [vmem:[#allocation2 + $0x38] sm:$0xf]
        %v1730 = vld [vmem:[#allocation2 + $0x50] sm:$0xf]
        %v1731 = vld [vmem:[#allocation2 + $0x68] sm:$0xf]
        %v1732 = vld [vmem:[#allocation2 + $0x80] sm:$0xf]
        %v1733 = vld [vmem:[#allocation2 + $0x98] sm:$0xf]
        %v1734 = vld [vmem:[#allocation2 + $0xb0] sm:$0xf]
        %v1735 = vld [vmem:[#allocation2 + $0xc8] sm:$0xf]
        %v1736 = vld [vmem:[#allocation2 + $0xe0] sm:$0xf]
        %v1737 = vld [vmem:[#allocation2 + $0xf8] sm:$0xf]
        %v1738 = vld [vmem:[#allocation2 + $0x110] sm:$0xf]
        %v1739 = vld [vmem:[#allocation2 + $0x128] sm:$0xf]
        %v1740 = vld [vmem:[#allocation2 + $0x140] sm:$0xf]
        %v1741 = vld [vmem:[#allocation2 + $0x158] sm:$0xf]
        %v1742 = vld [vmem:[#allocation2 + $0x170] sm:$0xf]
        %v1743 = vld [vmem:[#allocation2 + $0x10] sm:$0xf]
        %v1744 = vld [vmem:[#allocation2 + $0x28] sm:$0xf]
        %v1745 = vld [vmem:[#allocation2 + $0x40] sm:$0xf]
        %v1746 = vld [vmem:[#allocation2 + $0x58] sm:$0xf]
        %v1747 = vld [vmem:[#allocation2 + $0x70] sm:$0xf]
        %v1748 = vld [vmem:[#allocation2 + $0x88] sm:$0xf]
        %v1749 = vld [vmem:[#allocation2 + $0xa0] sm:$0xf]
        %v1750 = vld [vmem:[#allocation2 + $0xb8] sm:$0xf]
        %v1751 = vld [vmem:[#allocation2 + $0xd0] sm:$0xf]
        %v1752 = vld [vmem:[#allocation2 + $0xe8] sm:$0xf]
        %v1753 = vld [vmem:[#allocation2 + $0x100] sm:$0xf]
        %v1754 = vld [vmem:[#allocation2 + $0x118] sm:$0xf]
        %v1755 = vld [vmem:[#allocation2 + $0x130] sm:$0xf]
        %v1756 = vld [vmem:[#allocation2 + $0x148] sm:$0xf]
        %v1757 = vld [vmem:[#allocation2 + $0x160] sm:$0xf]
        %v1758 = vld [vmem:[#allocation2 + $0x178] sm:$0xf]
        %v1759 = vld [vmem:[%s1] sm:$0xff]
        %v1760 = vld [vmem:[%s1 + $0x8] sm:$0xff]
        %v1761 = vld [vmem:[%s1 + $0x10] sm:$0xff]
        %v1762 = vld [vmem:[%s1 + $0x18] sm:$0xff]
        %v1763 = vld [vmem:[%s1 + $0x20] sm:$0xff]
        %v1764 = vld [vmem:[%s1 + $0x28] sm:$0xff]
        %v1765 = vld [vmem:[%s1 + $0x30] sm:$0xff]
        %v1766 = vld [vmem:[%s1 + $0x38] sm:$0xff]
        %v1767 = vld [vmem:[%s1 + $0x40] sm:$0xff]
        %v1768 = vld [vmem:[%s1 + $0x48] sm:$0xff]
        %v1769 = vld [vmem:[%s1 + $0x50] sm:$0xff]
        %v1770 = vld [vmem:[%s1 + $0x58] sm:$0xff]
        %v1771 = vld [vmem:[%s1 + $0x60] sm:$0xff]
        %v1772 = vld [vmem:[%s1 + $0x68] sm:$0xff]
        %v1773 = vld [vmem:[%s1 + $0x70] sm:$0xff]
        %v1774 = vld [vmem:[%s1 + $0x78] sm:$0xff]
        %v1791 = vunpack.c.l.b16 %v1711
        %v1792 = vunpack.c.l.b16 %v1712
        %v1793 = vunpack.c.l.b16 %v1713
        %v1794 = vunpack.c.l.b16 %v1714
        %v1795 = vunpack.c.l.b16 %v1715
        %v1796 = vunpack.c.l.b16 %v1716
        %v1797 = vunpack.c.l.b16 %v1717
        %v1798 = vunpack.c.l.b16 %v1718
        %v1799 = vunpack.c.l.b16 %v1719
        %v1800 = vunpack.c.l.b16 %v1720
        %v1801 = vunpack.c.l.b16 %v1721
        %v1802 = vunpack.c.l.b16 %v1722
        %v1803 = vunpack.c.l.b16 %v1723
        %v1804 = vunpack.c.l.b16 %v1724
        %v1805 = vunpack.c.l.b16 %v1725
        %v1806 = vunpack.c.l.b16 %v1726
        %v1807 = vpack.c.b16 %v1792, %v1791
        %v1808 = vpack.c.b16 %v1794, %v1793
        %v1809 = vpack.c.b16 %v1796, %v1795
        %v1810 = vpack.c.b16 %v1798, %v1797
        %v1811 = vpack.c.b16 %v1800, %v1799
        %v1812 = vpack.c.b16 %v1802, %v1801
        %v1813 = vpack.c.b16 %v1804, %v1803
        %v1814 = vpack.c.b16 %v1806, %v1805
        %v1839 = vunpack.c.l.b16 %v1727
        %v1840 = vunpack.c.l.b16 %v1728
        %v1841 = vunpack.c.l.b16 %v1729
        %v1842 = vunpack.c.l.b16 %v1730
        %v1843 = vunpack.c.l.b16 %v1731
        %v1844 = vunpack.c.l.b16 %v1732
        %v1845 = vunpack.c.l.b16 %v1733
        %v1846 = vunpack.c.l.b16 %v1734
        %v1847 = vunpack.c.l.b16 %v1735
        %v1848 = vunpack.c.l.b16 %v1736
        %v1849 = vunpack.c.l.b16 %v1737
        %v1850 = vunpack.c.l.b16 %v1738
        %v1851 = vunpack.c.l.b16 %v1739
        %v1852 = vunpack.c.l.b16 %v1740
        %v1853 = vunpack.c.l.b16 %v1741
        %v1854 = vunpack.c.l.b16 %v1742
        %v1855 = vpack.c.b16 %v1840, %v1839
        %v1856 = vpack.c.b16 %v1842, %v1841
        %v1857 = vpack.c.b16 %v1844, %v1843
        %v1858 = vpack.c.b16 %v1846, %v1845
        %v1859 = vpack.c.b16 %v1848, %v1847
        %v1860 = vpack.c.b16 %v1850, %v1849
        %v1861 = vpack.c.b16 %v1852, %v1851
        %v1862 = vpack.c.b16 %v1854, %v1853
        %1871 = vmatpush.bf16.xpose.msra.mxu0 %v1862
        %1872 = vmatpush.bf16.xpose.msra.mxu0 %v1861
        %1873 = vmatpush.bf16.xpose.msra.mxu0 %v1860
        %1874 = vmatpush.bf16.xpose.msra.mxu0 %v1859
        %1875 = vmatpush.bf16.xpose.msra.mxu0 %v1858
        %1876 = vmatpush.bf16.xpose.msra.mxu0 %v1857
        %1877 = vmatpush.bf16.xpose.msra.mxu0 %v1856
        %1878 = vmatpush.bf16.xpose.msra.mxu0 %v1855
        %1879 = vmatmul.bf16.gmra.mxu0 %v1807
        %v1880 = vpop.f32.mrf.mxu0
        %v1881 = vadd.f32 %v1759, %v1880
        %v1882 = vpop.f32.mrf.mxu0
        %v1883 = vadd.f32 %v1760, %v1882
        %1884 = vmatmul.bf16.gmra.mxu0 %v1808
        %v1885 = vpop.f32.mrf.mxu0
        %v1886 = vadd.f32 %v1761, %v1885
        %v1887 = vpop.f32.mrf.mxu0
        %v1888 = vadd.f32 %v1762, %v1887
        %1889 = vmatmul.bf16.gmra.mxu0 %v1809
        %v1890 = vpop.f32.mrf.mxu0
        %v1891 = vadd.f32 %v1763, %v1890
        %v1892 = vpop.f32.mrf.mxu0
        %v1893 = vadd.f32 %v1764, %v1892
        %1894 = vmatmul.bf16.gmra.mxu0 %v1810
        %v1895 = vpop.f32.mrf.mxu0
        %v1896 = vadd.f32 %v1765, %v1895
        %v1897 = vpop.f32.mrf.mxu0
        %v1898 = vadd.f32 %v1766, %v1897
        %1899 = vmatmul.bf16.gmra.mxu0 %v1811
        %v1900 = vpop.f32.mrf.mxu0
        %v1901 = vadd.f32 %v1767, %v1900
        %v1902 = vpop.f32.mrf.mxu0
        %v1903 = vadd.f32 %v1768, %v1902
        %1904 = vmatmul.bf16.gmra.mxu0 %v1812
        %v1905 = vpop.f32.mrf.mxu0
        %v1906 = vadd.f32 %v1769, %v1905
        %v1907 = vpop.f32.mrf.mxu0
        %v1908 = vadd.f32 %v1770, %v1907
        %1909 = vmatmul.bf16.gmra.mxu0 %v1813
        %v1910 = vpop.f32.mrf.mxu0
        %v1911 = vadd.f32 %v1771, %v1910
        %v1912 = vpop.f32.mrf.mxu0
        %v1913 = vadd.f32 %v1772, %v1912
        %1914 = vmatmul.bf16.gmra.mxu0 %v1814
        %v1915 = vpop.f32.mrf.mxu0
        %v1916 = vadd.f32 %v1773, %v1915
        %v1917 = vpop.f32.mrf.mxu0
        %v1918 = vadd.f32 %v1774, %v1917
        %1919 = vdwg.mxu0
        %1920 = vmax.xlane.f32.xlu0 %v1881
        %v1921 = vpop.xlane.xlu0 %1920
        %1922 = vmax.xlane.f32.xlu0 %v1883
        %v1923 = vpop.xlane.xlu0 %1922
        %1924 = vmax.xlane.f32.xlu0 %v1886
        %v1925 = vpop.xlane.xlu0 %1924
        %1926 = vmax.xlane.f32.xlu0 %v1888
        %v1927 = vpop.xlane.xlu0 %1926
        %1928 = vmax.xlane.f32.xlu0 %v1891
        %v1929 = vpop.xlane.xlu0 %1928
        %1930 = vmax.xlane.f32.xlu0 %v1893
        %v1931 = vpop.xlane.xlu0 %1930
        %1932 = vmax.xlane.f32.xlu0 %v1896
        %v1933 = vpop.xlane.xlu0 %1932
        %1934 = vmax.xlane.f32.xlu0 %v1898
        %v1935 = vpop.xlane.xlu0 %1934
        %1936 = vmax.xlane.f32.xlu0 %v1901
        %v1937 = vpop.xlane.xlu0 %1936
        %1938 = vmax.xlane.f32.xlu0 %v1903
        %v1939 = vpop.xlane.xlu0 %1938
        %1940 = vmax.xlane.f32.xlu0 %v1906
        %v1941 = vpop.xlane.xlu0 %1940
        %1942 = vmax.xlane.f32.xlu0 %v1908
        %v1943 = vpop.xlane.xlu0 %1942
        %1944 = vmax.xlane.f32.xlu0 %v1911
        %v1945 = vpop.xlane.xlu0 %1944
        %1946 = vmax.xlane.f32.xlu0 %v1913
        %v1947 = vpop.xlane.xlu0 %1946
        %1948 = vmax.xlane.f32.xlu0 %v1916
        %v1949 = vpop.xlane.xlu0 %1948
        %1950 = vmax.xlane.f32.xlu0 %v1918
        %v1951 = vpop.xlane.xlu0 %1950
        %v1952 = vsub.f32 %v1881, %v1921
        %v1953 = vsub.f32 %v1883, %v1923
        %v1954 = vsub.f32 %v1886, %v1925
        %v1955 = vsub.f32 %v1888, %v1927
        %v1956 = vsub.f32 %v1891, %v1929
        %v1957 = vsub.f32 %v1893, %v1931
        %v1958 = vsub.f32 %v1896, %v1933
        %v1959 = vsub.f32 %v1898, %v1935
        %v1960 = vsub.f32 %v1901, %v1937
        %v1961 = vsub.f32 %v1903, %v1939
        %v1962 = vsub.f32 %v1906, %v1941
        %v1963 = vsub.f32 %v1908, %v1943
        %v1964 = vsub.f32 %v1911, %v1945
        %v1965 = vsub.f32 %v1913, %v1947
        %v1966 = vsub.f32 %v1916, %v1949
        %v1967 = vsub.f32 %v1918, %v1951
        %v1968 = vmul.f32 %v1952, 1.442695
        %v1969 = vpow.pop %v1968
        %v1970 = vmul.f32 %v1953, 1.442695
        %v1971 = vpow.pop %v1970
        %v1972 = vmul.f32 %v1954, 1.442695
        %v1973 = vpow.pop %v1972
        %v1974 = vmul.f32 %v1955, 1.442695
        %v1975 = vpow.pop %v1974
        %v1976 = vmul.f32 %v1956, 1.442695
        %v1977 = vpow.pop %v1976
        %v1978 = vmul.f32 %v1957, 1.442695
        %v1979 = vpow.pop %v1978
        %v1980 = vmul.f32 %v1958, 1.442695
        %v1981 = vpow.pop %v1980
        %v1982 = vmul.f32 %v1959, 1.442695
        %v1983 = vpow.pop %v1982
        %v1984 = vmul.f32 %v1960, 1.442695
        %v1985 = vpow.pop %v1984
        %v1986 = vmul.f32 %v1961, 1.442695
        %v1987 = vpow.pop %v1986
        %v1988 = vmul.f32 %v1962, 1.442695
        %v1989 = vpow.pop %v1988
        %v1990 = vmul.f32 %v1963, 1.442695
        %v1991 = vpow.pop %v1990
        %v1992 = vmul.f32 %v1964, 1.442695
        %v1993 = vpow.pop %v1992
        %v1994 = vmul.f32 %v1965, 1.442695
        %v1995 = vpow.pop %v1994
        %v1996 = vmul.f32 %v1966, 1.442695
        %v1997 = vpow.pop %v1996
        %v1998 = vmul.f32 %v1967, 1.442695
        %v1999 = vpow.pop %v1998
        %2000 = vadd.xlane.f32.xlu0 %v1969
        %v2001 = vpop.xlane.xlu0 %2000
        %2002 = vadd.xlane.f32.xlu0 %v1971
        %v2003 = vpop.xlane.xlu0 %2002
        %2004 = vadd.xlane.f32.xlu0 %v1973
        %v2005 = vpop.xlane.xlu0 %2004
        %2006 = vadd.xlane.f32.xlu0 %v1975
        %v2007 = vpop.xlane.xlu0 %2006
        %2008 = vadd.xlane.f32.xlu0 %v1977
        %v2009 = vpop.xlane.xlu0 %2008
        %2010 = vadd.xlane.f32.xlu0 %v1979
        %v2011 = vpop.xlane.xlu0 %2010
        %2012 = vadd.xlane.f32.xlu0 %v1981
        %v2013 = vpop.xlane.xlu0 %2012
        %2014 = vadd.xlane.f32.xlu0 %v1983
        %v2015 = vpop.xlane.xlu0 %2014
        %2016 = vadd.xlane.f32.xlu0 %v1985
        %v2017 = vpop.xlane.xlu0 %2016
        %2018 = vadd.xlane.f32.xlu0 %v1987
        %v2019 = vpop.xlane.xlu0 %2018
        %2020 = vadd.xlane.f32.xlu0 %v1989
        %v2021 = vpop.xlane.xlu0 %2020
        %2022 = vadd.xlane.f32.xlu0 %v1991
        %v2023 = vpop.xlane.xlu0 %2022
        %2024 = vadd.xlane.f32.xlu0 %v1993
        %v2025 = vpop.xlane.xlu0 %2024
        %2026 = vadd.xlane.f32.xlu0 %v1995
        %v2027 = vpop.xlane.xlu0 %2026
        %2028 = vadd.xlane.f32.xlu0 %v1997
        %v2029 = vpop.xlane.xlu0 %2028
        %2030 = vadd.xlane.f32.xlu0 %v1999
        %v2031 = vpop.xlane.xlu0 %2030
        %v2032 = vrcp.pop %v2001
        %v2033 = vrcp.pop %v2003
        %v2034 = vrcp.pop %v2005
        %v2035 = vrcp.pop %v2007
        %v2036 = vrcp.pop %v2009
        %v2037 = vrcp.pop %v2011
        %v2038 = vrcp.pop %v2013
        %v2039 = vrcp.pop %v2015
        %v2040 = vrcp.pop %v2017
        %v2041 = vrcp.pop %v2019
        %v2042 = vrcp.pop %v2021
        %v2043 = vrcp.pop %v2023
        %v2044 = vrcp.pop %v2025
        %v2045 = vrcp.pop %v2027
        %v2046 = vrcp.pop %v2029
        %v2047 = vrcp.pop %v2031
        %v2048 = vmul.f32 %v1969, %v2032
        %v2049 = vmul.f32 %v1971, %v2033
        %v2050 = vmul.f32 %v1973, %v2034
        %v2051 = vmul.f32 %v1975, %v2035
        %v2052 = vmul.f32 %v1977, %v2036
        %v2053 = vmul.f32 %v1979, %v2037
        %v2054 = vmul.f32 %v1981, %v2038
        %v2055 = vmul.f32 %v1983, %v2039
        %v2056 = vmul.f32 %v1985, %v2040
        %v2057 = vmul.f32 %v1987, %v2041
        %v2058 = vmul.f32 %v1989, %v2042
        %v2059 = vmul.f32 %v1991, %v2043
        %v2060 = vmul.f32 %v1993, %v2044
        %v2061 = vmul.f32 %v1995, %v2045
        %v2062 = vmul.f32 %v1997, %v2046
        %v2063 = vmul.f32 %v1999, %v2047
        %v2064 = vpack.c.bf16 %v2049, %v2048
        %v2065 = vpack.c.bf16 %v2051, %v2050
        %v2066 = vpack.c.bf16 %v2053, %v2052
        %v2067 = vpack.c.bf16 %v2055, %v2054
        %v2068 = vpack.c.bf16 %v2057, %v2056
        %v2069 = vpack.c.bf16 %v2059, %v2058
        %v2070 = vpack.c.bf16 %v2061, %v2060
        %v2071 = vpack.c.bf16 %v2063, %v2062
        %v2088 = vunpack.c.l.b16 %v1743
        %v2089 = vunpack.c.l.b16 %v1744
        %v2090 = vunpack.c.l.b16 %v1745
        %v2091 = vunpack.c.l.b16 %v1746
        %v2092 = vunpack.c.l.b16 %v1747
        %v2093 = vunpack.c.l.b16 %v1748
        %v2094 = vunpack.c.l.b16 %v1749
        %v2095 = vunpack.c.l.b16 %v1750
        %v2096 = vunpack.c.l.b16 %v1751
        %v2097 = vunpack.c.l.b16 %v1752
        %v2098 = vunpack.c.l.b16 %v1753
        %v2099 = vunpack.c.l.b16 %v1754
        %v2100 = vunpack.c.l.b16 %v1755
        %v2101 = vunpack.c.l.b16 %v1756
        %v2102 = vunpack.c.l.b16 %v1757
        %v2103 = vunpack.c.l.b16 %v1758
        %v2104 = vpack.c.b16 %v2089, %v2088
        %v2105 = vpack.c.b16 %v2091, %v2090
        %v2106 = vpack.c.b16 %v2093, %v2092
        %v2107 = vpack.c.b16 %v2095, %v2094
        %v2108 = vpack.c.b16 %v2097, %v2096
        %v2109 = vpack.c.b16 %v2099, %v2098
        %v2110 = vpack.c.b16 %v2101, %v2100
        %v2111 = vpack.c.b16 %v2103, %v2102
        %2120 = vmatpush.bf16.msra.mxu0 %v2111
        %2121 = vmatpush.bf16.msra.mxu0 %v2110
        %2122 = vmatpush.bf16.msra.mxu0 %v2109
        %2123 = vmatpush.bf16.msra.mxu0 %v2108
        %2124 = vmatpush.bf16.msra.mxu0 %v2107
        %2125 = vmatpush.bf16.msra.mxu0 %v2106
        %2126 = vmatpush.bf16.msra.mxu0 %v2105
        %2127 = vmatpush.bf16.msra.mxu0 %v2104
        %2128 = vmatmul.bf16.gmra.mxu0 %v2064
        %v2129 = vpop.f32.mrf.mxu0
        %v2130 = vadd.f32 0.0, %v2129
        %v2131 = vpop.f32.mrf.mxu0
        %v2132 = vadd.f32 0.0, %v2131
        %2133 = vmatmul.bf16.gmra.mxu0 %v2065
        %v2134 = vpop.f32.mrf.mxu0
        %v2135 = vadd.f32 0.0, %v2134
        %v2136 = vpop.f32.mrf.mxu0
        %v2137 = vadd.f32 0.0, %v2136
        %2138 = vmatmul.bf16.gmra.mxu0 %v2066
        %v2139 = vpop.f32.mrf.mxu0
        %v2140 = vadd.f32 0.0, %v2139
        %v2141 = vpop.f32.mrf.mxu0
        %v2142 = vadd.f32 0.0, %v2141
        %2143 = vmatmul.bf16.gmra.mxu0 %v2067
        %v2144 = vpop.f32.mrf.mxu0
        %v2145 = vadd.f32 0.0, %v2144
        %v2146 = vpop.f32.mrf.mxu0
        %v2147 = vadd.f32 0.0, %v2146
        %2148 = vmatmul.bf16.gmra.mxu0 %v2068
        %v2149 = vpop.f32.mrf.mxu0
        %v2150 = vadd.f32 0.0, %v2149
        %v2151 = vpop.f32.mrf.mxu0
        %v2152 = vadd.f32 0.0, %v2151
        %2153 = vmatmul.bf16.gmra.mxu0 %v2069
        %v2154 = vpop.f32.mrf.mxu0
        %v2155 = vadd.f32 0.0, %v2154
        %v2156 = vpop.f32.mrf.mxu0
        %v2157 = vadd.f32 0.0, %v2156
        %2158 = vmatmul.bf16.gmra.mxu0 %v2070
        %v2159 = vpop.f32.mrf.mxu0
        %v2160 = vadd.f32 0.0, %v2159
        %v2161 = vpop.f32.mrf.mxu0
        %v2162 = vadd.f32 0.0, %v2161
        %2163 = vmatmul.bf16.gmra.mxu0 %v2071
        %v2164 = vpop.f32.mrf.mxu0
        %v2165 = vadd.f32 0.0, %v2164
        %v2166 = vpop.f32.mrf.mxu0
        %v2167 = vadd.f32 0.0, %v2166
        %2168 = vdwg.mxu0
        %v2169 = vpack.c.bf16 %v2130, %v2130
        %v2170 = vpack.c.bf16 %v2132, %v2132
        %v2171 = vpack.c.bf16 %v2135, %v2135
        %v2172 = vpack.c.bf16 %v2137, %v2137
        %v2173 = vpack.c.bf16 %v2140, %v2140
        %v2174 = vpack.c.bf16 %v2142, %v2142
        %v2175 = vpack.c.bf16 %v2145, %v2145
        %v2176 = vpack.c.bf16 %v2147, %v2147
        %v2177 = vpack.c.bf16 %v2150, %v2150
        %v2178 = vpack.c.bf16 %v2152, %v2152
        %v2179 = vpack.c.bf16 %v2155, %v2155
        %v2180 = vpack.c.bf16 %v2157, %v2157
        %v2181 = vpack.c.bf16 %v2160, %v2160
        %v2182 = vpack.c.bf16 %v2162, %v2162
        %v2183 = vpack.c.bf16 %v2165, %v2165
        %v2184 = vpack.c.bf16 %v2167, %v2167
        %2185 = vst [vmem:[#allocation3] sm:$0xf] %v2169
        %2186 = vst [vmem:[#allocation3 + $0x8] sm:$0xf] %v2170
        %2187 = vst [vmem:[#allocation3 + $0x10] sm:$0xf] %v2171
        %2188 = vst [vmem:[#allocation3 + $0x18] sm:$0xf] %v2172
        %2189 = vst [vmem:[#allocation3 + $0x20] sm:$0xf] %v2173
        %2190 = vst [vmem:[#allocation3 + $0x28] sm:$0xf] %v2174
        %2191 = vst [vmem:[#allocation3 + $0x30] sm:$0xf] %v2175
        %2192 = vst [vmem:[#allocation3 + $0x38] sm:$0xf] %v2176
        %2193 = vst [vmem:[#allocation3 + $0x40] sm:$0xf] %v2177
        %2194 = vst [vmem:[#allocation3 + $0x48] sm:$0xf] %v2178
        %2195 = vst [vmem:[#allocation3 + $0x50] sm:$0xf] %v2179
        %2196 = vst [vmem:[#allocation3 + $0x58] sm:$0xf] %v2180
        %2197 = vst [vmem:[#allocation3 + $0x60] sm:$0xf] %v2181
        %2198 = vst [vmem:[#allocation3 + $0x68] sm:$0xf] %v2182
        %2199 = vst [vmem:[#allocation3 + $0x70] sm:$0xf] %v2183
        %2200 = vst [vmem:[#allocation3 + $0x78] sm:$0xf] %v2184
        %v2201 = vld [vmem:[#allocation2 + $0x4] sm:$0xf]
        %v2202 = vld [vmem:[#allocation2 + $0x1c] sm:$0xf]
        %v2203 = vld [vmem:[#allocation2 + $0x34] sm:$0xf]
        %v2204 = vld [vmem:[#allocation2 + $0x4c] sm:$0xf]
        %v2205 = vld [vmem:[#allocation2 + $0x64] sm:$0xf]
        %v2206 = vld [vmem:[#allocation2 + $0x7c] sm:$0xf]
        %v2207 = vld [vmem:[#allocation2 + $0x94] sm:$0xf]
        %v2208 = vld [vmem:[#allocation2 + $0xac] sm:$0xf]
        %v2209 = vld [vmem:[#allocation2 + $0xc4] sm:$0xf]
        %v2210 = vld [vmem:[#allocation2 + $0xdc] sm:$0xf]
        %v2211 = vld [vmem:[#allocation2 + $0xf4] sm:$0xf]
        %v2212 = vld [vmem:[#allocation2 + $0x10c] sm:$0xf]
        %v2213 = vld [vmem:[#allocation2 + $0x124] sm:$0xf]
        %v2214 = vld [vmem:[#allocation2 + $0x13c] sm:$0xf]
        %v2215 = vld [vmem:[#allocation2 + $0x154] sm:$0xf]
        %v2216 = vld [vmem:[#allocation2 + $0x16c] sm:$0xf]
        %v2217 = vld [vmem:[#allocation2 + $0xc] sm:$0xf]
        %v2218 = vld [vmem:[#allocation2 + $0x24] sm:$0xf]
        %v2219 = vld [vmem:[#allocation2 + $0x3c] sm:$0xf]
        %v2220 = vld [vmem:[#allocation2 + $0x54] sm:$0xf]
        %v2221 = vld [vmem:[#allocation2 + $0x6c] sm:$0xf]
        %v2222 = vld [vmem:[#allocation2 + $0x84] sm:$0xf]
        %v2223 = vld [vmem:[#allocation2 + $0x9c] sm:$0xf]
        %v2224 = vld [vmem:[#allocation2 + $0xb4] sm:$0xf]
        %v2225 = vld [vmem:[#allocation2 + $0xcc] sm:$0xf]
        %v2226 = vld [vmem:[#allocation2 + $0xe4] sm:$0xf]
        %v2227 = vld [vmem:[#allocation2 + $0xfc] sm:$0xf]
        %v2228 = vld [vmem:[#allocation2 + $0x114] sm:$0xf]
        %v2229 = vld [vmem:[#allocation2 + $0x12c] sm:$0xf]
        %v2230 = vld [vmem:[#allocation2 + $0x144] sm:$0xf]
        %v2231 = vld [vmem:[#allocation2 + $0x15c] sm:$0xf]
        %v2232 = vld [vmem:[#allocation2 + $0x174] sm:$0xf]
        %v2233 = vld [vmem:[#allocation2 + $0x14] sm:$0xf]
        %v2234 = vld [vmem:[#allocation2 + $0x2c] sm:$0xf]
        %v2235 = vld [vmem:[#allocation2 + $0x44] sm:$0xf]
        %v2236 = vld [vmem:[#allocation2 + $0x5c] sm:$0xf]
        %v2237 = vld [vmem:[#allocation2 + $0x74] sm:$0xf]
        %v2238 = vld [vmem:[#allocation2 + $0x8c] sm:$0xf]
        %v2239 = vld [vmem:[#allocation2 + $0xa4] sm:$0xf]
        %v2240 = vld [vmem:[#allocation2 + $0xbc] sm:$0xf]
        %v2241 = vld [vmem:[#allocation2 + $0xd4] sm:$0xf]
        %v2242 = vld [vmem:[#allocation2 + $0xec] sm:$0xf]
        %v2243 = vld [vmem:[#allocation2 + $0x104] sm:$0xf]
        %v2244 = vld [vmem:[#allocation2 + $0x11c] sm:$0xf]
        %v2245 = vld [vmem:[#allocation2 + $0x134] sm:$0xf]
        %v2246 = vld [vmem:[#allocation2 + $0x14c] sm:$0xf]
        %v2247 = vld [vmem:[#allocation2 + $0x164] sm:$0xf]
        %v2248 = vld [vmem:[#allocation2 + $0x17c] sm:$0xf]
        %v2249 = vld [vmem:[%s1] sm:$0xff]
        %v2250 = vld [vmem:[%s1 + $0x8] sm:$0xff]
        %v2251 = vld [vmem:[%s1 + $0x10] sm:$0xff]
        %v2252 = vld [vmem:[%s1 + $0x18] sm:$0xff]
        %v2253 = vld [vmem:[%s1 + $0x20] sm:$0xff]
        %v2254 = vld [vmem:[%s1 + $0x28] sm:$0xff]
        %v2255 = vld [vmem:[%s1 + $0x30] sm:$0xff]
        %v2256 = vld [vmem:[%s1 + $0x38] sm:$0xff]
        %v2257 = vld [vmem:[%s1 + $0x40] sm:$0xff]
        %v2258 = vld [vmem:[%s1 + $0x48] sm:$0xff]
        %v2259 = vld [vmem:[%s1 + $0x50] sm:$0xff]
        %v2260 = vld [vmem:[%s1 + $0x58] sm:$0xff]
        %v2261 = vld [vmem:[%s1 + $0x60] sm:$0xff]
        %v2262 = vld [vmem:[%s1 + $0x68] sm:$0xff]
        %v2263 = vld [vmem:[%s1 + $0x70] sm:$0xff]
        %v2264 = vld [vmem:[%s1 + $0x78] sm:$0xff]
        %v2281 = vunpack.c.l.b16 %v2201
        %v2282 = vunpack.c.l.b16 %v2202
        %v2283 = vunpack.c.l.b16 %v2203
        %v2284 = vunpack.c.l.b16 %v2204
        %v2285 = vunpack.c.l.b16 %v2205
        %v2286 = vunpack.c.l.b16 %v2206
        %v2287 = vunpack.c.l.b16 %v2207
        %v2288 = vunpack.c.l.b16 %v2208
        %v2289 = vunpack.c.l.b16 %v2209
        %v2290 = vunpack.c.l.b16 %v2210
        %v2291 = vunpack.c.l.b16 %v2211
        %v2292 = vunpack.c.l.b16 %v2212
        %v2293 = vunpack.c.l.b16 %v2213
        %v2294 = vunpack.c.l.b16 %v2214
        %v2295 = vunpack.c.l.b16 %v2215
        %v2296 = vunpack.c.l.b16 %v2216
        %v2297 = vpack.c.b16 %v2282, %v2281
        %v2298 = vpack.c.b16 %v2284, %v2283
        %v2299 = vpack.c.b16 %v2286, %v2285
        %v2300 = vpack.c.b16 %v2288, %v2287
        %v2301 = vpack.c.b16 %v2290, %v2289
        %v2302 = vpack.c.b16 %v2292, %v2291
        %v2303 = vpack.c.b16 %v2294, %v2293
        %v2304 = vpack.c.b16 %v2296, %v2295
        %v2329 = vunpack.c.l.b16 %v2217
        %v2330 = vunpack.c.l.b16 %v2218
        %v2331 = vunpack.c.l.b16 %v2219
        %v2332 = vunpack.c.l.b16 %v2220
        %v2333 = vunpack.c.l.b16 %v2221
        %v2334 = vunpack.c.l.b16 %v2222
        %v2335 = vunpack.c.l.b16 %v2223
        %v2336 = vunpack.c.l.b16 %v2224
        %v2337 = vunpack.c.l.b16 %v2225
        %v2338 = vunpack.c.l.b16 %v2226
        %v2339 = vunpack.c.l.b16 %v2227
        %v2340 = vunpack.c.l.b16 %v2228
        %v2341 = vunpack.c.l.b16 %v2229
        %v2342 = vunpack.c.l.b16 %v2230
        %v2343 = vunpack.c.l.b16 %v2231
        %v2344 = vunpack.c.l.b16 %v2232
        %v2345 = vpack.c.b16 %v2330, %v2329
        %v2346 = vpack.c.b16 %v2332, %v2331
        %v2347 = vpack.c.b16 %v2334, %v2333
        %v2348 = vpack.c.b16 %v2336, %v2335
        %v2349 = vpack.c.b16 %v2338, %v2337
        %v2350 = vpack.c.b16 %v2340, %v2339
        %v2351 = vpack.c.b16 %v2342, %v2341
        %v2352 = vpack.c.b16 %v2344, %v2343
        %2361 = vmatpush.bf16.xpose.msra.mxu0 %v2352
        %2362 = vmatpush.bf16.xpose.msra.mxu0 %v2351
        %2363 = vmatpush.bf16.xpose.msra.mxu0 %v2350
        %2364 = vmatpush.bf16.xpose.msra.mxu0 %v2349
        %2365 = vmatpush.bf16.xpose.msra.mxu0 %v2348
        %2366 = vmatpush.bf16.xpose.msra.mxu0 %v2347
        %2367 = vmatpush.bf16.xpose.msra.mxu0 %v2346
        %2368 = vmatpush.bf16.xpose.msra.mxu0 %v2345
        %2369 = vmatmul.bf16.gmra.mxu0 %v2297
        %v2370 = vpop.f32.mrf.mxu0
        %v2371 = vadd.f32 %v2249, %v2370
        %v2372 = vpop.f32.mrf.mxu0
        %v2373 = vadd.f32 %v2250, %v2372
        %2374 = vmatmul.bf16.gmra.mxu0 %v2298
        %v2375 = vpop.f32.mrf.mxu0
        %v2376 = vadd.f32 %v2251, %v2375
        %v2377 = vpop.f32.mrf.mxu0
        %v2378 = vadd.f32 %v2252, %v2377
        %2379 = vmatmul.bf16.gmra.mxu0 %v2299
        %v2380 = vpop.f32.mrf.mxu0
        %v2381 = vadd.f32 %v2253, %v2380
        %v2382 = vpop.f32.mrf.mxu0
        %v2383 = vadd.f32 %v2254, %v2382
        %2384 = vmatmul.bf16.gmra.mxu0 %v2300
        %v2385 = vpop.f32.mrf.mxu0
        %v2386 = vadd.f32 %v2255, %v2385
        %v2387 = vpop.f32.mrf.mxu0
        %v2388 = vadd.f32 %v2256, %v2387
        %2389 = vmatmul.bf16.gmra.mxu0 %v2301
        %v2390 = vpop.f32.mrf.mxu0
        %v2391 = vadd.f32 %v2257, %v2390
        %v2392 = vpop.f32.mrf.mxu0
        %v2393 = vadd.f32 %v2258, %v2392
        %2394 = vmatmul.bf16.gmra.mxu0 %v2302
        %v2395 = vpop.f32.mrf.mxu0
        %v2396 = vadd.f32 %v2259, %v2395
        %v2397 = vpop.f32.mrf.mxu0
        %v2398 = vadd.f32 %v2260, %v2397
        %2399 = vmatmul.bf16.gmra.mxu0 %v2303
        %v2400 = vpop.f32.mrf.mxu0
        %v2401 = vadd.f32 %v2261, %v2400
        %v2402 = vpop.f32.mrf.mxu0
        %v2403 = vadd.f32 %v2262, %v2402
        %2404 = vmatmul.bf16.gmra.mxu0 %v2304
        %v2405 = vpop.f32.mrf.mxu0
        %v2406 = vadd.f32 %v2263, %v2405
        %v2407 = vpop.f32.mrf.mxu0
        %v2408 = vadd.f32 %v2264, %v2407
        %2409 = vdwg.mxu0
        %2410 = vmax.xlane.f32.xlu0 %v2371
        %v2411 = vpop.xlane.xlu0 %2410
        %2412 = vmax.xlane.f32.xlu0 %v2373
        %v2413 = vpop.xlane.xlu0 %2412
        %2414 = vmax.xlane.f32.xlu0 %v2376
        %v2415 = vpop.xlane.xlu0 %2414
        %2416 = vmax.xlane.f32.xlu0 %v2378
        %v2417 = vpop.xlane.xlu0 %2416
        %2418 = vmax.xlane.f32.xlu0 %v2381
        %v2419 = vpop.xlane.xlu0 %2418
        %2420 = vmax.xlane.f32.xlu0 %v2383
        %v2421 = vpop.xlane.xlu0 %2420
        %2422 = vmax.xlane.f32.xlu0 %v2386
        %v2423 = vpop.xlane.xlu0 %2422
        %2424 = vmax.xlane.f32.xlu0 %v2388
        %v2425 = vpop.xlane.xlu0 %2424
        %2426 = vmax.xlane.f32.xlu0 %v2391
        %v2427 = vpop.xlane.xlu0 %2426
        %2428 = vmax.xlane.f32.xlu0 %v2393
        %v2429 = vpop.xlane.xlu0 %2428
        %2430 = vmax.xlane.f32.xlu0 %v2396
        %v2431 = vpop.xlane.xlu0 %2430
        %2432 = vmax.xlane.f32.xlu0 %v2398
        %v2433 = vpop.xlane.xlu0 %2432
        %2434 = vmax.xlane.f32.xlu0 %v2401
        %v2435 = vpop.xlane.xlu0 %2434
        %2436 = vmax.xlane.f32.xlu0 %v2403
        %v2437 = vpop.xlane.xlu0 %2436
        %2438 = vmax.xlane.f32.xlu0 %v2406
        %v2439 = vpop.xlane.xlu0 %2438
        %2440 = vmax.xlane.f32.xlu0 %v2408
        %v2441 = vpop.xlane.xlu0 %2440
        %v2442 = vsub.f32 %v2371, %v2411
        %v2443 = vsub.f32 %v2373, %v2413
        %v2444 = vsub.f32 %v2376, %v2415
        %v2445 = vsub.f32 %v2378, %v2417
        %v2446 = vsub.f32 %v2381, %v2419
        %v2447 = vsub.f32 %v2383, %v2421
        %v2448 = vsub.f32 %v2386, %v2423
        %v2449 = vsub.f32 %v2388, %v2425
        %v2450 = vsub.f32 %v2391, %v2427
        %v2451 = vsub.f32 %v2393, %v2429
        %v2452 = vsub.f32 %v2396, %v2431
        %v2453 = vsub.f32 %v2398, %v2433
        %v2454 = vsub.f32 %v2401, %v2435
        %v2455 = vsub.f32 %v2403, %v2437
        %v2456 = vsub.f32 %v2406, %v2439
        %v2457 = vsub.f32 %v2408, %v2441
        %v2458 = vmul.f32 %v2442, 1.442695
        %v2459 = vpow.pop %v2458
        %v2460 = vmul.f32 %v2443, 1.442695
        %v2461 = vpow.pop %v2460
        %v2462 = vmul.f32 %v2444, 1.442695
        %v2463 = vpow.pop %v2462
        %v2464 = vmul.f32 %v2445, 1.442695
        %v2465 = vpow.pop %v2464
        %v2466 = vmul.f32 %v2446, 1.442695
        %v2467 = vpow.pop %v2466
        %v2468 = vmul.f32 %v2447, 1.442695
        %v2469 = vpow.pop %v2468
        %v2470 = vmul.f32 %v2448, 1.442695
        %v2471 = vpow.pop %v2470
        %v2472 = vmul.f32 %v2449, 1.442695
        %v2473 = vpow.pop %v2472
        %v2474 = vmul.f32 %v2450, 1.442695
        %v2475 = vpow.pop %v2474
        %v2476 = vmul.f32 %v2451, 1.442695
        %v2477 = vpow.pop %v2476
        %v2478 = vmul.f32 %v2452, 1.442695
        %v2479 = vpow.pop %v2478
        %v2480 = vmul.f32 %v2453, 1.442695
        %v2481 = vpow.pop %v2480
        %v2482 = vmul.f32 %v2454, 1.442695
        %v2483 = vpow.pop %v2482
        %v2484 = vmul.f32 %v2455, 1.442695
        %v2485 = vpow.pop %v2484
        %v2486 = vmul.f32 %v2456, 1.442695
        %v2487 = vpow.pop %v2486
        %v2488 = vmul.f32 %v2457, 1.442695
        %v2489 = vpow.pop %v2488
        %2490 = vadd.xlane.f32.xlu0 %v2459
        %v2491 = vpop.xlane.xlu0 %2490
        %2492 = vadd.xlane.f32.xlu0 %v2461
        %v2493 = vpop.xlane.xlu0 %2492
        %2494 = vadd.xlane.f32.xlu0 %v2463
        %v2495 = vpop.xlane.xlu0 %2494
        %2496 = vadd.xlane.f32.xlu0 %v2465
        %v2497 = vpop.xlane.xlu0 %2496
        %2498 = vadd.xlane.f32.xlu0 %v2467
        %v2499 = vpop.xlane.xlu0 %2498
        %2500 = vadd.xlane.f32.xlu0 %v2469
        %v2501 = vpop.xlane.xlu0 %2500
        %2502 = vadd.xlane.f32.xlu0 %v2471
        %v2503 = vpop.xlane.xlu0 %2502
        %2504 = vadd.xlane.f32.xlu0 %v2473
        %v2505 = vpop.xlane.xlu0 %2504
        %2506 = vadd.xlane.f32.xlu0 %v2475
        %v2507 = vpop.xlane.xlu0 %2506
        %2508 = vadd.xlane.f32.xlu0 %v2477
        %v2509 = vpop.xlane.xlu0 %2508
        %2510 = vadd.xlane.f32.xlu0 %v2479
        %v2511 = vpop.xlane.xlu0 %2510
        %2512 = vadd.xlane.f32.xlu0 %v2481
        %v2513 = vpop.xlane.xlu0 %2512
        %2514 = vadd.xlane.f32.xlu0 %v2483
        %v2515 = vpop.xlane.xlu0 %2514
        %2516 = vadd.xlane.f32.xlu0 %v2485
        %v2517 = vpop.xlane.xlu0 %2516
        %2518 = vadd.xlane.f32.xlu0 %v2487
        %v2519 = vpop.xlane.xlu0 %2518
        %2520 = vadd.xlane.f32.xlu0 %v2489
        %v2521 = vpop.xlane.xlu0 %2520
        %v2522 = vrcp.pop %v2491
        %v2523 = vrcp.pop %v2493
        %v2524 = vrcp.pop %v2495
        %v2525 = vrcp.pop %v2497
        %v2526 = vrcp.pop %v2499
        %v2527 = vrcp.pop %v2501
        %v2528 = vrcp.pop %v2503
        %v2529 = vrcp.pop %v2505
        %v2530 = vrcp.pop %v2507
        %v2531 = vrcp.pop %v2509
        %v2532 = vrcp.pop %v2511
        %v2533 = vrcp.pop %v2513
        %v2534 = vrcp.pop %v2515
        %v2535 = vrcp.pop %v2517
        %v2536 = vrcp.pop %v2519
        %v2537 = vrcp.pop %v2521
        %v2538 = vmul.f32 %v2459, %v2522
        %v2539 = vmul.f32 %v2461, %v2523
        %v2540 = vmul.f32 %v2463, %v2524
        %v2541 = vmul.f32 %v2465, %v2525
        %v2542 = vmul.f32 %v2467, %v2526
        %v2543 = vmul.f32 %v2469, %v2527
        %v2544 = vmul.f32 %v2471, %v2528
        %v2545 = vmul.f32 %v2473, %v2529
        %v2546 = vmul.f32 %v2475, %v2530
        %v2547 = vmul.f32 %v2477, %v2531
        %v2548 = vmul.f32 %v2479, %v2532
        %v2549 = vmul.f32 %v2481, %v2533
        %v2550 = vmul.f32 %v2483, %v2534
        %v2551 = vmul.f32 %v2485, %v2535
        %v2552 = vmul.f32 %v2487, %v2536
        %v2553 = vmul.f32 %v2489, %v2537
        %v2554 = vpack.c.bf16 %v2539, %v2538
        %v2555 = vpack.c.bf16 %v2541, %v2540
        %v2556 = vpack.c.bf16 %v2543, %v2542
        %v2557 = vpack.c.bf16 %v2545, %v2544
        %v2558 = vpack.c.bf16 %v2547, %v2546
        %v2559 = vpack.c.bf16 %v2549, %v2548
        %v2560 = vpack.c.bf16 %v2551, %v2550
        %v2561 = vpack.c.bf16 %v2553, %v2552
        %v2578 = vunpack.c.l.b16 %v2233
        %v2579 = vunpack.c.l.b16 %v2234
        %v2580 = vunpack.c.l.b16 %v2235
        %v2581 = vunpack.c.l.b16 %v2236
        %v2582 = vunpack.c.l.b16 %v2237
        %v2583 = vunpack.c.l.b16 %v2238
        %v2584 = vunpack.c.l.b16 %v2239
        %v2585 = vunpack.c.l.b16 %v2240
        %v2586 = vunpack.c.l.b16 %v2241
        %v2587 = vunpack.c.l.b16 %v2242
        %v2588 = vunpack.c.l.b16 %v2243
        %v2589 = vunpack.c.l.b16 %v2244
        %v2590 = vunpack.c.l.b16 %v2245
        %v2591 = vunpack.c.l.b16 %v2246
        %v2592 = vunpack.c.l.b16 %v2247
        %v2593 = vunpack.c.l.b16 %v2248
        %v2594 = vpack.c.b16 %v2579, %v2578
        %v2595 = vpack.c.b16 %v2581, %v2580
        %v2596 = vpack.c.b16 %v2583, %v2582
        %v2597 = vpack.c.b16 %v2585, %v2584
        %v2598 = vpack.c.b16 %v2587, %v2586
        %v2599 = vpack.c.b16 %v2589, %v2588
        %v2600 = vpack.c.b16 %v2591, %v2590
        %v2601 = vpack.c.b16 %v2593, %v2592
        %2610 = vmatpush.bf16.msra.mxu0 %v2601
        %2611 = vmatpush.bf16.msra.mxu0 %v2600
        %2612 = vmatpush.bf16.msra.mxu0 %v2599
        %2613 = vmatpush.bf16.msra.mxu0 %v2598
        %2614 = vmatpush.bf16.msra.mxu0 %v2597
        %2615 = vmatpush.bf16.msra.mxu0 %v2596
        %2616 = vmatpush.bf16.msra.mxu0 %v2595
        %2617 = vmatpush.bf16.msra.mxu0 %v2594
        %2618 = vmatmul.bf16.gmra.mxu0 %v2554
        %v2619 = vpop.f32.mrf.mxu0
        %v2620 = vadd.f32 0.0, %v2619
        %v2621 = vpop.f32.mrf.mxu0
        %v2622 = vadd.f32 0.0, %v2621
        %2623 = vmatmul.bf16.gmra.mxu0 %v2555
        %v2624 = vpop.f32.mrf.mxu0
        %v2625 = vadd.f32 0.0, %v2624
        %v2626 = vpop.f32.mrf.mxu0
        %v2627 = vadd.f32 0.0, %v2626
        %2628 = vmatmul.bf16.gmra.mxu0 %v2556
        %v2629 = vpop.f32.mrf.mxu0
        %v2630 = vadd.f32 0.0, %v2629
        %v2631 = vpop.f32.mrf.mxu0
        %v2632 = vadd.f32 0.0, %v2631
        %2633 = vmatmul.bf16.gmra.mxu0 %v2557
        %v2634 = vpop.f32.mrf.mxu0
        %v2635 = vadd.f32 0.0, %v2634
        %v2636 = vpop.f32.mrf.mxu0
        %v2637 = vadd.f32 0.0, %v2636
        %2638 = vmatmul.bf16.gmra.mxu0 %v2558
        %v2639 = vpop.f32.mrf.mxu0
        %v2640 = vadd.f32 0.0, %v2639
        %v2641 = vpop.f32.mrf.mxu0
        %v2642 = vadd.f32 0.0, %v2641
        %2643 = vmatmul.bf16.gmra.mxu0 %v2559
        %v2644 = vpop.f32.mrf.mxu0
        %v2645 = vadd.f32 0.0, %v2644
        %v2646 = vpop.f32.mrf.mxu0
        %v2647 = vadd.f32 0.0, %v2646
        %2648 = vmatmul.bf16.gmra.mxu0 %v2560
        %v2649 = vpop.f32.mrf.mxu0
        %v2650 = vadd.f32 0.0, %v2649
        %v2651 = vpop.f32.mrf.mxu0
        %v2652 = vadd.f32 0.0, %v2651
        %2653 = vmatmul.bf16.gmra.mxu0 %v2561
        %v2654 = vpop.f32.mrf.mxu0
        %v2655 = vadd.f32 0.0, %v2654
        %v2656 = vpop.f32.mrf.mxu0
        %v2657 = vadd.f32 0.0, %v2656
        %2658 = vdwg.mxu0
        %v2659 = vpack.c.bf16 %v2620, %v2620
        %v2660 = vpack.c.bf16 %v2622, %v2622
        %v2661 = vpack.c.bf16 %v2625, %v2625
        %v2662 = vpack.c.bf16 %v2627, %v2627
        %v2663 = vpack.c.bf16 %v2630, %v2630
        %v2664 = vpack.c.bf16 %v2632, %v2632
        %v2665 = vpack.c.bf16 %v2635, %v2635
        %v2666 = vpack.c.bf16 %v2637, %v2637
        %v2667 = vpack.c.bf16 %v2640, %v2640
        %v2668 = vpack.c.bf16 %v2642, %v2642
        %v2669 = vpack.c.bf16 %v2645, %v2645
        %v2670 = vpack.c.bf16 %v2647, %v2647
        %v2671 = vpack.c.bf16 %v2650, %v2650
        %v2672 = vpack.c.bf16 %v2652, %v2652
        %v2673 = vpack.c.bf16 %v2655, %v2655
        %v2674 = vpack.c.bf16 %v2657, %v2657
        %2675 = vst [vmem:[#allocation3 + $0x4] sm:$0xf] %v2659
        %2676 = vst [vmem:[#allocation3 + $0xc] sm:$0xf] %v2660
        %2677 = vst [vmem:[#allocation3 + $0x14] sm:$0xf] %v2661
        %2678 = vst [vmem:[#allocation3 + $0x1c] sm:$0xf] %v2662
        %2679 = vst [vmem:[#allocation3 + $0x24] sm:$0xf] %v2663
        %2680 = vst [vmem:[#allocation3 + $0x2c] sm:$0xf] %v2664
        %2681 = vst [vmem:[#allocation3 + $0x34] sm:$0xf] %v2665
        %2682 = vst [vmem:[#allocation3 + $0x3c] sm:$0xf] %v2666
        %2683 = vst [vmem:[#allocation3 + $0x44] sm:$0xf] %v2667
        %2684 = vst [vmem:[#allocation3 + $0x4c] sm:$0xf] %v2668
        %2685 = vst [vmem:[#allocation3 + $0x54] sm:$0xf] %v2669
        %2686 = vst [vmem:[#allocation3 + $0x5c] sm:$0xf] %v2670
        %2687 = vst [vmem:[#allocation3 + $0x64] sm:$0xf] %v2671
        %2688 = vst [vmem:[#allocation3 + $0x6c] sm:$0xf] %v2672
        %2689 = vst [vmem:[#allocation3 + $0x74] sm:$0xf] %v2673
        %2690 = vst [vmem:[#allocation3 + $0x7c] sm:$0xf] %v2674
        %v2691 = vld [vmem:[#allocation3] sm:$0xff]
        %v2692 = vld [vmem:[#allocation3 + $0x8] sm:$0xff]
        %v2693 = vld [vmem:[#allocation3 + $0x10] sm:$0xff]
        %v2694 = vld [vmem:[#allocation3 + $0x18] sm:$0xff]
        %v2695 = vld [vmem:[#allocation3 + $0x20] sm:$0xff]
        %v2696 = vld [vmem:[#allocation3 + $0x28] sm:$0xff]
        %v2697 = vld [vmem:[#allocation3 + $0x30] sm:$0xff]
        %v2698 = vld [vmem:[#allocation3 + $0x38] sm:$0xff]
        %v2699 = vld [vmem:[#allocation3 + $0x40] sm:$0xff]
        %v2700 = vld [vmem:[#allocation3 + $0x48] sm:$0xff]
        %v2701 = vld [vmem:[#allocation3 + $0x50] sm:$0xff]
        %v2702 = vld [vmem:[#allocation3 + $0x58] sm:$0xff]
        %v2703 = vld [vmem:[#allocation3 + $0x60] sm:$0xff]
        %v2704 = vld [vmem:[#allocation3 + $0x68] sm:$0xff]
        %v2705 = vld [vmem:[#allocation3 + $0x70] sm:$0xff]
        %v2706 = vld [vmem:[#allocation3 + $0x78] sm:$0xff]
        %s2707 = smul.u32 %s374, 64
        %s2708 = smul.addr %s2707, 4
        %s2709 = scalar_lea.vmem %s4, %s2708
        %v2710 = vld [vmem:[%s2709] sm:$0xff]
        %v2711 = vld [vmem:[%s2709 + $0x8] sm:$0xff]
        %v2712 = vld [vmem:[%s2709 + $0x10] sm:$0xff]
        %v2713 = vld [vmem:[%s2709 + $0x18] sm:$0xff]
        %v2714 = vld [vmem:[%s2709 + $0x20] sm:$0xff]
        %v2715 = vld [vmem:[%s2709 + $0x28] sm:$0xff]
        %v2716 = vld [vmem:[%s2709 + $0x30] sm:$0xff]
        %v2717 = vld [vmem:[%s2709 + $0x38] sm:$0xff]
        %v2718 = vld [vmem:[%s2709 + $0x40] sm:$0xff]
        %v2719 = vld [vmem:[%s2709 + $0x48] sm:$0xff]
        %v2720 = vld [vmem:[%s2709 + $0x50] sm:$0xff]
        %v2721 = vld [vmem:[%s2709 + $0x58] sm:$0xff]
        %v2722 = vld [vmem:[%s2709 + $0x60] sm:$0xff]
        %v2723 = vld [vmem:[%s2709 + $0x68] sm:$0xff]
        %v2724 = vld [vmem:[%s2709 + $0x70] sm:$0xff]
        %v2725 = vld [vmem:[%s2709 + $0x78] sm:$0xff]
        %v2726 = vld [vmem:[%s2709 + $0x80] sm:$0xff]
        %v2727 = vld [vmem:[%s2709 + $0x88] sm:$0xff]
        %v2728 = vld [vmem:[%s2709 + $0x90] sm:$0xff]
        %v2729 = vld [vmem:[%s2709 + $0x98] sm:$0xff]
        %v2730 = vld [vmem:[%s2709 + $0xa0] sm:$0xff]
        %v2731 = vld [vmem:[%s2709 + $0xa8] sm:$0xff]
        %v2732 = vld [vmem:[%s2709 + $0xb0] sm:$0xff]
        %v2733 = vld [vmem:[%s2709 + $0xb8] sm:$0xff]
        %v2734 = vld [vmem:[%s2709 + $0xc0] sm:$0xff]
        %v2735 = vld [vmem:[%s2709 + $0xc8] sm:$0xff]
        %v2736 = vld [vmem:[%s2709 + $0xd0] sm:$0xff]
        %v2737 = vld [vmem:[%s2709 + $0xd8] sm:$0xff]
        %v2738 = vld [vmem:[%s2709 + $0xe0] sm:$0xff]
        %v2739 = vld [vmem:[%s2709 + $0xe8] sm:$0xff]
        %v2740 = vld [vmem:[%s2709 + $0xf0] sm:$0xff]
        %v2741 = vld [vmem:[%s2709 + $0xf8] sm:$0xff]
        %v2742 = vperm.slane %v414, 0
        %v2743 = vperm.slane %v415, 0
        %v2760 = vunpack.c.l.b16 %v2691
        %v2761 = vunpack.c.h.b16 %v2691
        %v2762 = vunpack.c.l.b16 %v2692
        %v2763 = vunpack.c.h.b16 %v2692
        %v2764 = vunpack.c.l.b16 %v2693
        %v2765 = vunpack.c.h.b16 %v2693
        %v2766 = vunpack.c.l.b16 %v2694
        %v2767 = vunpack.c.h.b16 %v2694
        %v2768 = vunpack.c.l.b16 %v2695
        %v2769 = vunpack.c.h.b16 %v2695
        %v2770 = vunpack.c.l.b16 %v2696
        %v2771 = vunpack.c.h.b16 %v2696
        %v2772 = vunpack.c.l.b16 %v2697
        %v2773 = vunpack.c.h.b16 %v2697
        %v2774 = vunpack.c.l.b16 %v2698
        %v2775 = vunpack.c.h.b16 %v2698
        %v2776 = vunpack.c.l.b16 %v2699
        %v2777 = vunpack.c.h.b16 %v2699
        %v2778 = vunpack.c.l.b16 %v2700
        %v2779 = vunpack.c.h.b16 %v2700
        %v2780 = vunpack.c.l.b16 %v2701
        %v2781 = vunpack.c.h.b16 %v2701
        %v2782 = vunpack.c.l.b16 %v2702
        %v2783 = vunpack.c.h.b16 %v2702
        %v2784 = vunpack.c.l.b16 %v2703
        %v2785 = vunpack.c.h.b16 %v2703
        %v2786 = vunpack.c.l.b16 %v2704
        %v2787 = vunpack.c.h.b16 %v2704
        %v2788 = vunpack.c.l.b16 %v2705
        %v2789 = vunpack.c.h.b16 %v2705
        %v2790 = vunpack.c.l.b16 %v2706
        %v2791 = vunpack.c.h.b16 %v2706
        %v2792 = vpack.c.b16 %v2762, %v2760
        %v2793 = vpack.c.b16 %v2763, %v2761
        %v2794 = vpack.c.b16 %v2766, %v2764
        %v2795 = vpack.c.b16 %v2767, %v2765
        %v2796 = vpack.c.b16 %v2770, %v2768
        %v2797 = vpack.c.b16 %v2771, %v2769
        %v2798 = vpack.c.b16 %v2774, %v2772
        %v2799 = vpack.c.b16 %v2775, %v2773
        %v2800 = vpack.c.b16 %v2778, %v2776
        %v2801 = vpack.c.b16 %v2779, %v2777
        %v2802 = vpack.c.b16 %v2782, %v2780
        %v2803 = vpack.c.b16 %v2783, %v2781
        %v2804 = vpack.c.b16 %v2786, %v2784
        %v2805 = vpack.c.b16 %v2787, %v2785
        %v2806 = vpack.c.b16 %v2790, %v2788
        %v2807 = vpack.c.b16 %v2791, %v2789
        %v2856 = vunpack.c.l.b16 %v2710
        %v2857 = vunpack.c.h.b16 %v2710
        %v2858 = vunpack.c.l.b16 %v2711
        %v2859 = vunpack.c.h.b16 %v2711
        %v2860 = vunpack.c.l.b16 %v2712
        %v2861 = vunpack.c.h.b16 %v2712
        %v2862 = vunpack.c.l.b16 %v2713
        %v2863 = vunpack.c.h.b16 %v2713
        %v2864 = vunpack.c.l.b16 %v2714
        %v2865 = vunpack.c.h.b16 %v2714
        %v2866 = vunpack.c.l.b16 %v2715
        %v2867 = vunpack.c.h.b16 %v2715
        %v2868 = vunpack.c.l.b16 %v2716
        %v2869 = vunpack.c.h.b16 %v2716
        %v2870 = vunpack.c.l.b16 %v2717
        %v2871 = vunpack.c.h.b16 %v2717
        %v2872 = vunpack.c.l.b16 %v2718
        %v2873 = vunpack.c.h.b16 %v2718
        %v2874 = vunpack.c.l.b16 %v2719
        %v2875 = vunpack.c.h.b16 %v2719
        %v2876 = vunpack.c.l.b16 %v2720
        %v2877 = vunpack.c.h.b16 %v2720
        %v2878 = vunpack.c.l.b16 %v2721
        %v2879 = vunpack.c.h.b16 %v2721
        %v2880 = vunpack.c.l.b16 %v2722
        %v2881 = vunpack.c.h.b16 %v2722
        %v2882 = vunpack.c.l.b16 %v2723
        %v2883 = vunpack.c.h.b16 %v2723
        %v2884 = vunpack.c.l.b16 %v2724
        %v2885 = vunpack.c.h.b16 %v2724
        %v2886 = vunpack.c.l.b16 %v2725
        %v2887 = vunpack.c.h.b16 %v2725
        %v2888 = vunpack.c.l.b16 %v2726
        %v2889 = vunpack.c.h.b16 %v2726
        %v2890 = vunpack.c.l.b16 %v2727
        %v2891 = vunpack.c.h.b16 %v2727
        %v2892 = vunpack.c.l.b16 %v2728
        %v2893 = vunpack.c.h.b16 %v2728
        %v2894 = vunpack.c.l.b16 %v2729
        %v2895 = vunpack.c.h.b16 %v2729
        %v2896 = vunpack.c.l.b16 %v2730
        %v2897 = vunpack.c.h.b16 %v2730
        %v2898 = vunpack.c.l.b16 %v2731
        %v2899 = vunpack.c.h.b16 %v2731
        %v2900 = vunpack.c.l.b16 %v2732
        %v2901 = vunpack.c.h.b16 %v2732
        %v2902 = vunpack.c.l.b16 %v2733
        %v2903 = vunpack.c.h.b16 %v2733
        %v2904 = vunpack.c.l.b16 %v2734
        %v2905 = vunpack.c.h.b16 %v2734
        %v2906 = vunpack.c.l.b16 %v2735
        %v2907 = vunpack.c.h.b16 %v2735
        %v2908 = vunpack.c.l.b16 %v2736
        %v2909 = vunpack.c.h.b16 %v2736
        %v2910 = vunpack.c.l.b16 %v2737
        %v2911 = vunpack.c.h.b16 %v2737
        %v2912 = vunpack.c.l.b16 %v2738
        %v2913 = vunpack.c.h.b16 %v2738
        %v2914 = vunpack.c.l.b16 %v2739
        %v2915 = vunpack.c.h.b16 %v2739
        %v2916 = vunpack.c.l.b16 %v2740
        %v2917 = vunpack.c.h.b16 %v2740
        %v2918 = vunpack.c.l.b16 %v2741
        %v2919 = vunpack.c.h.b16 %v2741
        %v2920 = vpack.c.b16 %v2858, %v2856
        %v2921 = vpack.c.b16 %v2859, %v2857
        %v2922 = vpack.c.b16 %v2862, %v2860
        %v2923 = vpack.c.b16 %v2863, %v2861
        %v2924 = vpack.c.b16 %v2866, %v2864
        %v2925 = vpack.c.b16 %v2867, %v2865
        %v2926 = vpack.c.b16 %v2870, %v2868
        %v2927 = vpack.c.b16 %v2871, %v2869
        %v2928 = vpack.c.b16 %v2874, %v2872
        %v2929 = vpack.c.b16 %v2875, %v2873
        %v2930 = vpack.c.b16 %v2878, %v2876
        %v2931 = vpack.c.b16 %v2879, %v2877
        %v2932 = vpack.c.b16 %v2882, %v2880
        %v2933 = vpack.c.b16 %v2883, %v2881
        %v2934 = vpack.c.b16 %v2886, %v2884
        %v2935 = vpack.c.b16 %v2887, %v2885
        %v2936 = vpack.c.b16 %v2890, %v2888
        %v2937 = vpack.c.b16 %v2891, %v2889
        %v2938 = vpack.c.b16 %v2894, %v2892
        %v2939 = vpack.c.b16 %v2895, %v2893
        %v2940 = vpack.c.b16 %v2898, %v2896
        %v2941 = vpack.c.b16 %v2899, %v2897
        %v2942 = vpack.c.b16 %v2902, %v2900
        %v2943 = vpack.c.b16 %v2903, %v2901
        %v2944 = vpack.c.b16 %v2906, %v2904
        %v2945 = vpack.c.b16 %v2907, %v2905
        %v2946 = vpack.c.b16 %v2910, %v2908
        %v2947 = vpack.c.b16 %v2911, %v2909
        %v2948 = vpack.c.b16 %v2914, %v2912
        %v2949 = vpack.c.b16 %v2915, %v2913
        %v2950 = vpack.c.b16 %v2918, %v2916
        %v2951 = vpack.c.b16 %v2919, %v2917
        %2984 = vmatpush.bf16.msra.mxu0 %v2934
        %2985 = vmatpush.bf16.msra.mxu0 %v2932
        %2986 = vmatpush.bf16.msra.mxu0 %v2930
        %2987 = vmatpush.bf16.msra.mxu0 %v2928
        %2988 = vmatpush.bf16.msra.mxu0 %v2926
        %2989 = vmatpush.bf16.msra.mxu0 %v2924
        %2990 = vmatpush.bf16.msra.mxu0 %v2922
        %2991 = vmatpush.bf16.msra.mxu0 %v2920
        %2992 = vmatmul.bf16.gmra.mxu0 %v2792
        %v2993 = vpop.f32.mrf.mxu0
        %v2994 = vadd.f32 %v2742, %v2993
        %v2995 = vpop.f32.mrf.mxu0
        %v2996 = vadd.f32 %v2742, %v2995
        %2997 = vmatmul.bf16.gmra.mxu0 %v2794
        %v2998 = vpop.f32.mrf.mxu0
        %v2999 = vadd.f32 %v2742, %v2998
        %v3000 = vpop.f32.mrf.mxu0
        %v3001 = vadd.f32 %v2742, %v3000
        %3002 = vmatmul.bf16.gmra.mxu0 %v2796
        %v3003 = vpop.f32.mrf.mxu0
        %v3004 = vadd.f32 %v2742, %v3003
        %v3005 = vpop.f32.mrf.mxu0
        %v3006 = vadd.f32 %v2742, %v3005
        %3007 = vmatmul.bf16.gmra.mxu0 %v2798
        %v3008 = vpop.f32.mrf.mxu0
        %v3009 = vadd.f32 %v2742, %v3008
        %v3010 = vpop.f32.mrf.mxu0
        %v3011 = vadd.f32 %v2742, %v3010
        %3012 = vmatmul.bf16.gmra.mxu0 %v2800
        %v3013 = vpop.f32.mrf.mxu0
        %v3014 = vadd.f32 %v2742, %v3013
        %v3015 = vpop.f32.mrf.mxu0
        %v3016 = vadd.f32 %v2742, %v3015
        %3017 = vmatmul.bf16.gmra.mxu0 %v2802
        %v3018 = vpop.f32.mrf.mxu0
        %v3019 = vadd.f32 %v2742, %v3018
        %v3020 = vpop.f32.mrf.mxu0
        %v3021 = vadd.f32 %v2742, %v3020
        %3022 = vmatmul.bf16.gmra.mxu0 %v2804
        %v3023 = vpop.f32.mrf.mxu0
        %v3024 = vadd.f32 %v2742, %v3023
        %v3025 = vpop.f32.mrf.mxu0
        %v3026 = vadd.f32 %v2742, %v3025
        %3027 = vmatmul.bf16.gmra.mxu0 %v2806
        %v3028 = vpop.f32.mrf.mxu0
        %v3029 = vadd.f32 %v2742, %v3028
        %v3030 = vpop.f32.mrf.mxu0
        %v3031 = vadd.f32 %v2742, %v3030
        %3032 = vdwg.mxu0
        %3033 = vmatpush.bf16.msra.mxu0 %v2950
        %3034 = vmatpush.bf16.msra.mxu0 %v2948
        %3035 = vmatpush.bf16.msra.mxu0 %v2946
        %3036 = vmatpush.bf16.msra.mxu0 %v2944
        %3037 = vmatpush.bf16.msra.mxu0 %v2942
        %3038 = vmatpush.bf16.msra.mxu0 %v2940
        %3039 = vmatpush.bf16.msra.mxu0 %v2938
        %3040 = vmatpush.bf16.msra.mxu0 %v2936
        %3041 = vmatmul.bf16.gmra.mxu0 %v2793
        %v3042 = vpop.f32.mrf.mxu0
        %v3043 = vadd.f32 %v2994, %v3042
        %v3044 = vpop.f32.mrf.mxu0
        %v3045 = vadd.f32 %v2996, %v3044
        %3046 = vmatmul.bf16.gmra.mxu0 %v2795
        %v3047 = vpop.f32.mrf.mxu0
        %v3048 = vadd.f32 %v2999, %v3047
        %v3049 = vpop.f32.mrf.mxu0
        %v3050 = vadd.f32 %v3001, %v3049
        %3051 = vmatmul.bf16.gmra.mxu0 %v2797
        %v3052 = vpop.f32.mrf.mxu0
        %v3053 = vadd.f32 %v3004, %v3052
        %v3054 = vpop.f32.mrf.mxu0
        %v3055 = vadd.f32 %v3006, %v3054
        %3056 = vmatmul.bf16.gmra.mxu0 %v2799
        %v3057 = vpop.f32.mrf.mxu0
        %v3058 = vadd.f32 %v3009, %v3057
        %v3059 = vpop.f32.mrf.mxu0
        %v3060 = vadd.f32 %v3011, %v3059
        %3061 = vmatmul.bf16.gmra.mxu0 %v2801
        %v3062 = vpop.f32.mrf.mxu0
        %v3063 = vadd.f32 %v3014, %v3062
        %v3064 = vpop.f32.mrf.mxu0
        %v3065 = vadd.f32 %v3016, %v3064
        %3066 = vmatmul.bf16.gmra.mxu0 %v2803
        %v3067 = vpop.f32.mrf.mxu0
        %v3068 = vadd.f32 %v3019, %v3067
        %v3069 = vpop.f32.mrf.mxu0
        %v3070 = vadd.f32 %v3021, %v3069
        %3071 = vmatmul.bf16.gmra.mxu0 %v2805
        %v3072 = vpop.f32.mrf.mxu0
        %v3073 = vadd.f32 %v3024, %v3072
        %v3074 = vpop.f32.mrf.mxu0
        %v3075 = vadd.f32 %v3026, %v3074
        %3076 = vmatmul.bf16.gmra.mxu0 %v2807
        %v3077 = vpop.f32.mrf.mxu0
        %v3078 = vadd.f32 %v3029, %v3077
        %v3079 = vpop.f32.mrf.mxu0
        %v3080 = vadd.f32 %v3031, %v3079
        %3081 = vdwg.mxu0
        %3082 = vmatpush.bf16.msra.mxu0 %v2935
        %3083 = vmatpush.bf16.msra.mxu0 %v2933
        %3084 = vmatpush.bf16.msra.mxu0 %v2931
        %3085 = vmatpush.bf16.msra.mxu0 %v2929
        %3086 = vmatpush.bf16.msra.mxu0 %v2927
        %3087 = vmatpush.bf16.msra.mxu0 %v2925
        %3088 = vmatpush.bf16.msra.mxu0 %v2923
        %3089 = vmatpush.bf16.msra.mxu0 %v2921
        %3090 = vmatmul.bf16.gmra.mxu0 %v2792
        %v3091 = vpop.f32.mrf.mxu0
        %v3092 = vadd.f32 %v2743, %v3091
        %v3093 = vpop.f32.mrf.mxu0
        %v3094 = vadd.f32 %v2743, %v3093
        %3095 = vmatmul.bf16.gmra.mxu0 %v2794
        %v3096 = vpop.f32.mrf.mxu0
        %v3097 = vadd.f32 %v2743, %v3096
        %v3098 = vpop.f32.mrf.mxu0
        %v3099 = vadd.f32 %v2743, %v3098
        %3100 = vmatmul.bf16.gmra.mxu0 %v2796
        %v3101 = vpop.f32.mrf.mxu0
        %v3102 = vadd.f32 %v2743, %v3101
        %v3103 = vpop.f32.mrf.mxu0
        %v3104 = vadd.f32 %v2743, %v3103
        %3105 = vmatmul.bf16.gmra.mxu0 %v2798
        %v3106 = vpop.f32.mrf.mxu0
        %v3107 = vadd.f32 %v2743, %v3106
        %v3108 = vpop.f32.mrf.mxu0
        %v3109 = vadd.f32 %v2743, %v3108
        %3110 = vmatmul.bf16.gmra.mxu0 %v2800
        %v3111 = vpop.f32.mrf.mxu0
        %v3112 = vadd.f32 %v2743, %v3111
        %v3113 = vpop.f32.mrf.mxu0
        %v3114 = vadd.f32 %v2743, %v3113
        %3115 = vmatmul.bf16.gmra.mxu0 %v2802
        %v3116 = vpop.f32.mrf.mxu0
        %v3117 = vadd.f32 %v2743, %v3116
        %v3118 = vpop.f32.mrf.mxu0
        %v3119 = vadd.f32 %v2743, %v3118
        %3120 = vmatmul.bf16.gmra.mxu0 %v2804
        %v3121 = vpop.f32.mrf.mxu0
        %v3122 = vadd.f32 %v2743, %v3121
        %v3123 = vpop.f32.mrf.mxu0
        %v3124 = vadd.f32 %v2743, %v3123
        %3125 = vmatmul.bf16.gmra.mxu0 %v2806
        %v3126 = vpop.f32.mrf.mxu0
        %v3127 = vadd.f32 %v2743, %v3126
        %v3128 = vpop.f32.mrf.mxu0
        %v3129 = vadd.f32 %v2743, %v3128
        %3130 = vdwg.mxu0
        %3131 = vmatpush.bf16.msra.mxu0 %v2951
        %3132 = vmatpush.bf16.msra.mxu0 %v2949
        %3133 = vmatpush.bf16.msra.mxu0 %v2947
        %3134 = vmatpush.bf16.msra.mxu0 %v2945
        %3135 = vmatpush.bf16.msra.mxu0 %v2943
        %3136 = vmatpush.bf16.msra.mxu0 %v2941
        %3137 = vmatpush.bf16.msra.mxu0 %v2939
        %3138 = vmatpush.bf16.msra.mxu0 %v2937
        %3139 = vmatmul.bf16.gmra.mxu0 %v2793
        %v3140 = vpop.f32.mrf.mxu0
        %v3141 = vadd.f32 %v3092, %v3140
        %v3142 = vpop.f32.mrf.mxu0
        %v3143 = vadd.f32 %v3094, %v3142
        %3144 = vmatmul.bf16.gmra.mxu0 %v2795
        %v3145 = vpop.f32.mrf.mxu0
        %v3146 = vadd.f32 %v3097, %v3145
        %v3147 = vpop.f32.mrf.mxu0
        %v3148 = vadd.f32 %v3099, %v3147
        %3149 = vmatmul.bf16.gmra.mxu0 %v2797
        %v3150 = vpop.f32.mrf.mxu0
        %v3151 = vadd.f32 %v3102, %v3150
        %v3152 = vpop.f32.mrf.mxu0
        %v3153 = vadd.f32 %v3104, %v3152
        %3154 = vmatmul.bf16.gmra.mxu0 %v2799
        %v3155 = vpop.f32.mrf.mxu0
        %v3156 = vadd.f32 %v3107, %v3155
        %v3157 = vpop.f32.mrf.mxu0
        %v3158 = vadd.f32 %v3109, %v3157
        %3159 = vmatmul.bf16.gmra.mxu0 %v2801
        %v3160 = vpop.f32.mrf.mxu0
        %v3161 = vadd.f32 %v3112, %v3160
        %v3162 = vpop.f32.mrf.mxu0
        %v3163 = vadd.f32 %v3114, %v3162
        %3164 = vmatmul.bf16.gmra.mxu0 %v2803
        %v3165 = vpop.f32.mrf.mxu0
        %v3166 = vadd.f32 %v3117, %v3165
        %v3167 = vpop.f32.mrf.mxu0
        %v3168 = vadd.f32 %v3119, %v3167
        %3169 = vmatmul.bf16.gmra.mxu0 %v2805
        %v3170 = vpop.f32.mrf.mxu0
        %v3171 = vadd.f32 %v3122, %v3170
        %v3172 = vpop.f32.mrf.mxu0
        %v3173 = vadd.f32 %v3124, %v3172
        %3174 = vmatmul.bf16.gmra.mxu0 %v2807
        %v3175 = vpop.f32.mrf.mxu0
        %v3176 = vadd.f32 %v3127, %v3175
        %v3177 = vpop.f32.mrf.mxu0
        %v3178 = vadd.f32 %v3129, %v3177
        %3179 = vdwg.mxu0
        %v3180 = vadd.f32 %v379, %v3043
        %v3181 = vadd.f32 %v380, %v3141
        %v3182 = vadd.f32 %v381, %v3045
        %v3183 = vadd.f32 %v382, %v3143
        %v3184 = vadd.f32 %v383, %v3048
        %v3185 = vadd.f32 %v384, %v3146
        %v3186 = vadd.f32 %v385, %v3050
        %v3187 = vadd.f32 %v386, %v3148
        %v3188 = vadd.f32 %v387, %v3053
        %v3189 = vadd.f32 %v388, %v3151
        %v3190 = vadd.f32 %v389, %v3055
        %v3191 = vadd.f32 %v390, %v3153
        %v3192 = vadd.f32 %v391, %v3058
        %v3193 = vadd.f32 %v392, %v3156
        %v3194 = vadd.f32 %v393, %v3060
        %v3195 = vadd.f32 %v394, %v3158
        %v3196 = vadd.f32 %v395, %v3063
        %v3197 = vadd.f32 %v396, %v3161
        %v3198 = vadd.f32 %v397, %v3065
        %v3199 = vadd.f32 %v398, %v3163
        %v3200 = vadd.f32 %v399, %v3068
        %v3201 = vadd.f32 %v400, %v3166
        %v3202 = vadd.f32 %v401, %v3070
        %v3203 = vadd.f32 %v402, %v3168
        %v3204 = vadd.f32 %v403, %v3073
        %v3205 = vadd.f32 %v404, %v3171
        %v3206 = vadd.f32 %v405, %v3075
        %v3207 = vadd.f32 %v406, %v3173
        %v3208 = vadd.f32 %v407, %v3078
        %v3209 = vadd.f32 %v408, %v3176
        %v3210 = vadd.f32 %v409, %v3080
        %v3211 = vadd.f32 %v410, %v3178
        %v3212 = vadd.f32 %v3180, %v3181
        %3213 = vadd.xlane.f32.xlu0 %v3212
        %v3214 = vpop.xlane.xlu0 %3213
        %v3215 = vadd.f32 %v3182, %v3183
        %3216 = vadd.xlane.f32.xlu0 %v3215
        %v3217 = vpop.xlane.xlu0 %3216
        %v3218 = vadd.f32 %v3184, %v3185
        %3219 = vadd.xlane.f32.xlu0 %v3218
        %v3220 = vpop.xlane.xlu0 %3219
        %v3221 = vadd.f32 %v3186, %v3187
        %3222 = vadd.xlane.f32.xlu0 %v3221
        %v3223 = vpop.xlane.xlu0 %3222
        %v3224 = vadd.f32 %v3188, %v3189
        %3225 = vadd.xlane.f32.xlu0 %v3224
        %v3226 = vpop.xlane.xlu0 %3225
        %v3227 = vadd.f32 %v3190, %v3191
        %3228 = vadd.xlane.f32.xlu0 %v3227
        %v3229 = vpop.xlane.xlu0 %3228
        %v3230 = vadd.f32 %v3192, %v3193
        %3231 = vadd.xlane.f32.xlu0 %v3230
        %v3232 = vpop.xlane.xlu0 %3231
        %v3233 = vadd.f32 %v3194, %v3195
        %3234 = vadd.xlane.f32.xlu0 %v3233
        %v3235 = vpop.xlane.xlu0 %3234
        %v3236 = vadd.f32 %v3196, %v3197
        %3237 = vadd.xlane.f32.xlu0 %v3236
        %v3238 = vpop.xlane.xlu0 %3237
        %v3239 = vadd.f32 %v3198, %v3199
        %3240 = vadd.xlane.f32.xlu0 %v3239
        %v3241 = vpop.xlane.xlu0 %3240
        %v3242 = vadd.f32 %v3200, %v3201
        %3243 = vadd.xlane.f32.xlu0 %v3242
        %v3244 = vpop.xlane.xlu0 %3243
        %v3245 = vadd.f32 %v3202, %v3203
        %3246 = vadd.xlane.f32.xlu0 %v3245
        %v3247 = vpop.xlane.xlu0 %3246
        %v3248 = vadd.f32 %v3204, %v3205
        %3249 = vadd.xlane.f32.xlu0 %v3248
        %v3250 = vpop.xlane.xlu0 %3249
        %v3251 = vadd.f32 %v3206, %v3207
        %3252 = vadd.xlane.f32.xlu0 %v3251
        %v3253 = vpop.xlane.xlu0 %3252
        %v3254 = vadd.f32 %v3208, %v3209
        %3255 = vadd.xlane.f32.xlu0 %v3254
        %v3256 = vpop.xlane.xlu0 %3255
        %v3257 = vadd.f32 %v3210, %v3211
        %3258 = vadd.xlane.f32.xlu0 %v3257
        %v3259 = vpop.xlane.xlu0 %3258
        %v3260 = vrcp.pop 256.0
        %v3261 = vmul.f32 256.0, %v3260
        %v3262 = vsub.f32 1.0, %v3261
        %v3263 = vmul.f32 %v3260, %v3262
        %v3264 = vadd.f32 %v3260, %v3263
        %vm3265 = vweird.f32 %v3260
        %v3266 = vsel %vm3265, %v3260, %v3264
        %v3267 = vmul.f32 %v3214, %v3266
        %v3268 = vmul.f32 %v3217, %v3266
        %v3269 = vmul.f32 %v3220, %v3266
        %v3270 = vmul.f32 %v3223, %v3266
        %v3271 = vmul.f32 %v3226, %v3266
        %v3272 = vmul.f32 %v3229, %v3266
        %v3273 = vmul.f32 %v3232, %v3266
        %v3274 = vmul.f32 %v3235, %v3266
        %v3275 = vmul.f32 %v3238, %v3266
        %v3276 = vmul.f32 %v3241, %v3266
        %v3277 = vmul.f32 %v3244, %v3266
        %v3278 = vmul.f32 %v3247, %v3266
        %v3279 = vmul.f32 %v3250, %v3266
        %v3280 = vmul.f32 %v3253, %v3266
        %v3281 = vmul.f32 %v3256, %v3266
        %v3282 = vmul.f32 %v3259, %v3266
        %v3283 = vmul.f32 %v3180, %v3180
        %v3284 = vmul.f32 %v3181, %v3181
        %v3285 = vmul.f32 %v3182, %v3182
        %v3286 = vmul.f32 %v3183, %v3183
        %v3287 = vmul.f32 %v3184, %v3184
        %v3288 = vmul.f32 %v3185, %v3185
        %v3289 = vmul.f32 %v3186, %v3186
        %v3290 = vmul.f32 %v3187, %v3187
        %v3291 = vmul.f32 %v3188, %v3188
        %v3292 = vmul.f32 %v3189, %v3189
        %v3293 = vmul.f32 %v3190, %v3190
        %v3294 = vmul.f32 %v3191, %v3191
        %v3295 = vmul.f32 %v3192, %v3192
        %v3296 = vmul.f32 %v3193, %v3193
        %v3297 = vmul.f32 %v3194, %v3194
        %v3298 = vmul.f32 %v3195, %v3195
        %v3299 = vmul.f32 %v3196, %v3196
        %v3300 = vmul.f32 %v3197, %v3197
        %v3301 = vmul.f32 %v3198, %v3198
        %v3302 = vmul.f32 %v3199, %v3199
        %v3303 = vmul.f32 %v3200, %v3200
        %v3304 = vmul.f32 %v3201, %v3201
        %v3305 = vmul.f32 %v3202, %v3202
        %v3306 = vmul.f32 %v3203, %v3203
        %v3307 = vmul.f32 %v3204, %v3204
        %v3308 = vmul.f32 %v3205, %v3205
        %v3309 = vmul.f32 %v3206, %v3206
        %v3310 = vmul.f32 %v3207, %v3207
        %v3311 = vmul.f32 %v3208, %v3208
        %v3312 = vmul.f32 %v3209, %v3209
        %v3313 = vmul.f32 %v3210, %v3210
        %v3314 = vmul.f32 %v3211, %v3211
        %v3315 = vadd.f32 %v3283, %v3284
        %3316 = vadd.xlane.f32.xlu0 %v3315
        %v3317 = vpop.xlane.xlu0 %3316
        %v3318 = vadd.f32 %v3285, %v3286
        %3319 = vadd.xlane.f32.xlu0 %v3318
        %v3320 = vpop.xlane.xlu0 %3319
        %v3321 = vadd.f32 %v3287, %v3288
        %3322 = vadd.xlane.f32.xlu0 %v3321
        %v3323 = vpop.xlane.xlu0 %3322
        %v3324 = vadd.f32 %v3289, %v3290
        %3325 = vadd.xlane.f32.xlu0 %v3324
        %v3326 = vpop.xlane.xlu0 %3325
        %v3327 = vadd.f32 %v3291, %v3292
        %3328 = vadd.xlane.f32.xlu0 %v3327
        %v3329 = vpop.xlane.xlu0 %3328
        %v3330 = vadd.f32 %v3293, %v3294
        %3331 = vadd.xlane.f32.xlu0 %v3330
        %v3332 = vpop.xlane.xlu0 %3331
        %v3333 = vadd.f32 %v3295, %v3296
        %3334 = vadd.xlane.f32.xlu0 %v3333
        %v3335 = vpop.xlane.xlu0 %3334
        %v3336 = vadd.f32 %v3297, %v3298
        %3337 = vadd.xlane.f32.xlu0 %v3336
        %v3338 = vpop.xlane.xlu0 %3337
        %v3339 = vadd.f32 %v3299, %v3300
        %3340 = vadd.xlane.f32.xlu0 %v3339
        %v3341 = vpop.xlane.xlu0 %3340
        %v3342 = vadd.f32 %v3301, %v3302
        %3343 = vadd.xlane.f32.xlu0 %v3342
        %v3344 = vpop.xlane.xlu0 %3343
        %v3345 = vadd.f32 %v3303, %v3304
        %3346 = vadd.xlane.f32.xlu0 %v3345
        %v3347 = vpop.xlane.xlu0 %3346
        %v3348 = vadd.f32 %v3305, %v3306
        %3349 = vadd.xlane.f32.xlu0 %v3348
        %v3350 = vpop.xlane.xlu0 %3349
        %v3351 = vadd.f32 %v3307, %v3308
        %3352 = vadd.xlane.f32.xlu0 %v3351
        %v3353 = vpop.xlane.xlu0 %3352
        %v3354 = vadd.f32 %v3309, %v3310
        %3355 = vadd.xlane.f32.xlu0 %v3354
        %v3356 = vpop.xlane.xlu0 %3355
        %v3357 = vadd.f32 %v3311, %v3312
        %3358 = vadd.xlane.f32.xlu0 %v3357
        %v3359 = vpop.xlane.xlu0 %3358
        %v3360 = vadd.f32 %v3313, %v3314
        %3361 = vadd.xlane.f32.xlu0 %v3360
        %v3362 = vpop.xlane.xlu0 %3361
        %v3363 = vmul.f32 %v3317, %v3266
        %v3364 = vmul.f32 %v3320, %v3266
        %v3365 = vmul.f32 %v3323, %v3266
        %v3366 = vmul.f32 %v3326, %v3266
        %v3367 = vmul.f32 %v3329, %v3266
        %v3368 = vmul.f32 %v3332, %v3266
        %v3369 = vmul.f32 %v3335, %v3266
        %v3370 = vmul.f32 %v3338, %v3266
        %v3371 = vmul.f32 %v3341, %v3266
        %v3372 = vmul.f32 %v3344, %v3266
        %v3373 = vmul.f32 %v3347, %v3266
        %v3374 = vmul.f32 %v3350, %v3266
        %v3375 = vmul.f32 %v3353, %v3266
        %v3376 = vmul.f32 %v3356, %v3266
        %v3377 = vmul.f32 %v3359, %v3266
        %v3378 = vmul.f32 %v3362, %v3266
        %v3379 = vmul.f32 %v3267, %v3267
        %v3380 = vmul.f32 %v3268, %v3268
        %v3381 = vmul.f32 %v3269, %v3269
        %v3382 = vmul.f32 %v3270, %v3270
        %v3383 = vmul.f32 %v3271, %v3271
        %v3384 = vmul.f32 %v3272, %v3272
        %v3385 = vmul.f32 %v3273, %v3273
        %v3386 = vmul.f32 %v3274, %v3274
        %v3387 = vmul.f32 %v3275, %v3275
        %v3388 = vmul.f32 %v3276, %v3276
        %v3389 = vmul.f32 %v3277, %v3277
        %v3390 = vmul.f32 %v3278, %v3278
        %v3391 = vmul.f32 %v3279, %v3279
        %v3392 = vmul.f32 %v3280, %v3280
        %v3393 = vmul.f32 %v3281, %v3281
        %v3394 = vmul.f32 %v3282, %v3282
        %v3395 = vsub.f32 %v3363, %v3379
        %v3396 = vsub.f32 %v3364, %v3380
        %v3397 = vsub.f32 %v3365, %v3381
        %v3398 = vsub.f32 %v3366, %v3382
        %v3399 = vsub.f32 %v3367, %v3383
        %v3400 = vsub.f32 %v3368, %v3384
        %v3401 = vsub.f32 %v3369, %v3385
        %v3402 = vsub.f32 %v3370, %v3386
        %v3403 = vsub.f32 %v3371, %v3387
        %v3404 = vsub.f32 %v3372, %v3388
        %v3405 = vsub.f32 %v3373, %v3389
        %v3406 = vsub.f32 %v3374, %v3390
        %v3407 = vsub.f32 %v3375, %v3391
        %v3408 = vsub.f32 %v3376, %v3392
        %v3409 = vsub.f32 %v3377, %v3393
        %v3410 = vsub.f32 %v3378, %v3394
        %v3411 = vsub.f32 %v3180, %v3267
        %v3412 = vsub.f32 %v3181, %v3267
        %v3413 = vsub.f32 %v3182, %v3268
        %v3414 = vsub.f32 %v3183, %v3268
        %v3415 = vsub.f32 %v3184, %v3269
        %v3416 = vsub.f32 %v3185, %v3269
        %v3417 = vsub.f32 %v3186, %v3270
        %v3418 = vsub.f32 %v3187, %v3270
        %v3419 = vsub.f32 %v3188, %v3271
        %v3420 = vsub.f32 %v3189, %v3271
        %v3421 = vsub.f32 %v3190, %v3272
        %v3422 = vsub.f32 %v3191, %v3272
        %v3423 = vsub.f32 %v3192, %v3273
        %v3424 = vsub.f32 %v3193, %v3273
        %v3425 = vsub.f32 %v3194, %v3274
        %v3426 = vsub.f32 %v3195, %v3274
        %v3427 = vsub.f32 %v3196, %v3275
        %v3428 = vsub.f32 %v3197, %v3275
        %v3429 = vsub.f32 %v3198, %v3276
        %v3430 = vsub.f32 %v3199, %v3276
        %v3431 = vsub.f32 %v3200, %v3277
        %v3432 = vsub.f32 %v3201, %v3277
        %v3433 = vsub.f32 %v3202, %v3278
        %v3434 = vsub.f32 %v3203, %v3278
        %v3435 = vsub.f32 %v3204, %v3279
        %v3436 = vsub.f32 %v3205, %v3279
        %v3437 = vsub.f32 %v3206, %v3280
        %v3438 = vsub.f32 %v3207, %v3280
        %v3439 = vsub.f32 %v3208, %v3281
        %v3440 = vsub.f32 %v3209, %v3281
        %v3441 = vsub.f32 %v3210, %v3282
        %v3442 = vsub.f32 %v3211, %v3282
        %v3443 = vadd.f32 %v3395, 1e-05
        %v3444 = vadd.f32 %v3396, 1e-05
        %v3445 = vadd.f32 %v3397, 1e-05
        %v3446 = vadd.f32 %v3398, 1e-05
        %v3447 = vadd.f32 %v3399, 1e-05
        %v3448 = vadd.f32 %v3400, 1e-05
        %v3449 = vadd.f32 %v3401, 1e-05
        %v3450 = vadd.f32 %v3402, 1e-05
        %v3451 = vadd.f32 %v3403, 1e-05
        %v3452 = vadd.f32 %v3404, 1e-05
        %v3453 = vadd.f32 %v3405, 1e-05
        %v3454 = vadd.f32 %v3406, 1e-05
        %v3455 = vadd.f32 %v3407, 1e-05
        %v3456 = vadd.f32 %v3408, 1e-05
        %v3457 = vadd.f32 %v3409, 1e-05
        %v3458 = vadd.f32 %v3410, 1e-05
        %v3459 = vrsqrt.pop %v3443
        %v3460 = vmul.f32 %v3459, %v3443
        %v3461 = vmul.f32 %v3460, %v3459
        %v3462 = vmul.f32 0.5, %v3461
        %v3463 = vsub.f32 1.5, %v3462
        %v3464 = vmul.f32 %v3459, %v3463
        %vm3465 = vweird.f32 %v3443
        %vm3466 = vweird.f32 %v3459
        %vm3467 = vmor %vm3465, %vm3466
        %v3468 = vsel %vm3467, %v3459, %v3464
        %v3469 = vrsqrt.pop %v3444
        %v3470 = vmul.f32 %v3469, %v3444
        %v3471 = vmul.f32 %v3470, %v3469
        %v3472 = vmul.f32 0.5, %v3471
        %v3473 = vsub.f32 1.5, %v3472
        %v3474 = vmul.f32 %v3469, %v3473
        %vm3475 = vweird.f32 %v3444
        %vm3476 = vweird.f32 %v3469
        %vm3477 = vmor %vm3475, %vm3476
        %v3478 = vsel %vm3477, %v3469, %v3474
        %v3479 = vrsqrt.pop %v3445
        %v3480 = vmul.f32 %v3479, %v3445
        %v3481 = vmul.f32 %v3480, %v3479
        %v3482 = vmul.f32 0.5, %v3481
        %v3483 = vsub.f32 1.5, %v3482
        %v3484 = vmul.f32 %v3479, %v3483
        %vm3485 = vweird.f32 %v3445
        %vm3486 = vweird.f32 %v3479
        %vm3487 = vmor %vm3485, %vm3486
        %v3488 = vsel %vm3487, %v3479, %v3484
        %v3489 = vrsqrt.pop %v3446
        %v3490 = vmul.f32 %v3489, %v3446
        %v3491 = vmul.f32 %v3490, %v3489
        %v3492 = vmul.f32 0.5, %v3491
        %v3493 = vsub.f32 1.5, %v3492
        %v3494 = vmul.f32 %v3489, %v3493
        %vm3495 = vweird.f32 %v3446
        %vm3496 = vweird.f32 %v3489
        %vm3497 = vmor %vm3495, %vm3496
        %v3498 = vsel %vm3497, %v3489, %v3494
        %v3499 = vrsqrt.pop %v3447
        %v3500 = vmul.f32 %v3499, %v3447
        %v3501 = vmul.f32 %v3500, %v3499
        %v3502 = vmul.f32 0.5, %v3501
        %v3503 = vsub.f32 1.5, %v3502
        %v3504 = vmul.f32 %v3499, %v3503
        %vm3505 = vweird.f32 %v3447
        %vm3506 = vweird.f32 %v3499
        %vm3507 = vmor %vm3505, %vm3506
        %v3508 = vsel %vm3507, %v3499, %v3504
        %v3509 = vrsqrt.pop %v3448
        %v3510 = vmul.f32 %v3509, %v3448
        %v3511 = vmul.f32 %v3510, %v3509
        %v3512 = vmul.f32 0.5, %v3511
        %v3513 = vsub.f32 1.5, %v3512
        %v3514 = vmul.f32 %v3509, %v3513
        %vm3515 = vweird.f32 %v3448
        %vm3516 = vweird.f32 %v3509
        %vm3517 = vmor %vm3515, %vm3516
        %v3518 = vsel %vm3517, %v3509, %v3514
        %v3519 = vrsqrt.pop %v3449
        %v3520 = vmul.f32 %v3519, %v3449
        %v3521 = vmul.f32 %v3520, %v3519
        %v3522 = vmul.f32 0.5, %v3521
        %v3523 = vsub.f32 1.5, %v3522
        %v3524 = vmul.f32 %v3519, %v3523
        %vm3525 = vweird.f32 %v3449
        %vm3526 = vweird.f32 %v3519
        %vm3527 = vmor %vm3525, %vm3526
        %v3528 = vsel %vm3527, %v3519, %v3524
        %v3529 = vrsqrt.pop %v3450
        %v3530 = vmul.f32 %v3529, %v3450
        %v3531 = vmul.f32 %v3530, %v3529
        %v3532 = vmul.f32 0.5, %v3531
        %v3533 = vsub.f32 1.5, %v3532
        %v3534 = vmul.f32 %v3529, %v3533
        %vm3535 = vweird.f32 %v3450
        %vm3536 = vweird.f32 %v3529
        %vm3537 = vmor %vm3535, %vm3536
        %v3538 = vsel %vm3537, %v3529, %v3534
        %v3539 = vrsqrt.pop %v3451
        %v3540 = vmul.f32 %v3539, %v3451
        %v3541 = vmul.f32 %v3540, %v3539
        %v3542 = vmul.f32 0.5, %v3541
        %v3543 = vsub.f32 1.5, %v3542
        %v3544 = vmul.f32 %v3539, %v3543
        %vm3545 = vweird.f32 %v3451
        %vm3546 = vweird.f32 %v3539
        %vm3547 = vmor %vm3545, %vm3546
        %v3548 = vsel %vm3547, %v3539, %v3544
        %v3549 = vrsqrt.pop %v3452
        %v3550 = vmul.f32 %v3549, %v3452
        %v3551 = vmul.f32 %v3550, %v3549
        %v3552 = vmul.f32 0.5, %v3551
        %v3553 = vsub.f32 1.5, %v3552
        %v3554 = vmul.f32 %v3549, %v3553
        %vm3555 = vweird.f32 %v3452
        %vm3556 = vweird.f32 %v3549
        %vm3557 = vmor %vm3555, %vm3556
        %v3558 = vsel %vm3557, %v3549, %v3554
        %v3559 = vrsqrt.pop %v3453
        %v3560 = vmul.f32 %v3559, %v3453
        %v3561 = vmul.f32 %v3560, %v3559
        %v3562 = vmul.f32 0.5, %v3561
        %v3563 = vsub.f32 1.5, %v3562
        %v3564 = vmul.f32 %v3559, %v3563
        %vm3565 = vweird.f32 %v3453
        %vm3566 = vweird.f32 %v3559
        %vm3567 = vmor %vm3565, %vm3566
        %v3568 = vsel %vm3567, %v3559, %v3564
        %v3569 = vrsqrt.pop %v3454
        %v3570 = vmul.f32 %v3569, %v3454
        %v3571 = vmul.f32 %v3570, %v3569
        %v3572 = vmul.f32 0.5, %v3571
        %v3573 = vsub.f32 1.5, %v3572
        %v3574 = vmul.f32 %v3569, %v3573
        %vm3575 = vweird.f32 %v3454
        %vm3576 = vweird.f32 %v3569
        %vm3577 = vmor %vm3575, %vm3576
        %v3578 = vsel %vm3577, %v3569, %v3574
        %v3579 = vrsqrt.pop %v3455
        %v3580 = vmul.f32 %v3579, %v3455
        %v3581 = vmul.f32 %v3580, %v3579
        %v3582 = vmul.f32 0.5, %v3581
        %v3583 = vsub.f32 1.5, %v3582
        %v3584 = vmul.f32 %v3579, %v3583
        %vm3585 = vweird.f32 %v3455
        %vm3586 = vweird.f32 %v3579
        %vm3587 = vmor %vm3585, %vm3586
        %v3588 = vsel %vm3587, %v3579, %v3584
        %v3589 = vrsqrt.pop %v3456
        %v3590 = vmul.f32 %v3589, %v3456
        %v3591 = vmul.f32 %v3590, %v3589
        %v3592 = vmul.f32 0.5, %v3591
        %v3593 = vsub.f32 1.5, %v3592
        %v3594 = vmul.f32 %v3589, %v3593
        %vm3595 = vweird.f32 %v3456
        %vm3596 = vweird.f32 %v3589
        %vm3597 = vmor %vm3595, %vm3596
        %v3598 = vsel %vm3597, %v3589, %v3594
        %v3599 = vrsqrt.pop %v3457
        %v3600 = vmul.f32 %v3599, %v3457
        %v3601 = vmul.f32 %v3600, %v3599
        %v3602 = vmul.f32 0.5, %v3601
        %v3603 = vsub.f32 1.5, %v3602
        %v3604 = vmul.f32 %v3599, %v3603
        %vm3605 = vweird.f32 %v3457
        %vm3606 = vweird.f32 %v3599
        %vm3607 = vmor %vm3605, %vm3606
        %v3608 = vsel %vm3607, %v3599, %v3604
        %v3609 = vrsqrt.pop %v3458
        %v3610 = vmul.f32 %v3609, %v3458
        %v3611 = vmul.f32 %v3610, %v3609
        %v3612 = vmul.f32 0.5, %v3611
        %v3613 = vsub.f32 1.5, %v3612
        %v3614 = vmul.f32 %v3609, %v3613
        %vm3615 = vweird.f32 %v3458
        %vm3616 = vweird.f32 %v3609
        %vm3617 = vmor %vm3615, %vm3616
        %v3618 = vsel %vm3617, %v3609, %v3614
        %v3619 = vmul.f32 %v3411, %v3468
        %v3620 = vmul.f32 %v3412, %v3468
        %v3621 = vmul.f32 %v3413, %v3478
        %v3622 = vmul.f32 %v3414, %v3478
        %v3623 = vmul.f32 %v3415, %v3488
        %v3624 = vmul.f32 %v3416, %v3488
        %v3625 = vmul.f32 %v3417, %v3498
        %v3626 = vmul.f32 %v3418, %v3498
        %v3627 = vmul.f32 %v3419, %v3508
        %v3628 = vmul.f32 %v3420, %v3508
        %v3629 = vmul.f32 %v3421, %v3518
        %v3630 = vmul.f32 %v3422, %v3518
        %v3631 = vmul.f32 %v3423, %v3528
        %v3632 = vmul.f32 %v3424, %v3528
        %v3633 = vmul.f32 %v3425, %v3538
        %v3634 = vmul.f32 %v3426, %v3538
        %v3635 = vmul.f32 %v3427, %v3548
        %v3636 = vmul.f32 %v3428, %v3548
        %v3637 = vmul.f32 %v3429, %v3558
        %v3638 = vmul.f32 %v3430, %v3558
        %v3639 = vmul.f32 %v3431, %v3568
        %v3640 = vmul.f32 %v3432, %v3568
        %v3641 = vmul.f32 %v3433, %v3578
        %v3642 = vmul.f32 %v3434, %v3578
        %v3643 = vmul.f32 %v3435, %v3588
        %v3644 = vmul.f32 %v3436, %v3588
        %v3645 = vmul.f32 %v3437, %v3598
        %v3646 = vmul.f32 %v3438, %v3598
        %v3647 = vmul.f32 %v3439, %v3608
        %v3648 = vmul.f32 %v3440, %v3608
        %v3649 = vmul.f32 %v3441, %v3618
        %v3650 = vmul.f32 %v3442, %v3618
        %v3651 = vperm.slane %v414, 1
        %v3652 = vperm.slane %v415, 1
        %v3653 = vmul.f32 %v3619, %v3651
        %v3654 = vmul.f32 %v3620, %v3652
        %v3655 = vmul.f32 %v3621, %v3651
        %v3656 = vmul.f32 %v3622, %v3652
        %v3657 = vmul.f32 %v3623, %v3651
        %v3658 = vmul.f32 %v3624, %v3652
        %v3659 = vmul.f32 %v3625, %v3651
        %v3660 = vmul.f32 %v3626, %v3652
        %v3661 = vmul.f32 %v3627, %v3651
        %v3662 = vmul.f32 %v3628, %v3652
        %v3663 = vmul.f32 %v3629, %v3651
        %v3664 = vmul.f32 %v3630, %v3652
        %v3665 = vmul.f32 %v3631, %v3651
        %v3666 = vmul.f32 %v3632, %v3652
        %v3667 = vmul.f32 %v3633, %v3651
        %v3668 = vmul.f32 %v3634, %v3652
        %v3669 = vmul.f32 %v3635, %v3651
        %v3670 = vmul.f32 %v3636, %v3652
        %v3671 = vmul.f32 %v3637, %v3651
        %v3672 = vmul.f32 %v3638, %v3652
        %v3673 = vmul.f32 %v3639, %v3651
        %v3674 = vmul.f32 %v3640, %v3652
        %v3675 = vmul.f32 %v3641, %v3651
        %v3676 = vmul.f32 %v3642, %v3652
        %v3677 = vmul.f32 %v3643, %v3651
        %v3678 = vmul.f32 %v3644, %v3652
        %v3679 = vmul.f32 %v3645, %v3651
        %v3680 = vmul.f32 %v3646, %v3652
        %v3681 = vmul.f32 %v3647, %v3651
        %v3682 = vmul.f32 %v3648, %v3652
        %v3683 = vmul.f32 %v3649, %v3651
        %v3684 = vmul.f32 %v3650, %v3652
        %v3685 = vperm.slane %v414, 2
        %v3686 = vperm.slane %v415, 2
        %v3687 = vadd.f32 %v3653, %v3685
        %v3688 = vadd.f32 %v3654, %v3686
        %v3689 = vadd.f32 %v3655, %v3685
        %v3690 = vadd.f32 %v3656, %v3686
        %v3691 = vadd.f32 %v3657, %v3685
        %v3692 = vadd.f32 %v3658, %v3686
        %v3693 = vadd.f32 %v3659, %v3685
        %v3694 = vadd.f32 %v3660, %v3686
        %v3695 = vadd.f32 %v3661, %v3685
        %v3696 = vadd.f32 %v3662, %v3686
        %v3697 = vadd.f32 %v3663, %v3685
        %v3698 = vadd.f32 %v3664, %v3686
        %v3699 = vadd.f32 %v3665, %v3685
        %v3700 = vadd.f32 %v3666, %v3686
        %v3701 = vadd.f32 %v3667, %v3685
        %v3702 = vadd.f32 %v3668, %v3686
        %v3703 = vadd.f32 %v3669, %v3685
        %v3704 = vadd.f32 %v3670, %v3686
        %v3705 = vadd.f32 %v3671, %v3685
        %v3706 = vadd.f32 %v3672, %v3686
        %v3707 = vadd.f32 %v3673, %v3685
        %v3708 = vadd.f32 %v3674, %v3686
        %v3709 = vadd.f32 %v3675, %v3685
        %v3710 = vadd.f32 %v3676, %v3686
        %v3711 = vadd.f32 %v3677, %v3685
        %v3712 = vadd.f32 %v3678, %v3686
        %v3713 = vadd.f32 %v3679, %v3685
        %v3714 = vadd.f32 %v3680, %v3686
        %v3715 = vadd.f32 %v3681, %v3685
        %v3716 = vadd.f32 %v3682, %v3686
        %v3717 = vadd.f32 %v3683, %v3685
        %v3718 = vadd.f32 %v3684, %v3686
        %v3719 = vpack.c.bf16 %v3689, %v3687
        %v3720 = vpack.c.bf16 %v3690, %v3688
        %v3721 = vpack.c.bf16 %v3693, %v3691
        %v3722 = vpack.c.bf16 %v3694, %v3692
        %v3723 = vpack.c.bf16 %v3697, %v3695
        %v3724 = vpack.c.bf16 %v3698, %v3696
        %v3725 = vpack.c.bf16 %v3701, %v3699
        %v3726 = vpack.c.bf16 %v3702, %v3700
        %v3727 = vpack.c.bf16 %v3705, %v3703
        %v3728 = vpack.c.bf16 %v3706, %v3704
        %v3729 = vpack.c.bf16 %v3709, %v3707
        %v3730 = vpack.c.bf16 %v3710, %v3708
        %v3731 = vpack.c.bf16 %v3713, %v3711
        %v3732 = vpack.c.bf16 %v3714, %v3712
        %v3733 = vpack.c.bf16 %v3717, %v3715
        %v3734 = vpack.c.bf16 %v3718, %v3716
        %s3735 = smul.u32 %s374, 128
        %s3736 = smul.addr %s3735, 4
        %s3737 = scalar_lea.vmem %s5, %s3736
        %v3738 = vld [vmem:[%s3737] sm:$0xff]
        %v3739 = vld [vmem:[%s3737 + $0x8] sm:$0xff]
        %v3740 = vld [vmem:[%s3737 + $0x10] sm:$0xff]
        %v3741 = vld [vmem:[%s3737 + $0x18] sm:$0xff]
        %v3742 = vld [vmem:[%s3737 + $0x20] sm:$0xff]
        %v3743 = vld [vmem:[%s3737 + $0x28] sm:$0xff]
        %v3744 = vld [vmem:[%s3737 + $0x30] sm:$0xff]
        %v3745 = vld [vmem:[%s3737 + $0x38] sm:$0xff]
        %v3746 = vld [vmem:[%s3737 + $0x40] sm:$0xff]
        %v3747 = vld [vmem:[%s3737 + $0x48] sm:$0xff]
        %v3748 = vld [vmem:[%s3737 + $0x50] sm:$0xff]
        %v3749 = vld [vmem:[%s3737 + $0x58] sm:$0xff]
        %v3750 = vld [vmem:[%s3737 + $0x60] sm:$0xff]
        %v3751 = vld [vmem:[%s3737 + $0x68] sm:$0xff]
        %v3752 = vld [vmem:[%s3737 + $0x70] sm:$0xff]
        %v3753 = vld [vmem:[%s3737 + $0x78] sm:$0xff]
        %v3754 = vld [vmem:[%s3737 + $0x80] sm:$0xff]
        %v3755 = vld [vmem:[%s3737 + $0x88] sm:$0xff]
        %v3756 = vld [vmem:[%s3737 + $0x90] sm:$0xff]
        %v3757 = vld [vmem:[%s3737 + $0x98] sm:$0xff]
        %v3758 = vld [vmem:[%s3737 + $0xa0] sm:$0xff]
        %v3759 = vld [vmem:[%s3737 + $0xa8] sm:$0xff]
        %v3760 = vld [vmem:[%s3737 + $0xb0] sm:$0xff]
        %v3761 = vld [vmem:[%s3737 + $0xb8] sm:$0xff]
        %v3762 = vld [vmem:[%s3737 + $0xc0] sm:$0xff]
        %v3763 = vld [vmem:[%s3737 + $0xc8] sm:$0xff]
        %v3764 = vld [vmem:[%s3737 + $0xd0] sm:$0xff]
        %v3765 = vld [vmem:[%s3737 + $0xd8] sm:$0xff]
        %v3766 = vld [vmem:[%s3737 + $0xe0] sm:$0xff]
        %v3767 = vld [vmem:[%s3737 + $0xe8] sm:$0xff]
        %v3768 = vld [vmem:[%s3737 + $0xf0] sm:$0xff]
        %v3769 = vld [vmem:[%s3737 + $0xf8] sm:$0xff]
        %v3770 = vld [vmem:[%s3737 + $0x100] sm:$0xff]
        %v3771 = vld [vmem:[%s3737 + $0x108] sm:$0xff]
        %v3772 = vld [vmem:[%s3737 + $0x110] sm:$0xff]
        %v3773 = vld [vmem:[%s3737 + $0x118] sm:$0xff]
        %v3774 = vld [vmem:[%s3737 + $0x120] sm:$0xff]
        %v3775 = vld [vmem:[%s3737 + $0x128] sm:$0xff]
        %v3776 = vld [vmem:[%s3737 + $0x130] sm:$0xff]
        %v3777 = vld [vmem:[%s3737 + $0x138] sm:$0xff]
        %v3778 = vld [vmem:[%s3737 + $0x140] sm:$0xff]
        %v3779 = vld [vmem:[%s3737 + $0x148] sm:$0xff]
        %v3780 = vld [vmem:[%s3737 + $0x150] sm:$0xff]
        %v3781 = vld [vmem:[%s3737 + $0x158] sm:$0xff]
        %v3782 = vld [vmem:[%s3737 + $0x160] sm:$0xff]
        %v3783 = vld [vmem:[%s3737 + $0x168] sm:$0xff]
        %v3784 = vld [vmem:[%s3737 + $0x170] sm:$0xff]
        %v3785 = vld [vmem:[%s3737 + $0x178] sm:$0xff]
        %v3786 = vld [vmem:[%s3737 + $0x180] sm:$0xff]
        %v3787 = vld [vmem:[%s3737 + $0x188] sm:$0xff]
        %v3788 = vld [vmem:[%s3737 + $0x190] sm:$0xff]
        %v3789 = vld [vmem:[%s3737 + $0x198] sm:$0xff]
        %v3790 = vld [vmem:[%s3737 + $0x1a0] sm:$0xff]
        %v3791 = vld [vmem:[%s3737 + $0x1a8] sm:$0xff]
        %v3792 = vld [vmem:[%s3737 + $0x1b0] sm:$0xff]
        %v3793 = vld [vmem:[%s3737 + $0x1b8] sm:$0xff]
        %v3794 = vld [vmem:[%s3737 + $0x1c0] sm:$0xff]
        %v3795 = vld [vmem:[%s3737 + $0x1c8] sm:$0xff]
        %v3796 = vld [vmem:[%s3737 + $0x1d0] sm:$0xff]
        %v3797 = vld [vmem:[%s3737 + $0x1d8] sm:$0xff]
        %v3798 = vld [vmem:[%s3737 + $0x1e0] sm:$0xff]
        %v3799 = vld [vmem:[%s3737 + $0x1e8] sm:$0xff]
        %v3800 = vld [vmem:[%s3737 + $0x1f0] sm:$0xff]
        %v3801 = vld [vmem:[%s3737 + $0x1f8] sm:$0xff]
        %s3802 = smul.u32 %s374, 4
        %s3803 = scalar_lea.vmem %s6, %s3802
        %v3804 = vld [vmem:[%s3803] sm:$0xf]
        %v3806 = vperm.slane %v3804, 0
        %v3807 = vperm.slane %v3804, 1
        %v3808 = vperm.slane %v3804, 2
        %v3809 = vperm.slane %v3804, 3
        %v3878 = vunpack.c.l.b16 %v3738
        %v3879 = vunpack.c.h.b16 %v3738
        %v3880 = vunpack.c.l.b16 %v3739
        %v3881 = vunpack.c.h.b16 %v3739
        %v3882 = vunpack.c.l.b16 %v3740
        %v3883 = vunpack.c.h.b16 %v3740
        %v3884 = vunpack.c.l.b16 %v3741
        %v3885 = vunpack.c.h.b16 %v3741
        %v3886 = vunpack.c.l.b16 %v3742
        %v3887 = vunpack.c.h.b16 %v3742
        %v3888 = vunpack.c.l.b16 %v3743
        %v3889 = vunpack.c.h.b16 %v3743
        %v3890 = vunpack.c.l.b16 %v3744
        %v3891 = vunpack.c.h.b16 %v3744
        %v3892 = vunpack.c.l.b16 %v3745
        %v3893 = vunpack.c.h.b16 %v3745
        %v3894 = vunpack.c.l.b16 %v3746
        %v3895 = vunpack.c.h.b16 %v3746
        %v3896 = vunpack.c.l.b16 %v3747
        %v3897 = vunpack.c.h.b16 %v3747
        %v3898 = vunpack.c.l.b16 %v3748
        %v3899 = vunpack.c.h.b16 %v3748
        %v3900 = vunpack.c.l.b16 %v3749
        %v3901 = vunpack.c.h.b16 %v3749
        %v3902 = vunpack.c.l.b16 %v3750
        %v3903 = vunpack.c.h.b16 %v3750
        %v3904 = vunpack.c.l.b16 %v3751
        %v3905 = vunpack.c.h.b16 %v3751
        %v3906 = vunpack.c.l.b16 %v3752
        %v3907 = vunpack.c.h.b16 %v3752
        %v3908 = vunpack.c.l.b16 %v3753
        %v3909 = vunpack.c.h.b16 %v3753
        %v3910 = vunpack.c.l.b16 %v3754
        %v3911 = vunpack.c.h.b16 %v3754
        %v3912 = vunpack.c.l.b16 %v3755
        %v3913 = vunpack.c.h.b16 %v3755
        %v3914 = vunpack.c.l.b16 %v3756
        %v3915 = vunpack.c.h.b16 %v3756
        %v3916 = vunpack.c.l.b16 %v3757
        %v3917 = vunpack.c.h.b16 %v3757
        %v3918 = vunpack.c.l.b16 %v3758
        %v3919 = vunpack.c.h.b16 %v3758
        %v3920 = vunpack.c.l.b16 %v3759
        %v3921 = vunpack.c.h.b16 %v3759
        %v3922 = vunpack.c.l.b16 %v3760
        %v3923 = vunpack.c.h.b16 %v3760
        %v3924 = vunpack.c.l.b16 %v3761
        %v3925 = vunpack.c.h.b16 %v3761
        %v3926 = vunpack.c.l.b16 %v3762
        %v3927 = vunpack.c.h.b16 %v3762
        %v3928 = vunpack.c.l.b16 %v3763
        %v3929 = vunpack.c.h.b16 %v3763
        %v3930 = vunpack.c.l.b16 %v3764
        %v3931 = vunpack.c.h.b16 %v3764
        %v3932 = vunpack.c.l.b16 %v3765
        %v3933 = vunpack.c.h.b16 %v3765
        %v3934 = vunpack.c.l.b16 %v3766
        %v3935 = vunpack.c.h.b16 %v3766
        %v3936 = vunpack.c.l.b16 %v3767
        %v3937 = vunpack.c.h.b16 %v3767
        %v3938 = vunpack.c.l.b16 %v3768
        %v3939 = vunpack.c.h.b16 %v3768
        %v3940 = vunpack.c.l.b16 %v3769
        %v3941 = vunpack.c.h.b16 %v3769
        %v3942 = vunpack.c.l.b16 %v3770
        %v3943 = vunpack.c.h.b16 %v3770
        %v3944 = vunpack.c.l.b16 %v3771
        %v3945 = vunpack.c.h.b16 %v3771
        %v3946 = vunpack.c.l.b16 %v3772
        %v3947 = vunpack.c.h.b16 %v3772
        %v3948 = vunpack.c.l.b16 %v3773
        %v3949 = vunpack.c.h.b16 %v3773
        %v3950 = vunpack.c.l.b16 %v3774
        %v3951 = vunpack.c.h.b16 %v3774
        %v3952 = vunpack.c.l.b16 %v3775
        %v3953 = vunpack.c.h.b16 %v3775
        %v3954 = vunpack.c.l.b16 %v3776
        %v3955 = vunpack.c.h.b16 %v3776
        %v3956 = vunpack.c.l.b16 %v3777
        %v3957 = vunpack.c.h.b16 %v3777
        %v3958 = vunpack.c.l.b16 %v3778
        %v3959 = vunpack.c.h.b16 %v3778
        %v3960 = vunpack.c.l.b16 %v3779
        %v3961 = vunpack.c.h.b16 %v3779
        %v3962 = vunpack.c.l.b16 %v3780
        %v3963 = vunpack.c.h.b16 %v3780
        %v3964 = vunpack.c.l.b16 %v3781
        %v3965 = vunpack.c.h.b16 %v3781
        %v3966 = vunpack.c.l.b16 %v3782
        %v3967 = vunpack.c.h.b16 %v3782
        %v3968 = vunpack.c.l.b16 %v3783
        %v3969 = vunpack.c.h.b16 %v3783
        %v3970 = vunpack.c.l.b16 %v3784
        %v3971 = vunpack.c.h.b16 %v3784
        %v3972 = vunpack.c.l.b16 %v3785
        %v3973 = vunpack.c.h.b16 %v3785
        %v3974 = vunpack.c.l.b16 %v3786
        %v3975 = vunpack.c.h.b16 %v3786
        %v3976 = vunpack.c.l.b16 %v3787
        %v3977 = vunpack.c.h.b16 %v3787
        %v3978 = vunpack.c.l.b16 %v3788
        %v3979 = vunpack.c.h.b16 %v3788
        %v3980 = vunpack.c.l.b16 %v3789
        %v3981 = vunpack.c.h.b16 %v3789
        %v3982 = vunpack.c.l.b16 %v3790
        %v3983 = vunpack.c.h.b16 %v3790
        %v3984 = vunpack.c.l.b16 %v3791
        %v3985 = vunpack.c.h.b16 %v3791
        %v3986 = vunpack.c.l.b16 %v3792
        %v3987 = vunpack.c.h.b16 %v3792
        %v3988 = vunpack.c.l.b16 %v3793
        %v3989 = vunpack.c.h.b16 %v3793
        %v3990 = vunpack.c.l.b16 %v3794
        %v3991 = vunpack.c.h.b16 %v3794
        %v3992 = vunpack.c.l.b16 %v3795
        %v3993 = vunpack.c.h.b16 %v3795
        %v3994 = vunpack.c.l.b16 %v3796
        %v3995 = vunpack.c.h.b16 %v3796
        %v3996 = vunpack.c.l.b16 %v3797
        %v3997 = vunpack.c.h.b16 %v3797
        %v3998 = vunpack.c.l.b16 %v3798
        %v3999 = vunpack.c.h.b16 %v3798
        %v4000 = vunpack.c.l.b16 %v3799
        %v4001 = vunpack.c.h.b16 %v3799
        %v4002 = vunpack.c.l.b16 %v3800
        %v4003 = vunpack.c.h.b16 %v3800
        %v4004 = vunpack.c.l.b16 %v3801
        %v4005 = vunpack.c.h.b16 %v3801
        %v4006 = vpack.c.b16 %v3882, %v3878
        %v4007 = vpack.c.b16 %v3883, %v3879
        %v4008 = vpack.c.b16 %v3884, %v3880
        %v4009 = vpack.c.b16 %v3885, %v3881
        %v4010 = vpack.c.b16 %v3890, %v3886
        %v4011 = vpack.c.b16 %v3891, %v3887
        %v4012 = vpack.c.b16 %v3892, %v3888
        %v4013 = vpack.c.b16 %v3893, %v3889
        %v4014 = vpack.c.b16 %v3898, %v3894
        %v4015 = vpack.c.b16 %v3899, %v3895
        %v4016 = vpack.c.b16 %v3900, %v3896
        %v4017 = vpack.c.b16 %v3901, %v3897
        %v4018 = vpack.c.b16 %v3906, %v3902
        %v4019 = vpack.c.b16 %v3907, %v3903
        %v4020 = vpack.c.b16 %v3908, %v3904
        %v4021 = vpack.c.b16 %v3909, %v3905
        %v4022 = vpack.c.b16 %v3914, %v3910
        %v4023 = vpack.c.b16 %v3915, %v3911
        %v4024 = vpack.c.b16 %v3916, %v3912
        %v4025 = vpack.c.b16 %v3917, %v3913
        %v4026 = vpack.c.b16 %v3922, %v3918
        %v4027 = vpack.c.b16 %v3923, %v3919
        %v4028 = vpack.c.b16 %v3924, %v3920
        %v4029 = vpack.c.b16 %v3925, %v3921
        %v4030 = vpack.c.b16 %v3930, %v3926
        %v4031 = vpack.c.b16 %v3931, %v3927
        %v4032 = vpack.c.b16 %v3932, %v3928
        %v4033 = vpack.c.b16 %v3933, %v3929
        %v4034 = vpack.c.b16 %v3938, %v3934
        %v4035 = vpack.c.b16 %v3939, %v3935
        %v4036 = vpack.c.b16 %v3940, %v3936
        %v4037 = vpack.c.b16 %v3941, %v3937
        %v4038 = vpack.c.b16 %v3946, %v3942
        %v4039 = vpack.c.b16 %v3947, %v3943
        %v4040 = vpack.c.b16 %v3948, %v3944
        %v4041 = vpack.c.b16 %v3949, %v3945
        %v4042 = vpack.c.b16 %v3954, %v3950
        %v4043 = vpack.c.b16 %v3955, %v3951
        %v4044 = vpack.c.b16 %v3956, %v3952
        %v4045 = vpack.c.b16 %v3957, %v3953
        %v4046 = vpack.c.b16 %v3962, %v3958
        %v4047 = vpack.c.b16 %v3963, %v3959
        %v4048 = vpack.c.b16 %v3964, %v3960
        %v4049 = vpack.c.b16 %v3965, %v3961
        %v4050 = vpack.c.b16 %v3970, %v3966
        %v4051 = vpack.c.b16 %v3971, %v3967
        %v4052 = vpack.c.b16 %v3972, %v3968
        %v4053 = vpack.c.b16 %v3973, %v3969
        %v4054 = vpack.c.b16 %v3978, %v3974
        %v4055 = vpack.c.b16 %v3979, %v3975
        %v4056 = vpack.c.b16 %v3980, %v3976
        %v4057 = vpack.c.b16 %v3981, %v3977
        %v4058 = vpack.c.b16 %v3986, %v3982
        %v4059 = vpack.c.b16 %v3987, %v3983
        %v4060 = vpack.c.b16 %v3988, %v3984
        %v4061 = vpack.c.b16 %v3989, %v3985
        %v4062 = vpack.c.b16 %v3994, %v3990
        %v4063 = vpack.c.b16 %v3995, %v3991
        %v4064 = vpack.c.b16 %v3996, %v3992
        %v4065 = vpack.c.b16 %v3997, %v3993
        %v4066 = vpack.c.b16 %v4002, %v3998
        %v4067 = vpack.c.b16 %v4003, %v3999
        %v4068 = vpack.c.b16 %v4004, %v4000
        %v4069 = vpack.c.b16 %v4005, %v4001
        %4134 = vmatpush.bf16.msra.mxu0 %v4034
        %4135 = vmatpush.bf16.msra.mxu0 %v4030
        %4136 = vmatpush.bf16.msra.mxu0 %v4026
        %4137 = vmatpush.bf16.msra.mxu0 %v4022
        %4138 = vmatpush.bf16.msra.mxu0 %v4018
        %4139 = vmatpush.bf16.msra.mxu0 %v4014
        %4140 = vmatpush.bf16.msra.mxu0 %v4010
        %4141 = vmatpush.bf16.msra.mxu0 %v4006
        %4142 = vmatmul.bf16.gmra.mxu0 %v3719
        %v4143 = vpop.f32.mrf.mxu0
        %v4144 = vadd.f32 %v3806, %v4143
        %v4145 = vpop.f32.mrf.mxu0
        %v4146 = vadd.f32 %v3806, %v4145
        %4147 = vmatmul.bf16.gmra.mxu0 %v3721
        %v4148 = vpop.f32.mrf.mxu0
        %v4149 = vadd.f32 %v3806, %v4148
        %v4150 = vpop.f32.mrf.mxu0
        %v4151 = vadd.f32 %v3806, %v4150
        %4152 = vmatmul.bf16.gmra.mxu0 %v3723
        %v4153 = vpop.f32.mrf.mxu0
        %v4154 = vadd.f32 %v3806, %v4153
        %v4155 = vpop.f32.mrf.mxu0
        %v4156 = vadd.f32 %v3806, %v4155
        %4157 = vmatmul.bf16.gmra.mxu0 %v3725
        %v4158 = vpop.f32.mrf.mxu0
        %v4159 = vadd.f32 %v3806, %v4158
        %v4160 = vpop.f32.mrf.mxu0
        %v4161 = vadd.f32 %v3806, %v4160
        %4162 = vmatmul.bf16.gmra.mxu0 %v3727
        %v4163 = vpop.f32.mrf.mxu0
        %v4164 = vadd.f32 %v3806, %v4163
        %v4165 = vpop.f32.mrf.mxu0
        %v4166 = vadd.f32 %v3806, %v4165
        %4167 = vmatmul.bf16.gmra.mxu0 %v3729
        %v4168 = vpop.f32.mrf.mxu0
        %v4169 = vadd.f32 %v3806, %v4168
        %v4170 = vpop.f32.mrf.mxu0
        %v4171 = vadd.f32 %v3806, %v4170
        %4172 = vmatmul.bf16.gmra.mxu0 %v3731
        %v4173 = vpop.f32.mrf.mxu0
        %v4174 = vadd.f32 %v3806, %v4173
        %v4175 = vpop.f32.mrf.mxu0
        %v4176 = vadd.f32 %v3806, %v4175
        %4177 = vmatmul.bf16.gmra.mxu0 %v3733
        %v4178 = vpop.f32.mrf.mxu0
        %v4179 = vadd.f32 %v3806, %v4178
        %v4180 = vpop.f32.mrf.mxu0
        %v4181 = vadd.f32 %v3806, %v4180
        %4182 = vdwg.mxu0
        %4183 = vmatpush.bf16.msra.mxu0 %v4066
        %4184 = vmatpush.bf16.msra.mxu0 %v4062
        %4185 = vmatpush.bf16.msra.mxu0 %v4058
        %4186 = vmatpush.bf16.msra.mxu0 %v4054
        %4187 = vmatpush.bf16.msra.mxu0 %v4050
        %4188 = vmatpush.bf16.msra.mxu0 %v4046
        %4189 = vmatpush.bf16.msra.mxu0 %v4042
        %4190 = vmatpush.bf16.msra.mxu0 %v4038
        %4191 = vmatmul.bf16.gmra.mxu0 %v3720
        %v4192 = vpop.f32.mrf.mxu0
        %v4193 = vadd.f32 %v4144, %v4192
        %v4194 = vpop.f32.mrf.mxu0
        %v4195 = vadd.f32 %v4146, %v4194
        %4196 = vmatmul.bf16.gmra.mxu0 %v3722
        %v4197 = vpop.f32.mrf.mxu0
        %v4198 = vadd.f32 %v4149, %v4197
        %v4199 = vpop.f32.mrf.mxu0
        %v4200 = vadd.f32 %v4151, %v4199
        %4201 = vmatmul.bf16.gmra.mxu0 %v3724
        %v4202 = vpop.f32.mrf.mxu0
        %v4203 = vadd.f32 %v4154, %v4202
        %v4204 = vpop.f32.mrf.mxu0
        %v4205 = vadd.f32 %v4156, %v4204
        %4206 = vmatmul.bf16.gmra.mxu0 %v3726
        %v4207 = vpop.f32.mrf.mxu0
        %v4208 = vadd.f32 %v4159, %v4207
        %v4209 = vpop.f32.mrf.mxu0
        %v4210 = vadd.f32 %v4161, %v4209
        %4211 = vmatmul.bf16.gmra.mxu0 %v3728
        %v4212 = vpop.f32.mrf.mxu0
        %v4213 = vadd.f32 %v4164, %v4212
        %v4214 = vpop.f32.mrf.mxu0
        %v4215 = vadd.f32 %v4166, %v4214
        %4216 = vmatmul.bf16.gmra.mxu0 %v3730
        %v4217 = vpop.f32.mrf.mxu0
        %v4218 = vadd.f32 %v4169, %v4217
        %v4219 = vpop.f32.mrf.mxu0
        %v4220 = vadd.f32 %v4171, %v4219
        %4221 = vmatmul.bf16.gmra.mxu0 %v3732
        %v4222 = vpop.f32.mrf.mxu0
        %v4223 = vadd.f32 %v4174, %v4222
        %v4224 = vpop.f32.mrf.mxu0
        %v4225 = vadd.f32 %v4176, %v4224
        %4226 = vmatmul.bf16.gmra.mxu0 %v3734
        %v4227 = vpop.f32.mrf.mxu0
        %v4228 = vadd.f32 %v4179, %v4227
        %v4229 = vpop.f32.mrf.mxu0
        %v4230 = vadd.f32 %v4181, %v4229
        %4231 = vdwg.mxu0
        %4232 = vmatpush.bf16.msra.mxu0 %v4035
        %4233 = vmatpush.bf16.msra.mxu0 %v4031
        %4234 = vmatpush.bf16.msra.mxu0 %v4027
        %4235 = vmatpush.bf16.msra.mxu0 %v4023
        %4236 = vmatpush.bf16.msra.mxu0 %v4019
        %4237 = vmatpush.bf16.msra.mxu0 %v4015
        %4238 = vmatpush.bf16.msra.mxu0 %v4011
        %4239 = vmatpush.bf16.msra.mxu0 %v4007
        %4240 = vmatmul.bf16.gmra.mxu0 %v3719
        %v4241 = vpop.f32.mrf.mxu0
        %v4242 = vadd.f32 %v3807, %v4241
        %v4243 = vpop.f32.mrf.mxu0
        %v4244 = vadd.f32 %v3807, %v4243
        %4245 = vmatmul.bf16.gmra.mxu0 %v3721
        %v4246 = vpop.f32.mrf.mxu0
        %v4247 = vadd.f32 %v3807, %v4246
        %v4248 = vpop.f32.mrf.mxu0
        %v4249 = vadd.f32 %v3807, %v4248
        %4250 = vmatmul.bf16.gmra.mxu0 %v3723
        %v4251 = vpop.f32.mrf.mxu0
        %v4252 = vadd.f32 %v3807, %v4251
        %v4253 = vpop.f32.mrf.mxu0
        %v4254 = vadd.f32 %v3807, %v4253
        %4255 = vmatmul.bf16.gmra.mxu0 %v3725
        %v4256 = vpop.f32.mrf.mxu0
        %v4257 = vadd.f32 %v3807, %v4256
        %v4258 = vpop.f32.mrf.mxu0
        %v4259 = vadd.f32 %v3807, %v4258
        %4260 = vmatmul.bf16.gmra.mxu0 %v3727
        %v4261 = vpop.f32.mrf.mxu0
        %v4262 = vadd.f32 %v3807, %v4261
        %v4263 = vpop.f32.mrf.mxu0
        %v4264 = vadd.f32 %v3807, %v4263
        %4265 = vmatmul.bf16.gmra.mxu0 %v3729
        %v4266 = vpop.f32.mrf.mxu0
        %v4267 = vadd.f32 %v3807, %v4266
        %v4268 = vpop.f32.mrf.mxu0
        %v4269 = vadd.f32 %v3807, %v4268
        %4270 = vmatmul.bf16.gmra.mxu0 %v3731
        %v4271 = vpop.f32.mrf.mxu0
        %v4272 = vadd.f32 %v3807, %v4271
        %v4273 = vpop.f32.mrf.mxu0
        %v4274 = vadd.f32 %v3807, %v4273
        %4275 = vmatmul.bf16.gmra.mxu0 %v3733
        %v4276 = vpop.f32.mrf.mxu0
        %v4277 = vadd.f32 %v3807, %v4276
        %v4278 = vpop.f32.mrf.mxu0
        %v4279 = vadd.f32 %v3807, %v4278
        %4280 = vdwg.mxu0
        %4281 = vmatpush.bf16.msra.mxu0 %v4067
        %4282 = vmatpush.bf16.msra.mxu0 %v4063
        %4283 = vmatpush.bf16.msra.mxu0 %v4059
        %4284 = vmatpush.bf16.msra.mxu0 %v4055
        %4285 = vmatpush.bf16.msra.mxu0 %v4051
        %4286 = vmatpush.bf16.msra.mxu0 %v4047
        %4287 = vmatpush.bf16.msra.mxu0 %v4043
        %4288 = vmatpush.bf16.msra.mxu0 %v4039
        %4289 = vmatmul.bf16.gmra.mxu0 %v3720
        %v4290 = vpop.f32.mrf.mxu0
        %v4291 = vadd.f32 %v4242, %v4290
        %v4292 = vpop.f32.mrf.mxu0
        %v4293 = vadd.f32 %v4244, %v4292
        %4294 = vmatmul.bf16.gmra.mxu0 %v3722
        %v4295 = vpop.f32.mrf.mxu0
        %v4296 = vadd.f32 %v4247, %v4295
        %v4297 = vpop.f32.mrf.mxu0
        %v4298 = vadd.f32 %v4249, %v4297
        %4299 = vmatmul.bf16.gmra.mxu0 %v3724
        %v4300 = vpop.f32.mrf.mxu0
        %v4301 = vadd.f32 %v4252, %v4300
        %v4302 = vpop.f32.mrf.mxu0
        %v4303 = vadd.f32 %v4254, %v4302
        %4304 = vmatmul.bf16.gmra.mxu0 %v3726
        %v4305 = vpop.f32.mrf.mxu0
        %v4306 = vadd.f32 %v4257, %v4305
        %v4307 = vpop.f32.mrf.mxu0
        %v4308 = vadd.f32 %v4259, %v4307
        %4309 = vmatmul.bf16.gmra.mxu0 %v3728
        %v4310 = vpop.f32.mrf.mxu0
        %v4311 = vadd.f32 %v4262, %v4310
        %v4312 = vpop.f32.mrf.mxu0
        %v4313 = vadd.f32 %v4264, %v4312
        %4314 = vmatmul.bf16.gmra.mxu0 %v3730
        %v4315 = vpop.f32.mrf.mxu0
        %v4316 = vadd.f32 %v4267, %v4315
        %v4317 = vpop.f32.mrf.mxu0
        %v4318 = vadd.f32 %v4269, %v4317
        %4319 = vmatmul.bf16.gmra.mxu0 %v3732
        %v4320 = vpop.f32.mrf.mxu0
        %v4321 = vadd.f32 %v4272, %v4320
        %v4322 = vpop.f32.mrf.mxu0
        %v4323 = vadd.f32 %v4274, %v4322
        %4324 = vmatmul.bf16.gmra.mxu0 %v3734
        %v4325 = vpop.f32.mrf.mxu0
        %v4326 = vadd.f32 %v4277, %v4325
        %v4327 = vpop.f32.mrf.mxu0
        %v4328 = vadd.f32 %v4279, %v4327
        %4329 = vdwg.mxu0
        %4330 = vmatpush.bf16.msra.mxu0 %v4036
        %4331 = vmatpush.bf16.msra.mxu0 %v4032
        %4332 = vmatpush.bf16.msra.mxu0 %v4028
        %4333 = vmatpush.bf16.msra.mxu0 %v4024
        %4334 = vmatpush.bf16.msra.mxu0 %v4020
        %4335 = vmatpush.bf16.msra.mxu0 %v4016
        %4336 = vmatpush.bf16.msra.mxu0 %v4012
        %4337 = vmatpush.bf16.msra.mxu0 %v4008
        %4338 = vmatmul.bf16.gmra.mxu0 %v3719
        %v4339 = vpop.f32.mrf.mxu0
        %v4340 = vadd.f32 %v3808, %v4339
        %v4341 = vpop.f32.mrf.mxu0
        %v4342 = vadd.f32 %v3808, %v4341
        %4343 = vmatmul.bf16.gmra.mxu0 %v3721
        %v4344 = vpop.f32.mrf.mxu0
        %v4345 = vadd.f32 %v3808, %v4344
        %v4346 = vpop.f32.mrf.mxu0
        %v4347 = vadd.f32 %v3808, %v4346
        %4348 = vmatmul.bf16.gmra.mxu0 %v3723
        %v4349 = vpop.f32.mrf.mxu0
        %v4350 = vadd.f32 %v3808, %v4349
        %v4351 = vpop.f32.mrf.mxu0
        %v4352 = vadd.f32 %v3808, %v4351
        %4353 = vmatmul.bf16.gmra.mxu0 %v3725
        %v4354 = vpop.f32.mrf.mxu0
        %v4355 = vadd.f32 %v3808, %v4354
        %v4356 = vpop.f32.mrf.mxu0
        %v4357 = vadd.f32 %v3808, %v4356
        %4358 = vmatmul.bf16.gmra.mxu0 %v3727
        %v4359 = vpop.f32.mrf.mxu0
        %v4360 = vadd.f32 %v3808, %v4359
        %v4361 = vpop.f32.mrf.mxu0
        %v4362 = vadd.f32 %v3808, %v4361
        %4363 = vmatmul.bf16.gmra.mxu0 %v3729
        %v4364 = vpop.f32.mrf.mxu0
        %v4365 = vadd.f32 %v3808, %v4364
        %v4366 = vpop.f32.mrf.mxu0
        %v4367 = vadd.f32 %v3808, %v4366
        %4368 = vmatmul.bf16.gmra.mxu0 %v3731
        %v4369 = vpop.f32.mrf.mxu0
        %v4370 = vadd.f32 %v3808, %v4369
        %v4371 = vpop.f32.mrf.mxu0
        %v4372 = vadd.f32 %v3808, %v4371
        %4373 = vmatmul.bf16.gmra.mxu0 %v3733
        %v4374 = vpop.f32.mrf.mxu0
        %v4375 = vadd.f32 %v3808, %v4374
        %v4376 = vpop.f32.mrf.mxu0
        %v4377 = vadd.f32 %v3808, %v4376
        %4378 = vdwg.mxu0
        %4379 = vmatpush.bf16.msra.mxu0 %v4068
        %4380 = vmatpush.bf16.msra.mxu0 %v4064
        %4381 = vmatpush.bf16.msra.mxu0 %v4060
        %4382 = vmatpush.bf16.msra.mxu0 %v4056
        %4383 = vmatpush.bf16.msra.mxu0 %v4052
        %4384 = vmatpush.bf16.msra.mxu0 %v4048
        %4385 = vmatpush.bf16.msra.mxu0 %v4044
        %4386 = vmatpush.bf16.msra.mxu0 %v4040
        %4387 = vmatmul.bf16.gmra.mxu0 %v3720
        %v4388 = vpop.f32.mrf.mxu0
        %v4389 = vadd.f32 %v4340, %v4388
        %v4390 = vpop.f32.mrf.mxu0
        %v4391 = vadd.f32 %v4342, %v4390
        %4392 = vmatmul.bf16.gmra.mxu0 %v3722
        %v4393 = vpop.f32.mrf.mxu0
        %v4394 = vadd.f32 %v4345, %v4393
        %v4395 = vpop.f32.mrf.mxu0
        %v4396 = vadd.f32 %v4347, %v4395
        %4397 = vmatmul.bf16.gmra.mxu0 %v3724
        %v4398 = vpop.f32.mrf.mxu0
        %v4399 = vadd.f32 %v4350, %v4398
        %v4400 = vpop.f32.mrf.mxu0
        %v4401 = vadd.f32 %v4352, %v4400
        %4402 = vmatmul.bf16.gmra.mxu0 %v3726
        %v4403 = vpop.f32.mrf.mxu0
        %v4404 = vadd.f32 %v4355, %v4403
        %v4405 = vpop.f32.mrf.mxu0
        %v4406 = vadd.f32 %v4357, %v4405
        %4407 = vmatmul.bf16.gmra.mxu0 %v3728
        %v4408 = vpop.f32.mrf.mxu0
        %v4409 = vadd.f32 %v4360, %v4408
        %v4410 = vpop.f32.mrf.mxu0
        %v4411 = vadd.f32 %v4362, %v4410
        %4412 = vmatmul.bf16.gmra.mxu0 %v3730
        %v4413 = vpop.f32.mrf.mxu0
        %v4414 = vadd.f32 %v4365, %v4413
        %v4415 = vpop.f32.mrf.mxu0
        %v4416 = vadd.f32 %v4367, %v4415
        %4417 = vmatmul.bf16.gmra.mxu0 %v3732
        %v4418 = vpop.f32.mrf.mxu0
        %v4419 = vadd.f32 %v4370, %v4418
        %v4420 = vpop.f32.mrf.mxu0
        %v4421 = vadd.f32 %v4372, %v4420
        %4422 = vmatmul.bf16.gmra.mxu0 %v3734
        %v4423 = vpop.f32.mrf.mxu0
        %v4424 = vadd.f32 %v4375, %v4423
        %v4425 = vpop.f32.mrf.mxu0
        %v4426 = vadd.f32 %v4377, %v4425
        %4427 = vdwg.mxu0
        %4428 = vmatpush.bf16.msra.mxu0 %v4037
        %4429 = vmatpush.bf16.msra.mxu0 %v4033
        %4430 = vmatpush.bf16.msra.mxu0 %v4029
        %4431 = vmatpush.bf16.msra.mxu0 %v4025
        %4432 = vmatpush.bf16.msra.mxu0 %v4021
        %4433 = vmatpush.bf16.msra.mxu0 %v4017
        %4434 = vmatpush.bf16.msra.mxu0 %v4013
        %4435 = vmatpush.bf16.msra.mxu0 %v4009
        %4436 = vmatmul.bf16.gmra.mxu0 %v3719
        %v4437 = vpop.f32.mrf.mxu0
        %v4438 = vadd.f32 %v3809, %v4437
        %v4439 = vpop.f32.mrf.mxu0
        %v4440 = vadd.f32 %v3809, %v4439
        %4441 = vmatmul.bf16.gmra.mxu0 %v3721
        %v4442 = vpop.f32.mrf.mxu0
        %v4443 = vadd.f32 %v3809, %v4442
        %v4444 = vpop.f32.mrf.mxu0
        %v4445 = vadd.f32 %v3809, %v4444
        %4446 = vmatmul.bf16.gmra.mxu0 %v3723
        %v4447 = vpop.f32.mrf.mxu0
        %v4448 = vadd.f32 %v3809, %v4447
        %v4449 = vpop.f32.mrf.mxu0
        %v4450 = vadd.f32 %v3809, %v4449
        %4451 = vmatmul.bf16.gmra.mxu0 %v3725
        %v4452 = vpop.f32.mrf.mxu0
        %v4453 = vadd.f32 %v3809, %v4452
        %v4454 = vpop.f32.mrf.mxu0
        %v4455 = vadd.f32 %v3809, %v4454
        %4456 = vmatmul.bf16.gmra.mxu0 %v3727
        %v4457 = vpop.f32.mrf.mxu0
        %v4458 = vadd.f32 %v3809, %v4457
        %v4459 = vpop.f32.mrf.mxu0
        %v4460 = vadd.f32 %v3809, %v4459
        %4461 = vmatmul.bf16.gmra.mxu0 %v3729
        %v4462 = vpop.f32.mrf.mxu0
        %v4463 = vadd.f32 %v3809, %v4462
        %v4464 = vpop.f32.mrf.mxu0
        %v4465 = vadd.f32 %v3809, %v4464
        %4466 = vmatmul.bf16.gmra.mxu0 %v3731
        %v4467 = vpop.f32.mrf.mxu0
        %v4468 = vadd.f32 %v3809, %v4467
        %v4469 = vpop.f32.mrf.mxu0
        %v4470 = vadd.f32 %v3809, %v4469
        %4471 = vmatmul.bf16.gmra.mxu0 %v3733
        %v4472 = vpop.f32.mrf.mxu0
        %v4473 = vadd.f32 %v3809, %v4472
        %v4474 = vpop.f32.mrf.mxu0
        %v4475 = vadd.f32 %v3809, %v4474
        %4476 = vdwg.mxu0
        %4477 = vmatpush.bf16.msra.mxu0 %v4069
        %4478 = vmatpush.bf16.msra.mxu0 %v4065
        %4479 = vmatpush.bf16.msra.mxu0 %v4061
        %4480 = vmatpush.bf16.msra.mxu0 %v4057
        %4481 = vmatpush.bf16.msra.mxu0 %v4053
        %4482 = vmatpush.bf16.msra.mxu0 %v4049
        %4483 = vmatpush.bf16.msra.mxu0 %v4045
        %4484 = vmatpush.bf16.msra.mxu0 %v4041
        %4485 = vmatmul.bf16.gmra.mxu0 %v3720
        %v4486 = vpop.f32.mrf.mxu0
        %v4487 = vadd.f32 %v4438, %v4486
        %v4488 = vpop.f32.mrf.mxu0
        %v4489 = vadd.f32 %v4440, %v4488
        %4490 = vmatmul.bf16.gmra.mxu0 %v3722
        %v4491 = vpop.f32.mrf.mxu0
        %v4492 = vadd.f32 %v4443, %v4491
        %v4493 = vpop.f32.mrf.mxu0
        %v4494 = vadd.f32 %v4445, %v4493
        %4495 = vmatmul.bf16.gmra.mxu0 %v3724
        %v4496 = vpop.f32.mrf.mxu0
        %v4497 = vadd.f32 %v4448, %v4496
        %v4498 = vpop.f32.mrf.mxu0
        %v4499 = vadd.f32 %v4450, %v4498
        %4500 = vmatmul.bf16.gmra.mxu0 %v3726
        %v4501 = vpop.f32.mrf.mxu0
        %v4502 = vadd.f32 %v4453, %v4501
        %v4503 = vpop.f32.mrf.mxu0
        %v4504 = vadd.f32 %v4455, %v4503
        %4505 = vmatmul.bf16.gmra.mxu0 %v3728
        %v4506 = vpop.f32.mrf.mxu0
        %v4507 = vadd.f32 %v4458, %v4506
        %v4508 = vpop.f32.mrf.mxu0
        %v4509 = vadd.f32 %v4460, %v4508
        %4510 = vmatmul.bf16.gmra.mxu0 %v3730
        %v4511 = vpop.f32.mrf.mxu0
        %v4512 = vadd.f32 %v4463, %v4511
        %v4513 = vpop.f32.mrf.mxu0
        %v4514 = vadd.f32 %v4465, %v4513
        %4515 = vmatmul.bf16.gmra.mxu0 %v3732
        %v4516 = vpop.f32.mrf.mxu0
        %v4517 = vadd.f32 %v4468, %v4516
        %v4518 = vpop.f32.mrf.mxu0
        %v4519 = vadd.f32 %v4470, %v4518
        %4520 = vmatmul.bf16.gmra.mxu0 %v3734
        %v4521 = vpop.f32.mrf.mxu0
        %v4522 = vadd.f32 %v4473, %v4521
        %v4523 = vpop.f32.mrf.mxu0
        %v4524 = vadd.f32 %v4475, %v4523
        %4525 = vdwg.mxu0
        %v4526 = vmax.f32 %v4193, 0.0
        %v4527 = vmax.f32 %v4291, 0.0
        %v4528 = vmax.f32 %v4389, 0.0
        %v4529 = vmax.f32 %v4487, 0.0
        %v4530 = vmax.f32 %v4195, 0.0
        %v4531 = vmax.f32 %v4293, 0.0
        %v4532 = vmax.f32 %v4391, 0.0
        %v4533 = vmax.f32 %v4489, 0.0
        %v4534 = vmax.f32 %v4198, 0.0
        %v4535 = vmax.f32 %v4296, 0.0
        %v4536 = vmax.f32 %v4394, 0.0
        %v4537 = vmax.f32 %v4492, 0.0
        %v4538 = vmax.f32 %v4200, 0.0
        %v4539 = vmax.f32 %v4298, 0.0
        %v4540 = vmax.f32 %v4396, 0.0
        %v4541 = vmax.f32 %v4494, 0.0
        %v4542 = vmax.f32 %v4203, 0.0
        %v4543 = vmax.f32 %v4301, 0.0
        %v4544 = vmax.f32 %v4399, 0.0
        %v4545 = vmax.f32 %v4497, 0.0
        %v4546 = vmax.f32 %v4205, 0.0
        %v4547 = vmax.f32 %v4303, 0.0
        %v4548 = vmax.f32 %v4401, 0.0
        %v4549 = vmax.f32 %v4499, 0.0
        %v4550 = vmax.f32 %v4208, 0.0
        %v4551 = vmax.f32 %v4306, 0.0
        %v4552 = vmax.f32 %v4404, 0.0
        %v4553 = vmax.f32 %v4502, 0.0
        %v4554 = vmax.f32 %v4210, 0.0
        %v4555 = vmax.f32 %v4308, 0.0
        %v4556 = vmax.f32 %v4406, 0.0
        %v4557 = vmax.f32 %v4504, 0.0
        %v4558 = vmax.f32 %v4213, 0.0
        %v4559 = vmax.f32 %v4311, 0.0
        %v4560 = vmax.f32 %v4409, 0.0
        %v4561 = vmax.f32 %v4507, 0.0
        %v4562 = vmax.f32 %v4215, 0.0
        %v4563 = vmax.f32 %v4313, 0.0
        %v4564 = vmax.f32 %v4411, 0.0
        %v4565 = vmax.f32 %v4509, 0.0
        %v4566 = vmax.f32 %v4218, 0.0
        %v4567 = vmax.f32 %v4316, 0.0
        %v4568 = vmax.f32 %v4414, 0.0
        %v4569 = vmax.f32 %v4512, 0.0
        %v4570 = vmax.f32 %v4220, 0.0
        %v4571 = vmax.f32 %v4318, 0.0
        %v4572 = vmax.f32 %v4416, 0.0
        %v4573 = vmax.f32 %v4514, 0.0
        %v4574 = vmax.f32 %v4223, 0.0
        %v4575 = vmax.f32 %v4321, 0.0
        %v4576 = vmax.f32 %v4419, 0.0
        %v4577 = vmax.f32 %v4517, 0.0
        %v4578 = vmax.f32 %v4225, 0.0
        %v4579 = vmax.f32 %v4323, 0.0
        %v4580 = vmax.f32 %v4421, 0.0
        %v4581 = vmax.f32 %v4519, 0.0
        %v4582 = vmax.f32 %v4228, 0.0
        %v4583 = vmax.f32 %v4326, 0.0
        %v4584 = vmax.f32 %v4424, 0.0
        %v4585 = vmax.f32 %v4522, 0.0
        %v4586 = vmax.f32 %v4230, 0.0
        %v4587 = vmax.f32 %v4328, 0.0
        %v4588 = vmax.f32 %v4426, 0.0
        %v4589 = vmax.f32 %v4524, 0.0
        %v4590 = vpack.c.bf16 %v4530, %v4526
        %v4591 = vpack.c.bf16 %v4531, %v4527
        %v4592 = vpack.c.bf16 %v4532, %v4528
        %v4593 = vpack.c.bf16 %v4533, %v4529
        %v4594 = vpack.c.bf16 %v4538, %v4534
        %v4595 = vpack.c.bf16 %v4539, %v4535
        %v4596 = vpack.c.bf16 %v4540, %v4536
        %v4597 = vpack.c.bf16 %v4541, %v4537
        %v4598 = vpack.c.bf16 %v4546, %v4542
        %v4599 = vpack.c.bf16 %v4547, %v4543
        %v4600 = vpack.c.bf16 %v4548, %v4544
        %v4601 = vpack.c.bf16 %v4549, %v4545
        %v4602 = vpack.c.bf16 %v4554, %v4550
        %v4603 = vpack.c.bf16 %v4555, %v4551
        %v4604 = vpack.c.bf16 %v4556, %v4552
        %v4605 = vpack.c.bf16 %v4557, %v4553
        %v4606 = vpack.c.bf16 %v4562, %v4558
        %v4607 = vpack.c.bf16 %v4563, %v4559
        %v4608 = vpack.c.bf16 %v4564, %v4560
        %v4609 = vpack.c.bf16 %v4565, %v4561
        %v4610 = vpack.c.bf16 %v4570, %v4566
        %v4611 = vpack.c.bf16 %v4571, %v4567
        %v4612 = vpack.c.bf16 %v4572, %v4568
        %v4613 = vpack.c.bf16 %v4573, %v4569
        %v4614 = vpack.c.bf16 %v4578, %v4574
        %v4615 = vpack.c.bf16 %v4579, %v4575
        %v4616 = vpack.c.bf16 %v4580, %v4576
        %v4617 = vpack.c.bf16 %v4581, %v4577
        %v4618 = vpack.c.bf16 %v4586, %v4582
        %v4619 = vpack.c.bf16 %v4587, %v4583
        %v4620 = vpack.c.bf16 %v4588, %v4584
        %v4621 = vpack.c.bf16 %v4589, %v4585
        %s4622 = smul.addr %s3735, 4
        %s4623 = scalar_lea.vmem %s7, %s4622
        %v4624 = vld [vmem:[%s4623] sm:$0xff]
        %v4625 = vld [vmem:[%s4623 + $0x8] sm:$0xff]
        %v4626 = vld [vmem:[%s4623 + $0x10] sm:$0xff]
        %v4627 = vld [vmem:[%s4623 + $0x18] sm:$0xff]
        %v4628 = vld [vmem:[%s4623 + $0x20] sm:$0xff]
        %v4629 = vld [vmem:[%s4623 + $0x28] sm:$0xff]
        %v4630 = vld [vmem:[%s4623 + $0x30] sm:$0xff]
        %v4631 = vld [vmem:[%s4623 + $0x38] sm:$0xff]
        %v4632 = vld [vmem:[%s4623 + $0x40] sm:$0xff]
        %v4633 = vld [vmem:[%s4623 + $0x48] sm:$0xff]
        %v4634 = vld [vmem:[%s4623 + $0x50] sm:$0xff]
        %v4635 = vld [vmem:[%s4623 + $0x58] sm:$0xff]
        %v4636 = vld [vmem:[%s4623 + $0x60] sm:$0xff]
        %v4637 = vld [vmem:[%s4623 + $0x68] sm:$0xff]
        %v4638 = vld [vmem:[%s4623 + $0x70] sm:$0xff]
        %v4639 = vld [vmem:[%s4623 + $0x78] sm:$0xff]
        %v4640 = vld [vmem:[%s4623 + $0x80] sm:$0xff]
        %v4641 = vld [vmem:[%s4623 + $0x88] sm:$0xff]
        %v4642 = vld [vmem:[%s4623 + $0x90] sm:$0xff]
        %v4643 = vld [vmem:[%s4623 + $0x98] sm:$0xff]
        %v4644 = vld [vmem:[%s4623 + $0xa0] sm:$0xff]
        %v4645 = vld [vmem:[%s4623 + $0xa8] sm:$0xff]
        %v4646 = vld [vmem:[%s4623 + $0xb0] sm:$0xff]
        %v4647 = vld [vmem:[%s4623 + $0xb8] sm:$0xff]
        %v4648 = vld [vmem:[%s4623 + $0xc0] sm:$0xff]
        %v4649 = vld [vmem:[%s4623 + $0xc8] sm:$0xff]
        %v4650 = vld [vmem:[%s4623 + $0xd0] sm:$0xff]
        %v4651 = vld [vmem:[%s4623 + $0xd8] sm:$0xff]
        %v4652 = vld [vmem:[%s4623 + $0xe0] sm:$0xff]
        %v4653 = vld [vmem:[%s4623 + $0xe8] sm:$0xff]
        %v4654 = vld [vmem:[%s4623 + $0xf0] sm:$0xff]
        %v4655 = vld [vmem:[%s4623 + $0xf8] sm:$0xff]
        %v4656 = vld [vmem:[%s4623 + $0x100] sm:$0xff]
        %v4657 = vld [vmem:[%s4623 + $0x108] sm:$0xff]
        %v4658 = vld [vmem:[%s4623 + $0x110] sm:$0xff]
        %v4659 = vld [vmem:[%s4623 + $0x118] sm:$0xff]
        %v4660 = vld [vmem:[%s4623 + $0x120] sm:$0xff]
        %v4661 = vld [vmem:[%s4623 + $0x128] sm:$0xff]
        %v4662 = vld [vmem:[%s4623 + $0x130] sm:$0xff]
        %v4663 = vld [vmem:[%s4623 + $0x138] sm:$0xff]
        %v4664 = vld [vmem:[%s4623 + $0x140] sm:$0xff]
        %v4665 = vld [vmem:[%s4623 + $0x148] sm:$0xff]
        %v4666 = vld [vmem:[%s4623 + $0x150] sm:$0xff]
        %v4667 = vld [vmem:[%s4623 + $0x158] sm:$0xff]
        %v4668 = vld [vmem:[%s4623 + $0x160] sm:$0xff]
        %v4669 = vld [vmem:[%s4623 + $0x168] sm:$0xff]
        %v4670 = vld [vmem:[%s4623 + $0x170] sm:$0xff]
        %v4671 = vld [vmem:[%s4623 + $0x178] sm:$0xff]
        %v4672 = vld [vmem:[%s4623 + $0x180] sm:$0xff]
        %v4673 = vld [vmem:[%s4623 + $0x188] sm:$0xff]
        %v4674 = vld [vmem:[%s4623 + $0x190] sm:$0xff]
        %v4675 = vld [vmem:[%s4623 + $0x198] sm:$0xff]
        %v4676 = vld [vmem:[%s4623 + $0x1a0] sm:$0xff]
        %v4677 = vld [vmem:[%s4623 + $0x1a8] sm:$0xff]
        %v4678 = vld [vmem:[%s4623 + $0x1b0] sm:$0xff]
        %v4679 = vld [vmem:[%s4623 + $0x1b8] sm:$0xff]
        %v4680 = vld [vmem:[%s4623 + $0x1c0] sm:$0xff]
        %v4681 = vld [vmem:[%s4623 + $0x1c8] sm:$0xff]
        %v4682 = vld [vmem:[%s4623 + $0x1d0] sm:$0xff]
        %v4683 = vld [vmem:[%s4623 + $0x1d8] sm:$0xff]
        %v4684 = vld [vmem:[%s4623 + $0x1e0] sm:$0xff]
        %v4685 = vld [vmem:[%s4623 + $0x1e8] sm:$0xff]
        %v4686 = vld [vmem:[%s4623 + $0x1f0] sm:$0xff]
        %v4687 = vld [vmem:[%s4623 + $0x1f8] sm:$0xff]
        %v4688 = vperm.slane %v414, 5
        %v4689 = vperm.slane %v415, 5
        %v4754 = vunpack.c.l.b16 %v4624
        %v4755 = vunpack.c.h.b16 %v4624
        %v4756 = vunpack.c.l.b16 %v4625
        %v4757 = vunpack.c.h.b16 %v4625
        %v4758 = vunpack.c.l.b16 %v4626
        %v4759 = vunpack.c.h.b16 %v4626
        %v4760 = vunpack.c.l.b16 %v4627
        %v4761 = vunpack.c.h.b16 %v4627
        %v4762 = vunpack.c.l.b16 %v4628
        %v4763 = vunpack.c.h.b16 %v4628
        %v4764 = vunpack.c.l.b16 %v4629
        %v4765 = vunpack.c.h.b16 %v4629
        %v4766 = vunpack.c.l.b16 %v4630
        %v4767 = vunpack.c.h.b16 %v4630
        %v4768 = vunpack.c.l.b16 %v4631
        %v4769 = vunpack.c.h.b16 %v4631
        %v4770 = vunpack.c.l.b16 %v4632
        %v4771 = vunpack.c.h.b16 %v4632
        %v4772 = vunpack.c.l.b16 %v4633
        %v4773 = vunpack.c.h.b16 %v4633
        %v4774 = vunpack.c.l.b16 %v4634
        %v4775 = vunpack.c.h.b16 %v4634
        %v4776 = vunpack.c.l.b16 %v4635
        %v4777 = vunpack.c.h.b16 %v4635
        %v4778 = vunpack.c.l.b16 %v4636
        %v4779 = vunpack.c.h.b16 %v4636
        %v4780 = vunpack.c.l.b16 %v4637
        %v4781 = vunpack.c.h.b16 %v4637
        %v4782 = vunpack.c.l.b16 %v4638
        %v4783 = vunpack.c.h.b16 %v4638
        %v4784 = vunpack.c.l.b16 %v4639
        %v4785 = vunpack.c.h.b16 %v4639
        %v4786 = vunpack.c.l.b16 %v4640
        %v4787 = vunpack.c.h.b16 %v4640
        %v4788 = vunpack.c.l.b16 %v4641
        %v4789 = vunpack.c.h.b16 %v4641
        %v4790 = vunpack.c.l.b16 %v4642
        %v4791 = vunpack.c.h.b16 %v4642
        %v4792 = vunpack.c.l.b16 %v4643
        %v4793 = vunpack.c.h.b16 %v4643
        %v4794 = vunpack.c.l.b16 %v4644
        %v4795 = vunpack.c.h.b16 %v4644
        %v4796 = vunpack.c.l.b16 %v4645
        %v4797 = vunpack.c.h.b16 %v4645
        %v4798 = vunpack.c.l.b16 %v4646
        %v4799 = vunpack.c.h.b16 %v4646
        %v4800 = vunpack.c.l.b16 %v4647
        %v4801 = vunpack.c.h.b16 %v4647
        %v4802 = vunpack.c.l.b16 %v4648
        %v4803 = vunpack.c.h.b16 %v4648
        %v4804 = vunpack.c.l.b16 %v4649
        %v4805 = vunpack.c.h.b16 %v4649
        %v4806 = vunpack.c.l.b16 %v4650
        %v4807 = vunpack.c.h.b16 %v4650
        %v4808 = vunpack.c.l.b16 %v4651
        %v4809 = vunpack.c.h.b16 %v4651
        %v4810 = vunpack.c.l.b16 %v4652
        %v4811 = vunpack.c.h.b16 %v4652
        %v4812 = vunpack.c.l.b16 %v4653
        %v4813 = vunpack.c.h.b16 %v4653
        %v4814 = vunpack.c.l.b16 %v4654
        %v4815 = vunpack.c.h.b16 %v4654
        %v4816 = vunpack.c.l.b16 %v4655
        %v4817 = vunpack.c.h.b16 %v4655
        %v4818 = vunpack.c.l.b16 %v4656
        %v4819 = vunpack.c.h.b16 %v4656
        %v4820 = vunpack.c.l.b16 %v4657
        %v4821 = vunpack.c.h.b16 %v4657
        %v4822 = vunpack.c.l.b16 %v4658
        %v4823 = vunpack.c.h.b16 %v4658
        %v4824 = vunpack.c.l.b16 %v4659
        %v4825 = vunpack.c.h.b16 %v4659
        %v4826 = vunpack.c.l.b16 %v4660
        %v4827 = vunpack.c.h.b16 %v4660
        %v4828 = vunpack.c.l.b16 %v4661
        %v4829 = vunpack.c.h.b16 %v4661
        %v4830 = vunpack.c.l.b16 %v4662
        %v4831 = vunpack.c.h.b16 %v4662
        %v4832 = vunpack.c.l.b16 %v4663
        %v4833 = vunpack.c.h.b16 %v4663
        %v4834 = vunpack.c.l.b16 %v4664
        %v4835 = vunpack.c.h.b16 %v4664
        %v4836 = vunpack.c.l.b16 %v4665
        %v4837 = vunpack.c.h.b16 %v4665
        %v4838 = vunpack.c.l.b16 %v4666
        %v4839 = vunpack.c.h.b16 %v4666
        %v4840 = vunpack.c.l.b16 %v4667
        %v4841 = vunpack.c.h.b16 %v4667
        %v4842 = vunpack.c.l.b16 %v4668
        %v4843 = vunpack.c.h.b16 %v4668
        %v4844 = vunpack.c.l.b16 %v4669
        %v4845 = vunpack.c.h.b16 %v4669
        %v4846 = vunpack.c.l.b16 %v4670
        %v4847 = vunpack.c.h.b16 %v4670
        %v4848 = vunpack.c.l.b16 %v4671
        %v4849 = vunpack.c.h.b16 %v4671
        %v4850 = vunpack.c.l.b16 %v4672
        %v4851 = vunpack.c.h.b16 %v4672
        %v4852 = vunpack.c.l.b16 %v4673
        %v4853 = vunpack.c.h.b16 %v4673
        %v4854 = vunpack.c.l.b16 %v4674
        %v4855 = vunpack.c.h.b16 %v4674
        %v4856 = vunpack.c.l.b16 %v4675
        %v4857 = vunpack.c.h.b16 %v4675
        %v4858 = vunpack.c.l.b16 %v4676
        %v4859 = vunpack.c.h.b16 %v4676
        %v4860 = vunpack.c.l.b16 %v4677
        %v4861 = vunpack.c.h.b16 %v4677
        %v4862 = vunpack.c.l.b16 %v4678
        %v4863 = vunpack.c.h.b16 %v4678
        %v4864 = vunpack.c.l.b16 %v4679
        %v4865 = vunpack.c.h.b16 %v4679
        %v4866 = vunpack.c.l.b16 %v4680
        %v4867 = vunpack.c.h.b16 %v4680
        %v4868 = vunpack.c.l.b16 %v4681
        %v4869 = vunpack.c.h.b16 %v4681
        %v4870 = vunpack.c.l.b16 %v4682
        %v4871 = vunpack.c.h.b16 %v4682
        %v4872 = vunpack.c.l.b16 %v4683
        %v4873 = vunpack.c.h.b16 %v4683
        %v4874 = vunpack.c.l.b16 %v4684
        %v4875 = vunpack.c.h.b16 %v4684
        %v4876 = vunpack.c.l.b16 %v4685
        %v4877 = vunpack.c.h.b16 %v4685
        %v4878 = vunpack.c.l.b16 %v4686
        %v4879 = vunpack.c.h.b16 %v4686
        %v4880 = vunpack.c.l.b16 %v4687
        %v4881 = vunpack.c.h.b16 %v4687
        %v4882 = vpack.c.b16 %v4756, %v4754
        %v4883 = vpack.c.b16 %v4757, %v4755
        %v4884 = vpack.c.b16 %v4760, %v4758
        %v4885 = vpack.c.b16 %v4761, %v4759
        %v4886 = vpack.c.b16 %v4764, %v4762
        %v4887 = vpack.c.b16 %v4765, %v4763
        %v4888 = vpack.c.b16 %v4768, %v4766
        %v4889 = vpack.c.b16 %v4769, %v4767
        %v4890 = vpack.c.b16 %v4772, %v4770
        %v4891 = vpack.c.b16 %v4773, %v4771
        %v4892 = vpack.c.b16 %v4776, %v4774
        %v4893 = vpack.c.b16 %v4777, %v4775
        %v4894 = vpack.c.b16 %v4780, %v4778
        %v4895 = vpack.c.b16 %v4781, %v4779
        %v4896 = vpack.c.b16 %v4784, %v4782
        %v4897 = vpack.c.b16 %v4785, %v4783
        %v4898 = vpack.c.b16 %v4788, %v4786
        %v4899 = vpack.c.b16 %v4789, %v4787
        %v4900 = vpack.c.b16 %v4792, %v4790
        %v4901 = vpack.c.b16 %v4793, %v4791
        %v4902 = vpack.c.b16 %v4796, %v4794
        %v4903 = vpack.c.b16 %v4797, %v4795
        %v4904 = vpack.c.b16 %v4800, %v4798
        %v4905 = vpack.c.b16 %v4801, %v4799
        %v4906 = vpack.c.b16 %v4804, %v4802
        %v4907 = vpack.c.b16 %v4805, %v4803
        %v4908 = vpack.c.b16 %v4808, %v4806
        %v4909 = vpack.c.b16 %v4809, %v4807
        %v4910 = vpack.c.b16 %v4812, %v4810
        %v4911 = vpack.c.b16 %v4813, %v4811
        %v4912 = vpack.c.b16 %v4816, %v4814
        %v4913 = vpack.c.b16 %v4817, %v4815
        %v4914 = vpack.c.b16 %v4820, %v4818
        %v4915 = vpack.c.b16 %v4821, %v4819
        %v4916 = vpack.c.b16 %v4824, %v4822
        %v4917 = vpack.c.b16 %v4825, %v4823
        %v4918 = vpack.c.b16 %v4828, %v4826
        %v4919 = vpack.c.b16 %v4829, %v4827
        %v4920 = vpack.c.b16 %v4832, %v4830
        %v4921 = vpack.c.b16 %v4833, %v4831
        %v4922 = vpack.c.b16 %v4836, %v4834
        %v4923 = vpack.c.b16 %v4837, %v4835
        %v4924 = vpack.c.b16 %v4840, %v4838
        %v4925 = vpack.c.b16 %v4841, %v4839
        %v4926 = vpack.c.b16 %v4844, %v4842
        %v4927 = vpack.c.b16 %v4845, %v4843
        %v4928 = vpack.c.b16 %v4848, %v4846
        %v4929 = vpack.c.b16 %v4849, %v4847
        %v4930 = vpack.c.b16 %v4852, %v4850
        %v4931 = vpack.c.b16 %v4853, %v4851
        %v4932 = vpack.c.b16 %v4856, %v4854
        %v4933 = vpack.c.b16 %v4857, %v4855
        %v4934 = vpack.c.b16 %v4860, %v4858
        %v4935 = vpack.c.b16 %v4861, %v4859
        %v4936 = vpack.c.b16 %v4864, %v4862
        %v4937 = vpack.c.b16 %v4865, %v4863
        %v4938 = vpack.c.b16 %v4868, %v4866
        %v4939 = vpack.c.b16 %v4869, %v4867
        %v4940 = vpack.c.b16 %v4872, %v4870
        %v4941 = vpack.c.b16 %v4873, %v4871
        %v4942 = vpack.c.b16 %v4876, %v4874
        %v4943 = vpack.c.b16 %v4877, %v4875
        %v4944 = vpack.c.b16 %v4880, %v4878
        %v4945 = vpack.c.b16 %v4881, %v4879
        %5010 = vmatpush.bf16.msra.mxu0 %v4896
        %5011 = vmatpush.bf16.msra.mxu0 %v4894
        %5012 = vmatpush.bf16.msra.mxu0 %v4892
        %5013 = vmatpush.bf16.msra.mxu0 %v4890
        %5014 = vmatpush.bf16.msra.mxu0 %v4888
        %5015 = vmatpush.bf16.msra.mxu0 %v4886
        %5016 = vmatpush.bf16.msra.mxu0 %v4884
        %5017 = vmatpush.bf16.msra.mxu0 %v4882
        %5018 = vmatmul.bf16.gmra.mxu0 %v4590
        %v5019 = vpop.f32.mrf.mxu0
        %v5020 = vadd.f32 %v4688, %v5019
        %v5021 = vpop.f32.mrf.mxu0
        %v5022 = vadd.f32 %v4688, %v5021
        %5023 = vmatmul.bf16.gmra.mxu0 %v4594
        %v5024 = vpop.f32.mrf.mxu0
        %v5025 = vadd.f32 %v4688, %v5024
        %v5026 = vpop.f32.mrf.mxu0
        %v5027 = vadd.f32 %v4688, %v5026
        %5028 = vmatmul.bf16.gmra.mxu0 %v4598
        %v5029 = vpop.f32.mrf.mxu0
        %v5030 = vadd.f32 %v4688, %v5029
        %v5031 = vpop.f32.mrf.mxu0
        %v5032 = vadd.f32 %v4688, %v5031
        %5033 = vmatmul.bf16.gmra.mxu0 %v4602
        %v5034 = vpop.f32.mrf.mxu0
        %v5035 = vadd.f32 %v4688, %v5034
        %v5036 = vpop.f32.mrf.mxu0
        %v5037 = vadd.f32 %v4688, %v5036
        %5038 = vmatmul.bf16.gmra.mxu0 %v4606
        %v5039 = vpop.f32.mrf.mxu0
        %v5040 = vadd.f32 %v4688, %v5039
        %v5041 = vpop.f32.mrf.mxu0
        %v5042 = vadd.f32 %v4688, %v5041
        %5043 = vmatmul.bf16.gmra.mxu0 %v4610
        %v5044 = vpop.f32.mrf.mxu0
        %v5045 = vadd.f32 %v4688, %v5044
        %v5046 = vpop.f32.mrf.mxu0
        %v5047 = vadd.f32 %v4688, %v5046
        %5048 = vmatmul.bf16.gmra.mxu0 %v4614
        %v5049 = vpop.f32.mrf.mxu0
        %v5050 = vadd.f32 %v4688, %v5049
        %v5051 = vpop.f32.mrf.mxu0
        %v5052 = vadd.f32 %v4688, %v5051
        %5053 = vmatmul.bf16.gmra.mxu0 %v4618
        %v5054 = vpop.f32.mrf.mxu0
        %v5055 = vadd.f32 %v4688, %v5054
        %v5056 = vpop.f32.mrf.mxu0
        %v5057 = vadd.f32 %v4688, %v5056
        %5058 = vdwg.mxu0
        %5059 = vmatpush.bf16.msra.mxu0 %v4912
        %5060 = vmatpush.bf16.msra.mxu0 %v4910
        %5061 = vmatpush.bf16.msra.mxu0 %v4908
        %5062 = vmatpush.bf16.msra.mxu0 %v4906
        %5063 = vmatpush.bf16.msra.mxu0 %v4904
        %5064 = vmatpush.bf16.msra.mxu0 %v4902
        %5065 = vmatpush.bf16.msra.mxu0 %v4900
        %5066 = vmatpush.bf16.msra.mxu0 %v4898
        %5067 = vmatmul.bf16.gmra.mxu0 %v4591
        %v5068 = vpop.f32.mrf.mxu0
        %v5069 = vadd.f32 %v5020, %v5068
        %v5070 = vpop.f32.mrf.mxu0
        %v5071 = vadd.f32 %v5022, %v5070
        %5072 = vmatmul.bf16.gmra.mxu0 %v4595
        %v5073 = vpop.f32.mrf.mxu0
        %v5074 = vadd.f32 %v5025, %v5073
        %v5075 = vpop.f32.mrf.mxu0
        %v5076 = vadd.f32 %v5027, %v5075
        %5077 = vmatmul.bf16.gmra.mxu0 %v4599
        %v5078 = vpop.f32.mrf.mxu0
        %v5079 = vadd.f32 %v5030, %v5078
        %v5080 = vpop.f32.mrf.mxu0
        %v5081 = vadd.f32 %v5032, %v5080
        %5082 = vmatmul.bf16.gmra.mxu0 %v4603
        %v5083 = vpop.f32.mrf.mxu0
        %v5084 = vadd.f32 %v5035, %v5083
        %v5085 = vpop.f32.mrf.mxu0
        %v5086 = vadd.f32 %v5037, %v5085
        %5087 = vmatmul.bf16.gmra.mxu0 %v4607
        %v5088 = vpop.f32.mrf.mxu0
        %v5089 = vadd.f32 %v5040, %v5088
        %v5090 = vpop.f32.mrf.mxu0
        %v5091 = vadd.f32 %v5042, %v5090
        %5092 = vmatmul.bf16.gmra.mxu0 %v4611
        %v5093 = vpop.f32.mrf.mxu0
        %v5094 = vadd.f32 %v5045, %v5093
        %v5095 = vpop.f32.mrf.mxu0
        %v5096 = vadd.f32 %v5047, %v5095
        %5097 = vmatmul.bf16.gmra.mxu0 %v4615
        %v5098 = vpop.f32.mrf.mxu0
        %v5099 = vadd.f32 %v5050, %v5098
        %v5100 = vpop.f32.mrf.mxu0
        %v5101 = vadd.f32 %v5052, %v5100
        %5102 = vmatmul.bf16.gmra.mxu0 %v4619
        %v5103 = vpop.f32.mrf.mxu0
        %v5104 = vadd.f32 %v5055, %v5103
        %v5105 = vpop.f32.mrf.mxu0
        %v5106 = vadd.f32 %v5057, %v5105
        %5107 = vdwg.mxu0
        %5108 = vmatpush.bf16.msra.mxu0 %v4928
        %5109 = vmatpush.bf16.msra.mxu0 %v4926
        %5110 = vmatpush.bf16.msra.mxu0 %v4924
        %5111 = vmatpush.bf16.msra.mxu0 %v4922
        %5112 = vmatpush.bf16.msra.mxu0 %v4920
        %5113 = vmatpush.bf16.msra.mxu0 %v4918
        %5114 = vmatpush.bf16.msra.mxu0 %v4916
        %5115 = vmatpush.bf16.msra.mxu0 %v4914
        %5116 = vmatmul.bf16.gmra.mxu0 %v4592
        %v5117 = vpop.f32.mrf.mxu0
        %v5118 = vadd.f32 %v5069, %v5117
        %v5119 = vpop.f32.mrf.mxu0
        %v5120 = vadd.f32 %v5071, %v5119
        %5121 = vmatmul.bf16.gmra.mxu0 %v4596
        %v5122 = vpop.f32.mrf.mxu0
        %v5123 = vadd.f32 %v5074, %v5122
        %v5124 = vpop.f32.mrf.mxu0
        %v5125 = vadd.f32 %v5076, %v5124
        %5126 = vmatmul.bf16.gmra.mxu0 %v4600
        %v5127 = vpop.f32.mrf.mxu0
        %v5128 = vadd.f32 %v5079, %v5127
        %v5129 = vpop.f32.mrf.mxu0
        %v5130 = vadd.f32 %v5081, %v5129
        %5131 = vmatmul.bf16.gmra.mxu0 %v4604
        %v5132 = vpop.f32.mrf.mxu0
        %v5133 = vadd.f32 %v5084, %v5132
        %v5134 = vpop.f32.mrf.mxu0
        %v5135 = vadd.f32 %v5086, %v5134
        %5136 = vmatmul.bf16.gmra.mxu0 %v4608
        %v5137 = vpop.f32.mrf.mxu0
        %v5138 = vadd.f32 %v5089, %v5137
        %v5139 = vpop.f32.mrf.mxu0
        %v5140 = vadd.f32 %v5091, %v5139
        %5141 = vmatmul.bf16.gmra.mxu0 %v4612
        %v5142 = vpop.f32.mrf.mxu0
        %v5143 = vadd.f32 %v5094, %v5142
        %v5144 = vpop.f32.mrf.mxu0
        %v5145 = vadd.f32 %v5096, %v5144
        %5146 = vmatmul.bf16.gmra.mxu0 %v4616
        %v5147 = vpop.f32.mrf.mxu0
        %v5148 = vadd.f32 %v5099, %v5147
        %v5149 = vpop.f32.mrf.mxu0
        %v5150 = vadd.f32 %v5101, %v5149
        %5151 = vmatmul.bf16.gmra.mxu0 %v4620
        %v5152 = vpop.f32.mrf.mxu0
        %v5153 = vadd.f32 %v5104, %v5152
        %v5154 = vpop.f32.mrf.mxu0
        %v5155 = vadd.f32 %v5106, %v5154
        %5156 = vdwg.mxu0
        %5157 = vmatpush.bf16.msra.mxu0 %v4944
        %5158 = vmatpush.bf16.msra.mxu0 %v4942
        %5159 = vmatpush.bf16.msra.mxu0 %v4940
        %5160 = vmatpush.bf16.msra.mxu0 %v4938
        %5161 = vmatpush.bf16.msra.mxu0 %v4936
        %5162 = vmatpush.bf16.msra.mxu0 %v4934
        %5163 = vmatpush.bf16.msra.mxu0 %v4932
        %5164 = vmatpush.bf16.msra.mxu0 %v4930
        %5165 = vmatmul.bf16.gmra.mxu0 %v4593
        %v5166 = vpop.f32.mrf.mxu0
        %v5167 = vadd.f32 %v5118, %v5166
        %v5168 = vpop.f32.mrf.mxu0
        %v5169 = vadd.f32 %v5120, %v5168
        %5170 = vmatmul.bf16.gmra.mxu0 %v4597
        %v5171 = vpop.f32.mrf.mxu0
        %v5172 = vadd.f32 %v5123, %v5171
        %v5173 = vpop.f32.mrf.mxu0
        %v5174 = vadd.f32 %v5125, %v5173
        %5175 = vmatmul.bf16.gmra.mxu0 %v4601
        %v5176 = vpop.f32.mrf.mxu0
        %v5177 = vadd.f32 %v5128, %v5176
        %v5178 = vpop.f32.mrf.mxu0
        %v5179 = vadd.f32 %v5130, %v5178
        %5180 = vmatmul.bf16.gmra.mxu0 %v4605
        %v5181 = vpop.f32.mrf.mxu0
        %v5182 = vadd.f32 %v5133, %v5181
        %v5183 = vpop.f32.mrf.mxu0
        %v5184 = vadd.f32 %v5135, %v5183
        %5185 = vmatmul.bf16.gmra.mxu0 %v4609
        %v5186 = vpop.f32.mrf.mxu0
        %v5187 = vadd.f32 %v5138, %v5186
        %v5188 = vpop.f32.mrf.mxu0
        %v5189 = vadd.f32 %v5140, %v5188
        %5190 = vmatmul.bf16.gmra.mxu0 %v4613
        %v5191 = vpop.f32.mrf.mxu0
        %v5192 = vadd.f32 %v5143, %v5191
        %v5193 = vpop.f32.mrf.mxu0
        %v5194 = vadd.f32 %v5145, %v5193
        %5195 = vmatmul.bf16.gmra.mxu0 %v4617
        %v5196 = vpop.f32.mrf.mxu0
        %v5197 = vadd.f32 %v5148, %v5196
        %v5198 = vpop.f32.mrf.mxu0
        %v5199 = vadd.f32 %v5150, %v5198
        %5200 = vmatmul.bf16.gmra.mxu0 %v4621
        %v5201 = vpop.f32.mrf.mxu0
        %v5202 = vadd.f32 %v5153, %v5201
        %v5203 = vpop.f32.mrf.mxu0
        %v5204 = vadd.f32 %v5155, %v5203
        %5205 = vdwg.mxu0
        %5206 = vmatpush.bf16.msra.mxu0 %v4897
        %5207 = vmatpush.bf16.msra.mxu0 %v4895
        %5208 = vmatpush.bf16.msra.mxu0 %v4893
        %5209 = vmatpush.bf16.msra.mxu0 %v4891
        %5210 = vmatpush.bf16.msra.mxu0 %v4889
        %5211 = vmatpush.bf16.msra.mxu0 %v4887
        %5212 = vmatpush.bf16.msra.mxu0 %v4885
        %5213 = vmatpush.bf16.msra.mxu0 %v4883
        %5214 = vmatmul.bf16.gmra.mxu0 %v4590
        %v5215 = vpop.f32.mrf.mxu0
        %v5216 = vadd.f32 %v4689, %v5215
        %v5217 = vpop.f32.mrf.mxu0
        %v5218 = vadd.f32 %v4689, %v5217
        %5219 = vmatmul.bf16.gmra.mxu0 %v4594
        %v5220 = vpop.f32.mrf.mxu0
        %v5221 = vadd.f32 %v4689, %v5220
        %v5222 = vpop.f32.mrf.mxu0
        %v5223 = vadd.f32 %v4689, %v5222
        %5224 = vmatmul.bf16.gmra.mxu0 %v4598
        %v5225 = vpop.f32.mrf.mxu0
        %v5226 = vadd.f32 %v4689, %v5225
        %v5227 = vpop.f32.mrf.mxu0
        %v5228 = vadd.f32 %v4689, %v5227
        %5229 = vmatmul.bf16.gmra.mxu0 %v4602
        %v5230 = vpop.f32.mrf.mxu0
        %v5231 = vadd.f32 %v4689, %v5230
        %v5232 = vpop.f32.mrf.mxu0
        %v5233 = vadd.f32 %v4689, %v5232
        %5234 = vmatmul.bf16.gmra.mxu0 %v4606
        %v5235 = vpop.f32.mrf.mxu0
        %v5236 = vadd.f32 %v4689, %v5235
        %v5237 = vpop.f32.mrf.mxu0
        %v5238 = vadd.f32 %v4689, %v5237
        %5239 = vmatmul.bf16.gmra.mxu0 %v4610
        %v5240 = vpop.f32.mrf.mxu0
        %v5241 = vadd.f32 %v4689, %v5240
        %v5242 = vpop.f32.mrf.mxu0
        %v5243 = vadd.f32 %v4689, %v5242
        %5244 = vmatmul.bf16.gmra.mxu0 %v4614
        %v5245 = vpop.f32.mrf.mxu0
        %v5246 = vadd.f32 %v4689, %v5245
        %v5247 = vpop.f32.mrf.mxu0
        %v5248 = vadd.f32 %v4689, %v5247
        %5249 = vmatmul.bf16.gmra.mxu0 %v4618
        %v5250 = vpop.f32.mrf.mxu0
        %v5251 = vadd.f32 %v4689, %v5250
        %v5252 = vpop.f32.mrf.mxu0
        %v5253 = vadd.f32 %v4689, %v5252
        %5254 = vdwg.mxu0
        %5255 = vmatpush.bf16.msra.mxu0 %v4913
        %5256 = vmatpush.bf16.msra.mxu0 %v4911
        %5257 = vmatpush.bf16.msra.mxu0 %v4909
        %5258 = vmatpush.bf16.msra.mxu0 %v4907
        %5259 = vmatpush.bf16.msra.mxu0 %v4905
        %5260 = vmatpush.bf16.msra.mxu0 %v4903
        %5261 = vmatpush.bf16.msra.mxu0 %v4901
        %5262 = vmatpush.bf16.msra.mxu0 %v4899
        %5263 = vmatmul.bf16.gmra.mxu0 %v4591
        %v5264 = vpop.f32.mrf.mxu0
        %v5265 = vadd.f32 %v5216, %v5264
        %v5266 = vpop.f32.mrf.mxu0
        %v5267 = vadd.f32 %v5218, %v5266
        %5268 = vmatmul.bf16.gmra.mxu0 %v4595
        %v5269 = vpop.f32.mrf.mxu0
        %v5270 = vadd.f32 %v5221, %v5269
        %v5271 = vpop.f32.mrf.mxu0
        %v5272 = vadd.f32 %v5223, %v5271
        %5273 = vmatmul.bf16.gmra.mxu0 %v4599
        %v5274 = vpop.f32.mrf.mxu0
        %v5275 = vadd.f32 %v5226, %v5274
        %v5276 = vpop.f32.mrf.mxu0
        %v5277 = vadd.f32 %v5228, %v5276
        %5278 = vmatmul.bf16.gmra.mxu0 %v4603
        %v5279 = vpop.f32.mrf.mxu0
        %v5280 = vadd.f32 %v5231, %v5279
        %v5281 = vpop.f32.mrf.mxu0
        %v5282 = vadd.f32 %v5233, %v5281
        %5283 = vmatmul.bf16.gmra.mxu0 %v4607
        %v5284 = vpop.f32.mrf.mxu0
        %v5285 = vadd.f32 %v5236, %v5284
        %v5286 = vpop.f32.mrf.mxu0
        %v5287 = vadd.f32 %v5238, %v5286
        %5288 = vmatmul.bf16.gmra.mxu0 %v4611
        %v5289 = vpop.f32.mrf.mxu0
        %v5290 = vadd.f32 %v5241, %v5289
        %v5291 = vpop.f32.mrf.mxu0
        %v5292 = vadd.f32 %v5243, %v5291
        %5293 = vmatmul.bf16.gmra.mxu0 %v4615
        %v5294 = vpop.f32.mrf.mxu0
        %v5295 = vadd.f32 %v5246, %v5294
        %v5296 = vpop.f32.mrf.mxu0
        %v5297 = vadd.f32 %v5248, %v5296
        %5298 = vmatmul.bf16.gmra.mxu0 %v4619
        %v5299 = vpop.f32.mrf.mxu0
        %v5300 = vadd.f32 %v5251, %v5299
        %v5301 = vpop.f32.mrf.mxu0
        %v5302 = vadd.f32 %v5253, %v5301
        %5303 = vdwg.mxu0
        %5304 = vmatpush.bf16.msra.mxu0 %v4929
        %5305 = vmatpush.bf16.msra.mxu0 %v4927
        %5306 = vmatpush.bf16.msra.mxu0 %v4925
        %5307 = vmatpush.bf16.msra.mxu0 %v4923
        %5308 = vmatpush.bf16.msra.mxu0 %v4921
        %5309 = vmatpush.bf16.msra.mxu0 %v4919
        %5310 = vmatpush.bf16.msra.mxu0 %v4917
        %5311 = vmatpush.bf16.msra.mxu0 %v4915
        %5312 = vmatmul.bf16.gmra.mxu0 %v4592
        %v5313 = vpop.f32.mrf.mxu0
        %v5314 = vadd.f32 %v5265, %v5313
        %v5315 = vpop.f32.mrf.mxu0
        %v5316 = vadd.f32 %v5267, %v5315
        %5317 = vmatmul.bf16.gmra.mxu0 %v4596
        %v5318 = vpop.f32.mrf.mxu0
        %v5319 = vadd.f32 %v5270, %v5318
        %v5320 = vpop.f32.mrf.mxu0
        %v5321 = vadd.f32 %v5272, %v5320
        %5322 = vmatmul.bf16.gmra.mxu0 %v4600
        %v5323 = vpop.f32.mrf.mxu0
        %v5324 = vadd.f32 %v5275, %v5323
        %v5325 = vpop.f32.mrf.mxu0
        %v5326 = vadd.f32 %v5277, %v5325
        %5327 = vmatmul.bf16.gmra.mxu0 %v4604
        %v5328 = vpop.f32.mrf.mxu0
        %v5329 = vadd.f32 %v5280, %v5328
        %v5330 = vpop.f32.mrf.mxu0
        %v5331 = vadd.f32 %v5282, %v5330
        %5332 = vmatmul.bf16.gmra.mxu0 %v4608
        %v5333 = vpop.f32.mrf.mxu0
        %v5334 = vadd.f32 %v5285, %v5333
        %v5335 = vpop.f32.mrf.mxu0
        %v5336 = vadd.f32 %v5287, %v5335
        %5337 = vmatmul.bf16.gmra.mxu0 %v4612
        %v5338 = vpop.f32.mrf.mxu0
        %v5339 = vadd.f32 %v5290, %v5338
        %v5340 = vpop.f32.mrf.mxu0
        %v5341 = vadd.f32 %v5292, %v5340
        %5342 = vmatmul.bf16.gmra.mxu0 %v4616
        %v5343 = vpop.f32.mrf.mxu0
        %v5344 = vadd.f32 %v5295, %v5343
        %v5345 = vpop.f32.mrf.mxu0
        %v5346 = vadd.f32 %v5297, %v5345
        %5347 = vmatmul.bf16.gmra.mxu0 %v4620
        %v5348 = vpop.f32.mrf.mxu0
        %v5349 = vadd.f32 %v5300, %v5348
        %v5350 = vpop.f32.mrf.mxu0
        %v5351 = vadd.f32 %v5302, %v5350
        %5352 = vdwg.mxu0
        %5353 = vmatpush.bf16.msra.mxu0 %v4945
        %5354 = vmatpush.bf16.msra.mxu0 %v4943
        %5355 = vmatpush.bf16.msra.mxu0 %v4941
        %5356 = vmatpush.bf16.msra.mxu0 %v4939
        %5357 = vmatpush.bf16.msra.mxu0 %v4937
        %5358 = vmatpush.bf16.msra.mxu0 %v4935
        %5359 = vmatpush.bf16.msra.mxu0 %v4933
        %5360 = vmatpush.bf16.msra.mxu0 %v4931
        %5361 = vmatmul.bf16.gmra.mxu0 %v4593
        %v5362 = vpop.f32.mrf.mxu0
        %v5363 = vadd.f32 %v5314, %v5362
        %v5364 = vpop.f32.mrf.mxu0
        %v5365 = vadd.f32 %v5316, %v5364
        %5366 = vmatmul.bf16.gmra.mxu0 %v4597
        %v5367 = vpop.f32.mrf.mxu0
        %v5368 = vadd.f32 %v5319, %v5367
        %v5369 = vpop.f32.mrf.mxu0
        %v5370 = vadd.f32 %v5321, %v5369
        %5371 = vmatmul.bf16.gmra.mxu0 %v4601
        %v5372 = vpop.f32.mrf.mxu0
        %v5373 = vadd.f32 %v5324, %v5372
        %v5374 = vpop.f32.mrf.mxu0
        %v5375 = vadd.f32 %v5326, %v5374
        %5376 = vmatmul.bf16.gmra.mxu0 %v4605
        %v5377 = vpop.f32.mrf.mxu0
        %v5378 = vadd.f32 %v5329, %v5377
        %v5379 = vpop.f32.mrf.mxu0
        %v5380 = vadd.f32 %v5331, %v5379
        %5381 = vmatmul.bf16.gmra.mxu0 %v4609
        %v5382 = vpop.f32.mrf.mxu0
        %v5383 = vadd.f32 %v5334, %v5382
        %v5384 = vpop.f32.mrf.mxu0
        %v5385 = vadd.f32 %v5336, %v5384
        %5386 = vmatmul.bf16.gmra.mxu0 %v4613
        %v5387 = vpop.f32.mrf.mxu0
        %v5388 = vadd.f32 %v5339, %v5387
        %v5389 = vpop.f32.mrf.mxu0
        %v5390 = vadd.f32 %v5341, %v5389
        %5391 = vmatmul.bf16.gmra.mxu0 %v4617
        %v5392 = vpop.f32.mrf.mxu0
        %v5393 = vadd.f32 %v5344, %v5392
        %v5394 = vpop.f32.mrf.mxu0
        %v5395 = vadd.f32 %v5346, %v5394
        %5396 = vmatmul.bf16.gmra.mxu0 %v4621
        %v5397 = vpop.f32.mrf.mxu0
        %v5398 = vadd.f32 %v5349, %v5397
        %v5399 = vpop.f32.mrf.mxu0
        %v5400 = vadd.f32 %v5351, %v5399
        %5401 = vdwg.mxu0
        %v5402 = vadd.f32 %v3687, %v5167
        %v5403 = vadd.f32 %v3688, %v5363
        %v5404 = vadd.f32 %v3689, %v5169
        %v5405 = vadd.f32 %v3690, %v5365
        %v5406 = vadd.f32 %v3691, %v5172
        %v5407 = vadd.f32 %v3692, %v5368
        %v5408 = vadd.f32 %v3693, %v5174
        %v5409 = vadd.f32 %v3694, %v5370
        %v5410 = vadd.f32 %v3695, %v5177
        %v5411 = vadd.f32 %v3696, %v5373
        %v5412 = vadd.f32 %v3697, %v5179
        %v5413 = vadd.f32 %v3698, %v5375
        %v5414 = vadd.f32 %v3699, %v5182
        %v5415 = vadd.f32 %v3700, %v5378
        %v5416 = vadd.f32 %v3701, %v5184
        %v5417 = vadd.f32 %v3702, %v5380
        %v5418 = vadd.f32 %v3703, %v5187
        %v5419 = vadd.f32 %v3704, %v5383
        %v5420 = vadd.f32 %v3705, %v5189
        %v5421 = vadd.f32 %v3706, %v5385
        %v5422 = vadd.f32 %v3707, %v5192
        %v5423 = vadd.f32 %v3708, %v5388
        %v5424 = vadd.f32 %v3709, %v5194
        %v5425 = vadd.f32 %v3710, %v5390
        %v5426 = vadd.f32 %v3711, %v5197
        %v5427 = vadd.f32 %v3712, %v5393
        %v5428 = vadd.f32 %v3713, %v5199
        %v5429 = vadd.f32 %v3714, %v5395
        %v5430 = vadd.f32 %v3715, %v5202
        %v5431 = vadd.f32 %v3716, %v5398
        %v5432 = vadd.f32 %v3717, %v5204
        %v5433 = vadd.f32 %v3718, %v5400
        %v5434 = vadd.f32 %v5402, %v5403
        %5435 = vadd.xlane.f32.xlu0 %v5434
        %v5436 = vpop.xlane.xlu0 %5435
        %v5437 = vadd.f32 %v5404, %v5405
        %5438 = vadd.xlane.f32.xlu0 %v5437
        %v5439 = vpop.xlane.xlu0 %5438
        %v5440 = vadd.f32 %v5406, %v5407
        %5441 = vadd.xlane.f32.xlu0 %v5440
        %v5442 = vpop.xlane.xlu0 %5441
        %v5443 = vadd.f32 %v5408, %v5409
        %5444 = vadd.xlane.f32.xlu0 %v5443
        %v5445 = vpop.xlane.xlu0 %5444
        %v5446 = vadd.f32 %v5410, %v5411
        %5447 = vadd.xlane.f32.xlu0 %v5446
        %v5448 = vpop.xlane.xlu0 %5447
        %v5449 = vadd.f32 %v5412, %v5413
        %5450 = vadd.xlane.f32.xlu0 %v5449
        %v5451 = vpop.xlane.xlu0 %5450
        %v5452 = vadd.f32 %v5414, %v5415
        %5453 = vadd.xlane.f32.xlu0 %v5452
        %v5454 = vpop.xlane.xlu0 %5453
        %v5455 = vadd.f32 %v5416, %v5417
        %5456 = vadd.xlane.f32.xlu0 %v5455
        %v5457 = vpop.xlane.xlu0 %5456
        %v5458 = vadd.f32 %v5418, %v5419
        %5459 = vadd.xlane.f32.xlu0 %v5458
        %v5460 = vpop.xlane.xlu0 %5459
        %v5461 = vadd.f32 %v5420, %v5421
        %5462 = vadd.xlane.f32.xlu0 %v5461
        %v5463 = vpop.xlane.xlu0 %5462
        %v5464 = vadd.f32 %v5422, %v5423
        %5465 = vadd.xlane.f32.xlu0 %v5464
        %v5466 = vpop.xlane.xlu0 %5465
        %v5467 = vadd.f32 %v5424, %v5425
        %5468 = vadd.xlane.f32.xlu0 %v5467
        %v5469 = vpop.xlane.xlu0 %5468
        %v5470 = vadd.f32 %v5426, %v5427
        %5471 = vadd.xlane.f32.xlu0 %v5470
        %v5472 = vpop.xlane.xlu0 %5471
        %v5473 = vadd.f32 %v5428, %v5429
        %5474 = vadd.xlane.f32.xlu0 %v5473
        %v5475 = vpop.xlane.xlu0 %5474
        %v5476 = vadd.f32 %v5430, %v5431
        %5477 = vadd.xlane.f32.xlu0 %v5476
        %v5478 = vpop.xlane.xlu0 %5477
        %v5479 = vadd.f32 %v5432, %v5433
        %5480 = vadd.xlane.f32.xlu0 %v5479
        %v5481 = vpop.xlane.xlu0 %5480
        %v5482 = vmul.f32 %v5436, %v3266
        %v5483 = vmul.f32 %v5439, %v3266
        %v5484 = vmul.f32 %v5442, %v3266
        %v5485 = vmul.f32 %v5445, %v3266
        %v5486 = vmul.f32 %v5448, %v3266
        %v5487 = vmul.f32 %v5451, %v3266
        %v5488 = vmul.f32 %v5454, %v3266
        %v5489 = vmul.f32 %v5457, %v3266
        %v5490 = vmul.f32 %v5460, %v3266
        %v5491 = vmul.f32 %v5463, %v3266
        %v5492 = vmul.f32 %v5466, %v3266
        %v5493 = vmul.f32 %v5469, %v3266
        %v5494 = vmul.f32 %v5472, %v3266
        %v5495 = vmul.f32 %v5475, %v3266
        %v5496 = vmul.f32 %v5478, %v3266
        %v5497 = vmul.f32 %v5481, %v3266
        %v5498 = vmul.f32 %v5402, %v5402
        %v5499 = vmul.f32 %v5403, %v5403
        %v5500 = vmul.f32 %v5404, %v5404
        %v5501 = vmul.f32 %v5405, %v5405
        %v5502 = vmul.f32 %v5406, %v5406
        %v5503 = vmul.f32 %v5407, %v5407
        %v5504 = vmul.f32 %v5408, %v5408
        %v5505 = vmul.f32 %v5409, %v5409
        %v5506 = vmul.f32 %v5410, %v5410
        %v5507 = vmul.f32 %v5411, %v5411
        %v5508 = vmul.f32 %v5412, %v5412
        %v5509 = vmul.f32 %v5413, %v5413
        %v5510 = vmul.f32 %v5414, %v5414
        %v5511 = vmul.f32 %v5415, %v5415
        %v5512 = vmul.f32 %v5416, %v5416
        %v5513 = vmul.f32 %v5417, %v5417
        %v5514 = vmul.f32 %v5418, %v5418
        %v5515 = vmul.f32 %v5419, %v5419
        %v5516 = vmul.f32 %v5420, %v5420
        %v5517 = vmul.f32 %v5421, %v5421
        %v5518 = vmul.f32 %v5422, %v5422
        %v5519 = vmul.f32 %v5423, %v5423
        %v5520 = vmul.f32 %v5424, %v5424
        %v5521 = vmul.f32 %v5425, %v5425
        %v5522 = vmul.f32 %v5426, %v5426
        %v5523 = vmul.f32 %v5427, %v5427
        %v5524 = vmul.f32 %v5428, %v5428
        %v5525 = vmul.f32 %v5429, %v5429
        %v5526 = vmul.f32 %v5430, %v5430
        %v5527 = vmul.f32 %v5431, %v5431
        %v5528 = vmul.f32 %v5432, %v5432
        %v5529 = vmul.f32 %v5433, %v5433
        %v5530 = vadd.f32 %v5498, %v5499
        %5531 = vadd.xlane.f32.xlu0 %v5530
        %v5532 = vpop.xlane.xlu0 %5531
        %v5533 = vadd.f32 %v5500, %v5501
        %5534 = vadd.xlane.f32.xlu0 %v5533
        %v5535 = vpop.xlane.xlu0 %5534
        %v5536 = vadd.f32 %v5502, %v5503
        %5537 = vadd.xlane.f32.xlu0 %v5536
        %v5538 = vpop.xlane.xlu0 %5537
        %v5539 = vadd.f32 %v5504, %v5505
        %5540 = vadd.xlane.f32.xlu0 %v5539
        %v5541 = vpop.xlane.xlu0 %5540
        %v5542 = vadd.f32 %v5506, %v5507
        %5543 = vadd.xlane.f32.xlu0 %v5542
        %v5544 = vpop.xlane.xlu0 %5543
        %v5545 = vadd.f32 %v5508, %v5509
        %5546 = vadd.xlane.f32.xlu0 %v5545
        %v5547 = vpop.xlane.xlu0 %5546
        %v5548 = vadd.f32 %v5510, %v5511
        %5549 = vadd.xlane.f32.xlu0 %v5548
        %v5550 = vpop.xlane.xlu0 %5549
        %v5551 = vadd.f32 %v5512, %v5513
        %5552 = vadd.xlane.f32.xlu0 %v5551
        %v5553 = vpop.xlane.xlu0 %5552
        %v5554 = vadd.f32 %v5514, %v5515
        %5555 = vadd.xlane.f32.xlu0 %v5554
        %v5556 = vpop.xlane.xlu0 %5555
        %v5557 = vadd.f32 %v5516, %v5517
        %5558 = vadd.xlane.f32.xlu0 %v5557
        %v5559 = vpop.xlane.xlu0 %5558
        %v5560 = vadd.f32 %v5518, %v5519
        %5561 = vadd.xlane.f32.xlu0 %v5560
        %v5562 = vpop.xlane.xlu0 %5561
        %v5563 = vadd.f32 %v5520, %v5521
        %5564 = vadd.xlane.f32.xlu0 %v5563
        %v5565 = vpop.xlane.xlu0 %5564
        %v5566 = vadd.f32 %v5522, %v5523
        %5567 = vadd.xlane.f32.xlu0 %v5566
        %v5568 = vpop.xlane.xlu0 %5567
        %v5569 = vadd.f32 %v5524, %v5525
        %5570 = vadd.xlane.f32.xlu0 %v5569
        %v5571 = vpop.xlane.xlu0 %5570
        %v5572 = vadd.f32 %v5526, %v5527
        %5573 = vadd.xlane.f32.xlu0 %v5572
        %v5574 = vpop.xlane.xlu0 %5573
        %v5575 = vadd.f32 %v5528, %v5529
        %5576 = vadd.xlane.f32.xlu0 %v5575
        %v5577 = vpop.xlane.xlu0 %5576
        %v5578 = vmul.f32 %v5532, %v3266
        %v5579 = vmul.f32 %v5535, %v3266
        %v5580 = vmul.f32 %v5538, %v3266
        %v5581 = vmul.f32 %v5541, %v3266
        %v5582 = vmul.f32 %v5544, %v3266
        %v5583 = vmul.f32 %v5547, %v3266
        %v5584 = vmul.f32 %v5550, %v3266
        %v5585 = vmul.f32 %v5553, %v3266
        %v5586 = vmul.f32 %v5556, %v3266
        %v5587 = vmul.f32 %v5559, %v3266
        %v5588 = vmul.f32 %v5562, %v3266
        %v5589 = vmul.f32 %v5565, %v3266
        %v5590 = vmul.f32 %v5568, %v3266
        %v5591 = vmul.f32 %v5571, %v3266
        %v5592 = vmul.f32 %v5574, %v3266
        %v5593 = vmul.f32 %v5577, %v3266
        %v5594 = vmul.f32 %v5482, %v5482
        %v5595 = vmul.f32 %v5483, %v5483
        %v5596 = vmul.f32 %v5484, %v5484
        %v5597 = vmul.f32 %v5485, %v5485
        %v5598 = vmul.f32 %v5486, %v5486
        %v5599 = vmul.f32 %v5487, %v5487
        %v5600 = vmul.f32 %v5488, %v5488
        %v5601 = vmul.f32 %v5489, %v5489
        %v5602 = vmul.f32 %v5490, %v5490
        %v5603 = vmul.f32 %v5491, %v5491
        %v5604 = vmul.f32 %v5492, %v5492
        %v5605 = vmul.f32 %v5493, %v5493
        %v5606 = vmul.f32 %v5494, %v5494
        %v5607 = vmul.f32 %v5495, %v5495
        %v5608 = vmul.f32 %v5496, %v5496
        %v5609 = vmul.f32 %v5497, %v5497
        %v5610 = vsub.f32 %v5578, %v5594
        %v5611 = vsub.f32 %v5579, %v5595
        %v5612 = vsub.f32 %v5580, %v5596
        %v5613 = vsub.f32 %v5581, %v5597
        %v5614 = vsub.f32 %v5582, %v5598
        %v5615 = vsub.f32 %v5583, %v5599
        %v5616 = vsub.f32 %v5584, %v5600
        %v5617 = vsub.f32 %v5585, %v5601
        %v5618 = vsub.f32 %v5586, %v5602
        %v5619 = vsub.f32 %v5587, %v5603
        %v5620 = vsub.f32 %v5588, %v5604
        %v5621 = vsub.f32 %v5589, %v5605
        %v5622 = vsub.f32 %v5590, %v5606
        %v5623 = vsub.f32 %v5591, %v5607
        %v5624 = vsub.f32 %v5592, %v5608
        %v5625 = vsub.f32 %v5593, %v5609
        %v5626 = vsub.f32 %v5402, %v5482
        %v5627 = vsub.f32 %v5403, %v5482
        %v5628 = vsub.f32 %v5404, %v5483
        %v5629 = vsub.f32 %v5405, %v5483
        %v5630 = vsub.f32 %v5406, %v5484
        %v5631 = vsub.f32 %v5407, %v5484
        %v5632 = vsub.f32 %v5408, %v5485
        %v5633 = vsub.f32 %v5409, %v5485
        %v5634 = vsub.f32 %v5410, %v5486
        %v5635 = vsub.f32 %v5411, %v5486
        %v5636 = vsub.f32 %v5412, %v5487
        %v5637 = vsub.f32 %v5413, %v5487
        %v5638 = vsub.f32 %v5414, %v5488
        %v5639 = vsub.f32 %v5415, %v5488
        %v5640 = vsub.f32 %v5416, %v5489
        %v5641 = vsub.f32 %v5417, %v5489
        %v5642 = vsub.f32 %v5418, %v5490
        %v5643 = vsub.f32 %v5419, %v5490
        %v5644 = vsub.f32 %v5420, %v5491
        %v5645 = vsub.f32 %v5421, %v5491
        %v5646 = vsub.f32 %v5422, %v5492
        %v5647 = vsub.f32 %v5423, %v5492
        %v5648 = vsub.f32 %v5424, %v5493
        %v5649 = vsub.f32 %v5425, %v5493
        %v5650 = vsub.f32 %v5426, %v5494
        %v5651 = vsub.f32 %v5427, %v5494
        %v5652 = vsub.f32 %v5428, %v5495
        %v5653 = vsub.f32 %v5429, %v5495
        %v5654 = vsub.f32 %v5430, %v5496
        %v5655 = vsub.f32 %v5431, %v5496
        %v5656 = vsub.f32 %v5432, %v5497
        %v5657 = vsub.f32 %v5433, %v5497
        %v5658 = vadd.f32 %v5610, 1e-05
        %v5659 = vadd.f32 %v5611, 1e-05
        %v5660 = vadd.f32 %v5612, 1e-05
        %v5661 = vadd.f32 %v5613, 1e-05
        %v5662 = vadd.f32 %v5614, 1e-05
        %v5663 = vadd.f32 %v5615, 1e-05
        %v5664 = vadd.f32 %v5616, 1e-05
        %v5665 = vadd.f32 %v5617, 1e-05
        %v5666 = vadd.f32 %v5618, 1e-05
        %v5667 = vadd.f32 %v5619, 1e-05
        %v5668 = vadd.f32 %v5620, 1e-05
        %v5669 = vadd.f32 %v5621, 1e-05
        %v5670 = vadd.f32 %v5622, 1e-05
        %v5671 = vadd.f32 %v5623, 1e-05
        %v5672 = vadd.f32 %v5624, 1e-05
        %v5673 = vadd.f32 %v5625, 1e-05
        %v5674 = vrsqrt.pop %v5658
        %v5675 = vmul.f32 %v5674, %v5658
        %v5676 = vmul.f32 %v5675, %v5674
        %v5677 = vmul.f32 0.5, %v5676
        %v5678 = vsub.f32 1.5, %v5677
        %v5679 = vmul.f32 %v5674, %v5678
        %vm5680 = vweird.f32 %v5658
        %vm5681 = vweird.f32 %v5674
        %vm5682 = vmor %vm5680, %vm5681
        %v5683 = vsel %vm5682, %v5674, %v5679
        %v5684 = vrsqrt.pop %v5659
        %v5685 = vmul.f32 %v5684, %v5659
        %v5686 = vmul.f32 %v5685, %v5684
        %v5687 = vmul.f32 0.5, %v5686
        %v5688 = vsub.f32 1.5, %v5687
        %v5689 = vmul.f32 %v5684, %v5688
        %vm5690 = vweird.f32 %v5659
        %vm5691 = vweird.f32 %v5684
        %vm5692 = vmor %vm5690, %vm5691
        %v5693 = vsel %vm5692, %v5684, %v5689
        %v5694 = vrsqrt.pop %v5660
        %v5695 = vmul.f32 %v5694, %v5660
        %v5696 = vmul.f32 %v5695, %v5694
        %v5697 = vmul.f32 0.5, %v5696
        %v5698 = vsub.f32 1.5, %v5697
        %v5699 = vmul.f32 %v5694, %v5698
        %vm5700 = vweird.f32 %v5660
        %vm5701 = vweird.f32 %v5694
        %vm5702 = vmor %vm5700, %vm5701
        %v5703 = vsel %vm5702, %v5694, %v5699
        %v5704 = vrsqrt.pop %v5661
        %v5705 = vmul.f32 %v5704, %v5661
        %v5706 = vmul.f32 %v5705, %v5704
        %v5707 = vmul.f32 0.5, %v5706
        %v5708 = vsub.f32 1.5, %v5707
        %v5709 = vmul.f32 %v5704, %v5708
        %vm5710 = vweird.f32 %v5661
        %vm5711 = vweird.f32 %v5704
        %vm5712 = vmor %vm5710, %vm5711
        %v5713 = vsel %vm5712, %v5704, %v5709
        %v5714 = vrsqrt.pop %v5662
        %v5715 = vmul.f32 %v5714, %v5662
        %v5716 = vmul.f32 %v5715, %v5714
        %v5717 = vmul.f32 0.5, %v5716
        %v5718 = vsub.f32 1.5, %v5717
        %v5719 = vmul.f32 %v5714, %v5718
        %vm5720 = vweird.f32 %v5662
        %vm5721 = vweird.f32 %v5714
        %vm5722 = vmor %vm5720, %vm5721
        %v5723 = vsel %vm5722, %v5714, %v5719
        %v5724 = vrsqrt.pop %v5663
        %v5725 = vmul.f32 %v5724, %v5663
        %v5726 = vmul.f32 %v5725, %v5724
        %v5727 = vmul.f32 0.5, %v5726
        %v5728 = vsub.f32 1.5, %v5727
        %v5729 = vmul.f32 %v5724, %v5728
        %vm5730 = vweird.f32 %v5663
        %vm5731 = vweird.f32 %v5724
        %vm5732 = vmor %vm5730, %vm5731
        %v5733 = vsel %vm5732, %v5724, %v5729
        %v5734 = vrsqrt.pop %v5664
        %v5735 = vmul.f32 %v5734, %v5664
        %v5736 = vmul.f32 %v5735, %v5734
        %v5737 = vmul.f32 0.5, %v5736
        %v5738 = vsub.f32 1.5, %v5737
        %v5739 = vmul.f32 %v5734, %v5738
        %vm5740 = vweird.f32 %v5664
        %vm5741 = vweird.f32 %v5734
        %vm5742 = vmor %vm5740, %vm5741
        %v5743 = vsel %vm5742, %v5734, %v5739
        %v5744 = vrsqrt.pop %v5665
        %v5745 = vmul.f32 %v5744, %v5665
        %v5746 = vmul.f32 %v5745, %v5744
        %v5747 = vmul.f32 0.5, %v5746
        %v5748 = vsub.f32 1.5, %v5747
        %v5749 = vmul.f32 %v5744, %v5748
        %vm5750 = vweird.f32 %v5665
        %vm5751 = vweird.f32 %v5744
        %vm5752 = vmor %vm5750, %vm5751
        %v5753 = vsel %vm5752, %v5744, %v5749
        %v5754 = vrsqrt.pop %v5666
        %v5755 = vmul.f32 %v5754, %v5666
        %v5756 = vmul.f32 %v5755, %v5754
        %v5757 = vmul.f32 0.5, %v5756
        %v5758 = vsub.f32 1.5, %v5757
        %v5759 = vmul.f32 %v5754, %v5758
        %vm5760 = vweird.f32 %v5666
        %vm5761 = vweird.f32 %v5754
        %vm5762 = vmor %vm5760, %vm5761
        %v5763 = vsel %vm5762, %v5754, %v5759
        %v5764 = vrsqrt.pop %v5667
        %v5765 = vmul.f32 %v5764, %v5667
        %v5766 = vmul.f32 %v5765, %v5764
        %v5767 = vmul.f32 0.5, %v5766
        %v5768 = vsub.f32 1.5, %v5767
        %v5769 = vmul.f32 %v5764, %v5768
        %vm5770 = vweird.f32 %v5667
        %vm5771 = vweird.f32 %v5764
        %vm5772 = vmor %vm5770, %vm5771
        %v5773 = vsel %vm5772, %v5764, %v5769
        %v5774 = vrsqrt.pop %v5668
        %v5775 = vmul.f32 %v5774, %v5668
        %v5776 = vmul.f32 %v5775, %v5774
        %v5777 = vmul.f32 0.5, %v5776
        %v5778 = vsub.f32 1.5, %v5777
        %v5779 = vmul.f32 %v5774, %v5778
        %vm5780 = vweird.f32 %v5668
        %vm5781 = vweird.f32 %v5774
        %vm5782 = vmor %vm5780, %vm5781
        %v5783 = vsel %vm5782, %v5774, %v5779
        %v5784 = vrsqrt.pop %v5669
        %v5785 = vmul.f32 %v5784, %v5669
        %v5786 = vmul.f32 %v5785, %v5784
        %v5787 = vmul.f32 0.5, %v5786
        %v5788 = vsub.f32 1.5, %v5787
        %v5789 = vmul.f32 %v5784, %v5788
        %vm5790 = vweird.f32 %v5669
        %vm5791 = vweird.f32 %v5784
        %vm5792 = vmor %vm5790, %vm5791
        %v5793 = vsel %vm5792, %v5784, %v5789
        %v5794 = vrsqrt.pop %v5670
        %v5795 = vmul.f32 %v5794, %v5670
        %v5796 = vmul.f32 %v5795, %v5794
        %v5797 = vmul.f32 0.5, %v5796
        %v5798 = vsub.f32 1.5, %v5797
        %v5799 = vmul.f32 %v5794, %v5798
        %vm5800 = vweird.f32 %v5670
        %vm5801 = vweird.f32 %v5794
        %vm5802 = vmor %vm5800, %vm5801
        %v5803 = vsel %vm5802, %v5794, %v5799
        %v5804 = vrsqrt.pop %v5671
        %v5805 = vmul.f32 %v5804, %v5671
        %v5806 = vmul.f32 %v5805, %v5804
        %v5807 = vmul.f32 0.5, %v5806
        %v5808 = vsub.f32 1.5, %v5807
        %v5809 = vmul.f32 %v5804, %v5808
        %vm5810 = vweird.f32 %v5671
        %vm5811 = vweird.f32 %v5804
        %vm5812 = vmor %vm5810, %vm5811
        %v5813 = vsel %vm5812, %v5804, %v5809
        %v5814 = vrsqrt.pop %v5672
        %v5815 = vmul.f32 %v5814, %v5672
        %v5816 = vmul.f32 %v5815, %v5814
        %v5817 = vmul.f32 0.5, %v5816
        %v5818 = vsub.f32 1.5, %v5817
        %v5819 = vmul.f32 %v5814, %v5818
        %vm5820 = vweird.f32 %v5672
        %vm5821 = vweird.f32 %v5814
        %vm5822 = vmor %vm5820, %vm5821
        %v5823 = vsel %vm5822, %v5814, %v5819
        %v5824 = vrsqrt.pop %v5673
        %v5825 = vmul.f32 %v5824, %v5673
        %v5826 = vmul.f32 %v5825, %v5824
        %v5827 = vmul.f32 0.5, %v5826
        %v5828 = vsub.f32 1.5, %v5827
        %v5829 = vmul.f32 %v5824, %v5828
        %vm5830 = vweird.f32 %v5673
        %vm5831 = vweird.f32 %v5824
        %vm5832 = vmor %vm5830, %vm5831
        %v5833 = vsel %vm5832, %v5824, %v5829
        %v5834 = vmul.f32 %v5626, %v5683
        %v5835 = vmul.f32 %v5627, %v5683
        %v5836 = vmul.f32 %v5628, %v5693
        %v5837 = vmul.f32 %v5629, %v5693
        %v5838 = vmul.f32 %v5630, %v5703
        %v5839 = vmul.f32 %v5631, %v5703
        %v5840 = vmul.f32 %v5632, %v5713
        %v5841 = vmul.f32 %v5633, %v5713
        %v5842 = vmul.f32 %v5634, %v5723
        %v5843 = vmul.f32 %v5635, %v5723
        %v5844 = vmul.f32 %v5636, %v5733
        %v5845 = vmul.f32 %v5637, %v5733
        %v5846 = vmul.f32 %v5638, %v5743
        %v5847 = vmul.f32 %v5639, %v5743
        %v5848 = vmul.f32 %v5640, %v5753
        %v5849 = vmul.f32 %v5641, %v5753
        %v5850 = vmul.f32 %v5642, %v5763
        %v5851 = vmul.f32 %v5643, %v5763
        %v5852 = vmul.f32 %v5644, %v5773
        %v5853 = vmul.f32 %v5645, %v5773
        %v5854 = vmul.f32 %v5646, %v5783
        %v5855 = vmul.f32 %v5647, %v5783
        %v5856 = vmul.f32 %v5648, %v5793
        %v5857 = vmul.f32 %v5649, %v5793
        %v5858 = vmul.f32 %v5650, %v5803
        %v5859 = vmul.f32 %v5651, %v5803
        %v5860 = vmul.f32 %v5652, %v5813
        %v5861 = vmul.f32 %v5653, %v5813
        %v5862 = vmul.f32 %v5654, %v5823
        %v5863 = vmul.f32 %v5655, %v5823
        %v5864 = vmul.f32 %v5656, %v5833
        %v5865 = vmul.f32 %v5657, %v5833
        %v5866 = vperm.slane %v414, 3
        %v5867 = vperm.slane %v415, 3
        %v5868 = vmul.f32 %v5834, %v5866
        %v5869 = vmul.f32 %v5835, %v5867
        %v5870 = vmul.f32 %v5836, %v5866
        %v5871 = vmul.f32 %v5837, %v5867
        %v5872 = vmul.f32 %v5838, %v5866
        %v5873 = vmul.f32 %v5839, %v5867
        %v5874 = vmul.f32 %v5840, %v5866
        %v5875 = vmul.f32 %v5841, %v5867
        %v5876 = vmul.f32 %v5842, %v5866
        %v5877 = vmul.f32 %v5843, %v5867
        %v5878 = vmul.f32 %v5844, %v5866
        %v5879 = vmul.f32 %v5845, %v5867
        %v5880 = vmul.f32 %v5846, %v5866
        %v5881 = vmul.f32 %v5847, %v5867
        %v5882 = vmul.f32 %v5848, %v5866
        %v5883 = vmul.f32 %v5849, %v5867
        %v5884 = vmul.f32 %v5850, %v5866
        %v5885 = vmul.f32 %v5851, %v5867
        %v5886 = vmul.f32 %v5852, %v5866
        %v5887 = vmul.f32 %v5853, %v5867
        %v5888 = vmul.f32 %v5854, %v5866
        %v5889 = vmul.f32 %v5855, %v5867
        %v5890 = vmul.f32 %v5856, %v5866
        %v5891 = vmul.f32 %v5857, %v5867
        %v5892 = vmul.f32 %v5858, %v5866
        %v5893 = vmul.f32 %v5859, %v5867
        %v5894 = vmul.f32 %v5860, %v5866
        %v5895 = vmul.f32 %v5861, %v5867
        %v5896 = vmul.f32 %v5862, %v5866
        %v5897 = vmul.f32 %v5863, %v5867
        %v5898 = vmul.f32 %v5864, %v5866
        %v5899 = vmul.f32 %v5865, %v5867
        %v5900 = vperm.slane %v414, 4
        %v5901 = vperm.slane %v415, 4
        %v5902 = vadd.f32 %v5868, %v5900
        %v5903 = vadd.f32 %v5869, %v5901
        %v5904 = vadd.f32 %v5870, %v5900
        %v5905 = vadd.f32 %v5871, %v5901
        %v5906 = vadd.f32 %v5872, %v5900
        %v5907 = vadd.f32 %v5873, %v5901
        %v5908 = vadd.f32 %v5874, %v5900
        %v5909 = vadd.f32 %v5875, %v5901
        %v5910 = vadd.f32 %v5876, %v5900
        %v5911 = vadd.f32 %v5877, %v5901
        %v5912 = vadd.f32 %v5878, %v5900
        %v5913 = vadd.f32 %v5879, %v5901
        %v5914 = vadd.f32 %v5880, %v5900
        %v5915 = vadd.f32 %v5881, %v5901
        %v5916 = vadd.f32 %v5882, %v5900
        %v5917 = vadd.f32 %v5883, %v5901
        %v5918 = vadd.f32 %v5884, %v5900
        %v5919 = vadd.f32 %v5885, %v5901
        %v5920 = vadd.f32 %v5886, %v5900
        %v5921 = vadd.f32 %v5887, %v5901
        %v5922 = vadd.f32 %v5888, %v5900
        %v5923 = vadd.f32 %v5889, %v5901
        %v5924 = vadd.f32 %v5890, %v5900
        %v5925 = vadd.f32 %v5891, %v5901
        %v5926 = vadd.f32 %v5892, %v5900
        %v5927 = vadd.f32 %v5893, %v5901
        %v5928 = vadd.f32 %v5894, %v5900
        %v5929 = vadd.f32 %v5895, %v5901
        %v5930 = vadd.f32 %v5896, %v5900
        %v5931 = vadd.f32 %v5897, %v5901
        %v5932 = vadd.f32 %v5898, %v5900
        %v5933 = vadd.f32 %v5899, %v5901
      $region61: #{transformer_model_forward.2} parent=55 // loop_footer
        %s378 = sadd.s32 1, %s374
      $region62: #{transformer_model_forward.2} parent=55 // loop_footer_branch
        %373 = sbr.rel target = $region58
      $region63: #{transformer_model_forward.2} parent=55 // loop_exit
        _
      %v5934 = vpack.c.bf16 %v380, %v379
      %v5935 = vpack.c.bf16 %v382, %v381
      %v5936 = vpack.c.bf16 %v384, %v383
      %v5937 = vpack.c.bf16 %v386, %v385
      %v5938 = vpack.c.bf16 %v388, %v387
      %v5939 = vpack.c.bf16 %v390, %v389
      %v5940 = vpack.c.bf16 %v392, %v391
      %v5941 = vpack.c.bf16 %v394, %v393
      %v5942 = vpack.c.bf16 %v396, %v395
      %v5943 = vpack.c.bf16 %v398, %v397
      %v5944 = vpack.c.bf16 %v400, %v399
      %v5945 = vpack.c.bf16 %v402, %v401
      %v5946 = vpack.c.bf16 %v404, %v403
      %v5947 = vpack.c.bf16 %v406, %v405
      %v5948 = vpack.c.bf16 %v408, %v407
      %v5949 = vpack.c.bf16 %v410, %v409
      %5950 = vst [vmem:[%s339] sm:$0xff] %v5934
      %5951 = vst [vmem:[%s339 + $0x8] sm:$0xff] %v5935
      %5952 = vst [vmem:[%s339 + $0x10] sm:$0xff] %v5936
      %5953 = vst [vmem:[%s339 + $0x18] sm:$0xff] %v5937
      %5954 = vst [vmem:[%s339 + $0x20] sm:$0xff] %v5938
      %5955 = vst [vmem:[%s339 + $0x28] sm:$0xff] %v5939
      %5956 = vst [vmem:[%s339 + $0x30] sm:$0xff] %v5940
      %5957 = vst [vmem:[%s339 + $0x38] sm:$0xff] %v5941
      %5958 = vst [vmem:[%s339 + $0x40] sm:$0xff] %v5942
      %5959 = vst [vmem:[%s339 + $0x48] sm:$0xff] %v5943
      %5960 = vst [vmem:[%s339 + $0x50] sm:$0xff] %v5944
      %5961 = vst [vmem:[%s339 + $0x58] sm:$0xff] %v5945
      %5962 = vst [vmem:[%s339 + $0x60] sm:$0xff] %v5946
      %5963 = vst [vmem:[%s339 + $0x68] sm:$0xff] %v5947
      %5964 = vst [vmem:[%s339 + $0x70] sm:$0xff] %v5948
      %5965 = vst [vmem:[%s339 + $0x78] sm:$0xff] %v5949
      %s5966 = smul.u32 16, %s20
      %p5967 = scmp.lt.s32.totalorder %s5966, 31
      %s5968 = scalar_select %p5967, %s5966, 31
      %s5969 = smul.addr %s5968, 2
      %s5970 = smul.addr %s5969, 4
      %s5971 = scalar_lea.vmem %s9, %s5970
      // Predicated region
      $region64: #{transformer_model_forward.2} parent=55 // pred_check
        %p5972 = pneg %p232
      $region65: #{transformer_model_forward.2} parent=55 // pred_check_branch
        %5974 = sbr.rel (%p5972) target = $region67
      $region66: #{transformer_model_forward.2} parent=55 // pred_region
        %s5975 = smul.u32 16, %s20
      $region67: #{transformer_model_forward.2} parent=55 // pred_fallthru
        _
    $region56: #{transformer_model_forward.2} parent=5 // pred_fallthru
      _
    %p5976 = scmp.le.s32.totalorder 2, %s15
    // Predicated region
    $region68: #{transformer_model_forward.2} parent=5 // pred_check
      %p5977 = pneg %p5976
    $region69: #{transformer_model_forward.2} parent=5 // pred_check_branch
      %5979 = sbr.rel (%p5977) target = $region71
    $region70: #{transformer_model_forward.2} parent=5 // pred_region
      %s5980 = ssub.s32 %s15, 2
      // Predicated region
      $region72: #{transformer_model_forward.2} parent=70 // pred_check
        %p5981 = pneg %p238
      $region73: #{transformer_model_forward.2} parent=70 // pred_check_branch
        %5983 = sbr.rel (%p5981) target = $region75
      $region74: #{transformer_model_forward.2} parent=70 // pred_region
        %s5984 = smul.u32 16, %s21
        %p5985 = scmp.lt.s32.totalorder %s5984, 31
        %s5986 = scalar_select %p5985, %s5984, 31
        %s5987 = smul.addr %s5986, 2
        %s5988 = smul.addr %s5987, 4
        %s5989 = scalar_lea.vmem %s9, %s5988
      $region75: #{transformer_model_forward.2} parent=70 // pred_fallthru
        _
    $region71: #{transformer_model_forward.2} parent=5 // pred_fallthru
      _
  $region6: #{transformer_model_forward.2} parent=0 // loop_footer
    %s19 = sadd.s32 1, %s15
  $region7: #{transformer_model_forward.2} parent=0 // loop_footer_branch
    %14 = sbr.rel target = $region3
  $region8: #{transformer_model_forward.2} parent=0 // loop_exit
    _

</llo_original>
